<compile_context>
chip_gen: v7x
topology: tpu7x:2x2x1
jax: 0.10.0
libtpu: 0.0.40
codegen_flags: <defaults>
</compile_context>

<pallas_src>
import functools
import numpy as np

import jax
import jax.numpy as jnp
from jax.experimental import pallas as pl
from jax.experimental.pallas import tpu as pltpu

DTYPE = jnp.float32
BN_EPS = 1e-5


# ----------------------------------------------------------------------------
# small helpers (host/XLA glue)
# ----------------------------------------------------------------------------
def _round_up(v, m):
    return (v + m - 1) // m * m


def _bn_scale_bias(mean, var):
    inv = 1.0 / jnp.sqrt(var.astype(DTYPE) + BN_EPS)
    return inv.astype(DTYPE), (-mean.astype(DTYPE) * inv).astype(DTYPE)


def _stack_w_same(w, c_pad):
    """(C_out, C_in, K) -> (C_out, K*c_pad); column k*c_pad + ci holds W[:, ci, k]."""
    C_out, C_in, K = w.shape
    wt = jnp.transpose(w.astype(DTYPE), (0, 2, 1))          # (C_out, K, C_in)
    if c_pad > C_in:
        wt = jnp.pad(wt, ((0, 0), (0, 0), (0, c_pad - C_in)))
    return wt.reshape(C_out, K * c_pad)


def _stack_w_strided(w, s, sc_pad):
    """(C_out, C_in, K) -> (C_out, (K//s)*sc_pad) for the phase-major strided conv.

    Column q*sc_pad + (r*C_in + c) holds W[:, c, s*q + r]."""
    C_out, C_in, K = w.shape
    q = K // s
    wt = w.astype(DTYPE).reshape(C_out, C_in, q, s)
    wt = jnp.transpose(wt, (0, 2, 3, 1)).reshape(C_out, q, s * C_in)
    if sc_pad > s * C_in:
        wt = jnp.pad(wt, ((0, 0), (0, 0), (0, sc_pad - s * C_in)))
    return wt.reshape(C_out, q * sc_pad)


def _phase_split(z, s):
    """[B, C, s*M] -> [B, s*C, M]; row r*C + c holds z[:, c, s*m + r]."""
    B, C, L = z.shape
    M = L // s
    return z.reshape(B, C, M, s).transpose(0, 3, 1, 2).reshape(B, s * C, M)


# ----------------------------------------------------------------------------
# in-kernel helper: scatter the K 'same'-padded shifted views into a scratch
# ----------------------------------------------------------------------------
def _emit_tap_stores(dst_ref, get_src_cols, c_rows, c_pad, K, lpad, L_out, L_src):
    """dst rows [k*c_pad, k*c_pad + c_rows), col j == x_padded[:, j + k].

    Zero-padding of the 'same' conv is realised by the (pre-zeroed) scratch plus
    clipped column windows; all offsets are static Python ints."""
    for k in range(K):
        lo = k - lpad
        s_lo = max(lo, 0)
        s_hi = min(lo + L_out, L_src)
        width = s_hi - s_lo
        if width <= 0:
            continue
        d_lo = s_lo - lo
        dst_ref[k * c_pad:k * c_pad + c_rows, d_lo:d_lo + width] = get_src_cols(s_lo, s_hi)


# ----------------------------------------------------------------------------
# kernel 1: Conv1d(padding='same', stride=1, bias=False) + BN + (ReLU), fused
# ----------------------------------------------------------------------------
def _conv_same_kernel_factory(C_in, C_pad, C_out, K, L, lpad, relu):
    def kernel(x_ref, w_ref, scale_ref, bias_ref, o_ref, stk_ref):
        stk_ref[...] = jnp.zeros_like(stk_ref)               # zero pad rows/cols
        _emit_tap_stores(stk_ref, lambda a, b: x_ref[:, a:b],
                         C_in, C_pad, K, lpad, L, L)
        acc = jnp.dot(w_ref[...], stk_ref[...],
                      preferred_element_type=jnp.float32)    # (C_out, L) single MXU dot
        acc = acc * scale_ref[...] + bias_ref[...]           # fused BatchNorm
        if relu:
            acc = jnp.maximum(acc, 0.0)
        o_ref[...] = acc.astype(o_ref.dtype)
    return kernel


def conv_same_bn_relu(x, w, scale, bias, *, relu=True):
    B, C_in, L = x.shape
    C_out, _, K = w.shape
    lpad = (K - 1) // 2                                      # torch 'same': left=(K-1)//2
    C_pad = _round_up(C_in, 8)                               # fill sublanes
    w_s = _stack_w_same(w, C_pad)
    return pl.pallas_call(
        _conv_same_kernel_factory(C_in, C_pad, C_out, K, L, lpad, relu),
        out_shape=jax.ShapeDtypeStruct((B, C_out, L), DTYPE),
        grid=(B,),
        in_specs=[
            pl.BlockSpec((None, C_in, L), lambda b: (b, 0, 0)),
            pl.BlockSpec((C_out, K * C_pad), lambda b: (0, 0)),
            pl.BlockSpec((C_out, 1), lambda b: (0, 0)),
            pl.BlockSpec((C_out, 1), lambda b: (0, 0)),
        ],
        out_specs=pl.BlockSpec((None, C_out, L), lambda b: (b, 0, 0)),
        scratch_shapes=[pltpu.VMEM((K * C_pad, L), jnp.float32)],
        compiler_params=pltpu.CompilerParams(dimension_semantics=("parallel",)),
    )(x.astype(DTYPE), w_s,
      scale.reshape(C_out, 1).astype(DTYPE), bias.reshape(C_out, 1).astype(DTYPE))


# ----------------------------------------------------------------------------
# kernel 2: fused ResBlock tail
#   maxpool(y) + skip conv  |  strided x2 conv (phase trick)  |  add + BN + ReLU
# ----------------------------------------------------------------------------
def _block_tail_kernel_factory(C_in, Cin_pad, C_out, SC, SC_pad, K, s, L_out, lpad):
    q_taps = K // s

    def kernel(y_pm_ref, x_pm_ref, wy_ref, w2_ref, scale_ref, bias_ref,
               xy_ref, x2_ref, ys_ref, xs_ref):
        # ---- skip path: MaxPool1d(kernel=s, stride=s) == max over the s phases ----
        pooled = y_pm_ref[0:C_in, :]
        for r in range(1, s):
            pooled = jnp.maximum(pooled, y_pm_ref[r * C_in:(r + 1) * C_in, :])
        # stride-1 'same' conv on the pooled signal (K taps folded into one dot)
        ys_ref[...] = jnp.zeros_like(ys_ref)
        _emit_tap_stores(ys_ref, lambda a, b: pooled[:, a:b],
                         C_in, Cin_pad, K, lpad, L_out, L_out)
        y_skip = jnp.dot(wy_ref[...], ys_ref[...], preferred_element_type=jnp.float32)

        # ---- main path x2: stride-s conv realised as a phase-major stride-1 conv ----
        if SC_pad > SC:
            xs_ref[...] = jnp.zeros_like(xs_ref)
        for q in range(q_taps):
            xs_ref[q * SC_pad:q * SC_pad + SC, :] = x_pm_ref[:, q:q + L_out]
        x2 = jnp.dot(w2_ref[...], xs_ref[...], preferred_element_type=jnp.float32)

        # ---- residual add + BatchNorm(affine=False) + ReLU (fused epilogue) ----
        xy = jnp.maximum((x2 + y_skip) * scale_ref[...] + bias_ref[...], 0.0)
        xy_ref[...] = xy.astype(xy_ref.dtype)
        x2_ref[...] = x2.astype(x2_ref.dtype)

    return kernel


def block_tail(y_pm, x_pm, wy, w2, scale, bias, *, C_in, C_out, K, s, L_out):
    B = y_pm.shape[0]
    My = y_pm.shape[-1]
    M2 = x_pm.shape[-1]
    SC = s * C_out
    Cin_pad = _round_up(C_in, 8)
    SC_pad = _round_up(SC, 8)
    lpad = (K - 1) // 2
    wy_s = _stack_w_same(wy, Cin_pad)            # (C_out, K*Cin_pad)
    w2_s = _stack_w_strided(w2, s, SC_pad)       # (C_out, (K//s)*SC_pad)
    return pl.pallas_call(
        _block_tail_kernel_factory(C_in, Cin_pad, C_out, SC, SC_pad, K, s, L_out, lpad),
        out_shape=(jax.ShapeDtypeStruct((B, C_out, L_out), DTYPE),
                   jax.ShapeDtypeStruct((B, C_out, L_out), DTYPE)),
        grid=(B,),
        in_specs=[
            pl.BlockSpec((None, s * C_in, My), lambda b: (b, 0, 0)),
            pl.BlockSpec((None, SC, M2), lambda b: (b, 0, 0)),
            pl.BlockSpec((C_out, K * Cin_pad), lambda b: (0, 0)),
            pl.BlockSpec((C_out, (K // s) * SC_pad), lambda b: (0, 0)),
            pl.BlockSpec((C_out, 1), lambda b: (0, 0)),
            pl.BlockSpec((C_out, 1), lambda b: (0, 0)),
        ],
        out_specs=(pl.BlockSpec((None, C_out, L_out), lambda b: (b, 0, 0)),
                   pl.BlockSpec((None, C_out, L_out), lambda b: (b, 0, 0))),
        scratch_shapes=[pltpu.VMEM((K * Cin_pad, L_out), jnp.float32),
                        pltpu.VMEM(((K // s) * SC_pad, L_out), jnp.float32)],
        compiler_params=pltpu.CompilerParams(dimension_semantics=("parallel",)),
    )(y_pm, x_pm, wy_s, w2_s,
      scale.reshape(C_out, 1).astype(DTYPE), bias.reshape(C_out, 1).astype(DTYPE))


# ----------------------------------------------------------------------------
# kernel 3: final Linear
# ----------------------------------------------------------------------------
def _linear_kernel(x_ref, w_ref, b_ref, o_ref):
    o_ref[...] = (jnp.dot(x_ref[...], w_ref[...],
                          preferred_element_type=jnp.float32)
                  + b_ref[...]).astype(o_ref.dtype)


def linear(x, w_t, b):
    """x: [B, F], w_t: [F, N] (pre-transposed torch weight), b: [N]."""
    B, F = x.shape
    _, N = w_t.shape
    return pl.pallas_call(
        _linear_kernel,
        out_shape=jax.ShapeDtypeStruct((B, N), DTYPE),
        grid=(1,),
        in_specs=[
            pl.BlockSpec((B, F), lambda i: (0, 0)),
            pl.BlockSpec((F, N), lambda i: (0, 0)),
            pl.BlockSpec((1, N), lambda i: (0, 0)),
        ],
        out_specs=pl.BlockSpec((B, N), lambda i: (0, 0)),
    )(x.astype(DTYPE), w_t.astype(DTYPE), b.reshape(1, N).astype(DTYPE))


# ----------------------------------------------------------------------------
# ResBlock / ResNet forward (wrapper orchestration; all hot math in kernels)
# ----------------------------------------------------------------------------
def res_block_forward(inputs, p, input_dim, out_dim, kernel_size):
    x, y = inputs
    B, C_in, L_in = x.shape
    C_out, _, K = p['x1_w'].shape
    s = input_dim // out_dim
    # TODO(synk): downsample==1 (no pooling, stride-1 x2) and strides that do not
    # divide K are not reachable in this architecture (stride is always 4, K=16)
    # and are not implemented in the fused kernels.
    assert s > 1 and K % s == 0

    # ---- main path: x1 = Conv(same) + BN + ReLU (Dropout = identity) ----
    s1, b1 = _bn_scale_bias(p['bn1_mean'], p['bn1_var'])
    x1 = conv_same_bn_relu(x, p['x1_w'], s1, b1, relu=True)

    # ---- skip path input prep: reference pad formula, truncate, phase split ----
    Ly = y.shape[-1]
    sp = int(np.ceil(0.5 * (Ly // out_dim * (out_dim - 1) - Ly + s)))
    sp = max(sp, 0)
    if sp > 0:
        y = jnp.pad(y, ((0, 0), (0, 0), (sp, sp)))
    My = y.shape[-1] // s
    y = y[:, :, :My * s]                      # torch MaxPool floor semantics
    y_pm = _phase_split(y, s)                 # [B, s*C_in, My]

    # ---- x2 input prep: reference pad formula, then phase split ----
    Lx = x1.shape[-1]
    p2 = int(np.ceil(0.5 * (Lx // out_dim * (out_dim - 1) - Lx + K)))
    p2 = max(p2, 0)
    Lp = Lx + 2 * p2
    L_out = (Lp - K) // s + 1
    Lp_r = _round_up(Lp, s)                   # extra right zeros never reach the output
    xp = jnp.pad(x1, ((0, 0), (0, 0), (p2, p2 + (Lp_r - Lp))))
    x_pm = _phase_split(xp, s)                # [B, s*C_out, Lp_r // s]

    assert My == L_out, "skip-path / main-path lengths must match (as in the reference)"

    s2, b2 = _bn_scale_bias(p['bn2_mean'], p['bn2_var'])
    xy, x2 = block_tail(y_pm, x_pm, p['y1_w'], p['x2_w'], s2, b2,
                        C_in=C_in, C_out=C_out, K=K, s=s, L_out=L_out)
    return xy, x2


def resnet_forward(x, params, block_cfgs, kernel_size):
    s0, b0 = _bn_scale_bias(params['x1_bn_mean'], params['x1_bn_var'])
    h = conv_same_bn_relu(x, params['x1_w'], s0, b0, relu=True)
    carry = (h, h)
    for cfg, p in zip(block_cfgs, params['blocks']):
        din, _cin, _cout, dout = cfg
        carry = res_block_forward(carry, p, din, dout, kernel_size)
    xy, _ = carry
    flat = xy.reshape(xy.shape[0], -1)        # nn.Flatten (row-major, matches torch)
    return linear(flat, jnp.transpose(params['lin_w']), params['lin_b'])


# ----------------------------------------------------------------------------
# deterministic parameter construction (mirrors module __init__ shapes)
# ----------------------------------------------------------------------------
def init_resnet_params(key, input_dim, input_channels, n_output, kernel_size):
    def conv_init(k, c_out, c_in, ksz):
        bound = 1.0 / np.sqrt(c_in * ksz)
        return jax.random.uniform(k, (c_out, c_in, ksz), DTYPE, -bound, bound)

    keys = jax.random.split(key, 20)
    ki = iter(keys)
    C = input_channels
    params = {
        'x1_w': conv_init(next(ki), C, C, kernel_size),
        'x1_bn_mean': jnp.zeros((C,), DTYPE),
        'x1_bn_var': jnp.ones((C,), DTYPE),
    }
    block_cfgs = [
        (input_dim,        C,     2 * C, input_dim // 4),
        (input_dim // 4,   2 * C, 3 * C, input_dim // 16),
        (input_dim // 16,  3 * C, 4 * C, input_dim // 64),
        (input_dim // 64,  4 * C, 5 * C, input_dim // 256),
    ]
    blocks = []
    for (_din, cin, cout, _dout) in block_cfgs:
        blocks.append({
            'x1_w': conv_init(next(ki), cout, cin, kernel_size),
            'x2_w': conv_init(next(ki), cout, cout, kernel_size),
            'y1_w': conv_init(next(ki), cout, cin, kernel_size),
            'bn1_mean': jnp.zeros((cout,), DTYPE),
            'bn1_var': jnp.ones((cout,), DTYPE),
            'bn2_mean': jnp.zeros((cout,), DTYPE),
            'bn2_var': jnp.ones((cout,), DTYPE),
        })
    params['blocks'] = blocks

    F = input_dim // 256 * (5 * C)
    bound = 1.0 / np.sqrt(F)
    params['lin_w'] = jax.random.uniform(next(ki), (n_output, F), DTYPE, -bound, bound)
    params['lin_b'] = jax.random.uniform(next(ki), (n_output,), DTYPE, -bound, bound)
    return params, block_cfgs


# ----------------------------------------------------------------------------
if __name__ == "__main__":
    # smallest sizes consistent with the module (needs input_dim divisible by 256)
    INPUT_DIM = 256
    INPUT_CHANNELS = 4
    KERNEL_SIZE = 16
    N_OUTPUT = 10
    BATCH = 2

    key = jax.random.PRNGKey(0)
    pkey, xkey = jax.random.split(key)
    params, cfgs = init_resnet_params(pkey, INPUT_DIM, INPUT_CHANNELS,
                                      N_OUTPUT, KERNEL_SIZE)
    x = jax.random.normal(xkey, (BATCH, INPUT_CHANNELS, INPUT_DIM), DTYPE)

    fwd = jax.jit(functools.partial(resnet_forward,
                                    block_cfgs=tuple(cfgs),
                                    kernel_size=KERNEL_SIZE))
    out = fwd(x, params)
    jax.block_until_ready(out)
    assert out.shape == (BATCH, N_OUTPUT) and out.dtype == DTYPE
    print("KERNEL_OK")
</pallas_src>

<mosaic_0001>
module attributes {stable_mosaic.version = 11 : i64} {
  func.func @kernel(%arg0: i32, %arg1: memref<1x4x256xf32, #tpu.memory_space<vmem>>, %arg2: memref<4x128xf32, #tpu.memory_space<vmem>>, %arg3: memref<4x1xf32, #tpu.memory_space<vmem>>, %arg4: memref<4x1xf32, #tpu.memory_space<vmem>>, %arg5: memref<1x4x256xf32, #tpu.memory_space<vmem>>, %arg6: memref<128x256xf32, #tpu.memory_space<vmem>>) attributes {dimension_semantics = [#tpu.dimension_semantics<parallel>], iteration_bounds = array<i64: 2>, scalar_prefetch = 0 : i64, scratch_operands = 1 : i64, tpu.core_type = #tpu.core_type<tc>, window_params = [{transform_indices = @transform_0, window_bounds = array<i64: 1, 4, 256>}, {pipeline_mode = #tpu.pipeline_mode<synchronous>, transform_indices = @transform_1, window_bounds = array<i64: 4, 128>}, {pipeline_mode = #tpu.pipeline_mode<synchronous>, transform_indices = @transform_2, window_bounds = array<i64: 4, 1>}, {pipeline_mode = #tpu.pipeline_mode<synchronous>, transform_indices = @transform_3, window_bounds = array<i64: 4, 1>}, {transform_indices = @transform_4, window_bounds = array<i64: 1, 4, 256>}]} {
    %cst = arith.constant 0.000000e+00 : f32
    %0 = vector.broadcast %cst : f32 to vector<128x256xf32>
    %c0 = arith.constant 0 : index
    %c0_0 = arith.constant 0 : index
    %1 = vector.load %arg6[%c0, %c0_0] : memref<128x256xf32, #tpu.memory_space<vmem>>, vector<128x256xf32>
    tpu.vector_store %arg6[%c0, %c0_0], %0 {strides = array<i32>} : memref<128x256xf32, #tpu.memory_space<vmem>>, vector<128x256xf32>,
    %c0_1 = arith.constant 0 : index
    %c0_2 = arith.constant 0 : index
    %c0_3 = arith.constant 0 : index
    %2 = vector.load %arg1[%c0_1, %c0_2, %c0_3] : memref<1x4x256xf32, #tpu.memory_space<vmem>>, vector<1x4x249xf32>
    %3 = vector.shape_cast %2 : vector<1x4x249xf32> to vector<4x249xf32>
    %c0_4 = arith.constant 0 : index
    %c7 = arith.constant 7 : index
    %4 = vector.load %arg6[%c0_4, %c7] : memref<128x256xf32, #tpu.memory_space<vmem>>, vector<4x249xf32>
    tpu.vector_store %arg6[%c0_4, %c7], %3 {strides = array<i32>} : memref<128x256xf32, #tpu.memory_space<vmem>>, vector<4x249xf32>,
    %c0_5 = arith.constant 0 : index
    %c0_6 = arith.constant 0 : index
    %c0_7 = arith.constant 0 : index
    %5 = vector.load %arg1[%c0_5, %c0_6, %c0_7] : memref<1x4x256xf32, #tpu.memory_space<vmem>>, vector<1x4x250xf32>
    %6 = vector.shape_cast %5 : vector<1x4x250xf32> to vector<4x250xf32>
    %c8 = arith.constant 8 : index
    %c6 = arith.constant 6 : index
    %7 = vector.load %arg6[%c8, %c6] : memref<128x256xf32, #tpu.memory_space<vmem>>, vector<4x250xf32>
    tpu.vector_store %arg6[%c8, %c6], %6 {strides = array<i32>} : memref<128x256xf32, #tpu.memory_space<vmem>>, vector<4x250xf32>,
    %c0_8 = arith.constant 0 : index
    %c0_9 = arith.constant 0 : index
    %c0_10 = arith.constant 0 : index
    %8 = vector.load %arg1[%c0_8, %c0_9, %c0_10] : memref<1x4x256xf32, #tpu.memory_space<vmem>>, vector<1x4x251xf32>
    %9 = vector.shape_cast %8 : vector<1x4x251xf32> to vector<4x251xf32>
    %c16 = arith.constant 16 : index
    %c5 = arith.constant 5 : index
    %10 = vector.load %arg6[%c16, %c5] : memref<128x256xf32, #tpu.memory_space<vmem>>, vector<4x251xf32>
    tpu.vector_store %arg6[%c16, %c5], %9 {strides = array<i32>} : memref<128x256xf32, #tpu.memory_space<vmem>>, vector<4x251xf32>,
    %c0_11 = arith.constant 0 : index
    %c0_12 = arith.constant 0 : index
    %c0_13 = arith.constant 0 : index
    %11 = vector.load %arg1[%c0_11, %c0_12, %c0_13] : memref<1x4x256xf32, #tpu.memory_space<vmem>>, vector<1x4x252xf32>
    %12 = vector.shape_cast %11 : vector<1x4x252xf32> to vector<4x252xf32>
    %c24 = arith.constant 24 : index
    %c4 = arith.constant 4 : index
    %13 = vector.load %arg6[%c24, %c4] : memref<128x256xf32, #tpu.memory_space<vmem>>, vector<4x252xf32>
    tpu.vector_store %arg6[%c24, %c4], %12 {strides = array<i32>} : memref<128x256xf32, #tpu.memory_space<vmem>>, vector<4x252xf32>,
    %c0_14 = arith.constant 0 : index
    %c0_15 = arith.constant 0 : index
    %c0_16 = arith.constant 0 : index
    %14 = vector.load %arg1[%c0_14, %c0_15, %c0_16] : memref<1x4x256xf32, #tpu.memory_space<vmem>>, vector<1x4x253xf32>
    %15 = vector.shape_cast %14 : vector<1x4x253xf32> to vector<4x253xf32>
    %c32 = arith.constant 32 : index
    %c3 = arith.constant 3 : index
    %16 = vector.load %arg6[%c32, %c3] : memref<128x256xf32, #tpu.memory_space<vmem>>, vector<4x253xf32>
    tpu.vector_store %arg6[%c32, %c3], %15 {strides = array<i32>} : memref<128x256xf32, #tpu.memory_space<vmem>>, vector<4x253xf32>,
    %c0_17 = arith.constant 0 : index
    %c0_18 = arith.constant 0 : index
    %c0_19 = arith.constant 0 : index
    %17 = vector.load %arg1[%c0_17, %c0_18, %c0_19] : memref<1x4x256xf32, #tpu.memory_space<vmem>>, vector<1x4x254xf32>
    %18 = vector.shape_cast %17 : vector<1x4x254xf32> to vector<4x254xf32>
    %c40 = arith.constant 40 : index
    %c2 = arith.constant 2 : index
    %19 = vector.load %arg6[%c40, %c2] : memref<128x256xf32, #tpu.memory_space<vmem>>, vector<4x254xf32>
    tpu.vector_store %arg6[%c40, %c2], %18 {strides = array<i32>} : memref<128x256xf32, #tpu.memory_space<vmem>>, vector<4x254xf32>,
    %c0_20 = arith.constant 0 : index
    %c0_21 = arith.constant 0 : index
    %c0_22 = arith.constant 0 : index
    %20 = vector.load %arg1[%c0_20, %c0_21, %c0_22] : memref<1x4x256xf32, #tpu.memory_space<vmem>>, vector<1x4x255xf32>
    %21 = vector.shape_cast %20 : vector<1x4x255xf32> to vector<4x255xf32>
    %c48 = arith.constant 48 : index
    %c1 = arith.constant 1 : index
    %22 = vector.load %arg6[%c48, %c1] : memref<128x256xf32, #tpu.memory_space<vmem>>, vector<4x255xf32>
    tpu.vector_store %arg6[%c48, %c1], %21 {strides = array<i32>} : memref<128x256xf32, #tpu.memory_space<vmem>>, vector<4x255xf32>,
    %c0_23 = arith.constant 0 : index
    %c0_24 = arith.constant 0 : index
    %c0_25 = arith.constant 0 : index
    %23 = vector.load %arg1[%c0_23, %c0_24, %c0_25] : memref<1x4x256xf32, #tpu.memory_space<vmem>>, vector<1x4x256xf32>
    %24 = vector.shape_cast %23 : vector<1x4x256xf32> to vector<4x256xf32>
    %c56 = arith.constant 56 : index
    %c0_26 = arith.constant 0 : index
    %25 = vector.load %arg6[%c56, %c0_26] : memref<128x256xf32, #tpu.memory_space<vmem>>, vector<4x256xf32>
    tpu.vector_store %arg6[%c56, %c0_26], %24 {strides = array<i32>} : memref<128x256xf32, #tpu.memory_space<vmem>>, vector<4x256xf32>,
    %c0_27 = arith.constant 0 : index
    %c0_28 = arith.constant 0 : index
    %c1_29 = arith.constant 1 : index
    %26 = vector.load %arg1[%c0_27, %c0_28, %c1_29] : memref<1x4x256xf32, #tpu.memory_space<vmem>>, vector<1x4x255xf32>
    %27 = vector.shape_cast %26 : vector<1x4x255xf32> to vector<4x255xf32>
    %c64 = arith.constant 64 : index
    %c0_30 = arith.constant 0 : index
    %28 = vector.load %arg6[%c64, %c0_30] : memref<128x256xf32, #tpu.memory_space<vmem>>, vector<4x255xf32>
    tpu.vector_store %arg6[%c64, %c0_30], %27 {strides = array<i32>} : memref<128x256xf32, #tpu.memory_space<vmem>>, vector<4x255xf32>,
    %c0_31 = arith.constant 0 : index
    %c0_32 = arith.constant 0 : index
    %c2_33 = arith.constant 2 : index
    %29 = vector.load %arg1[%c0_31, %c0_32, %c2_33] : memref<1x4x256xf32, #tpu.memory_space<vmem>>, vector<1x4x254xf32>
    %30 = vector.shape_cast %29 : vector<1x4x254xf32> to vector<4x254xf32>
    %c72 = arith.constant 72 : index
    %c0_34 = arith.constant 0 : index
    %31 = vector.load %arg6[%c72, %c0_34] : memref<128x256xf32, #tpu.memory_space<vmem>>, vector<4x254xf32>
    tpu.vector_store %arg6[%c72, %c0_34], %30 {strides = array<i32>} : memref<128x256xf32, #tpu.memory_space<vmem>>, vector<4x254xf32>,
    %c0_35 = arith.constant 0 : index
    %c0_36 = arith.constant 0 : index
    %c3_37 = arith.constant 3 : index
    %32 = vector.load %arg1[%c0_35, %c0_36, %c3_37] : memref<1x4x256xf32, #tpu.memory_space<vmem>>, vector<1x4x253xf32>
    %33 = vector.shape_cast %32 : vector<1x4x253xf32> to vector<4x253xf32>
    %c80 = arith.constant 80 : index
    %c0_38 = arith.constant 0 : index
    %34 = vector.load %arg6[%c80, %c0_38] : memref<128x256xf32, #tpu.memory_space<vmem>>, vector<4x253xf32>
    tpu.vector_store %arg6[%c80, %c0_38], %33 {strides = array<i32>} : memref<128x256xf32, #tpu.memory_space<vmem>>, vector<4x253xf32>,
    %c0_39 = arith.constant 0 : index
    %c0_40 = arith.constant 0 : index
    %c4_41 = arith.constant 4 : index
    %35 = vector.load %arg1[%c0_39, %c0_40, %c4_41] : memref<1x4x256xf32, #tpu.memory_space<vmem>>, vector<1x4x252xf32>
    %36 = vector.shape_cast %35 : vector<1x4x252xf32> to vector<4x252xf32>
    %c88 = arith.constant 88 : index
    %c0_42 = arith.constant 0 : index
    %37 = vector.load %arg6[%c88, %c0_42] : memref<128x256xf32, #tpu.memory_space<vmem>>, vector<4x252xf32>
    tpu.vector_store %arg6[%c88, %c0_42], %36 {strides = array<i32>} : memref<128x256xf32, #tpu.memory_space<vmem>>, vector<4x252xf32>,
    %c0_43 = arith.constant 0 : index
    %c0_44 = arith.constant 0 : index
    %c5_45 = arith.constant 5 : index
    %38 = vector.load %arg1[%c0_43, %c0_44, %c5_45] : memref<1x4x256xf32, #tpu.memory_space<vmem>>, vector<1x4x251xf32>
    %39 = vector.shape_cast %38 : vector<1x4x251xf32> to vector<4x251xf32>
    %c96 = arith.constant 96 : index
    %c0_46 = arith.constant 0 : index
    %40 = vector.load %arg6[%c96, %c0_46] : memref<128x256xf32, #tpu.memory_space<vmem>>, vector<4x251xf32>
    tpu.vector_store %arg6[%c96, %c0_46], %39 {strides = array<i32>} : memref<128x256xf32, #tpu.memory_space<vmem>>, vector<4x251xf32>,
    %c0_47 = arith.constant 0 : index
    %c0_48 = arith.constant 0 : index
    %c6_49 = arith.constant 6 : index
    %41 = vector.load %arg1[%c0_47, %c0_48, %c6_49] : memref<1x4x256xf32, #tpu.memory_space<vmem>>, vector<1x4x250xf32>
    %42 = vector.shape_cast %41 : vector<1x4x250xf32> to vector<4x250xf32>
    %c104 = arith.constant 104 : index
    %c0_50 = arith.constant 0 : index
    %43 = vector.load %arg6[%c104, %c0_50] : memref<128x256xf32, #tpu.memory_space<vmem>>, vector<4x250xf32>
    tpu.vector_store %arg6[%c104, %c0_50], %42 {strides = array<i32>} : memref<128x256xf32, #tpu.memory_space<vmem>>, vector<4x250xf32>,
    %c0_51 = arith.constant 0 : index
    %c0_52 = arith.constant 0 : index
    %c7_53 = arith.constant 7 : index
    %44 = vector.load %arg1[%c0_51, %c0_52, %c7_53] : memref<1x4x256xf32, #tpu.memory_space<vmem>>, vector<1x4x249xf32>
    %45 = vector.shape_cast %44 : vector<1x4x249xf32> to vector<4x249xf32>
    %c112 = arith.constant 112 : index
    %c0_54 = arith.constant 0 : index
    %46 = vector.load %arg6[%c112, %c0_54] : memref<128x256xf32, #tpu.memory_space<vmem>>, vector<4x249xf32>
    tpu.vector_store %arg6[%c112, %c0_54], %45 {strides = array<i32>} : memref<128x256xf32, #tpu.memory_space<vmem>>, vector<4x249xf32>,
    %c0_55 = arith.constant 0 : index
    %c0_56 = arith.constant 0 : index
    %c8_57 = arith.constant 8 : index
    %47 = vector.load %arg1[%c0_55, %c0_56, %c8_57] : memref<1x4x256xf32, #tpu.memory_space<vmem>>, vector<1x4x248xf32>
    %48 = vector.shape_cast %47 : vector<1x4x248xf32> to vector<4x248xf32>
    %c120 = arith.constant 120 : index
    %c0_58 = arith.constant 0 : index
    %49 = vector.load %arg6[%c120, %c0_58] : memref<128x256xf32, #tpu.memory_space<vmem>>, vector<4x248xf32>
    tpu.vector_store %arg6[%c120, %c0_58], %48 {strides = array<i32>} : memref<128x256xf32, #tpu.memory_space<vmem>>, vector<4x248xf32>,
    %c0_59 = arith.constant 0 : index
    %c0_60 = arith.constant 0 : index
    %50 = vector.load %arg2[%c0_59, %c0_60] : memref<4x128xf32, #tpu.memory_space<vmem>>, vector<4x128xf32>
    %c0_61 = arith.constant 0 : index
    %c0_62 = arith.constant 0 : index
    %51 = vector.load %arg6[%c0_61, %c0_62] : memref<128x256xf32, #tpu.memory_space<vmem>>, vector<128x256xf32>
    %cst_63 = arith.constant dense<0.000000e+00> : vector<4x256xf32>
    %52 = tpu.matmul %50, %51, %cst_63 {dimension_numbers = #tpu.dot_dimension_numbers<[1], [0], [0], [1], [0, 0, 1, 1], [], []>} : vector<4x128xf32>, vector<128x256xf32>, vector<4x256xf32> -> vector<4x256xf32>
    %c0_64 = arith.constant 0 : index
    %c0_65 = arith.constant 0 : index
    %53 = vector.load %arg3[%c0_64, %c0_65] : memref<4x1xf32, #tpu.memory_space<vmem>>, vector<4x1xf32>
    %54 = vector.broadcast %53 : vector<4x1xf32> to vector<4x256xf32>
    %55 = arith.mulf %52, %54 : vector<4x256xf32>
    %c0_66 = arith.constant 0 : index
    %c0_67 = arith.constant 0 : index
    %56 = vector.load %arg4[%c0_66, %c0_67] : memref<4x1xf32, #tpu.memory_space<vmem>>, vector<4x1xf32>
    %57 = vector.broadcast %56 : vector<4x1xf32> to vector<4x256xf32>
    %58 = arith.addf %55, %57 : vector<4x256xf32>
    %cst_68 = arith.constant 0.000000e+00 : f32
    %59 = vector.broadcast %cst_68 : f32 to vector<4x256xf32>
    %60 = arith.maximumf %58, %59 : vector<4x256xf32>
    %c0_69 = arith.constant 0 : index
    %c0_70 = arith.constant 0 : index
    %c0_71 = arith.constant 0 : index
    %61 = vector.load %arg5[%c0_69, %c0_70, %c0_71] : memref<1x4x256xf32, #tpu.memory_space<vmem>>, vector<1x4x256xf32>
    %62 = vector.shape_cast %61 : vector<1x4x256xf32> to vector<4x256xf32>
    %63 = vector.shape_cast %60 : vector<4x256xf32> to vector<1x4x256xf32>
    tpu.vector_store %arg5[%c0_69, %c0_70, %c0_71], %63 {strides = array<i32>} : memref<1x4x256xf32, #tpu.memory_space<vmem>>, vector<1x4x256xf32>,
    return
  }
  func.func @transform_0(%arg0: i32) -> (i32, i32, i32) {
    %c0_i32 = arith.constant 0 : i32
    %c0_i32_0 = arith.constant 0 : i32
    %c0_i32_1 = arith.constant 0 : i32
    return %arg0, %c0_i32, %c0_i32_0 : i32, i32, i32
  }
  func.func @transform_1(%arg0: i32) -> (i32, i32) {
    %c0_i32 = arith.constant 0 : i32
    %c0_i32_0 = arith.constant 0 : i32
    %c0_i32_1 = arith.constant 0 : i32
    return %c0_i32, %c0_i32_0 : i32, i32
  }
  func.func @transform_2(%arg0: i32) -> (i32, i32) {
    %c0_i32 = arith.constant 0 : i32
    %c0_i32_0 = arith.constant 0 : i32
    %c0_i32_1 = arith.constant 0 : i32
    return %c0_i32, %c0_i32_0 : i32, i32
  }
  func.func @transform_3(%arg0: i32) -> (i32, i32) {
    %c0_i32 = arith.constant 0 : i32
    %c0_i32_0 = arith.constant 0 : i32
    %c0_i32_1 = arith.constant 0 : i32
    return %c0_i32, %c0_i32_0 : i32, i32
  }
  func.func @transform_4(%arg0: i32) -> (i32, i32, i32) {
    %c0_i32 = arith.constant 0 : i32
    %c0_i32_0 = arith.constant 0 : i32
    %c0_i32_1 = arith.constant 0 : i32
    return %arg0, %c0_i32, %c0_i32_0 : i32, i32, i32
  }
}

module attributes {stable_mosaic.version = 11 : i64} {
  func.func @kernel(%arg0: i32, %arg1: memref<1x4x256xf32, #tpu.memory_space<vmem>>, %arg2: memref<8x128xf32, #tpu.memory_space<vmem>>, %arg3: memref<8x1xf32, #tpu.memory_space<vmem>>, %arg4: memref<8x1xf32, #tpu.memory_space<vmem>>, %arg5: memref<1x8x256xf32, #tpu.memory_space<vmem>>, %arg6: memref<128x256xf32, #tpu.memory_space<vmem>>) attributes {dimension_semantics = [#tpu.dimension_semantics<parallel>], iteration_bounds = array<i64: 2>, scalar_prefetch = 0 : i64, scratch_operands = 1 : i64, tpu.core_type = #tpu.core_type<tc>, window_params = [{transform_indices = @transform_0, window_bounds = array<i64: 1, 4, 256>}, {pipeline_mode = #tpu.pipeline_mode<synchronous>, transform_indices = @transform_1, window_bounds = array<i64: 8, 128>}, {pipeline_mode = #tpu.pipeline_mode<synchronous>, transform_indices = @transform_2, window_bounds = array<i64: 8, 1>}, {pipeline_mode = #tpu.pipeline_mode<synchronous>, transform_indices = @transform_3, window_bounds = array<i64: 8, 1>}, {transform_indices = @transform_4, window_bounds = array<i64: 1, 8, 256>}]} {
    %cst = arith.constant 0.000000e+00 : f32
    %0 = vector.broadcast %cst : f32 to vector<128x256xf32>
    %c0 = arith.constant 0 : index
    %c0_0 = arith.constant 0 : index
    %1 = vector.load %arg6[%c0, %c0_0] : memref<128x256xf32, #tpu.memory_space<vmem>>, vector<128x256xf32>
    tpu.vector_store %arg6[%c0, %c0_0], %0 {strides = array<i32>} : memref<128x256xf32, #tpu.memory_space<vmem>>, vector<128x256xf32>,
    %c0_1 = arith.constant 0 : index
    %c0_2 = arith.constant 0 : index
    %c0_3 = arith.constant 0 : index
    %2 = vector.load %arg1[%c0_1, %c0_2, %c0_3] : memref<1x4x256xf32, #tpu.memory_space<vmem>>, vector<1x4x249xf32>
    %3 = vector.shape_cast %2 : vector<1x4x249xf32> to vector<4x249xf32>
    %c0_4 = arith.constant 0 : index
    %c7 = arith.constant 7 : index
    %4 = vector.load %arg6[%c0_4, %c7] : memref<128x256xf32, #tpu.memory_space<vmem>>, vector<4x249xf32>
    tpu.vector_store %arg6[%c0_4, %c7], %3 {strides = array<i32>} : memref<128x256xf32, #tpu.memory_space<vmem>>, vector<4x249xf32>,
    %c0_5 = arith.constant 0 : index
    %c0_6 = arith.constant 0 : index
    %c0_7 = arith.constant 0 : index
    %5 = vector.load %arg1[%c0_5, %c0_6, %c0_7] : memref<1x4x256xf32, #tpu.memory_space<vmem>>, vector<1x4x250xf32>
    %6 = vector.shape_cast %5 : vector<1x4x250xf32> to vector<4x250xf32>
    %c8 = arith.constant 8 : index
    %c6 = arith.constant 6 : index
    %7 = vector.load %arg6[%c8, %c6] : memref<128x256xf32, #tpu.memory_space<vmem>>, vector<4x250xf32>
    tpu.vector_store %arg6[%c8, %c6], %6 {strides = array<i32>} : memref<128x256xf32, #tpu.memory_space<vmem>>, vector<4x250xf32>,
    %c0_8 = arith.constant 0 : index
    %c0_9 = arith.constant 0 : index
    %c0_10 = arith.constant 0 : index
    %8 = vector.load %arg1[%c0_8, %c0_9, %c0_10] : memref<1x4x256xf32, #tpu.memory_space<vmem>>, vector<1x4x251xf32>
    %9 = vector.shape_cast %8 : vector<1x4x251xf32> to vector<4x251xf32>
    %c16 = arith.constant 16 : index
    %c5 = arith.constant 5 : index
    %10 = vector.load %arg6[%c16, %c5] : memref<128x256xf32, #tpu.memory_space<vmem>>, vector<4x251xf32>
    tpu.vector_store %arg6[%c16, %c5], %9 {strides = array<i32>} : memref<128x256xf32, #tpu.memory_space<vmem>>, vector<4x251xf32>,
    %c0_11 = arith.constant 0 : index
    %c0_12 = arith.constant 0 : index
    %c0_13 = arith.constant 0 : index
    %11 = vector.load %arg1[%c0_11, %c0_12, %c0_13] : memref<1x4x256xf32, #tpu.memory_space<vmem>>, vector<1x4x252xf32>
    %12 = vector.shape_cast %11 : vector<1x4x252xf32> to vector<4x252xf32>
    %c24 = arith.constant 24 : index
    %c4 = arith.constant 4 : index
    %13 = vector.load %arg6[%c24, %c4] : memref<128x256xf32, #tpu.memory_space<vmem>>, vector<4x252xf32>
    tpu.vector_store %arg6[%c24, %c4], %12 {strides = array<i32>} : memref<128x256xf32, #tpu.memory_space<vmem>>, vector<4x252xf32>,
    %c0_14 = arith.constant 0 : index
    %c0_15 = arith.constant 0 : index
    %c0_16 = arith.constant 0 : index
    %14 = vector.load %arg1[%c0_14, %c0_15, %c0_16] : memref<1x4x256xf32, #tpu.memory_space<vmem>>, vector<1x4x253xf32>
    %15 = vector.shape_cast %14 : vector<1x4x253xf32> to vector<4x253xf32>
    %c32 = arith.constant 32 : index
    %c3 = arith.constant 3 : index
    %16 = vector.load %arg6[%c32, %c3] : memref<128x256xf32, #tpu.memory_space<vmem>>, vector<4x253xf32>
    tpu.vector_store %arg6[%c32, %c3], %15 {strides = array<i32>} : memref<128x256xf32, #tpu.memory_space<vmem>>, vector<4x253xf32>,
    %c0_17 = arith.constant 0 : index
    %c0_18 = arith.constant 0 : index
    %c0_19 = arith.constant 0 : index
    %17 = vector.load %arg1[%c0_17, %c0_18, %c0_19] : memref<1x4x256xf32, #tpu.memory_space<vmem>>, vector<1x4x254xf32>
    %18 = vector.shape_cast %17 : vector<1x4x254xf32> to vector<4x254xf32>
    %c40 = arith.constant 40 : index
    %c2 = arith.constant 2 : index
    %19 = vector.load %arg6[%c40, %c2] : memref<128x256xf32, #tpu.memory_space<vmem>>, vector<4x254xf32>
    tpu.vector_store %arg6[%c40, %c2], %18 {strides = array<i32>} : memref<128x256xf32, #tpu.memory_space<vmem>>, vector<4x254xf32>,
    %c0_20 = arith.constant 0 : index
    %c0_21 = arith.constant 0 : index
    %c0_22 = arith.constant 0 : index
    %20 = vector.load %arg1[%c0_20, %c0_21, %c0_22] : memref<1x4x256xf32, #tpu.memory_space<vmem>>, vector<1x4x255xf32>
    %21 = vector.shape_cast %20 : vector<1x4x255xf32> to vector<4x255xf32>
    %c48 = arith.constant 48 : index
    %c1 = arith.constant 1 : index
    %22 = vector.load %arg6[%c48, %c1] : memref<128x256xf32, #tpu.memory_space<vmem>>, vector<4x255xf32>
    tpu.vector_store %arg6[%c48, %c1], %21 {strides = array<i32>} : memref<128x256xf32, #tpu.memory_space<vmem>>, vector<4x255xf32>,
    %c0_23 = arith.constant 0 : index
    %c0_24 = arith.constant 0 : index
    %c0_25 = arith.constant 0 : index
    %23 = vector.load %arg1[%c0_23, %c0_24, %c0_25] : memref<1x4x256xf32, #tpu.memory_space<vmem>>, vector<1x4x256xf32>
    %24 = vector.shape_cast %23 : vector<1x4x256xf32> to vector<4x256xf32>
    %c56 = arith.constant 56 : index
    %c0_26 = arith.constant 0 : index
    %25 = vector.load %arg6[%c56, %c0_26] : memref<128x256xf32, #tpu.memory_space<vmem>>, vector<4x256xf32>
    tpu.vector_store %arg6[%c56, %c0_26], %24 {strides = array<i32>} : memref<128x256xf32, #tpu.memory_space<vmem>>, vector<4x256xf32>,
    %c0_27 = arith.constant 0 : index
    %c0_28 = arith.constant 0 : index
    %c1_29 = arith.constant 1 : index
    %26 = vector.load %arg1[%c0_27, %c0_28, %c1_29] : memref<1x4x256xf32, #tpu.memory_space<vmem>>, vector<1x4x255xf32>
    %27 = vector.shape_cast %26 : vector<1x4x255xf32> to vector<4x255xf32>
    %c64 = arith.constant 64 : index
    %c0_30 = arith.constant 0 : index
    %28 = vector.load %arg6[%c64, %c0_30] : memref<128x256xf32, #tpu.memory_space<vmem>>, vector<4x255xf32>
    tpu.vector_store %arg6[%c64, %c0_30], %27 {strides = array<i32>} : memref<128x256xf32, #tpu.memory_space<vmem>>, vector<4x255xf32>,
    %c0_31 = arith.constant 0 : index
    %c0_32 = arith.constant 0 : index
    %c2_33 = arith.constant 2 : index
    %29 = vector.load %arg1[%c0_31, %c0_32, %c2_33] : memref<1x4x256xf32, #tpu.memory_space<vmem>>, vector<1x4x254xf32>
    %30 = vector.shape_cast %29 : vector<1x4x254xf32> to vector<4x254xf32>
    %c72 = arith.constant 72 : index
    %c0_34 = arith.constant 0 : index
    %31 = vector.load %arg6[%c72, %c0_34] : memref<128x256xf32, #tpu.memory_space<vmem>>, vector<4x254xf32>
    tpu.vector_store %arg6[%c72, %c0_34], %30 {strides = array<i32>} : memref<128x256xf32, #tpu.memory_space<vmem>>, vector<4x254xf32>,
    %c0_35 = arith.constant 0 : index
    %c0_36 = arith.constant 0 : index
    %c3_37 = arith.constant 3 : index
    %32 = vector.load %arg1[%c0_35, %c0_36, %c3_37] : memref<1x4x256xf32, #tpu.memory_space<vmem>>, vector<1x4x253xf32>
    %33 = vector.shape_cast %32 : vector<1x4x253xf32> to vector<4x253xf32>
    %c80 = arith.constant 80 : index
    %c0_38 = arith.constant 0 : index
    %34 = vector.load %arg6[%c80, %c0_38] : memref<128x256xf32, #tpu.memory_space<vmem>>, vector<4x253xf32>
    tpu.vector_store %arg6[%c80, %c0_38], %33 {strides = array<i32>} : memref<128x256xf32, #tpu.memory_space<vmem>>, vector<4x253xf32>,
    %c0_39 = arith.constant 0 : index
    %c0_40 = arith.constant 0 : index
    %c4_41 = arith.constant 4 : index
    %35 = vector.load %arg1[%c0_39, %c0_40, %c4_41] : memref<1x4x256xf32, #tpu.memory_space<vmem>>, vector<1x4x252xf32>
    %36 = vector.shape_cast %35 : vector<1x4x252xf32> to vector<4x252xf32>
    %c88 = arith.constant 88 : index
    %c0_42 = arith.constant 0 : index
    %37 = vector.load %arg6[%c88, %c0_42] : memref<128x256xf32, #tpu.memory_space<vmem>>, vector<4x252xf32>
    tpu.vector_store %arg6[%c88, %c0_42], %36 {strides = array<i32>} : memref<128x256xf32, #tpu.memory_space<vmem>>, vector<4x252xf32>,
    %c0_43 = arith.constant 0 : index
    %c0_44 = arith.constant 0 : index
    %c5_45 = arith.constant 5 : index
    %38 = vector.load %arg1[%c0_43, %c0_44, %c5_45] : memref<1x4x256xf32, #tpu.memory_space<vmem>>, vector<1x4x251xf32>
    %39 = vector.shape_cast %38 : vector<1x4x251xf32> to vector<4x251xf32>
    %c96 = arith.constant 96 : index
    %c0_46 = arith.constant 0 : index
    %40 = vector.load %arg6[%c96, %c0_46] : memref<128x256xf32, #tpu.memory_space<vmem>>, vector<4x251xf32>
    tpu.vector_store %arg6[%c96, %c0_46], %39 {strides = array<i32>} : memref<128x256xf32, #tpu.memory_space<vmem>>, vector<4x251xf32>,
    %c0_47 = arith.constant 0 : index
    %c0_48 = arith.constant 0 : index
    %c6_49 = arith.constant 6 : index
    %41 = vector.load %arg1[%c0_47, %c0_48, %c6_49] : memref<1x4x256xf32, #tpu.memory_space<vmem>>, vector<1x4x250xf32>
    %42 = vector.shape_cast %41 : vector<1x4x250xf32> to vector<4x250xf32>
    %c104 = arith.constant 104 : index
    %c0_50 = arith.constant 0 : index
    %43 = vector.load %arg6[%c104, %c0_50] : memref<128x256xf32, #tpu.memory_space<vmem>>, vector<4x250xf32>
    tpu.vector_store %arg6[%c104, %c0_50], %42 {strides = array<i32>} : memref<128x256xf32, #tpu.memory_space<vmem>>, vector<4x250xf32>,
    %c0_51 = arith.constant 0 : index
    %c0_52 = arith.constant 0 : index
    %c7_53 = arith.constant 7 : index
    %44 = vector.load %arg1[%c0_51, %c0_52, %c7_53] : memref<1x4x256xf32, #tpu.memory_space<vmem>>, vector<1x4x249xf32>
    %45 = vector.shape_cast %44 : vector<1x4x249xf32> to vector<4x249xf32>
    %c112 = arith.constant 112 : index
    %c0_54 = arith.constant 0 : index
    %46 = vector.load %arg6[%c112, %c0_54] : memref<128x256xf32, #tpu.memory_space<vmem>>, vector<4x249xf32>
    tpu.vector_store %arg6[%c112, %c0_54], %45 {strides = array<i32>} : memref<128x256xf32, #tpu.memory_space<vmem>>, vector<4x249xf32>,
    %c0_55 = arith.constant 0 : index
    %c0_56 = arith.constant 0 : index
    %c8_57 = arith.constant 8 : index
    %47 = vector.load %arg1[%c0_55, %c0_56, %c8_57] : memref<1x4x256xf32, #tpu.memory_space<vmem>>, vector<1x4x248xf32>
    %48 = vector.shape_cast %47 : vector<1x4x248xf32> to vector<4x248xf32>
    %c120 = arith.constant 120 : index
    %c0_58 = arith.constant 0 : index
    %49 = vector.load %arg6[%c120, %c0_58] : memref<128x256xf32, #tpu.memory_space<vmem>>, vector<4x248xf32>
    tpu.vector_store %arg6[%c120, %c0_58], %48 {strides = array<i32>} : memref<128x256xf32, #tpu.memory_space<vmem>>, vector<4x248xf32>,
    %c0_59 = arith.constant 0 : index
    %c0_60 = arith.constant 0 : index
    %50 = vector.load %arg2[%c0_59, %c0_60] : memref<8x128xf32, #tpu.memory_space<vmem>>, vector<8x128xf32>
    %c0_61 = arith.constant 0 : index
    %c0_62 = arith.constant 0 : index
    %51 = vector.load %arg6[%c0_61, %c0_62] : memref<128x256xf32, #tpu.memory_space<vmem>>, vector<128x256xf32>
    %cst_63 = arith.constant dense<0.000000e+00> : vector<8x256xf32>
    %52 = tpu.matmul %50, %51, %cst_63 {dimension_numbers = #tpu.dot_dimension_numbers<[1], [0], [0], [1], [0, 0, 1, 1], [], []>} : vector<8x128xf32>, vector<128x256xf32>, vector<8x256xf32> -> vector<8x256xf32>
    %c0_64 = arith.constant 0 : index
    %c0_65 = arith.constant 0 : index
    %53 = vector.load %arg3[%c0_64, %c0_65] : memref<8x1xf32, #tpu.memory_space<vmem>>, vector<8x1xf32>
    %54 = vector.broadcast %53 : vector<8x1xf32> to vector<8x256xf32>
    %55 = arith.mulf %52, %54 : vector<8x256xf32>
    %c0_66 = arith.constant 0 : index
    %c0_67 = arith.constant 0 : index
    %56 = vector.load %arg4[%c0_66, %c0_67] : memref<8x1xf32, #tpu.memory_space<vmem>>, vector<8x1xf32>
    %57 = vector.broadcast %56 : vector<8x1xf32> to vector<8x256xf32>
    %58 = arith.addf %55, %57 : vector<8x256xf32>
    %cst_68 = arith.constant 0.000000e+00 : f32
    %59 = vector.broadcast %cst_68 : f32 to vector<8x256xf32>
    %60 = arith.maximumf %58, %59 : vector<8x256xf32>
    %c0_69 = arith.constant 0 : index
    %c0_70 = arith.constant 0 : index
    %c0_71 = arith.constant 0 : index
    %61 = vector.load %arg5[%c0_69, %c0_70, %c0_71] : memref<1x8x256xf32, #tpu.memory_space<vmem>>, vector<1x8x256xf32>
    %62 = vector.shape_cast %61 : vector<1x8x256xf32> to vector<8x256xf32>
    %63 = vector.shape_cast %60 : vector<8x256xf32> to vector<1x8x256xf32>
    tpu.vector_store %arg5[%c0_69, %c0_70, %c0_71], %63 {strides = array<i32>} : memref<1x8x256xf32, #tpu.memory_space<vmem>>, vector<1x8x256xf32>,
    return
  }
  func.func @transform_0(%arg0: i32) -> (i32, i32, i32) {
    %c0_i32 = arith.constant 0 : i32
    %c0_i32_0 = arith.constant 0 : i32
    %c0_i32_1 = arith.constant 0 : i32
    return %arg0, %c0_i32, %c0_i32_0 : i32, i32, i32
  }
  func.func @transform_1(%arg0: i32) -> (i32, i32) {
    %c0_i32 = arith.constant 0 : i32
    %c0_i32_0 = arith.constant 0 : i32
    %c0_i32_1 = arith.constant 0 : i32
    return %c0_i32, %c0_i32_0 : i32, i32
  }
  func.func @transform_2(%arg0: i32) -> (i32, i32) {
    %c0_i32 = arith.constant 0 : i32
    %c0_i32_0 = arith.constant 0 : i32
    %c0_i32_1 = arith.constant 0 : i32
    return %c0_i32, %c0_i32_0 : i32, i32
  }
  func.func @transform_3(%arg0: i32) -> (i32, i32) {
    %c0_i32 = arith.constant 0 : i32
    %c0_i32_0 = arith.constant 0 : i32
    %c0_i32_1 = arith.constant 0 : i32
    return %c0_i32, %c0_i32_0 : i32, i32
  }
  func.func @transform_4(%arg0: i32) -> (i32, i32, i32) {
    %c0_i32 = arith.constant 0 : i32
    %c0_i32_0 = arith.constant 0 : i32
    %c0_i32_1 = arith.constant 0 : i32
    return %arg0, %c0_i32, %c0_i32_0 : i32, i32, i32
  }
}

module attributes {stable_mosaic.version = 11 : i64} {
  func.func @kernel(%arg0: i32, %arg1: memref<1x16x64xf32, #tpu.memory_space<vmem>>, %arg2: memref<1x32x67xf32, #tpu.memory_space<vmem>>, %arg3: memref<8x128xf32, #tpu.memory_space<vmem>>, %arg4: memref<8x128xf32, #tpu.memory_space<vmem>>, %arg5: memref<8x1xf32, #tpu.memory_space<vmem>>, %arg6: memref<8x1xf32, #tpu.memory_space<vmem>>, %arg7: memref<1x8x64xf32, #tpu.memory_space<vmem>>, %arg8: memref<1x8x64xf32, #tpu.memory_space<vmem>>, %arg9: memref<128x64xf32, #tpu.memory_space<vmem>>, %arg10: memref<128x64xf32, #tpu.memory_space<vmem>>) attributes {dimension_semantics = [#tpu.dimension_semantics<parallel>], iteration_bounds = array<i64: 2>, scalar_prefetch = 0 : i64, scratch_operands = 2 : i64, tpu.core_type = #tpu.core_type<tc>, window_params = [{transform_indices = @transform_0, window_bounds = array<i64: 1, 16, 64>}, {transform_indices = @transform_1, window_bounds = array<i64: 1, 32, 67>}, {pipeline_mode = #tpu.pipeline_mode<synchronous>, transform_indices = @transform_2, window_bounds = array<i64: 8, 128>}, {pipeline_mode = #tpu.pipeline_mode<synchronous>, transform_indices = @transform_3, window_bounds = array<i64: 8, 128>}, {pipeline_mode = #tpu.pipeline_mode<synchronous>, transform_indices = @transform_4, window_bounds = array<i64: 8, 1>}, {pipeline_mode = #tpu.pipeline_mode<synchronous>, transform_indices = @transform_5, window_bounds = array<i64: 8, 1>}, {transform_indices = @transform_6, window_bounds = array<i64: 1, 8, 64>}, {transform_indices = @transform_7, window_bounds = array<i64: 1, 8, 64>}]} {
    %c0 = arith.constant 0 : index
    %c0_0 = arith.constant 0 : index
    %c0_1 = arith.constant 0 : index
    %0 = vector.load %arg1[%c0, %c0_0, %c0_1] : memref<1x16x64xf32, #tpu.memory_space<vmem>>, vector<1x4x64xf32>
    %1 = vector.shape_cast %0 : vector<1x4x64xf32> to vector<4x64xf32>
    %c0_2 = arith.constant 0 : index
    %c4 = arith.constant 4 : index
    %c0_3 = arith.constant 0 : index
    %2 = vector.load %arg1[%c0_2, %c4, %c0_3] : memref<1x16x64xf32, #tpu.memory_space<vmem>>, vector<1x4x64xf32>
    %3 = vector.shape_cast %2 : vector<1x4x64xf32> to vector<4x64xf32>
    %4 = arith.maximumf %1, %3 : vector<4x64xf32>
    %c0_4 = arith.constant 0 : index
    %c8 = arith.constant 8 : index
    %c0_5 = arith.constant 0 : index
    %5 = vector.load %arg1[%c0_4, %c8, %c0_5] : memref<1x16x64xf32, #tpu.memory_space<vmem>>, vector<1x4x64xf32>
    %6 = vector.shape_cast %5 : vector<1x4x64xf32> to vector<4x64xf32>
    %7 = arith.maximumf %4, %6 : vector<4x64xf32>
    %c0_6 = arith.constant 0 : index
    %c12 = arith.constant 12 : index
    %c0_7 = arith.constant 0 : index
    %8 = vector.load %arg1[%c0_6, %c12, %c0_7] : memref<1x16x64xf32, #tpu.memory_space<vmem>>, vector<1x4x64xf32>
    %9 = vector.shape_cast %8 : vector<1x4x64xf32> to vector<4x64xf32>
    %10 = arith.maximumf %7, %9 : vector<4x64xf32>
    %cst = arith.constant 0.000000e+00 : f32
    %11 = vector.broadcast %cst : f32 to vector<128x64xf32>
    %c0_8 = arith.constant 0 : index
    %c0_9 = arith.constant 0 : index
    %12 = vector.load %arg9[%c0_8, %c0_9] : memref<128x64xf32, #tpu.memory_space<vmem>>, vector<128x64xf32>
    tpu.vector_store %arg9[%c0_8, %c0_9], %11 {strides = array<i32>} : memref<128x64xf32, #tpu.memory_space<vmem>>, vector<128x64xf32>,
    %13 = vector.extract_strided_slice %10 {offsets = [0, 0], sizes = [4, 57], strides = [1, 1]} : vector<4x64xf32> to vector<4x57xf32>
    %c0_10 = arith.constant 0 : index
    %c7 = arith.constant 7 : index
    %14 = vector.load %arg9[%c0_10, %c7] : memref<128x64xf32, #tpu.memory_space<vmem>>, vector<4x57xf32>
    tpu.vector_store %arg9[%c0_10, %c7], %13 {strides = array<i32>} : memref<128x64xf32, #tpu.memory_space<vmem>>, vector<4x57xf32>,
    %15 = vector.extract_strided_slice %10 {offsets = [0, 0], sizes = [4, 58], strides = [1, 1]} : vector<4x64xf32> to vector<4x58xf32>
    %c8_11 = arith.constant 8 : index
    %c6 = arith.constant 6 : index
    %16 = vector.load %arg9[%c8_11, %c6] : memref<128x64xf32, #tpu.memory_space<vmem>>, vector<4x58xf32>
    tpu.vector_store %arg9[%c8_11, %c6], %15 {strides = array<i32>} : memref<128x64xf32, #tpu.memory_space<vmem>>, vector<4x58xf32>,
    %17 = vector.extract_strided_slice %10 {offsets = [0, 0], sizes = [4, 59], strides = [1, 1]} : vector<4x64xf32> to vector<4x59xf32>
    %c16 = arith.constant 16 : index
    %c5 = arith.constant 5 : index
    %18 = vector.load %arg9[%c16, %c5] : memref<128x64xf32, #tpu.memory_space<vmem>>, vector<4x59xf32>
    tpu.vector_store %arg9[%c16, %c5], %17 {strides = array<i32>} : memref<128x64xf32, #tpu.memory_space<vmem>>, vector<4x59xf32>,
    %19 = vector.extract_strided_slice %10 {offsets = [0, 0], sizes = [4, 60], strides = [1, 1]} : vector<4x64xf32> to vector<4x60xf32>
    %c24 = arith.constant 24 : index
    %c4_12 = arith.constant 4 : index
    %20 = vector.load %arg9[%c24, %c4_12] : memref<128x64xf32, #tpu.memory_space<vmem>>, vector<4x60xf32>
    tpu.vector_store %arg9[%c24, %c4_12], %19 {strides = array<i32>} : memref<128x64xf32, #tpu.memory_space<vmem>>, vector<4x60xf32>,
    %21 = vector.extract_strided_slice %10 {offsets = [0, 0], sizes = [4, 61], strides = [1, 1]} : vector<4x64xf32> to vector<4x61xf32>
    %c32 = arith.constant 32 : index
    %c3 = arith.constant 3 : index
    %22 = vector.load %arg9[%c32, %c3] : memref<128x64xf32, #tpu.memory_space<vmem>>, vector<4x61xf32>
    tpu.vector_store %arg9[%c32, %c3], %21 {strides = array<i32>} : memref<128x64xf32, #tpu.memory_space<vmem>>, vector<4x61xf32>,
    %23 = vector.extract_strided_slice %10 {offsets = [0, 0], sizes = [4, 62], strides = [1, 1]} : vector<4x64xf32> to vector<4x62xf32>
    %c40 = arith.constant 40 : index
    %c2 = arith.constant 2 : index
    %24 = vector.load %arg9[%c40, %c2] : memref<128x64xf32, #tpu.memory_space<vmem>>, vector<4x62xf32>
    tpu.vector_store %arg9[%c40, %c2], %23 {strides = array<i32>} : memref<128x64xf32, #tpu.memory_space<vmem>>, vector<4x62xf32>,
    %25 = vector.extract_strided_slice %10 {offsets = [0, 0], sizes = [4, 63], strides = [1, 1]} : vector<4x64xf32> to vector<4x63xf32>
    %c48 = arith.constant 48 : index
    %c1 = arith.constant 1 : index
    %26 = vector.load %arg9[%c48, %c1] : memref<128x64xf32, #tpu.memory_space<vmem>>, vector<4x63xf32>
    tpu.vector_store %arg9[%c48, %c1], %25 {strides = array<i32>} : memref<128x64xf32, #tpu.memory_space<vmem>>, vector<4x63xf32>,
    %c56 = arith.constant 56 : index
    %c0_13 = arith.constant 0 : index
    %27 = vector.load %arg9[%c56, %c0_13] : memref<128x64xf32, #tpu.memory_space<vmem>>, vector<4x64xf32>
    tpu.vector_store %arg9[%c56, %c0_13], %10 {strides = array<i32>} : memref<128x64xf32, #tpu.memory_space<vmem>>, vector<4x64xf32>,
    %28 = vector.extract_strided_slice %10 {offsets = [0, 1], sizes = [4, 63], strides = [1, 1]} : vector<4x64xf32> to vector<4x63xf32>
    %c64 = arith.constant 64 : index
    %c0_14 = arith.constant 0 : index
    %29 = vector.load %arg9[%c64, %c0_14] : memref<128x64xf32, #tpu.memory_space<vmem>>, vector<4x63xf32>
    tpu.vector_store %arg9[%c64, %c0_14], %28 {strides = array<i32>} : memref<128x64xf32, #tpu.memory_space<vmem>>, vector<4x63xf32>,
    %30 = vector.extract_strided_slice %10 {offsets = [0, 2], sizes = [4, 62], strides = [1, 1]} : vector<4x64xf32> to vector<4x62xf32>
    %c72 = arith.constant 72 : index
    %c0_15 = arith.constant 0 : index
    %31 = vector.load %arg9[%c72, %c0_15] : memref<128x64xf32, #tpu.memory_space<vmem>>, vector<4x62xf32>
    tpu.vector_store %arg9[%c72, %c0_15], %30 {strides = array<i32>} : memref<128x64xf32, #tpu.memory_space<vmem>>, vector<4x62xf32>,
    %32 = vector.extract_strided_slice %10 {offsets = [0, 3], sizes = [4, 61], strides = [1, 1]} : vector<4x64xf32> to vector<4x61xf32>
    %c80 = arith.constant 80 : index
    %c0_16 = arith.constant 0 : index
    %33 = vector.load %arg9[%c80, %c0_16] : memref<128x64xf32, #tpu.memory_space<vmem>>, vector<4x61xf32>
    tpu.vector_store %arg9[%c80, %c0_16], %32 {strides = array<i32>} : memref<128x64xf32, #tpu.memory_space<vmem>>, vector<4x61xf32>,
    %34 = vector.extract_strided_slice %10 {offsets = [0, 4], sizes = [4, 60], strides = [1, 1]} : vector<4x64xf32> to vector<4x60xf32>
    %c88 = arith.constant 88 : index
    %c0_17 = arith.constant 0 : index
    %35 = vector.load %arg9[%c88, %c0_17] : memref<128x64xf32, #tpu.memory_space<vmem>>, vector<4x60xf32>
    tpu.vector_store %arg9[%c88, %c0_17], %34 {strides = array<i32>} : memref<128x64xf32, #tpu.memory_space<vmem>>, vector<4x60xf32>,
    %36 = vector.extract_strided_slice %10 {offsets = [0, 5], sizes = [4, 59], strides = [1, 1]} : vector<4x64xf32> to vector<4x59xf32>
    %c96 = arith.constant 96 : index
    %c0_18 = arith.constant 0 : index
    %37 = vector.load %arg9[%c96, %c0_18] : memref<128x64xf32, #tpu.memory_space<vmem>>, vector<4x59xf32>
    tpu.vector_store %arg9[%c96, %c0_18], %36 {strides = array<i32>} : memref<128x64xf32, #tpu.memory_space<vmem>>, vector<4x59xf32>,
    %38 = vector.extract_strided_slice %10 {offsets = [0, 6], sizes = [4, 58], strides = [1, 1]} : vector<4x64xf32> to vector<4x58xf32>
    %c104 = arith.constant 104 : index
    %c0_19 = arith.constant 0 : index
    %39 = vector.load %arg9[%c104, %c0_19] : memref<128x64xf32, #tpu.memory_space<vmem>>, vector<4x58xf32>
    tpu.vector_store %arg9[%c104, %c0_19], %38 {strides = array<i32>} : memref<128x64xf32, #tpu.memory_space<vmem>>, vector<4x58xf32>,
    %40 = vector.extract_strided_slice %10 {offsets = [0, 7], sizes = [4, 57], strides = [1, 1]} : vector<4x64xf32> to vector<4x57xf32>
    %c112 = arith.constant 112 : index
    %c0_20 = arith.constant 0 : index
    %41 = vector.load %arg9[%c112, %c0_20] : memref<128x64xf32, #tpu.memory_space<vmem>>, vector<4x57xf32>
    tpu.vector_store %arg9[%c112, %c0_20], %40 {strides = array<i32>} : memref<128x64xf32, #tpu.memory_space<vmem>>, vector<4x57xf32>,
    %42 = vector.extract_strided_slice %10 {offsets = [0, 8], sizes = [4, 56], strides = [1, 1]} : vector<4x64xf32> to vector<4x56xf32>
    %c120 = arith.constant 120 : index
    %c0_21 = arith.constant 0 : index
    %43 = vector.load %arg9[%c120, %c0_21] : memref<128x64xf32, #tpu.memory_space<vmem>>, vector<4x56xf32>
    tpu.vector_store %arg9[%c120, %c0_21], %42 {strides = array<i32>} : memref<128x64xf32, #tpu.memory_space<vmem>>, vector<4x56xf32>,
    %c0_22 = arith.constant 0 : index
    %c0_23 = arith.constant 0 : index
    %44 = vector.load %arg3[%c0_22, %c0_23] : memref<8x128xf32, #tpu.memory_space<vmem>>, vector<8x128xf32>
    %c0_24 = arith.constant 0 : index
    %c0_25 = arith.constant 0 : index
    %45 = vector.load %arg9[%c0_24, %c0_25] : memref<128x64xf32, #tpu.memory_space<vmem>>, vector<128x64xf32>
    %cst_26 = arith.constant dense<0.000000e+00> : vector<8x64xf32>
    %46 = tpu.matmul %44, %45, %cst_26 {dimension_numbers = #tpu.dot_dimension_numbers<[1], [0], [0], [1], [0, 0, 1, 1], [], []>} : vector<8x128xf32>, vector<128x64xf32>, vector<8x64xf32> -> vector<8x64xf32>
    %c0_27 = arith.constant 0 : index
    %c0_28 = arith.constant 0 : index
    %c0_29 = arith.constant 0 : index
    %47 = vector.load %arg2[%c0_27, %c0_28, %c0_29] : memref<1x32x67xf32, #tpu.memory_space<vmem>>, vector<1x32x64xf32>
    %48 = vector.shape_cast %47 : vector<1x32x64xf32> to vector<32x64xf32>
    %c0_30 = arith.constant 0 : index
    %c0_31 = arith.constant 0 : index
    %49 = vector.load %arg10[%c0_30, %c0_31] : memref<128x64xf32, #tpu.memory_space<vmem>>, vector<32x64xf32>
    tpu.vector_store %arg10[%c0_30, %c0_31], %48 {strides = array<i32>} : memref<128x64xf32, #tpu.memory_space<vmem>>, vector<32x64xf32>,
    %c0_32 = arith.constant 0 : index
    %c0_33 = arith.constant 0 : index
    %c1_34 = arith.constant 1 : index
    %50 = vector.load %arg2[%c0_32, %c0_33, %c1_34] : memref<1x32x67xf32, #tpu.memory_space<vmem>>, vector<1x32x64xf32>
    %51 = vector.shape_cast %50 : vector<1x32x64xf32> to vector<32x64xf32>
    %c32_35 = arith.constant 32 : index
    %c0_36 = arith.constant 0 : index
    %52 = vector.load %arg10[%c32_35, %c0_36] : memref<128x64xf32, #tpu.memory_space<vmem>>, vector<32x64xf32>
    tpu.vector_store %arg10[%c32_35, %c0_36], %51 {strides = array<i32>} : memref<128x64xf32, #tpu.memory_space<vmem>>, vector<32x64xf32>,
    %c0_37 = arith.constant 0 : index
    %c0_38 = arith.constant 0 : index
    %c2_39 = arith.constant 2 : index
    %53 = vector.load %arg2[%c0_37, %c0_38, %c2_39] : memref<1x32x67xf32, #tpu.memory_space<vmem>>, vector<1x32x64xf32>
    %54 = vector.shape_cast %53 : vector<1x32x64xf32> to vector<32x64xf32>
    %c64_40 = arith.constant 64 : index
    %c0_41 = arith.constant 0 : index
    %55 = vector.load %arg10[%c64_40, %c0_41] : memref<128x64xf32, #tpu.memory_space<vmem>>, vector<32x64xf32>
    tpu.vector_store %arg10[%c64_40, %c0_41], %54 {strides = array<i32>} : memref<128x64xf32, #tpu.memory_space<vmem>>, vector<32x64xf32>,
    %c0_42 = arith.constant 0 : index
    %c0_43 = arith.constant 0 : index
    %c3_44 = arith.constant 3 : index
    %56 = vector.load %arg2[%c0_42, %c0_43, %c3_44] : memref<1x32x67xf32, #tpu.memory_space<vmem>>, vector<1x32x64xf32>
    %57 = vector.shape_cast %56 : vector<1x32x64xf32> to vector<32x64xf32>
    %c96_45 = arith.constant 96 : index
    %c0_46 = arith.constant 0 : index
    %58 = vector.load %arg10[%c96_45, %c0_46] : memref<128x64xf32, #tpu.memory_space<vmem>>, vector<32x64xf32>
    tpu.vector_store %arg10[%c96_45, %c0_46], %57 {strides = array<i32>} : memref<128x64xf32, #tpu.memory_space<vmem>>, vector<32x64xf32>,
    %c0_47 = arith.constant 0 : index
    %c0_48 = arith.constant 0 : index
    %59 = vector.load %arg4[%c0_47, %c0_48] : memref<8x128xf32, #tpu.memory_space<vmem>>, vector<8x128xf32>
    %c0_49 = arith.constant 0 : index
    %c0_50 = arith.constant 0 : index
    %60 = vector.load %arg10[%c0_49, %c0_50] : memref<128x64xf32, #tpu.memory_space<vmem>>, vector<128x64xf32>
    %cst_51 = arith.constant dense<0.000000e+00> : vector<8x64xf32>
    %61 = tpu.matmul %59, %60, %cst_51 {dimension_numbers = #tpu.dot_dimension_numbers<[1], [0], [0], [1], [0, 0, 1, 1], [], []>} : vector<8x128xf32>, vector<128x64xf32>, vector<8x64xf32> -> vector<8x64xf32>
    %62 = arith.addf %61, %46 : vector<8x64xf32>
    %c0_52 = arith.constant 0 : index
    %c0_53 = arith.constant 0 : index
    %63 = vector.load %arg5[%c0_52, %c0_53] : memref<8x1xf32, #tpu.memory_space<vmem>>, vector<8x1xf32>
    %64 = vector.broadcast %63 : vector<8x1xf32> to vector<8x64xf32>
    %65 = arith.mulf %62, %64 : vector<8x64xf32>
    %c0_54 = arith.constant 0 : index
    %c0_55 = arith.constant 0 : index
    %66 = vector.load %arg6[%c0_54, %c0_55] : memref<8x1xf32, #tpu.memory_space<vmem>>, vector<8x1xf32>
    %67 = vector.broadcast %66 : vector<8x1xf32> to vector<8x64xf32>
    %68 = arith.addf %65, %67 : vector<8x64xf32>
    %cst_56 = arith.constant 0.000000e+00 : f32
    %69 = vector.broadcast %cst_56 : f32 to vector<8x64xf32>
    %70 = arith.maximumf %68, %69 : vector<8x64xf32>
    %c0_57 = arith.constant 0 : index
    %c0_58 = arith.constant 0 : index
    %c0_59 = arith.constant 0 : index
    %71 = vector.load %arg7[%c0_57, %c0_58, %c0_59] : memref<1x8x64xf32, #tpu.memory_space<vmem>>, vector<1x8x64xf32>
    %72 = vector.shape_cast %71 : vector<1x8x64xf32> to vector<8x64xf32>
    %73 = vector.shape_cast %70 : vector<8x64xf32> to vector<1x8x64xf32>
    tpu.vector_store %arg7[%c0_57, %c0_58, %c0_59], %73 {strides = array<i32>} : memref<1x8x64xf32, #tpu.memory_space<vmem>>, vector<1x8x64xf32>,
    %c0_60 = arith.constant 0 : index
    %c0_61 = arith.constant 0 : index
    %c0_62 = arith.constant 0 : index
    %74 = vector.load %arg8[%c0_60, %c0_61, %c0_62] : memref<1x8x64xf32, #tpu.memory_space<vmem>>, vector<1x8x64xf32>
    %75 = vector.shape_cast %74 : vector<1x8x64xf32> to vector<8x64xf32>
    %76 = vector.shape_cast %61 : vector<8x64xf32> to vector<1x8x64xf32>
    tpu.vector_store %arg8[%c0_60, %c0_61, %c0_62], %76 {strides = array<i32>} : memref<1x8x64xf32, #tpu.memory_space<vmem>>, vector<1x8x64xf32>,
    return
  }
  func.func @transform_0(%arg0: i32) -> (i32, i32, i32) {
    %c0_i32 = arith.constant 0 : i32
    %c0_i32_0 = arith.constant 0 : i32
    %c0_i32_1 = arith.constant 0 : i32
    return %arg0, %c0_i32, %c0_i32_0 : i32, i32, i32
  }
  func.func @transform_1(%arg0: i32) -> (i32, i32, i32) {
    %c0_i32 = arith.constant 0 : i32
    %c0_i32_0 = arith.constant 0 : i32
    %c0_i32_1 = arith.constant 0 : i32
    return %arg0, %c0_i32, %c0_i32_0 : i32, i32, i32
  }
  func.func @transform_2(%arg0: i32) -> (i32, i32) {
    %c0_i32 = arith.constant 0 : i32
    %c0_i32_0 = arith.constant 0 : i32
    %c0_i32_1 = arith.constant 0 : i32
    return %c0_i32, %c0_i32_0 : i32, i32
  }
  func.func @transform_3(%arg0: i32) -> (i32, i32) {
    %c0_i32 = arith.constant 0 : i32
    %c0_i32_0 = arith.constant 0 : i32
    %c0_i32_1 = arith.constant 0 : i32
    return %c0_i32, %c0_i32_0 : i32, i32
  }
  func.func @transform_4(%arg0: i32) -> (i32, i32) {
    %c0_i32 = arith.constant 0 : i32
    %c0_i32_0 = arith.constant 0 : i32
    %c0_i32_1 = arith.constant 0 : i32
    return %c0_i32, %c0_i32_0 : i32, i32
  }
  func.func @transform_5(%arg0: i32) -> (i32, i32) {
    %c0_i32 = arith.constant 0 : i32
    %c0_i32_0 = arith.constant 0 : i32
    %c0_i32_1 = arith.constant 0 : i32
    return %c0_i32, %c0_i32_0 : i32, i32
  }
  func.func @transform_6(%arg0: i32) -> (i32, i32, i32) {
    %c0_i32 = arith.constant 0 : i32
    %c0_i32_0 = arith.constant 0 : i32
    %c0_i32_1 = arith.constant 0 : i32
    return %arg0, %c0_i32, %c0_i32_0 : i32, i32, i32
  }
  func.func @transform_7(%arg0: i32) -> (i32, i32, i32) {
    %c0_i32 = arith.constant 0 : i32
    %c0_i32_0 = arith.constant 0 : i32
    %c0_i32_1 = arith.constant 0 : i32
    return %arg0, %c0_i32, %c0_i32_0 : i32, i32, i32
  }
}

module attributes {stable_mosaic.version = 11 : i64} {
  func.func @kernel(%arg0: i32, %arg1: memref<1x8x64xf32, #tpu.memory_space<vmem>>, %arg2: memref<12x128xf32, #tpu.memory_space<vmem>>, %arg3: memref<12x1xf32, #tpu.memory_space<vmem>>, %arg4: memref<12x1xf32, #tpu.memory_space<vmem>>, %arg5: memref<1x12x64xf32, #tpu.memory_space<vmem>>, %arg6: memref<128x64xf32, #tpu.memory_space<vmem>>) attributes {dimension_semantics = [#tpu.dimension_semantics<parallel>], iteration_bounds = array<i64: 2>, scalar_prefetch = 0 : i64, scratch_operands = 1 : i64, tpu.core_type = #tpu.core_type<tc>, window_params = [{transform_indices = @transform_0, window_bounds = array<i64: 1, 8, 64>}, {pipeline_mode = #tpu.pipeline_mode<synchronous>, transform_indices = @transform_1, window_bounds = array<i64: 12, 128>}, {pipeline_mode = #tpu.pipeline_mode<synchronous>, transform_indices = @transform_2, window_bounds = array<i64: 12, 1>}, {pipeline_mode = #tpu.pipeline_mode<synchronous>, transform_indices = @transform_3, window_bounds = array<i64: 12, 1>}, {transform_indices = @transform_4, window_bounds = array<i64: 1, 12, 64>}]} {
    %cst = arith.constant 0.000000e+00 : f32
    %0 = vector.broadcast %cst : f32 to vector<128x64xf32>
    %c0 = arith.constant 0 : index
    %c0_0 = arith.constant 0 : index
    %1 = vector.load %arg6[%c0, %c0_0] : memref<128x64xf32, #tpu.memory_space<vmem>>, vector<128x64xf32>
    tpu.vector_store %arg6[%c0, %c0_0], %0 {strides = array<i32>} : memref<128x64xf32, #tpu.memory_space<vmem>>, vector<128x64xf32>,
    %c0_1 = arith.constant 0 : index
    %c0_2 = arith.constant 0 : index
    %c0_3 = arith.constant 0 : index
    %2 = vector.load %arg1[%c0_1, %c0_2, %c0_3] : memref<1x8x64xf32, #tpu.memory_space<vmem>>, vector<1x8x57xf32>
    %3 = vector.shape_cast %2 : vector<1x8x57xf32> to vector<8x57xf32>
    %c0_4 = arith.constant 0 : index
    %c7 = arith.constant 7 : index
    %4 = vector.load %arg6[%c0_4, %c7] : memref<128x64xf32, #tpu.memory_space<vmem>>, vector<8x57xf32>
    tpu.vector_store %arg6[%c0_4, %c7], %3 {strides = array<i32>} : memref<128x64xf32, #tpu.memory_space<vmem>>, vector<8x57xf32>,
    %c0_5 = arith.constant 0 : index
    %c0_6 = arith.constant 0 : index
    %c0_7 = arith.constant 0 : index
    %5 = vector.load %arg1[%c0_5, %c0_6, %c0_7] : memref<1x8x64xf32, #tpu.memory_space<vmem>>, vector<1x8x58xf32>
    %6 = vector.shape_cast %5 : vector<1x8x58xf32> to vector<8x58xf32>
    %c8 = arith.constant 8 : index
    %c6 = arith.constant 6 : index
    %7 = vector.load %arg6[%c8, %c6] : memref<128x64xf32, #tpu.memory_space<vmem>>, vector<8x58xf32>
    tpu.vector_store %arg6[%c8, %c6], %6 {strides = array<i32>} : memref<128x64xf32, #tpu.memory_space<vmem>>, vector<8x58xf32>,
    %c0_8 = arith.constant 0 : index
    %c0_9 = arith.constant 0 : index
    %c0_10 = arith.constant 0 : index
    %8 = vector.load %arg1[%c0_8, %c0_9, %c0_10] : memref<1x8x64xf32, #tpu.memory_space<vmem>>, vector<1x8x59xf32>
    %9 = vector.shape_cast %8 : vector<1x8x59xf32> to vector<8x59xf32>
    %c16 = arith.constant 16 : index
    %c5 = arith.constant 5 : index
    %10 = vector.load %arg6[%c16, %c5] : memref<128x64xf32, #tpu.memory_space<vmem>>, vector<8x59xf32>
    tpu.vector_store %arg6[%c16, %c5], %9 {strides = array<i32>} : memref<128x64xf32, #tpu.memory_space<vmem>>, vector<8x59xf32>,
    %c0_11 = arith.constant 0 : index
    %c0_12 = arith.constant 0 : index
    %c0_13 = arith.constant 0 : index
    %11 = vector.load %arg1[%c0_11, %c0_12, %c0_13] : memref<1x8x64xf32, #tpu.memory_space<vmem>>, vector<1x8x60xf32>
    %12 = vector.shape_cast %11 : vector<1x8x60xf32> to vector<8x60xf32>
    %c24 = arith.constant 24 : index
    %c4 = arith.constant 4 : index
    %13 = vector.load %arg6[%c24, %c4] : memref<128x64xf32, #tpu.memory_space<vmem>>, vector<8x60xf32>
    tpu.vector_store %arg6[%c24, %c4], %12 {strides = array<i32>} : memref<128x64xf32, #tpu.memory_space<vmem>>, vector<8x60xf32>,
    %c0_14 = arith.constant 0 : index
    %c0_15 = arith.constant 0 : index
    %c0_16 = arith.constant 0 : index
    %14 = vector.load %arg1[%c0_14, %c0_15, %c0_16] : memref<1x8x64xf32, #tpu.memory_space<vmem>>, vector<1x8x61xf32>
    %15 = vector.shape_cast %14 : vector<1x8x61xf32> to vector<8x61xf32>
    %c32 = arith.constant 32 : index
    %c3 = arith.constant 3 : index
    %16 = vector.load %arg6[%c32, %c3] : memref<128x64xf32, #tpu.memory_space<vmem>>, vector<8x61xf32>
    tpu.vector_store %arg6[%c32, %c3], %15 {strides = array<i32>} : memref<128x64xf32, #tpu.memory_space<vmem>>, vector<8x61xf32>,
    %c0_17 = arith.constant 0 : index
    %c0_18 = arith.constant 0 : index
    %c0_19 = arith.constant 0 : index
    %17 = vector.load %arg1[%c0_17, %c0_18, %c0_19] : memref<1x8x64xf32, #tpu.memory_space<vmem>>, vector<1x8x62xf32>
    %18 = vector.shape_cast %17 : vector<1x8x62xf32> to vector<8x62xf32>
    %c40 = arith.constant 40 : index
    %c2 = arith.constant 2 : index
    %19 = vector.load %arg6[%c40, %c2] : memref<128x64xf32, #tpu.memory_space<vmem>>, vector<8x62xf32>
    tpu.vector_store %arg6[%c40, %c2], %18 {strides = array<i32>} : memref<128x64xf32, #tpu.memory_space<vmem>>, vector<8x62xf32>,
    %c0_20 = arith.constant 0 : index
    %c0_21 = arith.constant 0 : index
    %c0_22 = arith.constant 0 : index
    %20 = vector.load %arg1[%c0_20, %c0_21, %c0_22] : memref<1x8x64xf32, #tpu.memory_space<vmem>>, vector<1x8x63xf32>
    %21 = vector.shape_cast %20 : vector<1x8x63xf32> to vector<8x63xf32>
    %c48 = arith.constant 48 : index
    %c1 = arith.constant 1 : index
    %22 = vector.load %arg6[%c48, %c1] : memref<128x64xf32, #tpu.memory_space<vmem>>, vector<8x63xf32>
    tpu.vector_store %arg6[%c48, %c1], %21 {strides = array<i32>} : memref<128x64xf32, #tpu.memory_space<vmem>>, vector<8x63xf32>,
    %c0_23 = arith.constant 0 : index
    %c0_24 = arith.constant 0 : index
    %c0_25 = arith.constant 0 : index
    %23 = vector.load %arg1[%c0_23, %c0_24, %c0_25] : memref<1x8x64xf32, #tpu.memory_space<vmem>>, vector<1x8x64xf32>
    %24 = vector.shape_cast %23 : vector<1x8x64xf32> to vector<8x64xf32>
    %c56 = arith.constant 56 : index
    %c0_26 = arith.constant 0 : index
    %25 = vector.load %arg6[%c56, %c0_26] : memref<128x64xf32, #tpu.memory_space<vmem>>, vector<8x64xf32>
    tpu.vector_store %arg6[%c56, %c0_26], %24 {strides = array<i32>} : memref<128x64xf32, #tpu.memory_space<vmem>>, vector<8x64xf32>,
    %c0_27 = arith.constant 0 : index
    %c0_28 = arith.constant 0 : index
    %c1_29 = arith.constant 1 : index
    %26 = vector.load %arg1[%c0_27, %c0_28, %c1_29] : memref<1x8x64xf32, #tpu.memory_space<vmem>>, vector<1x8x63xf32>
    %27 = vector.shape_cast %26 : vector<1x8x63xf32> to vector<8x63xf32>
    %c64 = arith.constant 64 : index
    %c0_30 = arith.constant 0 : index
    %28 = vector.load %arg6[%c64, %c0_30] : memref<128x64xf32, #tpu.memory_space<vmem>>, vector<8x63xf32>
    tpu.vector_store %arg6[%c64, %c0_30], %27 {strides = array<i32>} : memref<128x64xf32, #tpu.memory_space<vmem>>, vector<8x63xf32>,
    %c0_31 = arith.constant 0 : index
    %c0_32 = arith.constant 0 : index
    %c2_33 = arith.constant 2 : index
    %29 = vector.load %arg1[%c0_31, %c0_32, %c2_33] : memref<1x8x64xf32, #tpu.memory_space<vmem>>, vector<1x8x62xf32>
    %30 = vector.shape_cast %29 : vector<1x8x62xf32> to vector<8x62xf32>
    %c72 = arith.constant 72 : index
    %c0_34 = arith.constant 0 : index
    %31 = vector.load %arg6[%c72, %c0_34] : memref<128x64xf32, #tpu.memory_space<vmem>>, vector<8x62xf32>
    tpu.vector_store %arg6[%c72, %c0_34], %30 {strides = array<i32>} : memref<128x64xf32, #tpu.memory_space<vmem>>, vector<8x62xf32>,
    %c0_35 = arith.constant 0 : index
    %c0_36 = arith.constant 0 : index
    %c3_37 = arith.constant 3 : index
    %32 = vector.load %arg1[%c0_35, %c0_36, %c3_37] : memref<1x8x64xf32, #tpu.memory_space<vmem>>, vector<1x8x61xf32>
    %33 = vector.shape_cast %32 : vector<1x8x61xf32> to vector<8x61xf32>
    %c80 = arith.constant 80 : index
    %c0_38 = arith.constant 0 : index
    %34 = vector.load %arg6[%c80, %c0_38] : memref<128x64xf32, #tpu.memory_space<vmem>>, vector<8x61xf32>
    tpu.vector_store %arg6[%c80, %c0_38], %33 {strides = array<i32>} : memref<128x64xf32, #tpu.memory_space<vmem>>, vector<8x61xf32>,
    %c0_39 = arith.constant 0 : index
    %c0_40 = arith.constant 0 : index
    %c4_41 = arith.constant 4 : index
    %35 = vector.load %arg1[%c0_39, %c0_40, %c4_41] : memref<1x8x64xf32, #tpu.memory_space<vmem>>, vector<1x8x60xf32>
    %36 = vector.shape_cast %35 : vector<1x8x60xf32> to vector<8x60xf32>
    %c88 = arith.constant 88 : index
    %c0_42 = arith.constant 0 : index
    %37 = vector.load %arg6[%c88, %c0_42] : memref<128x64xf32, #tpu.memory_space<vmem>>, vector<8x60xf32>
    tpu.vector_store %arg6[%c88, %c0_42], %36 {strides = array<i32>} : memref<128x64xf32, #tpu.memory_space<vmem>>, vector<8x60xf32>,
    %c0_43 = arith.constant 0 : index
    %c0_44 = arith.constant 0 : index
    %c5_45 = arith.constant 5 : index
    %38 = vector.load %arg1[%c0_43, %c0_44, %c5_45] : memref<1x8x64xf32, #tpu.memory_space<vmem>>, vector<1x8x59xf32>
    %39 = vector.shape_cast %38 : vector<1x8x59xf32> to vector<8x59xf32>
    %c96 = arith.constant 96 : index
    %c0_46 = arith.constant 0 : index
    %40 = vector.load %arg6[%c96, %c0_46] : memref<128x64xf32, #tpu.memory_space<vmem>>, vector<8x59xf32>
    tpu.vector_store %arg6[%c96, %c0_46], %39 {strides = array<i32>} : memref<128x64xf32, #tpu.memory_space<vmem>>, vector<8x59xf32>,
    %c0_47 = arith.constant 0 : index
    %c0_48 = arith.constant 0 : index
    %c6_49 = arith.constant 6 : index
    %41 = vector.load %arg1[%c0_47, %c0_48, %c6_49] : memref<1x8x64xf32, #tpu.memory_space<vmem>>, vector<1x8x58xf32>
    %42 = vector.shape_cast %41 : vector<1x8x58xf32> to vector<8x58xf32>
    %c104 = arith.constant 104 : index
    %c0_50 = arith.constant 0 : index
    %43 = vector.load %arg6[%c104, %c0_50] : memref<128x64xf32, #tpu.memory_space<vmem>>, vector<8x58xf32>
    tpu.vector_store %arg6[%c104, %c0_50], %42 {strides = array<i32>} : memref<128x64xf32, #tpu.memory_space<vmem>>, vector<8x58xf32>,
    %c0_51 = arith.constant 0 : index
    %c0_52 = arith.constant 0 : index
    %c7_53 = arith.constant 7 : index
    %44 = vector.load %arg1[%c0_51, %c0_52, %c7_53] : memref<1x8x64xf32, #tpu.memory_space<vmem>>, vector<1x8x57xf32>
    %45 = vector.shape_cast %44 : vector<1x8x57xf32> to vector<8x57xf32>
    %c112 = arith.constant 112 : index
    %c0_54 = arith.constant 0 : index
    %46 = vector.load %arg6[%c112, %c0_54] : memref<128x64xf32, #tpu.memory_space<vmem>>, vector<8x57xf32>
    tpu.vector_store %arg6[%c112, %c0_54], %45 {strides = array<i32>} : memref<128x64xf32, #tpu.memory_space<vmem>>, vector<8x57xf32>,
    %c0_55 = arith.constant 0 : index
    %c0_56 = arith.constant 0 : index
    %c8_57 = arith.constant 8 : index
    %47 = vector.load %arg1[%c0_55, %c0_56, %c8_57] : memref<1x8x64xf32, #tpu.memory_space<vmem>>, vector<1x8x56xf32>
    %48 = vector.shape_cast %47 : vector<1x8x56xf32> to vector<8x56xf32>
    %c120 = arith.constant 120 : index
    %c0_58 = arith.constant 0 : index
    %49 = vector.load %arg6[%c120, %c0_58] : memref<128x64xf32, #tpu.memory_space<vmem>>, vector<8x56xf32>
    tpu.vector_store %arg6[%c120, %c0_58], %48 {strides = array<i32>} : memref<128x64xf32, #tpu.memory_space<vmem>>, vector<8x56xf32>,
    %c0_59 = arith.constant 0 : index
    %c0_60 = arith.constant 0 : index
    %50 = vector.load %arg2[%c0_59, %c0_60] : memref<12x128xf32, #tpu.memory_space<vmem>>, vector<12x128xf32>
    %c0_61 = arith.constant 0 : index
    %c0_62 = arith.constant 0 : index
    %51 = vector.load %arg6[%c0_61, %c0_62] : memref<128x64xf32, #tpu.memory_space<vmem>>, vector<128x64xf32>
    %cst_63 = arith.constant dense<0.000000e+00> : vector<12x64xf32>
    %52 = tpu.matmul %50, %51, %cst_63 {dimension_numbers = #tpu.dot_dimension_numbers<[1], [0], [0], [1], [0, 0, 1, 1], [], []>} : vector<12x128xf32>, vector<128x64xf32>, vector<12x64xf32> -> vector<12x64xf32>
    %c0_64 = arith.constant 0 : index
    %c0_65 = arith.constant 0 : index
    %53 = vector.load %arg3[%c0_64, %c0_65] : memref<12x1xf32, #tpu.memory_space<vmem>>, vector<12x1xf32>
    %54 = vector.broadcast %53 : vector<12x1xf32> to vector<12x64xf32>
    %55 = arith.mulf %52, %54 : vector<12x64xf32>
    %c0_66 = arith.constant 0 : index
    %c0_67 = arith.constant 0 : index
    %56 = vector.load %arg4[%c0_66, %c0_67] : memref<12x1xf32, #tpu.memory_space<vmem>>, vector<12x1xf32>
    %57 = vector.broadcast %56 : vector<12x1xf32> to vector<12x64xf32>
    %58 = arith.addf %55, %57 : vector<12x64xf32>
    %cst_68 = arith.constant 0.000000e+00 : f32
    %59 = vector.broadcast %cst_68 : f32 to vector<12x64xf32>
    %60 = arith.maximumf %58, %59 : vector<12x64xf32>
    %c0_69 = arith.constant 0 : index
    %c0_70 = arith.constant 0 : index
    %c0_71 = arith.constant 0 : index
    %61 = vector.load %arg5[%c0_69, %c0_70, %c0_71] : memref<1x12x64xf32, #tpu.memory_space<vmem>>, vector<1x12x64xf32>
    %62 = vector.shape_cast %61 : vector<1x12x64xf32> to vector<12x64xf32>
    %63 = vector.shape_cast %60 : vector<12x64xf32> to vector<1x12x64xf32>
    tpu.vector_store %arg5[%c0_69, %c0_70, %c0_71], %63 {strides = array<i32>} : memref<1x12x64xf32, #tpu.memory_space<vmem>>, vector<1x12x64xf32>,
    return
  }
  func.func @transform_0(%arg0: i32) -> (i32, i32, i32) {
    %c0_i32 = arith.constant 0 : i32
    %c0_i32_0 = arith.constant 0 : i32
    %c0_i32_1 = arith.constant 0 : i32
    return %arg0, %c0_i32, %c0_i32_0 : i32, i32, i32
  }
  func.func @transform_1(%arg0: i32) -> (i32, i32) {
    %c0_i32 = arith.constant 0 : i32
    %c0_i32_0 = arith.constant 0 : i32
    %c0_i32_1 = arith.constant 0 : i32
    return %c0_i32, %c0_i32_0 : i32, i32
  }
  func.func @transform_2(%arg0: i32) -> (i32, i32) {
    %c0_i32 = arith.constant 0 : i32
    %c0_i32_0 = arith.constant 0 : i32
    %c0_i32_1 = arith.constant 0 : i32
    return %c0_i32, %c0_i32_0 : i32, i32
  }
  func.func @transform_3(%arg0: i32) -> (i32, i32) {
    %c0_i32 = arith.constant 0 : i32
    %c0_i32_0 = arith.constant 0 : i32
    %c0_i32_1 = arith.constant 0 : i32
    return %c0_i32, %c0_i32_0 : i32, i32
  }
  func.func @transform_4(%arg0: i32) -> (i32, i32, i32) {
    %c0_i32 = arith.constant 0 : i32
    %c0_i32_0 = arith.constant 0 : i32
    %c0_i32_1 = arith.constant 0 : i32
    return %arg0, %c0_i32, %c0_i32_0 : i32, i32, i32
  }
}

module attributes {stable_mosaic.version = 11 : i64} {
  func.func @kernel(%arg0: i32, %arg1: memref<1x32x16xf32, #tpu.memory_space<vmem>>, %arg2: memref<1x48x19xf32, #tpu.memory_space<vmem>>, %arg3: memref<12x128xf32, #tpu.memory_space<vmem>>, %arg4: memref<12x192xf32, #tpu.memory_space<vmem>>, %arg5: memref<12x1xf32, #tpu.memory_space<vmem>>, %arg6: memref<12x1xf32, #tpu.memory_space<vmem>>, %arg7: memref<1x12x16xf32, #tpu.memory_space<vmem>>, %arg8: memref<1x12x16xf32, #tpu.memory_space<vmem>>, %arg9: memref<128x16xf32, #tpu.memory_space<vmem>>, %arg10: memref<192x16xf32, #tpu.memory_space<vmem>>) attributes {dimension_semantics = [#tpu.dimension_semantics<parallel>], iteration_bounds = array<i64: 2>, scalar_prefetch = 0 : i64, scratch_operands = 2 : i64, tpu.core_type = #tpu.core_type<tc>, window_params = [{transform_indices = @transform_0, window_bounds = array<i64: 1, 32, 16>}, {transform_indices = @transform_1, window_bounds = array<i64: 1, 48, 19>}, {pipeline_mode = #tpu.pipeline_mode<synchronous>, transform_indices = @transform_2, window_bounds = array<i64: 12, 128>}, {pipeline_mode = #tpu.pipeline_mode<synchronous>, transform_indices = @transform_3, window_bounds = array<i64: 12, 192>}, {pipeline_mode = #tpu.pipeline_mode<synchronous>, transform_indices = @transform_4, window_bounds = array<i64: 12, 1>}, {pipeline_mode = #tpu.pipeline_mode<synchronous>, transform_indices = @transform_5, window_bounds = array<i64: 12, 1>}, {transform_indices = @transform_6, window_bounds = array<i64: 1, 12, 16>}, {transform_indices = @transform_7, window_bounds = array<i64: 1, 12, 16>}]} {
    %c0 = arith.constant 0 : index
    %c0_0 = arith.constant 0 : index
    %c0_1 = arith.constant 0 : index
    %0 = vector.load %arg1[%c0, %c0_0, %c0_1] : memref<1x32x16xf32, #tpu.memory_space<vmem>>, vector<1x8x16xf32>
    %1 = vector.shape_cast %0 : vector<1x8x16xf32> to vector<8x16xf32>
    %c0_2 = arith.constant 0 : index
    %c8 = arith.constant 8 : index
    %c0_3 = arith.constant 0 : index
    %2 = vector.load %arg1[%c0_2, %c8, %c0_3] : memref<1x32x16xf32, #tpu.memory_space<vmem>>, vector<1x8x16xf32>
    %3 = vector.shape_cast %2 : vector<1x8x16xf32> to vector<8x16xf32>
    %4 = arith.maximumf %1, %3 : vector<8x16xf32>
    %c0_4 = arith.constant 0 : index
    %c16 = arith.constant 16 : index
    %c0_5 = arith.constant 0 : index
    %5 = vector.load %arg1[%c0_4, %c16, %c0_5] : memref<1x32x16xf32, #tpu.memory_space<vmem>>, vector<1x8x16xf32>
    %6 = vector.shape_cast %5 : vector<1x8x16xf32> to vector<8x16xf32>
    %7 = arith.maximumf %4, %6 : vector<8x16xf32>
    %c0_6 = arith.constant 0 : index
    %c24 = arith.constant 24 : index
    %c0_7 = arith.constant 0 : index
    %8 = vector.load %arg1[%c0_6, %c24, %c0_7] : memref<1x32x16xf32, #tpu.memory_space<vmem>>, vector<1x8x16xf32>
    %9 = vector.shape_cast %8 : vector<1x8x16xf32> to vector<8x16xf32>
    %10 = arith.maximumf %7, %9 : vector<8x16xf32>
    %cst = arith.constant 0.000000e+00 : f32
    %11 = vector.broadcast %cst : f32 to vector<128x16xf32>
    %c0_8 = arith.constant 0 : index
    %c0_9 = arith.constant 0 : index
    %12 = vector.load %arg9[%c0_8, %c0_9] : memref<128x16xf32, #tpu.memory_space<vmem>>, vector<128x16xf32>
    tpu.vector_store %arg9[%c0_8, %c0_9], %11 {strides = array<i32>} : memref<128x16xf32, #tpu.memory_space<vmem>>, vector<128x16xf32>,
    %13 = vector.extract_strided_slice %10 {offsets = [0, 0], sizes = [8, 9], strides = [1, 1]} : vector<8x16xf32> to vector<8x9xf32>
    %c0_10 = arith.constant 0 : index
    %c7 = arith.constant 7 : index
    %14 = vector.load %arg9[%c0_10, %c7] : memref<128x16xf32, #tpu.memory_space<vmem>>, vector<8x9xf32>
    tpu.vector_store %arg9[%c0_10, %c7], %13 {strides = array<i32>} : memref<128x16xf32, #tpu.memory_space<vmem>>, vector<8x9xf32>,
    %15 = vector.extract_strided_slice %10 {offsets = [0, 0], sizes = [8, 10], strides = [1, 1]} : vector<8x16xf32> to vector<8x10xf32>
    %c8_11 = arith.constant 8 : index
    %c6 = arith.constant 6 : index
    %16 = vector.load %arg9[%c8_11, %c6] : memref<128x16xf32, #tpu.memory_space<vmem>>, vector<8x10xf32>
    tpu.vector_store %arg9[%c8_11, %c6], %15 {strides = array<i32>} : memref<128x16xf32, #tpu.memory_space<vmem>>, vector<8x10xf32>,
    %17 = vector.extract_strided_slice %10 {offsets = [0, 0], sizes = [8, 11], strides = [1, 1]} : vector<8x16xf32> to vector<8x11xf32>
    %c16_12 = arith.constant 16 : index
    %c5 = arith.constant 5 : index
    %18 = vector.load %arg9[%c16_12, %c5] : memref<128x16xf32, #tpu.memory_space<vmem>>, vector<8x11xf32>
    tpu.vector_store %arg9[%c16_12, %c5], %17 {strides = array<i32>} : memref<128x16xf32, #tpu.memory_space<vmem>>, vector<8x11xf32>,
    %19 = vector.extract_strided_slice %10 {offsets = [0, 0], sizes = [8, 12], strides = [1, 1]} : vector<8x16xf32> to vector<8x12xf32>
    %c24_13 = arith.constant 24 : index
    %c4 = arith.constant 4 : index
    %20 = vector.load %arg9[%c24_13, %c4] : memref<128x16xf32, #tpu.memory_space<vmem>>, vector<8x12xf32>
    tpu.vector_store %arg9[%c24_13, %c4], %19 {strides = array<i32>} : memref<128x16xf32, #tpu.memory_space<vmem>>, vector<8x12xf32>,
    %21 = vector.extract_strided_slice %10 {offsets = [0, 0], sizes = [8, 13], strides = [1, 1]} : vector<8x16xf32> to vector<8x13xf32>
    %c32 = arith.constant 32 : index
    %c3 = arith.constant 3 : index
    %22 = vector.load %arg9[%c32, %c3] : memref<128x16xf32, #tpu.memory_space<vmem>>, vector<8x13xf32>
    tpu.vector_store %arg9[%c32, %c3], %21 {strides = array<i32>} : memref<128x16xf32, #tpu.memory_space<vmem>>, vector<8x13xf32>,
    %23 = vector.extract_strided_slice %10 {offsets = [0, 0], sizes = [8, 14], strides = [1, 1]} : vector<8x16xf32> to vector<8x14xf32>
    %c40 = arith.constant 40 : index
    %c2 = arith.constant 2 : index
    %24 = vector.load %arg9[%c40, %c2] : memref<128x16xf32, #tpu.memory_space<vmem>>, vector<8x14xf32>
    tpu.vector_store %arg9[%c40, %c2], %23 {strides = array<i32>} : memref<128x16xf32, #tpu.memory_space<vmem>>, vector<8x14xf32>,
    %25 = vector.extract_strided_slice %10 {offsets = [0, 0], sizes = [8, 15], strides = [1, 1]} : vector<8x16xf32> to vector<8x15xf32>
    %c48 = arith.constant 48 : index
    %c1 = arith.constant 1 : index
    %26 = vector.load %arg9[%c48, %c1] : memref<128x16xf32, #tpu.memory_space<vmem>>, vector<8x15xf32>
    tpu.vector_store %arg9[%c48, %c1], %25 {strides = array<i32>} : memref<128x16xf32, #tpu.memory_space<vmem>>, vector<8x15xf32>,
    %c56 = arith.constant 56 : index
    %c0_14 = arith.constant 0 : index
    %27 = vector.load %arg9[%c56, %c0_14] : memref<128x16xf32, #tpu.memory_space<vmem>>, vector<8x16xf32>
    tpu.vector_store %arg9[%c56, %c0_14], %10 {strides = array<i32>} : memref<128x16xf32, #tpu.memory_space<vmem>>, vector<8x16xf32>,
    %28 = vector.extract_strided_slice %10 {offsets = [0, 1], sizes = [8, 15], strides = [1, 1]} : vector<8x16xf32> to vector<8x15xf32>
    %c64 = arith.constant 64 : index
    %c0_15 = arith.constant 0 : index
    %29 = vector.load %arg9[%c64, %c0_15] : memref<128x16xf32, #tpu.memory_space<vmem>>, vector<8x15xf32>
    tpu.vector_store %arg9[%c64, %c0_15], %28 {strides = array<i32>} : memref<128x16xf32, #tpu.memory_space<vmem>>, vector<8x15xf32>,
    %30 = vector.extract_strided_slice %10 {offsets = [0, 2], sizes = [8, 14], strides = [1, 1]} : vector<8x16xf32> to vector<8x14xf32>
    %c72 = arith.constant 72 : index
    %c0_16 = arith.constant 0 : index
    %31 = vector.load %arg9[%c72, %c0_16] : memref<128x16xf32, #tpu.memory_space<vmem>>, vector<8x14xf32>
    tpu.vector_store %arg9[%c72, %c0_16], %30 {strides = array<i32>} : memref<128x16xf32, #tpu.memory_space<vmem>>, vector<8x14xf32>,
    %32 = vector.extract_strided_slice %10 {offsets = [0, 3], sizes = [8, 13], strides = [1, 1]} : vector<8x16xf32> to vector<8x13xf32>
    %c80 = arith.constant 80 : index
    %c0_17 = arith.constant 0 : index
    %33 = vector.load %arg9[%c80, %c0_17] : memref<128x16xf32, #tpu.memory_space<vmem>>, vector<8x13xf32>
    tpu.vector_store %arg9[%c80, %c0_17], %32 {strides = array<i32>} : memref<128x16xf32, #tpu.memory_space<vmem>>, vector<8x13xf32>,
    %34 = vector.extract_strided_slice %10 {offsets = [0, 4], sizes = [8, 12], strides = [1, 1]} : vector<8x16xf32> to vector<8x12xf32>
    %c88 = arith.constant 88 : index
    %c0_18 = arith.constant 0 : index
    %35 = vector.load %arg9[%c88, %c0_18] : memref<128x16xf32, #tpu.memory_space<vmem>>, vector<8x12xf32>
    tpu.vector_store %arg9[%c88, %c0_18], %34 {strides = array<i32>} : memref<128x16xf32, #tpu.memory_space<vmem>>, vector<8x12xf32>,
    %36 = vector.extract_strided_slice %10 {offsets = [0, 5], sizes = [8, 11], strides = [1, 1]} : vector<8x16xf32> to vector<8x11xf32>
    %c96 = arith.constant 96 : index
    %c0_19 = arith.constant 0 : index
    %37 = vector.load %arg9[%c96, %c0_19] : memref<128x16xf32, #tpu.memory_space<vmem>>, vector<8x11xf32>
    tpu.vector_store %arg9[%c96, %c0_19], %36 {strides = array<i32>} : memref<128x16xf32, #tpu.memory_space<vmem>>, vector<8x11xf32>,
    %38 = vector.extract_strided_slice %10 {offsets = [0, 6], sizes = [8, 10], strides = [1, 1]} : vector<8x16xf32> to vector<8x10xf32>
    %c104 = arith.constant 104 : index
    %c0_20 = arith.constant 0 : index
    %39 = vector.load %arg9[%c104, %c0_20] : memref<128x16xf32, #tpu.memory_space<vmem>>, vector<8x10xf32>
    tpu.vector_store %arg9[%c104, %c0_20], %38 {strides = array<i32>} : memref<128x16xf32, #tpu.memory_space<vmem>>, vector<8x10xf32>,
    %40 = vector.extract_strided_slice %10 {offsets = [0, 7], sizes = [8, 9], strides = [1, 1]} : vector<8x16xf32> to vector<8x9xf32>
    %c112 = arith.constant 112 : index
    %c0_21 = arith.constant 0 : index
    %41 = vector.load %arg9[%c112, %c0_21] : memref<128x16xf32, #tpu.memory_space<vmem>>, vector<8x9xf32>
    tpu.vector_store %arg9[%c112, %c0_21], %40 {strides = array<i32>} : memref<128x16xf32, #tpu.memory_space<vmem>>, vector<8x9xf32>,
    %42 = vector.extract_strided_slice %10 {offsets = [0, 8], sizes = [8, 8], strides = [1, 1]} : vector<8x16xf32> to vector<8x8xf32>
    %c120 = arith.constant 120 : index
    %c0_22 = arith.constant 0 : index
    %43 = vector.load %arg9[%c120, %c0_22] : memref<128x16xf32, #tpu.memory_space<vmem>>, vector<8x8xf32>
    tpu.vector_store %arg9[%c120, %c0_22], %42 {strides = array<i32>} : memref<128x16xf32, #tpu.memory_space<vmem>>, vector<8x8xf32>,
    %c0_23 = arith.constant 0 : index
    %c0_24 = arith.constant 0 : index
    %44 = vector.load %arg3[%c0_23, %c0_24] : memref<12x128xf32, #tpu.memory_space<vmem>>, vector<12x128xf32>
    %c0_25 = arith.constant 0 : index
    %c0_26 = arith.constant 0 : index
    %45 = vector.load %arg9[%c0_25, %c0_26] : memref<128x16xf32, #tpu.memory_space<vmem>>, vector<128x16xf32>
    %cst_27 = arith.constant dense<0.000000e+00> : vector<12x16xf32>
    %46 = tpu.matmul %44, %45, %cst_27 {dimension_numbers = #tpu.dot_dimension_numbers<[1], [0], [0], [1], [0, 0, 1, 1], [], []>} : vector<12x128xf32>, vector<128x16xf32>, vector<12x16xf32> -> vector<12x16xf32>
    %c0_28 = arith.constant 0 : index
    %c0_29 = arith.constant 0 : index
    %c0_30 = arith.constant 0 : index
    %47 = vector.load %arg2[%c0_28, %c0_29, %c0_30] : memref<1x48x19xf32, #tpu.memory_space<vmem>>, vector<1x48x16xf32>
    %48 = vector.shape_cast %47 : vector<1x48x16xf32> to vector<48x16xf32>
    %c0_31 = arith.constant 0 : index
    %c0_32 = arith.constant 0 : index
    %49 = vector.load %arg10[%c0_31, %c0_32] : memref<192x16xf32, #tpu.memory_space<vmem>>, vector<48x16xf32>
    tpu.vector_store %arg10[%c0_31, %c0_32], %48 {strides = array<i32>} : memref<192x16xf32, #tpu.memory_space<vmem>>, vector<48x16xf32>,
    %c0_33 = arith.constant 0 : index
    %c0_34 = arith.constant 0 : index
    %c1_35 = arith.constant 1 : index
    %50 = vector.load %arg2[%c0_33, %c0_34, %c1_35] : memref<1x48x19xf32, #tpu.memory_space<vmem>>, vector<1x48x16xf32>
    %51 = vector.shape_cast %50 : vector<1x48x16xf32> to vector<48x16xf32>
    %c48_36 = arith.constant 48 : index
    %c0_37 = arith.constant 0 : index
    %52 = vector.load %arg10[%c48_36, %c0_37] : memref<192x16xf32, #tpu.memory_space<vmem>>, vector<48x16xf32>
    tpu.vector_store %arg10[%c48_36, %c0_37], %51 {strides = array<i32>} : memref<192x16xf32, #tpu.memory_space<vmem>>, vector<48x16xf32>,
    %c0_38 = arith.constant 0 : index
    %c0_39 = arith.constant 0 : index
    %c2_40 = arith.constant 2 : index
    %53 = vector.load %arg2[%c0_38, %c0_39, %c2_40] : memref<1x48x19xf32, #tpu.memory_space<vmem>>, vector<1x48x16xf32>
    %54 = vector.shape_cast %53 : vector<1x48x16xf32> to vector<48x16xf32>
    %c96_41 = arith.constant 96 : index
    %c0_42 = arith.constant 0 : index
    %55 = vector.load %arg10[%c96_41, %c0_42] : memref<192x16xf32, #tpu.memory_space<vmem>>, vector<48x16xf32>
    tpu.vector_store %arg10[%c96_41, %c0_42], %54 {strides = array<i32>} : memref<192x16xf32, #tpu.memory_space<vmem>>, vector<48x16xf32>,
    %c0_43 = arith.constant 0 : index
    %c0_44 = arith.constant 0 : index
    %c3_45 = arith.constant 3 : index
    %56 = vector.load %arg2[%c0_43, %c0_44, %c3_45] : memref<1x48x19xf32, #tpu.memory_space<vmem>>, vector<1x48x16xf32>
    %57 = vector.shape_cast %56 : vector<1x48x16xf32> to vector<48x16xf32>
    %c144 = arith.constant 144 : index
    %c0_46 = arith.constant 0 : index
    %58 = vector.load %arg10[%c144, %c0_46] : memref<192x16xf32, #tpu.memory_space<vmem>>, vector<48x16xf32>
    tpu.vector_store %arg10[%c144, %c0_46], %57 {strides = array<i32>} : memref<192x16xf32, #tpu.memory_space<vmem>>, vector<48x16xf32>,
    %c0_47 = arith.constant 0 : index
    %c0_48 = arith.constant 0 : index
    %59 = vector.load %arg4[%c0_47, %c0_48] : memref<12x192xf32, #tpu.memory_space<vmem>>, vector<12x192xf32>
    %c0_49 = arith.constant 0 : index
    %c0_50 = arith.constant 0 : index
    %60 = vector.load %arg10[%c0_49, %c0_50] : memref<192x16xf32, #tpu.memory_space<vmem>>, vector<192x16xf32>
    %cst_51 = arith.constant dense<0.000000e+00> : vector<12x16xf32>
    %61 = tpu.matmul %59, %60, %cst_51 {dimension_numbers = #tpu.dot_dimension_numbers<[1], [0], [0], [1], [0, 0, 1, 1], [], []>} : vector<12x192xf32>, vector<192x16xf32>, vector<12x16xf32> -> vector<12x16xf32>
    %62 = arith.addf %61, %46 : vector<12x16xf32>
    %c0_52 = arith.constant 0 : index
    %c0_53 = arith.constant 0 : index
    %63 = vector.load %arg5[%c0_52, %c0_53] : memref<12x1xf32, #tpu.memory_space<vmem>>, vector<12x1xf32>
    %64 = vector.broadcast %63 : vector<12x1xf32> to vector<12x16xf32>
    %65 = arith.mulf %62, %64 : vector<12x16xf32>
    %c0_54 = arith.constant 0 : index
    %c0_55 = arith.constant 0 : index
    %66 = vector.load %arg6[%c0_54, %c0_55] : memref<12x1xf32, #tpu.memory_space<vmem>>, vector<12x1xf32>
    %67 = vector.broadcast %66 : vector<12x1xf32> to vector<12x16xf32>
    %68 = arith.addf %65, %67 : vector<12x16xf32>
    %cst_56 = arith.constant 0.000000e+00 : f32
    %69 = vector.broadcast %cst_56 : f32 to vector<12x16xf32>
    %70 = arith.maximumf %68, %69 : vector<12x16xf32>
    %c0_57 = arith.constant 0 : index
    %c0_58 = arith.constant 0 : index
    %c0_59 = arith.constant 0 : index
    %71 = vector.load %arg7[%c0_57, %c0_58, %c0_59] : memref<1x12x16xf32, #tpu.memory_space<vmem>>, vector<1x12x16xf32>
    %72 = vector.shape_cast %71 : vector<1x12x16xf32> to vector<12x16xf32>
    %73 = vector.shape_cast %70 : vector<12x16xf32> to vector<1x12x16xf32>
    tpu.vector_store %arg7[%c0_57, %c0_58, %c0_59], %73 {strides = array<i32>} : memref<1x12x16xf32, #tpu.memory_space<vmem>>, vector<1x12x16xf32>,
    %c0_60 = arith.constant 0 : index
    %c0_61 = arith.constant 0 : index
    %c0_62 = arith.constant 0 : index
    %74 = vector.load %arg8[%c0_60, %c0_61, %c0_62] : memref<1x12x16xf32, #tpu.memory_space<vmem>>, vector<1x12x16xf32>
    %75 = vector.shape_cast %74 : vector<1x12x16xf32> to vector<12x16xf32>
    %76 = vector.shape_cast %61 : vector<12x16xf32> to vector<1x12x16xf32>
    tpu.vector_store %arg8[%c0_60, %c0_61, %c0_62], %76 {strides = array<i32>} : memref<1x12x16xf32, #tpu.memory_space<vmem>>, vector<1x12x16xf32>,
    return
  }
  func.func @transform_0(%arg0: i32) -> (i32, i32, i32) {
    %c0_i32 = arith.constant 0 : i32
    %c0_i32_0 = arith.constant 0 : i32
    %c0_i32_1 = arith.constant 0 : i32
    return %arg0, %c0_i32, %c0_i32_0 : i32, i32, i32
  }
  func.func @transform_1(%arg0: i32) -> (i32, i32, i32) {
    %c0_i32 = arith.constant 0 : i32
    %c0_i32_0 = arith.constant 0 : i32
    %c0_i32_1 = arith.constant 0 : i32
    return %arg0, %c0_i32, %c0_i32_0 : i32, i32, i32
  }
  func.func @transform_2(%arg0: i32) -> (i32, i32) {
    %c0_i32 = arith.constant 0 : i32
    %c0_i32_0 = arith.constant 0 : i32
    %c0_i32_1 = arith.constant 0 : i32
    return %c0_i32, %c0_i32_0 : i32, i32
  }
  func.func @transform_3(%arg0: i32) -> (i32, i32) {
    %c0_i32 = arith.constant 0 : i32
    %c0_i32_0 = arith.constant 0 : i32
    %c0_i32_1 = arith.constant 0 : i32
    return %c0_i32, %c0_i32_0 : i32, i32
  }
  func.func @transform_4(%arg0: i32) -> (i32, i32) {
    %c0_i32 = arith.constant 0 : i32
    %c0_i32_0 = arith.constant 0 : i32
    %c0_i32_1 = arith.constant 0 : i32
    return %c0_i32, %c0_i32_0 : i32, i32
  }
  func.func @transform_5(%arg0: i32) -> (i32, i32) {
    %c0_i32 = arith.constant 0 : i32
    %c0_i32_0 = arith.constant 0 : i32
    %c0_i32_1 = arith.constant 0 : i32
    return %c0_i32, %c0_i32_0 : i32, i32
  }
  func.func @transform_6(%arg0: i32) -> (i32, i32, i32) {
    %c0_i32 = arith.constant 0 : i32
    %c0_i32_0 = arith.constant 0 : i32
    %c0_i32_1 = arith.constant 0 : i32
    return %arg0, %c0_i32, %c0_i32_0 : i32, i32, i32
  }
  func.func @transform_7(%arg0: i32) -> (i32, i32, i32) {
    %c0_i32 = arith.constant 0 : i32
    %c0_i32_0 = arith.constant 0 : i32
    %c0_i32_1 = arith.constant 0 : i32
    return %arg0, %c0_i32, %c0_i32_0 : i32, i32, i32
  }
}

module attributes {stable_mosaic.version = 11 : i64} {
  func.func @kernel(%arg0: i32, %arg1: memref<1x12x16xf32, #tpu.memory_space<vmem>>, %arg2: memref<16x256xf32, #tpu.memory_space<vmem>>, %arg3: memref<16x1xf32, #tpu.memory_space<vmem>>, %arg4: memref<16x1xf32, #tpu.memory_space<vmem>>, %arg5: memref<1x16x16xf32, #tpu.memory_space<vmem>>, %arg6: memref<256x16xf32, #tpu.memory_space<vmem>>) attributes {dimension_semantics = [#tpu.dimension_semantics<parallel>], iteration_bounds = array<i64: 2>, scalar_prefetch = 0 : i64, scratch_operands = 1 : i64, tpu.core_type = #tpu.core_type<tc>, window_params = [{transform_indices = @transform_0, window_bounds = array<i64: 1, 12, 16>}, {pipeline_mode = #tpu.pipeline_mode<synchronous>, transform_indices = @transform_1, window_bounds = array<i64: 16, 256>}, {pipeline_mode = #tpu.pipeline_mode<synchronous>, transform_indices = @transform_2, window_bounds = array<i64: 16, 1>}, {pipeline_mode = #tpu.pipeline_mode<synchronous>, transform_indices = @transform_3, window_bounds = array<i64: 16, 1>}, {transform_indices = @transform_4, window_bounds = array<i64: 1, 16, 16>}]} {
    %cst = arith.constant 0.000000e+00 : f32
    %0 = vector.broadcast %cst : f32 to vector<256x16xf32>
    %c0 = arith.constant 0 : index
    %c0_0 = arith.constant 0 : index
    %1 = vector.load %arg6[%c0, %c0_0] : memref<256x16xf32, #tpu.memory_space<vmem>>, vector<256x16xf32>
    tpu.vector_store %arg6[%c0, %c0_0], %0 {strides = array<i32>} : memref<256x16xf32, #tpu.memory_space<vmem>>, vector<256x16xf32>,
    %c0_1 = arith.constant 0 : index
    %c0_2 = arith.constant 0 : index
    %c0_3 = arith.constant 0 : index
    %2 = vector.load %arg1[%c0_1, %c0_2, %c0_3] : memref<1x12x16xf32, #tpu.memory_space<vmem>>, vector<1x12x9xf32>
    %3 = vector.shape_cast %2 : vector<1x12x9xf32> to vector<12x9xf32>
    %c0_4 = arith.constant 0 : index
    %c7 = arith.constant 7 : index
    %4 = vector.load %arg6[%c0_4, %c7] : memref<256x16xf32, #tpu.memory_space<vmem>>, vector<12x9xf32>
    tpu.vector_store %arg6[%c0_4, %c7], %3 {strides = array<i32>} : memref<256x16xf32, #tpu.memory_space<vmem>>, vector<12x9xf32>,
    %c0_5 = arith.constant 0 : index
    %c0_6 = arith.constant 0 : index
    %c0_7 = arith.constant 0 : index
    %5 = vector.load %arg1[%c0_5, %c0_6, %c0_7] : memref<1x12x16xf32, #tpu.memory_space<vmem>>, vector<1x12x10xf32>
    %6 = vector.shape_cast %5 : vector<1x12x10xf32> to vector<12x10xf32>
    %c16 = arith.constant 16 : index
    %c6 = arith.constant 6 : index
    %7 = vector.load %arg6[%c16, %c6] : memref<256x16xf32, #tpu.memory_space<vmem>>, vector<12x10xf32>
    tpu.vector_store %arg6[%c16, %c6], %6 {strides = array<i32>} : memref<256x16xf32, #tpu.memory_space<vmem>>, vector<12x10xf32>,
    %c0_8 = arith.constant 0 : index
    %c0_9 = arith.constant 0 : index
    %c0_10 = arith.constant 0 : index
    %8 = vector.load %arg1[%c0_8, %c0_9, %c0_10] : memref<1x12x16xf32, #tpu.memory_space<vmem>>, vector<1x12x11xf32>
    %9 = vector.shape_cast %8 : vector<1x12x11xf32> to vector<12x11xf32>
    %c32 = arith.constant 32 : index
    %c5 = arith.constant 5 : index
    %10 = vector.load %arg6[%c32, %c5] : memref<256x16xf32, #tpu.memory_space<vmem>>, vector<12x11xf32>
    tpu.vector_store %arg6[%c32, %c5], %9 {strides = array<i32>} : memref<256x16xf32, #tpu.memory_space<vmem>>, vector<12x11xf32>,
    %c0_11 = arith.constant 0 : index
    %c0_12 = arith.constant 0 : index
    %c0_13 = arith.constant 0 : index
    %11 = vector.load %arg1[%c0_11, %c0_12, %c0_13] : memref<1x12x16xf32, #tpu.memory_space<vmem>>, vector<1x12x12xf32>
    %12 = vector.shape_cast %11 : vector<1x12x12xf32> to vector<12x12xf32>
    %c48 = arith.constant 48 : index
    %c4 = arith.constant 4 : index
    %13 = vector.load %arg6[%c48, %c4] : memref<256x16xf32, #tpu.memory_space<vmem>>, vector<12x12xf32>
    tpu.vector_store %arg6[%c48, %c4], %12 {strides = array<i32>} : memref<256x16xf32, #tpu.memory_space<vmem>>, vector<12x12xf32>,
    %c0_14 = arith.constant 0 : index
    %c0_15 = arith.constant 0 : index
    %c0_16 = arith.constant 0 : index
    %14 = vector.load %arg1[%c0_14, %c0_15, %c0_16] : memref<1x12x16xf32, #tpu.memory_space<vmem>>, vector<1x12x13xf32>
    %15 = vector.shape_cast %14 : vector<1x12x13xf32> to vector<12x13xf32>
    %c64 = arith.constant 64 : index
    %c3 = arith.constant 3 : index
    %16 = vector.load %arg6[%c64, %c3] : memref<256x16xf32, #tpu.memory_space<vmem>>, vector<12x13xf32>
    tpu.vector_store %arg6[%c64, %c3], %15 {strides = array<i32>} : memref<256x16xf32, #tpu.memory_space<vmem>>, vector<12x13xf32>,
    %c0_17 = arith.constant 0 : index
    %c0_18 = arith.constant 0 : index
    %c0_19 = arith.constant 0 : index
    %17 = vector.load %arg1[%c0_17, %c0_18, %c0_19] : memref<1x12x16xf32, #tpu.memory_space<vmem>>, vector<1x12x14xf32>
    %18 = vector.shape_cast %17 : vector<1x12x14xf32> to vector<12x14xf32>
    %c80 = arith.constant 80 : index
    %c2 = arith.constant 2 : index
    %19 = vector.load %arg6[%c80, %c2] : memref<256x16xf32, #tpu.memory_space<vmem>>, vector<12x14xf32>
    tpu.vector_store %arg6[%c80, %c2], %18 {strides = array<i32>} : memref<256x16xf32, #tpu.memory_space<vmem>>, vector<12x14xf32>,
    %c0_20 = arith.constant 0 : index
    %c0_21 = arith.constant 0 : index
    %c0_22 = arith.constant 0 : index
    %20 = vector.load %arg1[%c0_20, %c0_21, %c0_22] : memref<1x12x16xf32, #tpu.memory_space<vmem>>, vector<1x12x15xf32>
    %21 = vector.shape_cast %20 : vector<1x12x15xf32> to vector<12x15xf32>
    %c96 = arith.constant 96 : index
    %c1 = arith.constant 1 : index
    %22 = vector.load %arg6[%c96, %c1] : memref<256x16xf32, #tpu.memory_space<vmem>>, vector<12x15xf32>
    tpu.vector_store %arg6[%c96, %c1], %21 {strides = array<i32>} : memref<256x16xf32, #tpu.memory_space<vmem>>, vector<12x15xf32>,
    %c0_23 = arith.constant 0 : index
    %c0_24 = arith.constant 0 : index
    %c0_25 = arith.constant 0 : index
    %23 = vector.load %arg1[%c0_23, %c0_24, %c0_25] : memref<1x12x16xf32, #tpu.memory_space<vmem>>, vector<1x12x16xf32>
    %24 = vector.shape_cast %23 : vector<1x12x16xf32> to vector<12x16xf32>
    %c112 = arith.constant 112 : index
    %c0_26 = arith.constant 0 : index
    %25 = vector.load %arg6[%c112, %c0_26] : memref<256x16xf32, #tpu.memory_space<vmem>>, vector<12x16xf32>
    tpu.vector_store %arg6[%c112, %c0_26], %24 {strides = array<i32>} : memref<256x16xf32, #tpu.memory_space<vmem>>, vector<12x16xf32>,
    %c0_27 = arith.constant 0 : index
    %c0_28 = arith.constant 0 : index
    %c1_29 = arith.constant 1 : index
    %26 = vector.load %arg1[%c0_27, %c0_28, %c1_29] : memref<1x12x16xf32, #tpu.memory_space<vmem>>, vector<1x12x15xf32>
    %27 = vector.shape_cast %26 : vector<1x12x15xf32> to vector<12x15xf32>
    %c128 = arith.constant 128 : index
    %c0_30 = arith.constant 0 : index
    %28 = vector.load %arg6[%c128, %c0_30] : memref<256x16xf32, #tpu.memory_space<vmem>>, vector<12x15xf32>
    tpu.vector_store %arg6[%c128, %c0_30], %27 {strides = array<i32>} : memref<256x16xf32, #tpu.memory_space<vmem>>, vector<12x15xf32>,
    %c0_31 = arith.constant 0 : index
    %c0_32 = arith.constant 0 : index
    %c2_33 = arith.constant 2 : index
    %29 = vector.load %arg1[%c0_31, %c0_32, %c2_33] : memref<1x12x16xf32, #tpu.memory_space<vmem>>, vector<1x12x14xf32>
    %30 = vector.shape_cast %29 : vector<1x12x14xf32> to vector<12x14xf32>
    %c144 = arith.constant 144 : index
    %c0_34 = arith.constant 0 : index
    %31 = vector.load %arg6[%c144, %c0_34] : memref<256x16xf32, #tpu.memory_space<vmem>>, vector<12x14xf32>
    tpu.vector_store %arg6[%c144, %c0_34], %30 {strides = array<i32>} : memref<256x16xf32, #tpu.memory_space<vmem>>, vector<12x14xf32>,
    %c0_35 = arith.constant 0 : index
    %c0_36 = arith.constant 0 : index
    %c3_37 = arith.constant 3 : index
    %32 = vector.load %arg1[%c0_35, %c0_36, %c3_37] : memref<1x12x16xf32, #tpu.memory_space<vmem>>, vector<1x12x13xf32>
    %33 = vector.shape_cast %32 : vector<1x12x13xf32> to vector<12x13xf32>
    %c160 = arith.constant 160 : index
    %c0_38 = arith.constant 0 : index
    %34 = vector.load %arg6[%c160, %c0_38] : memref<256x16xf32, #tpu.memory_space<vmem>>, vector<12x13xf32>
    tpu.vector_store %arg6[%c160, %c0_38], %33 {strides = array<i32>} : memref<256x16xf32, #tpu.memory_space<vmem>>, vector<12x13xf32>,
    %c0_39 = arith.constant 0 : index
    %c0_40 = arith.constant 0 : index
    %c4_41 = arith.constant 4 : index
    %35 = vector.load %arg1[%c0_39, %c0_40, %c4_41] : memref<1x12x16xf32, #tpu.memory_space<vmem>>, vector<1x12x12xf32>
    %36 = vector.shape_cast %35 : vector<1x12x12xf32> to vector<12x12xf32>
    %c176 = arith.constant 176 : index
    %c0_42 = arith.constant 0 : index
    %37 = vector.load %arg6[%c176, %c0_42] : memref<256x16xf32, #tpu.memory_space<vmem>>, vector<12x12xf32>
    tpu.vector_store %arg6[%c176, %c0_42], %36 {strides = array<i32>} : memref<256x16xf32, #tpu.memory_space<vmem>>, vector<12x12xf32>,
    %c0_43 = arith.constant 0 : index
    %c0_44 = arith.constant 0 : index
    %c5_45 = arith.constant 5 : index
    %38 = vector.load %arg1[%c0_43, %c0_44, %c5_45] : memref<1x12x16xf32, #tpu.memory_space<vmem>>, vector<1x12x11xf32>
    %39 = vector.shape_cast %38 : vector<1x12x11xf32> to vector<12x11xf32>
    %c192 = arith.constant 192 : index
    %c0_46 = arith.constant 0 : index
    %40 = vector.load %arg6[%c192, %c0_46] : memref<256x16xf32, #tpu.memory_space<vmem>>, vector<12x11xf32>
    tpu.vector_store %arg6[%c192, %c0_46], %39 {strides = array<i32>} : memref<256x16xf32, #tpu.memory_space<vmem>>, vector<12x11xf32>,
    %c0_47 = arith.constant 0 : index
    %c0_48 = arith.constant 0 : index
    %c6_49 = arith.constant 6 : index
    %41 = vector.load %arg1[%c0_47, %c0_48, %c6_49] : memref<1x12x16xf32, #tpu.memory_space<vmem>>, vector<1x12x10xf32>
    %42 = vector.shape_cast %41 : vector<1x12x10xf32> to vector<12x10xf32>
    %c208 = arith.constant 208 : index
    %c0_50 = arith.constant 0 : index
    %43 = vector.load %arg6[%c208, %c0_50] : memref<256x16xf32, #tpu.memory_space<vmem>>, vector<12x10xf32>
    tpu.vector_store %arg6[%c208, %c0_50], %42 {strides = array<i32>} : memref<256x16xf32, #tpu.memory_space<vmem>>, vector<12x10xf32>,
    %c0_51 = arith.constant 0 : index
    %c0_52 = arith.constant 0 : index
    %c7_53 = arith.constant 7 : index
    %44 = vector.load %arg1[%c0_51, %c0_52, %c7_53] : memref<1x12x16xf32, #tpu.memory_space<vmem>>, vector<1x12x9xf32>
    %45 = vector.shape_cast %44 : vector<1x12x9xf32> to vector<12x9xf32>
    %c224 = arith.constant 224 : index
    %c0_54 = arith.constant 0 : index
    %46 = vector.load %arg6[%c224, %c0_54] : memref<256x16xf32, #tpu.memory_space<vmem>>, vector<12x9xf32>
    tpu.vector_store %arg6[%c224, %c0_54], %45 {strides = array<i32>} : memref<256x16xf32, #tpu.memory_space<vmem>>, vector<12x9xf32>,
    %c0_55 = arith.constant 0 : index
    %c0_56 = arith.constant 0 : index
    %c8 = arith.constant 8 : index
    %47 = vector.load %arg1[%c0_55, %c0_56, %c8] : memref<1x12x16xf32, #tpu.memory_space<vmem>>, vector<1x12x8xf32>
    %48 = vector.shape_cast %47 : vector<1x12x8xf32> to vector<12x8xf32>
    %c240 = arith.constant 240 : index
    %c0_57 = arith.constant 0 : index
    %49 = vector.load %arg6[%c240, %c0_57] : memref<256x16xf32, #tpu.memory_space<vmem>>, vector<12x8xf32>
    tpu.vector_store %arg6[%c240, %c0_57], %48 {strides = array<i32>} : memref<256x16xf32, #tpu.memory_space<vmem>>, vector<12x8xf32>,
    %c0_58 = arith.constant 0 : index
    %c0_59 = arith.constant 0 : index
    %50 = vector.load %arg2[%c0_58, %c0_59] : memref<16x256xf32, #tpu.memory_space<vmem>>, vector<16x256xf32>
    %c0_60 = arith.constant 0 : index
    %c0_61 = arith.constant 0 : index
    %51 = vector.load %arg6[%c0_60, %c0_61] : memref<256x16xf32, #tpu.memory_space<vmem>>, vector<256x16xf32>
    %cst_62 = arith.constant dense<0.000000e+00> : vector<16x16xf32>
    %52 = tpu.matmul %50, %51, %cst_62 {dimension_numbers = #tpu.dot_dimension_numbers<[1], [0], [0], [1], [0, 0, 1, 1], [], []>} : vector<16x256xf32>, vector<256x16xf32>, vector<16x16xf32> -> vector<16x16xf32>
    %c0_63 = arith.constant 0 : index
    %c0_64 = arith.constant 0 : index
    %53 = vector.load %arg3[%c0_63, %c0_64] : memref<16x1xf32, #tpu.memory_space<vmem>>, vector<16x1xf32>
    %54 = vector.broadcast %53 : vector<16x1xf32> to vector<16x16xf32>
    %55 = arith.mulf %52, %54 : vector<16x16xf32>
    %c0_65 = arith.constant 0 : index
    %c0_66 = arith.constant 0 : index
    %56 = vector.load %arg4[%c0_65, %c0_66] : memref<16x1xf32, #tpu.memory_space<vmem>>, vector<16x1xf32>
    %57 = vector.broadcast %56 : vector<16x1xf32> to vector<16x16xf32>
    %58 = arith.addf %55, %57 : vector<16x16xf32>
    %cst_67 = arith.constant 0.000000e+00 : f32
    %59 = vector.broadcast %cst_67 : f32 to vector<16x16xf32>
    %60 = arith.maximumf %58, %59 : vector<16x16xf32>
    %c0_68 = arith.constant 0 : index
    %c0_69 = arith.constant 0 : index
    %c0_70 = arith.constant 0 : index
    %61 = vector.load %arg5[%c0_68, %c0_69, %c0_70] : memref<1x16x16xf32, #tpu.memory_space<vmem>>, vector<1x16x16xf32>
    %62 = vector.shape_cast %61 : vector<1x16x16xf32> to vector<16x16xf32>
    %63 = vector.shape_cast %60 : vector<16x16xf32> to vector<1x16x16xf32>
    tpu.vector_store %arg5[%c0_68, %c0_69, %c0_70], %63 {strides = array<i32>} : memref<1x16x16xf32, #tpu.memory_space<vmem>>, vector<1x16x16xf32>,
    return
  }
  func.func @transform_0(%arg0: i32) -> (i32, i32, i32) {
    %c0_i32 = arith.constant 0 : i32
    %c0_i32_0 = arith.constant 0 : i32
    %c0_i32_1 = arith.constant 0 : i32
    return %arg0, %c0_i32, %c0_i32_0 : i32, i32, i32
  }
  func.func @transform_1(%arg0: i32) -> (i32, i32) {
    %c0_i32 = arith.constant 0 : i32
    %c0_i32_0 = arith.constant 0 : i32
    %c0_i32_1 = arith.constant 0 : i32
    return %c0_i32, %c0_i32_0 : i32, i32
  }
  func.func @transform_2(%arg0: i32) -> (i32, i32) {
    %c0_i32 = arith.constant 0 : i32
    %c0_i32_0 = arith.constant 0 : i32
    %c0_i32_1 = arith.constant 0 : i32
    return %c0_i32, %c0_i32_0 : i32, i32
  }
  func.func @transform_3(%arg0: i32) -> (i32, i32) {
    %c0_i32 = arith.constant 0 : i32
    %c0_i32_0 = arith.constant 0 : i32
    %c0_i32_1 = arith.constant 0 : i32
    return %c0_i32, %c0_i32_0 : i32, i32
  }
  func.func @transform_4(%arg0: i32) -> (i32, i32, i32) {
    %c0_i32 = arith.constant 0 : i32
    %c0_i32_0 = arith.constant 0 : i32
    %c0_i32_1 = arith.constant 0 : i32
    return %arg0, %c0_i32, %c0_i32_0 : i32, i32, i32
  }
}

module attributes {stable_mosaic.version = 11 : i64} {
  func.func @kernel(%arg0: i32, %arg1: memref<1x48x4xf32, #tpu.memory_space<vmem>>, %arg2: memref<1x64x7xf32, #tpu.memory_space<vmem>>, %arg3: memref<16x256xf32, #tpu.memory_space<vmem>>, %arg4: memref<16x256xf32, #tpu.memory_space<vmem>>, %arg5: memref<16x1xf32, #tpu.memory_space<vmem>>, %arg6: memref<16x1xf32, #tpu.memory_space<vmem>>, %arg7: memref<1x16x4xf32, #tpu.memory_space<vmem>>, %arg8: memref<1x16x4xf32, #tpu.memory_space<vmem>>, %arg9: memref<256x4xf32, #tpu.memory_space<vmem>>, %arg10: memref<256x4xf32, #tpu.memory_space<vmem>>) attributes {dimension_semantics = [#tpu.dimension_semantics<parallel>], iteration_bounds = array<i64: 2>, scalar_prefetch = 0 : i64, scratch_operands = 2 : i64, tpu.core_type = #tpu.core_type<tc>, window_params = [{transform_indices = @transform_0, window_bounds = array<i64: 1, 48, 4>}, {transform_indices = @transform_1, window_bounds = array<i64: 1, 64, 7>}, {pipeline_mode = #tpu.pipeline_mode<synchronous>, transform_indices = @transform_2, window_bounds = array<i64: 16, 256>}, {pipeline_mode = #tpu.pipeline_mode<synchronous>, transform_indices = @transform_3, window_bounds = array<i64: 16, 256>}, {pipeline_mode = #tpu.pipeline_mode<synchronous>, transform_indices = @transform_4, window_bounds = array<i64: 16, 1>}, {pipeline_mode = #tpu.pipeline_mode<synchronous>, transform_indices = @transform_5, window_bounds = array<i64: 16, 1>}, {transform_indices = @transform_6, window_bounds = array<i64: 1, 16, 4>}, {transform_indices = @transform_7, window_bounds = array<i64: 1, 16, 4>}]} {
    %c0 = arith.constant 0 : index
    %c0_0 = arith.constant 0 : index
    %c0_1 = arith.constant 0 : index
    %0 = vector.load %arg1[%c0, %c0_0, %c0_1] : memref<1x48x4xf32, #tpu.memory_space<vmem>>, vector<1x12x4xf32>
    %1 = vector.shape_cast %0 : vector<1x12x4xf32> to vector<12x4xf32>
    %c0_2 = arith.constant 0 : index
    %c12 = arith.constant 12 : index
    %c0_3 = arith.constant 0 : index
    %2 = vector.load %arg1[%c0_2, %c12, %c0_3] : memref<1x48x4xf32, #tpu.memory_space<vmem>>, vector<1x12x4xf32>
    %3 = vector.shape_cast %2 : vector<1x12x4xf32> to vector<12x4xf32>
    %4 = arith.maximumf %1, %3 : vector<12x4xf32>
    %c0_4 = arith.constant 0 : index
    %c24 = arith.constant 24 : index
    %c0_5 = arith.constant 0 : index
    %5 = vector.load %arg1[%c0_4, %c24, %c0_5] : memref<1x48x4xf32, #tpu.memory_space<vmem>>, vector<1x12x4xf32>
    %6 = vector.shape_cast %5 : vector<1x12x4xf32> to vector<12x4xf32>
    %7 = arith.maximumf %4, %6 : vector<12x4xf32>
    %c0_6 = arith.constant 0 : index
    %c36 = arith.constant 36 : index
    %c0_7 = arith.constant 0 : index
    %8 = vector.load %arg1[%c0_6, %c36, %c0_7] : memref<1x48x4xf32, #tpu.memory_space<vmem>>, vector<1x12x4xf32>
    %9 = vector.shape_cast %8 : vector<1x12x4xf32> to vector<12x4xf32>
    %10 = arith.maximumf %7, %9 : vector<12x4xf32>
    %cst = arith.constant 0.000000e+00 : f32
    %11 = vector.broadcast %cst : f32 to vector<256x4xf32>
    %c0_8 = arith.constant 0 : index
    %c0_9 = arith.constant 0 : index
    %12 = vector.load %arg9[%c0_8, %c0_9] : memref<256x4xf32, #tpu.memory_space<vmem>>, vector<256x4xf32>
    tpu.vector_store %arg9[%c0_8, %c0_9], %11 {strides = array<i32>} : memref<256x4xf32, #tpu.memory_space<vmem>>, vector<256x4xf32>,
    %13 = vector.extract_strided_slice %10 {offsets = [0, 0], sizes = [12, 1], strides = [1, 1]} : vector<12x4xf32> to vector<12x1xf32>
    %c64 = arith.constant 64 : index
    %c3 = arith.constant 3 : index
    %14 = vector.load %arg9[%c64, %c3] : memref<256x4xf32, #tpu.memory_space<vmem>>, vector<12x1xf32>
    tpu.vector_store %arg9[%c64, %c3], %13 {strides = array<i32>} : memref<256x4xf32, #tpu.memory_space<vmem>>, vector<12x1xf32>,
    %15 = vector.extract_strided_slice %10 {offsets = [0, 0], sizes = [12, 2], strides = [1, 1]} : vector<12x4xf32> to vector<12x2xf32>
    %c80 = arith.constant 80 : index
    %c2 = arith.constant 2 : index
    %16 = vector.load %arg9[%c80, %c2] : memref<256x4xf32, #tpu.memory_space<vmem>>, vector<12x2xf32>
    tpu.vector_store %arg9[%c80, %c2], %15 {strides = array<i32>} : memref<256x4xf32, #tpu.memory_space<vmem>>, vector<12x2xf32>,
    %17 = vector.extract_strided_slice %10 {offsets = [0, 0], sizes = [12, 3], strides = [1, 1]} : vector<12x4xf32> to vector<12x3xf32>
    %c96 = arith.constant 96 : index
    %c1 = arith.constant 1 : index
    %18 = vector.load %arg9[%c96, %c1] : memref<256x4xf32, #tpu.memory_space<vmem>>, vector<12x3xf32>
    tpu.vector_store %arg9[%c96, %c1], %17 {strides = array<i32>} : memref<256x4xf32, #tpu.memory_space<vmem>>, vector<12x3xf32>,
    %c112 = arith.constant 112 : index
    %c0_10 = arith.constant 0 : index
    %19 = vector.load %arg9[%c112, %c0_10] : memref<256x4xf32, #tpu.memory_space<vmem>>, vector<12x4xf32>
    tpu.vector_store %arg9[%c112, %c0_10], %10 {strides = array<i32>} : memref<256x4xf32, #tpu.memory_space<vmem>>, vector<12x4xf32>,
    %20 = vector.extract_strided_slice %10 {offsets = [0, 1], sizes = [12, 3], strides = [1, 1]} : vector<12x4xf32> to vector<12x3xf32>
    %c128 = arith.constant 128 : index
    %c0_11 = arith.constant 0 : index
    %21 = vector.load %arg9[%c128, %c0_11] : memref<256x4xf32, #tpu.memory_space<vmem>>, vector<12x3xf32>
    tpu.vector_store %arg9[%c128, %c0_11], %20 {strides = array<i32>} : memref<256x4xf32, #tpu.memory_space<vmem>>, vector<12x3xf32>,
    %22 = vector.extract_strided_slice %10 {offsets = [0, 2], sizes = [12, 2], strides = [1, 1]} : vector<12x4xf32> to vector<12x2xf32>
    %c144 = arith.constant 144 : index
    %c0_12 = arith.constant 0 : index
    %23 = vector.load %arg9[%c144, %c0_12] : memref<256x4xf32, #tpu.memory_space<vmem>>, vector<12x2xf32>
    tpu.vector_store %arg9[%c144, %c0_12], %22 {strides = array<i32>} : memref<256x4xf32, #tpu.memory_space<vmem>>, vector<12x2xf32>,
    %24 = vector.extract_strided_slice %10 {offsets = [0, 3], sizes = [12, 1], strides = [1, 1]} : vector<12x4xf32> to vector<12x1xf32>
    %c160 = arith.constant 160 : index
    %c0_13 = arith.constant 0 : index
    %25 = vector.load %arg9[%c160, %c0_13] : memref<256x4xf32, #tpu.memory_space<vmem>>, vector<12x1xf32>
    tpu.vector_store %arg9[%c160, %c0_13], %24 {strides = array<i32>} : memref<256x4xf32, #tpu.memory_space<vmem>>, vector<12x1xf32>,
    %c0_14 = arith.constant 0 : index
    %c0_15 = arith.constant 0 : index
    %26 = vector.load %arg3[%c0_14, %c0_15] : memref<16x256xf32, #tpu.memory_space<vmem>>, vector<16x256xf32>
    %c0_16 = arith.constant 0 : index
    %c0_17 = arith.constant 0 : index
    %27 = vector.load %arg9[%c0_16, %c0_17] : memref<256x4xf32, #tpu.memory_space<vmem>>, vector<256x4xf32>
    %cst_18 = arith.constant dense<0.000000e+00> : vector<16x4xf32>
    %28 = tpu.matmul %26, %27, %cst_18 {dimension_numbers = #tpu.dot_dimension_numbers<[1], [0], [0], [1], [0, 0, 1, 1], [], []>} : vector<16x256xf32>, vector<256x4xf32>, vector<16x4xf32> -> vector<16x4xf32>
    %c0_19 = arith.constant 0 : index
    %c0_20 = arith.constant 0 : index
    %c0_21 = arith.constant 0 : index
    %29 = vector.load %arg2[%c0_19, %c0_20, %c0_21] : memref<1x64x7xf32, #tpu.memory_space<vmem>>, vector<1x64x4xf32>
    %30 = vector.shape_cast %29 : vector<1x64x4xf32> to vector<64x4xf32>
    %c0_22 = arith.constant 0 : index
    %c0_23 = arith.constant 0 : index
    %31 = vector.load %arg10[%c0_22, %c0_23] : memref<256x4xf32, #tpu.memory_space<vmem>>, vector<64x4xf32>
    tpu.vector_store %arg10[%c0_22, %c0_23], %30 {strides = array<i32>} : memref<256x4xf32, #tpu.memory_space<vmem>>, vector<64x4xf32>,
    %c0_24 = arith.constant 0 : index
    %c0_25 = arith.constant 0 : index
    %c1_26 = arith.constant 1 : index
    %32 = vector.load %arg2[%c0_24, %c0_25, %c1_26] : memref<1x64x7xf32, #tpu.memory_space<vmem>>, vector<1x64x4xf32>
    %33 = vector.shape_cast %32 : vector<1x64x4xf32> to vector<64x4xf32>
    %c64_27 = arith.constant 64 : index
    %c0_28 = arith.constant 0 : index
    %34 = vector.load %arg10[%c64_27, %c0_28] : memref<256x4xf32, #tpu.memory_space<vmem>>, vector<64x4xf32>
    tpu.vector_store %arg10[%c64_27, %c0_28], %33 {strides = array<i32>} : memref<256x4xf32, #tpu.memory_space<vmem>>, vector<64x4xf32>,
    %c0_29 = arith.constant 0 : index
    %c0_30 = arith.constant 0 : index
    %c2_31 = arith.constant 2 : index
    %35 = vector.load %arg2[%c0_29, %c0_30, %c2_31] : memref<1x64x7xf32, #tpu.memory_space<vmem>>, vector<1x64x4xf32>
    %36 = vector.shape_cast %35 : vector<1x64x4xf32> to vector<64x4xf32>
    %c128_32 = arith.constant 128 : index
    %c0_33 = arith.constant 0 : index
    %37 = vector.load %arg10[%c128_32, %c0_33] : memref<256x4xf32, #tpu.memory_space<vmem>>, vector<64x4xf32>
    tpu.vector_store %arg10[%c128_32, %c0_33], %36 {strides = array<i32>} : memref<256x4xf32, #tpu.memory_space<vmem>>, vector<64x4xf32>,
    %c0_34 = arith.constant 0 : index
    %c0_35 = arith.constant 0 : index
    %c3_36 = arith.constant 3 : index
    %38 = vector.load %arg2[%c0_34, %c0_35, %c3_36] : memref<1x64x7xf32, #tpu.memory_space<vmem>>, vector<1x64x4xf32>
    %39 = vector.shape_cast %38 : vector<1x64x4xf32> to vector<64x4xf32>
    %c192 = arith.constant 192 : index
    %c0_37 = arith.constant 0 : index
    %40 = vector.load %arg10[%c192, %c0_37] : memref<256x4xf32, #tpu.memory_space<vmem>>, vector<64x4xf32>
    tpu.vector_store %arg10[%c192, %c0_37], %39 {strides = array<i32>} : memref<256x4xf32, #tpu.memory_space<vmem>>, vector<64x4xf32>,
    %c0_38 = arith.constant 0 : index
    %c0_39 = arith.constant 0 : index
    %41 = vector.load %arg4[%c0_38, %c0_39] : memref<16x256xf32, #tpu.memory_space<vmem>>, vector<16x256xf32>
    %c0_40 = arith.constant 0 : index
    %c0_41 = arith.constant 0 : index
    %42 = vector.load %arg10[%c0_40, %c0_41] : memref<256x4xf32, #tpu.memory_space<vmem>>, vector<256x4xf32>
    %cst_42 = arith.constant dense<0.000000e+00> : vector<16x4xf32>
    %43 = tpu.matmul %41, %42, %cst_42 {dimension_numbers = #tpu.dot_dimension_numbers<[1], [0], [0], [1], [0, 0, 1, 1], [], []>} : vector<16x256xf32>, vector<256x4xf32>, vector<16x4xf32> -> vector<16x4xf32>
    %44 = arith.addf %43, %28 : vector<16x4xf32>
    %c0_43 = arith.constant 0 : index
    %c0_44 = arith.constant 0 : index
    %45 = vector.load %arg5[%c0_43, %c0_44] : memref<16x1xf32, #tpu.memory_space<vmem>>, vector<16x1xf32>
    %46 = vector.broadcast %45 : vector<16x1xf32> to vector<16x4xf32>
    %47 = arith.mulf %44, %46 : vector<16x4xf32>
    %c0_45 = arith.constant 0 : index
    %c0_46 = arith.constant 0 : index
    %48 = vector.load %arg6[%c0_45, %c0_46] : memref<16x1xf32, #tpu.memory_space<vmem>>, vector<16x1xf32>
    %49 = vector.broadcast %48 : vector<16x1xf32> to vector<16x4xf32>
    %50 = arith.addf %47, %49 : vector<16x4xf32>
    %cst_47 = arith.constant 0.000000e+00 : f32
    %51 = vector.broadcast %cst_47 : f32 to vector<16x4xf32>
    %52 = arith.maximumf %50, %51 : vector<16x4xf32>
    %c0_48 = arith.constant 0 : index
    %c0_49 = arith.constant 0 : index
    %c0_50 = arith.constant 0 : index
    %53 = vector.load %arg7[%c0_48, %c0_49, %c0_50] : memref<1x16x4xf32, #tpu.memory_space<vmem>>, vector<1x16x4xf32>
    %54 = vector.shape_cast %53 : vector<1x16x4xf32> to vector<16x4xf32>
    %55 = vector.shape_cast %52 : vector<16x4xf32> to vector<1x16x4xf32>
    tpu.vector_store %arg7[%c0_48, %c0_49, %c0_50], %55 {strides = array<i32>} : memref<1x16x4xf32, #tpu.memory_space<vmem>>, vector<1x16x4xf32>,
    %c0_51 = arith.constant 0 : index
    %c0_52 = arith.constant 0 : index
    %c0_53 = arith.constant 0 : index
    %56 = vector.load %arg8[%c0_51, %c0_52, %c0_53] : memref<1x16x4xf32, #tpu.memory_space<vmem>>, vector<1x16x4xf32>
    %57 = vector.shape_cast %56 : vector<1x16x4xf32> to vector<16x4xf32>
    %58 = vector.shape_cast %43 : vector<16x4xf32> to vector<1x16x4xf32>
    tpu.vector_store %arg8[%c0_51, %c0_52, %c0_53], %58 {strides = array<i32>} : memref<1x16x4xf32, #tpu.memory_space<vmem>>, vector<1x16x4xf32>,
    return
  }
  func.func @transform_0(%arg0: i32) -> (i32, i32, i32) {
    %c0_i32 = arith.constant 0 : i32
    %c0_i32_0 = arith.constant 0 : i32
    %c0_i32_1 = arith.constant 0 : i32
    return %arg0, %c0_i32, %c0_i32_0 : i32, i32, i32
  }
  func.func @transform_1(%arg0: i32) -> (i32, i32, i32) {
    %c0_i32 = arith.constant 0 : i32
    %c0_i32_0 = arith.constant 0 : i32
    %c0_i32_1 = arith.constant 0 : i32
    return %arg0, %c0_i32, %c0_i32_0 : i32, i32, i32
  }
  func.func @transform_2(%arg0: i32) -> (i32, i32) {
    %c0_i32 = arith.constant 0 : i32
    %c0_i32_0 = arith.constant 0 : i32
    %c0_i32_1 = arith.constant 0 : i32
    return %c0_i32, %c0_i32_0 : i32, i32
  }
  func.func @transform_3(%arg0: i32) -> (i32, i32) {
    %c0_i32 = arith.constant 0 : i32
    %c0_i32_0 = arith.constant 0 : i32
    %c0_i32_1 = arith.constant 0 : i32
    return %c0_i32, %c0_i32_0 : i32, i32
  }
  func.func @transform_4(%arg0: i32) -> (i32, i32) {
    %c0_i32 = arith.constant 0 : i32
    %c0_i32_0 = arith.constant 0 : i32
    %c0_i32_1 = arith.constant 0 : i32
    return %c0_i32, %c0_i32_0 : i32, i32
  }
  func.func @transform_5(%arg0: i32) -> (i32, i32) {
    %c0_i32 = arith.constant 0 : i32
    %c0_i32_0 = arith.constant 0 : i32
    %c0_i32_1 = arith.constant 0 : i32
    return %c0_i32, %c0_i32_0 : i32, i32
  }
  func.func @transform_6(%arg0: i32) -> (i32, i32, i32) {
    %c0_i32 = arith.constant 0 : i32
    %c0_i32_0 = arith.constant 0 : i32
    %c0_i32_1 = arith.constant 0 : i32
    return %arg0, %c0_i32, %c0_i32_0 : i32, i32, i32
  }
  func.func @transform_7(%arg0: i32) -> (i32, i32, i32) {
    %c0_i32 = arith.constant 0 : i32
    %c0_i32_0 = arith.constant 0 : i32
    %c0_i32_1 = arith.constant 0 : i32
    return %arg0, %c0_i32, %c0_i32_0 : i32, i32, i32
  }
}

module attributes {stable_mosaic.version = 11 : i64} {
  func.func @kernel(%arg0: i32, %arg1: memref<1x16x4xf32, #tpu.memory_space<vmem>>, %arg2: memref<20x256xf32, #tpu.memory_space<vmem>>, %arg3: memref<20x1xf32, #tpu.memory_space<vmem>>, %arg4: memref<20x1xf32, #tpu.memory_space<vmem>>, %arg5: memref<1x20x4xf32, #tpu.memory_space<vmem>>, %arg6: memref<256x4xf32, #tpu.memory_space<vmem>>) attributes {dimension_semantics = [#tpu.dimension_semantics<parallel>], iteration_bounds = array<i64: 2>, scalar_prefetch = 0 : i64, scratch_operands = 1 : i64, tpu.core_type = #tpu.core_type<tc>, window_params = [{transform_indices = @transform_0, window_bounds = array<i64: 1, 16, 4>}, {pipeline_mode = #tpu.pipeline_mode<synchronous>, transform_indices = @transform_1, window_bounds = array<i64: 20, 256>}, {pipeline_mode = #tpu.pipeline_mode<synchronous>, transform_indices = @transform_2, window_bounds = array<i64: 20, 1>}, {pipeline_mode = #tpu.pipeline_mode<synchronous>, transform_indices = @transform_3, window_bounds = array<i64: 20, 1>}, {transform_indices = @transform_4, window_bounds = array<i64: 1, 20, 4>}]} {
    %cst = arith.constant 0.000000e+00 : f32
    %0 = vector.broadcast %cst : f32 to vector<256x4xf32>
    %c0 = arith.constant 0 : index
    %c0_0 = arith.constant 0 : index
    %1 = vector.load %arg6[%c0, %c0_0] : memref<256x4xf32, #tpu.memory_space<vmem>>, vector<256x4xf32>
    tpu.vector_store %arg6[%c0, %c0_0], %0 {strides = array<i32>} : memref<256x4xf32, #tpu.memory_space<vmem>>, vector<256x4xf32>,
    %c0_1 = arith.constant 0 : index
    %c0_2 = arith.constant 0 : index
    %c0_3 = arith.constant 0 : index
    %2 = vector.load %arg1[%c0_1, %c0_2, %c0_3] : memref<1x16x4xf32, #tpu.memory_space<vmem>>, vector<1x16x1xf32>
    %3 = vector.shape_cast %2 : vector<1x16x1xf32> to vector<16x1xf32>
    %c64 = arith.constant 64 : index
    %c3 = arith.constant 3 : index
    %4 = vector.load %arg6[%c64, %c3] : memref<256x4xf32, #tpu.memory_space<vmem>>, vector<16x1xf32>
    tpu.vector_store %arg6[%c64, %c3], %3 {strides = array<i32>} : memref<256x4xf32, #tpu.memory_space<vmem>>, vector<16x1xf32>,
    %c0_4 = arith.constant 0 : index
    %c0_5 = arith.constant 0 : index
    %c0_6 = arith.constant 0 : index
    %5 = vector.load %arg1[%c0_4, %c0_5, %c0_6] : memref<1x16x4xf32, #tpu.memory_space<vmem>>, vector<1x16x2xf32>
    %6 = vector.shape_cast %5 : vector<1x16x2xf32> to vector<16x2xf32>
    %c80 = arith.constant 80 : index
    %c2 = arith.constant 2 : index
    %7 = vector.load %arg6[%c80, %c2] : memref<256x4xf32, #tpu.memory_space<vmem>>, vector<16x2xf32>
    tpu.vector_store %arg6[%c80, %c2], %6 {strides = array<i32>} : memref<256x4xf32, #tpu.memory_space<vmem>>, vector<16x2xf32>,
    %c0_7 = arith.constant 0 : index
    %c0_8 = arith.constant 0 : index
    %c0_9 = arith.constant 0 : index
    %8 = vector.load %arg1[%c0_7, %c0_8, %c0_9] : memref<1x16x4xf32, #tpu.memory_space<vmem>>, vector<1x16x3xf32>
    %9 = vector.shape_cast %8 : vector<1x16x3xf32> to vector<16x3xf32>
    %c96 = arith.constant 96 : index
    %c1 = arith.constant 1 : index
    %10 = vector.load %arg6[%c96, %c1] : memref<256x4xf32, #tpu.memory_space<vmem>>, vector<16x3xf32>
    tpu.vector_store %arg6[%c96, %c1], %9 {strides = array<i32>} : memref<256x4xf32, #tpu.memory_space<vmem>>, vector<16x3xf32>,
    %c0_10 = arith.constant 0 : index
    %c0_11 = arith.constant 0 : index
    %c0_12 = arith.constant 0 : index
    %11 = vector.load %arg1[%c0_10, %c0_11, %c0_12] : memref<1x16x4xf32, #tpu.memory_space<vmem>>, vector<1x16x4xf32>
    %12 = vector.shape_cast %11 : vector<1x16x4xf32> to vector<16x4xf32>
    %c112 = arith.constant 112 : index
    %c0_13 = arith.constant 0 : index
    %13 = vector.load %arg6[%c112, %c0_13] : memref<256x4xf32, #tpu.memory_space<vmem>>, vector<16x4xf32>
    tpu.vector_store %arg6[%c112, %c0_13], %12 {strides = array<i32>} : memref<256x4xf32, #tpu.memory_space<vmem>>, vector<16x4xf32>,
    %c0_14 = arith.constant 0 : index
    %c0_15 = arith.constant 0 : index
    %c1_16 = arith.constant 1 : index
    %14 = vector.load %arg1[%c0_14, %c0_15, %c1_16] : memref<1x16x4xf32, #tpu.memory_space<vmem>>, vector<1x16x3xf32>
    %15 = vector.shape_cast %14 : vector<1x16x3xf32> to vector<16x3xf32>
    %c128 = arith.constant 128 : index
    %c0_17 = arith.constant 0 : index
    %16 = vector.load %arg6[%c128, %c0_17] : memref<256x4xf32, #tpu.memory_space<vmem>>, vector<16x3xf32>
    tpu.vector_store %arg6[%c128, %c0_17], %15 {strides = array<i32>} : memref<256x4xf32, #tpu.memory_space<vmem>>, vector<16x3xf32>,
    %c0_18 = arith.constant 0 : index
    %c0_19 = arith.constant 0 : index
    %c2_20 = arith.constant 2 : index
    %17 = vector.load %arg1[%c0_18, %c0_19, %c2_20] : memref<1x16x4xf32, #tpu.memory_space<vmem>>, vector<1x16x2xf32>
    %18 = vector.shape_cast %17 : vector<1x16x2xf32> to vector<16x2xf32>
    %c144 = arith.constant 144 : index
    %c0_21 = arith.constant 0 : index
    %19 = vector.load %arg6[%c144, %c0_21] : memref<256x4xf32, #tpu.memory_space<vmem>>, vector<16x2xf32>
    tpu.vector_store %arg6[%c144, %c0_21], %18 {strides = array<i32>} : memref<256x4xf32, #tpu.memory_space<vmem>>, vector<16x2xf32>,
    %c0_22 = arith.constant 0 : index
    %c0_23 = arith.constant 0 : index
    %c3_24 = arith.constant 3 : index
    %20 = vector.load %arg1[%c0_22, %c0_23, %c3_24] : memref<1x16x4xf32, #tpu.memory_space<vmem>>, vector<1x16x1xf32>
    %21 = vector.shape_cast %20 : vector<1x16x1xf32> to vector<16x1xf32>
    %c160 = arith.constant 160 : index
    %c0_25 = arith.constant 0 : index
    %22 = vector.load %arg6[%c160, %c0_25] : memref<256x4xf32, #tpu.memory_space<vmem>>, vector<16x1xf32>
    tpu.vector_store %arg6[%c160, %c0_25], %21 {strides = array<i32>} : memref<256x4xf32, #tpu.memory_space<vmem>>, vector<16x1xf32>,
    %c0_26 = arith.constant 0 : index
    %c0_27 = arith.constant 0 : index
    %23 = vector.load %arg2[%c0_26, %c0_27] : memref<20x256xf32, #tpu.memory_space<vmem>>, vector<20x256xf32>
    %c0_28 = arith.constant 0 : index
    %c0_29 = arith.constant 0 : index
    %24 = vector.load %arg6[%c0_28, %c0_29] : memref<256x4xf32, #tpu.memory_space<vmem>>, vector<256x4xf32>
    %cst_30 = arith.constant dense<0.000000e+00> : vector<20x4xf32>
    %25 = tpu.matmul %23, %24, %cst_30 {dimension_numbers = #tpu.dot_dimension_numbers<[1], [0], [0], [1], [0, 0, 1, 1], [], []>} : vector<20x256xf32>, vector<256x4xf32>, vector<20x4xf32> -> vector<20x4xf32>
    %c0_31 = arith.constant 0 : index
    %c0_32 = arith.constant 0 : index
    %26 = vector.load %arg3[%c0_31, %c0_32] : memref<20x1xf32, #tpu.memory_space<vmem>>, vector<20x1xf32>
    %27 = vector.broadcast %26 : vector<20x1xf32> to vector<20x4xf32>
    %28 = arith.mulf %25, %27 : vector<20x4xf32>
    %c0_33 = arith.constant 0 : index
    %c0_34 = arith.constant 0 : index
    %29 = vector.load %arg4[%c0_33, %c0_34] : memref<20x1xf32, #tpu.memory_space<vmem>>, vector<20x1xf32>
    %30 = vector.broadcast %29 : vector<20x1xf32> to vector<20x4xf32>
    %31 = arith.addf %28, %30 : vector<20x4xf32>
    %cst_35 = arith.constant 0.000000e+00 : f32
    %32 = vector.broadcast %cst_35 : f32 to vector<20x4xf32>
    %33 = arith.maximumf %31, %32 : vector<20x4xf32>
    %c0_36 = arith.constant 0 : index
    %c0_37 = arith.constant 0 : index
    %c0_38 = arith.constant 0 : index
    %34 = vector.load %arg5[%c0_36, %c0_37, %c0_38] : memref<1x20x4xf32, #tpu.memory_space<vmem>>, vector<1x20x4xf32>
    %35 = vector.shape_cast %34 : vector<1x20x4xf32> to vector<20x4xf32>
    %36 = vector.shape_cast %33 : vector<20x4xf32> to vector<1x20x4xf32>
    tpu.vector_store %arg5[%c0_36, %c0_37, %c0_38], %36 {strides = array<i32>} : memref<1x20x4xf32, #tpu.memory_space<vmem>>, vector<1x20x4xf32>,
    return
  }
  func.func @transform_0(%arg0: i32) -> (i32, i32, i32) {
    %c0_i32 = arith.constant 0 : i32
    %c0_i32_0 = arith.constant 0 : i32
    %c0_i32_1 = arith.constant 0 : i32
    return %arg0, %c0_i32, %c0_i32_0 : i32, i32, i32
  }
  func.func @transform_1(%arg0: i32) -> (i32, i32) {
    %c0_i32 = arith.constant 0 : i32
    %c0_i32_0 = arith.constant 0 : i32
    %c0_i32_1 = arith.constant 0 : i32
    return %c0_i32, %c0_i32_0 : i32, i32
  }
  func.func @transform_2(%arg0: i32) -> (i32, i32) {
    %c0_i32 = arith.constant 0 : i32
    %c0_i32_0 = arith.constant 0 : i32
    %c0_i32_1 = arith.constant 0 : i32
    return %c0_i32, %c0_i32_0 : i32, i32
  }
  func.func @transform_3(%arg0: i32) -> (i32, i32) {
    %c0_i32 = arith.constant 0 : i32
    %c0_i32_0 = arith.constant 0 : i32
    %c0_i32_1 = arith.constant 0 : i32
    return %c0_i32, %c0_i32_0 : i32, i32
  }
  func.func @transform_4(%arg0: i32) -> (i32, i32, i32) {
    %c0_i32 = arith.constant 0 : i32
    %c0_i32_0 = arith.constant 0 : i32
    %c0_i32_1 = arith.constant 0 : i32
    return %arg0, %c0_i32, %c0_i32_0 : i32, i32, i32
  }
}

module attributes {stable_mosaic.version = 11 : i64} {
  func.func @kernel(%arg0: i32, %arg1: memref<1x64x1xf32, #tpu.memory_space<vmem>>, %arg2: memref<1x80x4xf32, #tpu.memory_space<vmem>>, %arg3: memref<20x256xf32, #tpu.memory_space<vmem>>, %arg4: memref<20x320xf32, #tpu.memory_space<vmem>>, %arg5: memref<20x1xf32, #tpu.memory_space<vmem>>, %arg6: memref<20x1xf32, #tpu.memory_space<vmem>>, %arg7: memref<1x20x1xf32, #tpu.memory_space<vmem>>, %arg8: memref<1x20x1xf32, #tpu.memory_space<vmem>>, %arg9: memref<256x1xf32, #tpu.memory_space<vmem>>, %arg10: memref<320x1xf32, #tpu.memory_space<vmem>>) attributes {dimension_semantics = [#tpu.dimension_semantics<parallel>], iteration_bounds = array<i64: 2>, scalar_prefetch = 0 : i64, scratch_operands = 2 : i64, tpu.core_type = #tpu.core_type<tc>, window_params = [{transform_indices = @transform_0, window_bounds = array<i64: 1, 64, 1>}, {transform_indices = @transform_1, window_bounds = array<i64: 1, 80, 4>}, {pipeline_mode = #tpu.pipeline_mode<synchronous>, transform_indices = @transform_2, window_bounds = array<i64: 20, 256>}, {pipeline_mode = #tpu.pipeline_mode<synchronous>, transform_indices = @transform_3, window_bounds = array<i64: 20, 320>}, {pipeline_mode = #tpu.pipeline_mode<synchronous>, transform_indices = @transform_4, window_bounds = array<i64: 20, 1>}, {pipeline_mode = #tpu.pipeline_mode<synchronous>, transform_indices = @transform_5, window_bounds = array<i64: 20, 1>}, {transform_indices = @transform_6, window_bounds = array<i64: 1, 20, 1>}, {transform_indices = @transform_7, window_bounds = array<i64: 1, 20, 1>}]} {
    %c0 = arith.constant 0 : index
    %c0_0 = arith.constant 0 : index
    %c0_1 = arith.constant 0 : index
    %0 = vector.load %arg1[%c0, %c0_0, %c0_1] : memref<1x64x1xf32, #tpu.memory_space<vmem>>, vector<1x16x1xf32>
    %1 = vector.shape_cast %0 : vector<1x16x1xf32> to vector<16x1xf32>
    %c0_2 = arith.constant 0 : index
    %c16 = arith.constant 16 : index
    %c0_3 = arith.constant 0 : index
    %2 = vector.load %arg1[%c0_2, %c16, %c0_3] : memref<1x64x1xf32, #tpu.memory_space<vmem>>, vector<1x16x1xf32>
    %3 = vector.shape_cast %2 : vector<1x16x1xf32> to vector<16x1xf32>
    %4 = arith.maximumf %1, %3 : vector<16x1xf32>
    %c0_4 = arith.constant 0 : index
    %c32 = arith.constant 32 : index
    %c0_5 = arith.constant 0 : index
    %5 = vector.load %arg1[%c0_4, %c32, %c0_5] : memref<1x64x1xf32, #tpu.memory_space<vmem>>, vector<1x16x1xf32>
    %6 = vector.shape_cast %5 : vector<1x16x1xf32> to vector<16x1xf32>
    %7 = arith.maximumf %4, %6 : vector<16x1xf32>
    %c0_6 = arith.constant 0 : index
    %c48 = arith.constant 48 : index
    %c0_7 = arith.constant 0 : index
    %8 = vector.load %arg1[%c0_6, %c48, %c0_7] : memref<1x64x1xf32, #tpu.memory_space<vmem>>, vector<1x16x1xf32>
    %9 = vector.shape_cast %8 : vector<1x16x1xf32> to vector<16x1xf32>
    %10 = arith.maximumf %7, %9 : vector<16x1xf32>
    %cst = arith.constant 0.000000e+00 : f32
    %11 = vector.broadcast %cst : f32 to vector<256x1xf32>
    %c0_8 = arith.constant 0 : index
    %c0_9 = arith.constant 0 : index
    %12 = vector.load %arg9[%c0_8, %c0_9] : memref<256x1xf32, #tpu.memory_space<vmem>>, vector<256x1xf32>
    tpu.vector_store %arg9[%c0_8, %c0_9], %11 {strides = array<i32>} : memref<256x1xf32, #tpu.memory_space<vmem>>, vector<256x1xf32>,
    %c112 = arith.constant 112 : index
    %c0_10 = arith.constant 0 : index
    %13 = vector.load %arg9[%c112, %c0_10] : memref<256x1xf32, #tpu.memory_space<vmem>>, vector<16x1xf32>
    tpu.vector_store %arg9[%c112, %c0_10], %10 {strides = array<i32>} : memref<256x1xf32, #tpu.memory_space<vmem>>, vector<16x1xf32>,
    %c0_11 = arith.constant 0 : index
    %c0_12 = arith.constant 0 : index
    %14 = vector.load %arg3[%c0_11, %c0_12] : memref<20x256xf32, #tpu.memory_space<vmem>>, vector<20x256xf32>
    %c0_13 = arith.constant 0 : index
    %c0_14 = arith.constant 0 : index
    %15 = vector.load %arg9[%c0_13, %c0_14] : memref<256x1xf32, #tpu.memory_space<vmem>>, vector<256x1xf32>
    %cst_15 = arith.constant dense<0.000000e+00> : vector<20x1xf32>
    %16 = tpu.matmul %14, %15, %cst_15 {dimension_numbers = #tpu.dot_dimension_numbers<[1], [0], [0], [1], [0, 0, 1, 1], [], []>} : vector<20x256xf32>, vector<256x1xf32>, vector<20x1xf32> -> vector<20x1xf32>
    %c0_16 = arith.constant 0 : index
    %c0_17 = arith.constant 0 : index
    %c0_18 = arith.constant 0 : index
    %17 = vector.load %arg2[%c0_16, %c0_17, %c0_18] : memref<1x80x4xf32, #tpu.memory_space<vmem>>, vector<1x80x1xf32>
    %18 = vector.shape_cast %17 : vector<1x80x1xf32> to vector<80x1xf32>
    %c0_19 = arith.constant 0 : index
    %c0_20 = arith.constant 0 : index
    %19 = vector.load %arg10[%c0_19, %c0_20] : memref<320x1xf32, #tpu.memory_space<vmem>>, vector<80x1xf32>
    tpu.vector_store %arg10[%c0_19, %c0_20], %18 {strides = array<i32>} : memref<320x1xf32, #tpu.memory_space<vmem>>, vector<80x1xf32>,
    %c0_21 = arith.constant 0 : index
    %c0_22 = arith.constant 0 : index
    %c1 = arith.constant 1 : index
    %20 = vector.load %arg2[%c0_21, %c0_22, %c1] : memref<1x80x4xf32, #tpu.memory_space<vmem>>, vector<1x80x1xf32>
    %21 = vector.shape_cast %20 : vector<1x80x1xf32> to vector<80x1xf32>
    %c80 = arith.constant 80 : index
    %c0_23 = arith.constant 0 : index
    %22 = vector.load %arg10[%c80, %c0_23] : memref<320x1xf32, #tpu.memory_space<vmem>>, vector<80x1xf32>
    tpu.vector_store %arg10[%c80, %c0_23], %21 {strides = array<i32>} : memref<320x1xf32, #tpu.memory_space<vmem>>, vector<80x1xf32>,
    %c0_24 = arith.constant 0 : index
    %c0_25 = arith.constant 0 : index
    %c2 = arith.constant 2 : index
    %23 = vector.load %arg2[%c0_24, %c0_25, %c2] : memref<1x80x4xf32, #tpu.memory_space<vmem>>, vector<1x80x1xf32>
    %24 = vector.shape_cast %23 : vector<1x80x1xf32> to vector<80x1xf32>
    %c160 = arith.constant 160 : index
    %c0_26 = arith.constant 0 : index
    %25 = vector.load %arg10[%c160, %c0_26] : memref<320x1xf32, #tpu.memory_space<vmem>>, vector<80x1xf32>
    tpu.vector_store %arg10[%c160, %c0_26], %24 {strides = array<i32>} : memref<320x1xf32, #tpu.memory_space<vmem>>, vector<80x1xf32>,
    %c0_27 = arith.constant 0 : index
    %c0_28 = arith.constant 0 : index
    %c3 = arith.constant 3 : index
    %26 = vector.load %arg2[%c0_27, %c0_28, %c3] : memref<1x80x4xf32, #tpu.memory_space<vmem>>, vector<1x80x1xf32>
    %27 = vector.shape_cast %26 : vector<1x80x1xf32> to vector<80x1xf32>
    %c240 = arith.constant 240 : index
    %c0_29 = arith.constant 0 : index
    %28 = vector.load %arg10[%c240, %c0_29] : memref<320x1xf32, #tpu.memory_space<vmem>>, vector<80x1xf32>
    tpu.vector_store %arg10[%c240, %c0_29], %27 {strides = array<i32>} : memref<320x1xf32, #tpu.memory_space<vmem>>, vector<80x1xf32>,
    %c0_30 = arith.constant 0 : index
    %c0_31 = arith.constant 0 : index
    %29 = vector.load %arg4[%c0_30, %c0_31] : memref<20x320xf32, #tpu.memory_space<vmem>>, vector<20x320xf32>
    %c0_32 = arith.constant 0 : index
    %c0_33 = arith.constant 0 : index
    %30 = vector.load %arg10[%c0_32, %c0_33] : memref<320x1xf32, #tpu.memory_space<vmem>>, vector<320x1xf32>
    %cst_34 = arith.constant dense<0.000000e+00> : vector<20x1xf32>
    %31 = tpu.matmul %29, %30, %cst_34 {dimension_numbers = #tpu.dot_dimension_numbers<[1], [0], [0], [1], [0, 0, 1, 1], [], []>} : vector<20x320xf32>, vector<320x1xf32>, vector<20x1xf32> -> vector<20x1xf32>
    %32 = arith.addf %31, %16 : vector<20x1xf32>
    %c0_35 = arith.constant 0 : index
    %c0_36 = arith.constant 0 : index
    %33 = vector.load %arg5[%c0_35, %c0_36] : memref<20x1xf32, #tpu.memory_space<vmem>>, vector<20x1xf32>
    %34 = arith.mulf %32, %33 : vector<20x1xf32>
    %c0_37 = arith.constant 0 : index
    %c0_38 = arith.constant 0 : index
    %35 = vector.load %arg6[%c0_37, %c0_38] : memref<20x1xf32, #tpu.memory_space<vmem>>, vector<20x1xf32>
    %36 = arith.addf %34, %35 : vector<20x1xf32>
    %cst_39 = arith.constant 0.000000e+00 : f32
    %37 = vector.broadcast %cst_39 : f32 to vector<20x1xf32>
    %38 = arith.maximumf %36, %37 : vector<20x1xf32>
    %c0_40 = arith.constant 0 : index
    %c0_41 = arith.constant 0 : index
    %c0_42 = arith.constant 0 : index
    %39 = vector.load %arg7[%c0_40, %c0_41, %c0_42] : memref<1x20x1xf32, #tpu.memory_space<vmem>>, vector<1x20x1xf32>
    %40 = vector.shape_cast %39 : vector<1x20x1xf32> to vector<20x1xf32>
    %41 = vector.shape_cast %38 : vector<20x1xf32> to vector<1x20x1xf32>
    tpu.vector_store %arg7[%c0_40, %c0_41, %c0_42], %41 {strides = array<i32>} : memref<1x20x1xf32, #tpu.memory_space<vmem>>, vector<1x20x1xf32>,
    %c0_43 = arith.constant 0 : index
    %c0_44 = arith.constant 0 : index
    %c0_45 = arith.constant 0 : index
    %42 = vector.load %arg8[%c0_43, %c0_44, %c0_45] : memref<1x20x1xf32, #tpu.memory_space<vmem>>, vector<1x20x1xf32>
    %43 = vector.shape_cast %42 : vector<1x20x1xf32> to vector<20x1xf32>
    %44 = vector.shape_cast %31 : vector<20x1xf32> to vector<1x20x1xf32>
    tpu.vector_store %arg8[%c0_43, %c0_44, %c0_45], %44 {strides = array<i32>} : memref<1x20x1xf32, #tpu.memory_space<vmem>>, vector<1x20x1xf32>,
    return
  }
  func.func @transform_0(%arg0: i32) -> (i32, i32, i32) {
    %c0_i32 = arith.constant 0 : i32
    %c0_i32_0 = arith.constant 0 : i32
    %c0_i32_1 = arith.constant 0 : i32
    return %arg0, %c0_i32, %c0_i32_0 : i32, i32, i32
  }
  func.func @transform_1(%arg0: i32) -> (i32, i32, i32) {
    %c0_i32 = arith.constant 0 : i32
    %c0_i32_0 = arith.constant 0 : i32
    %c0_i32_1 = arith.constant 0 : i32
    return %arg0, %c0_i32, %c0_i32_0 : i32, i32, i32
  }
  func.func @transform_2(%arg0: i32) -> (i32, i32) {
    %c0_i32 = arith.constant 0 : i32
    %c0_i32_0 = arith.constant 0 : i32
    %c0_i32_1 = arith.constant 0 : i32
    return %c0_i32, %c0_i32_0 : i32, i32
  }
  func.func @transform_3(%arg0: i32) -> (i32, i32) {
    %c0_i32 = arith.constant 0 : i32
    %c0_i32_0 = arith.constant 0 : i32
    %c0_i32_1 = arith.constant 0 : i32
    return %c0_i32, %c0_i32_0 : i32, i32
  }
  func.func @transform_4(%arg0: i32) -> (i32, i32) {
    %c0_i32 = arith.constant 0 : i32
    %c0_i32_0 = arith.constant 0 : i32
    %c0_i32_1 = arith.constant 0 : i32
    return %c0_i32, %c0_i32_0 : i32, i32
  }
  func.func @transform_5(%arg0: i32) -> (i32, i32) {
    %c0_i32 = arith.constant 0 : i32
    %c0_i32_0 = arith.constant 0 : i32
    %c0_i32_1 = arith.constant 0 : i32
    return %c0_i32, %c0_i32_0 : i32, i32
  }
  func.func @transform_6(%arg0: i32) -> (i32, i32, i32) {
    %c0_i32 = arith.constant 0 : i32
    %c0_i32_0 = arith.constant 0 : i32
    %c0_i32_1 = arith.constant 0 : i32
    return %arg0, %c0_i32, %c0_i32_0 : i32, i32, i32
  }
  func.func @transform_7(%arg0: i32) -> (i32, i32, i32) {
    %c0_i32 = arith.constant 0 : i32
    %c0_i32_0 = arith.constant 0 : i32
    %c0_i32_1 = arith.constant 0 : i32
    return %arg0, %c0_i32, %c0_i32_0 : i32, i32, i32
  }
}

module attributes {stable_mosaic.version = 11 : i64} {
  func.func @_linear_kernel(%arg0: i32, %arg1: memref<2x20xf32, #tpu.memory_space<vmem>>, %arg2: memref<20x10xf32, #tpu.memory_space<vmem>>, %arg3: memref<1x10xf32, #tpu.memory_space<vmem>>, %arg4: memref<2x10xf32, #tpu.memory_space<vmem>>) attributes {dimension_semantics = [#tpu.dimension_semantics<arbitrary>], iteration_bounds = array<i64: 1>, scalar_prefetch = 0 : i64, scratch_operands = 0 : i64, tpu.core_type = #tpu.core_type<tc>, window_params = [{pipeline_mode = #tpu.pipeline_mode<synchronous>, transform_indices = @transform_0, window_bounds = array<i64: 2, 20>}, {pipeline_mode = #tpu.pipeline_mode<synchronous>, transform_indices = @transform_1, window_bounds = array<i64: 20, 10>}, {pipeline_mode = #tpu.pipeline_mode<synchronous>, transform_indices = @transform_2, window_bounds = array<i64: 1, 10>}, {pipeline_mode = #tpu.pipeline_mode<synchronous>, transform_indices = @transform_3, window_bounds = array<i64: 2, 10>}]} {
    %c0 = arith.constant 0 : index
    %c0_0 = arith.constant 0 : index
    %0 = vector.load %arg1[%c0, %c0_0] : memref<2x20xf32, #tpu.memory_space<vmem>>, vector<2x20xf32>
    %c0_1 = arith.constant 0 : index
    %c0_2 = arith.constant 0 : index
    %1 = vector.load %arg2[%c0_1, %c0_2] : memref<20x10xf32, #tpu.memory_space<vmem>>, vector<20x10xf32>
    %cst = arith.constant dense<0.000000e+00> : vector<2x10xf32>
    %2 = tpu.matmul %0, %1, %cst {dimension_numbers = #tpu.dot_dimension_numbers<[1], [0], [0], [1], [0, 0, 1, 1], [], []>} : vector<2x20xf32>, vector<20x10xf32>, vector<2x10xf32> -> vector<2x10xf32>
    %c0_3 = arith.constant 0 : index
    %c0_4 = arith.constant 0 : index
    %3 = vector.load %arg3[%c0_3, %c0_4] : memref<1x10xf32, #tpu.memory_space<vmem>>, vector<1x10xf32>
    %4 = vector.broadcast %3 : vector<1x10xf32> to vector<2x10xf32>
    %5 = arith.addf %2, %4 : vector<2x10xf32>
    %c0_5 = arith.constant 0 : index
    %c0_6 = arith.constant 0 : index
    %6 = vector.load %arg4[%c0_5, %c0_6] : memref<2x10xf32, #tpu.memory_space<vmem>>, vector<2x10xf32>
    tpu.vector_store %arg4[%c0_5, %c0_6], %5 {strides = array<i32>} : memref<2x10xf32, #tpu.memory_space<vmem>>, vector<2x10xf32>,
    return
  }
  func.func @transform_0(%arg0: i32) -> (i32, i32) {
    %c0_i32 = arith.constant 0 : i32
    %c0_i32_0 = arith.constant 0 : i32
    %c0_i32_1 = arith.constant 0 : i32
    return %c0_i32, %c0_i32_0 : i32, i32
  }
  func.func @transform_1(%arg0: i32) -> (i32, i32) {
    %c0_i32 = arith.constant 0 : i32
    %c0_i32_0 = arith.constant 0 : i32
    %c0_i32_1 = arith.constant 0 : i32
    return %c0_i32, %c0_i32_0 : i32, i32
  }
  func.func @transform_2(%arg0: i32) -> (i32, i32) {
    %c0_i32 = arith.constant 0 : i32
    %c0_i32_0 = arith.constant 0 : i32
    %c0_i32_1 = arith.constant 0 : i32
    return %c0_i32, %c0_i32_0 : i32, i32
  }
  func.func @transform_3(%arg0: i32) -> (i32, i32) {
    %c0_i32 = arith.constant 0 : i32
    %c0_i32_0 = arith.constant 0 : i32
    %c0_i32_1 = arith.constant 0 : i32
    return %c0_i32, %c0_i32_0 : i32, i32
  }
}

</mosaic_0001>

<llo_original>
// kernel: resnet_forward.11
$region0: #{resnet_forward.11}
  #allocation0 [shape = 'u32[]', space=smem, size = 0x4, offset = 0x4, fixed_abs, tag = 'smem constant byte address 0x4 - core index']
  #allocation1 [shape = 'u32[144,128]{1,0:T(1,128)}', space=vmem, size = 0x12000, scoped, tag = 'internal scratch']
  #allocation2 [shape = 'f32[128,256]{1,0:T(8,128)}', space=vmem, size = 0x20000, scoped, tag = 'scratch operand']
  %s0 = inlined_call_operand.vmem [shape: f32[2,4,256], index: 0, kind: input, shape index: {}]
  %s1 = inlined_call_operand.vmem [shape: f32[8,128], index: 1, kind: input, shape index: {}]
  %s2 = inlined_call_operand.vmem [shape: f32[8,1], index: 2, kind: input, shape index: {}]
  %s3 = inlined_call_operand.vmem [shape: f32[8,1], index: 3, kind: input, shape index: {}]
  %s4 = inlined_call_operand.vmem [shape: f32[2,8,256], index: 4, kind: output, shape index: {}]
  %s5 = sld [smem:[#allocation0]]
  $region49: #{resnet_forward.11} parent=0
    _
  %s7 = ssub.s32 1, %s5
  %s8 = scalar_select 0, %s7, %s5
  loop: start=0, step=1, limit=4
  $region2: #{resnet_forward.11} parent=0 // loop_pre_header
    _
  $region3: #{resnet_forward.11} parent=0 // loop_header
    %s10 = sphi 0, %s14
    %p11 = scmp.ge.s32.totalorder %s10, 4
    %s20 = sphi 0, %s22
    %s23 = sphi 0, %s20
    %s24 = sphi 0, %s23
    %s40 = sphi 0, %s24
    %s44 = sphi 0, %s44
    %s46 = sphi 0, %s44
    %s47 = sphi 0, %s46
    %s61 = sphi 0, %s47
    %s65 = sphi 0, %s65
    %s67 = sphi 0, %s65
    %s68 = sphi 0, %s67
    %s82 = sphi 0, %s68
    %s86 = sphi 0, %s86
    %s88 = sphi 0, %s86
    %s89 = sphi 0, %s88
    %s103 = sphi 0, %s89
    %s109 = sphi 0, %s111
    %s112 = sphi 0, %s109
    %s113 = sphi 0, %s112
    %s129 = sphi 0, %s113
  $region4: #{resnet_forward.11} parent=0 // loop_header_branch
    %13 = sbr.rel (%p11) target = $region8
  $region5: #{resnet_forward.11} parent=0 // loop_body
    %s15 = ssub.s32 %s10, 1
    %s16 = ssub.s32 %s10, 2
    %s17 = sadd.s32 %s10, 1
    %s18 = ssub.s32 %s10, %s17
    %p19 = scmp.eq.s32.totalorder %s18, 0
    %s21 = sadd.s32 %s20, 1
    %s22 = scalar_select %p19, %s20, %s21
    %p25 = pneg %p19
    %p26 = scmp.eq.s32.totalorder %s10, 1
    %p27 = por %p25, %p26
    %p28 = scmp.ne.s32.totalorder %s20, %s23
    %p29 = scmp.eq.s32.totalorder %s10, 0
    %p30 = por %p28, %p29
    %p31 = scmp.ne.s32.totalorder %s20, %s23
    %p32 = scmp.eq.s32.totalorder %s15, 1
    %p33 = por %p31, %p32
    %p34 = scmp.ne.s32.totalorder %s23, %s24
    %p35 = scmp.eq.s32.totalorder %s15, 0
    %p36 = por %p34, %p35
    %p37 = scmp.ne.s32.totalorder %s23, %s24
    %p38 = scmp.eq.s32.totalorder %s16, 1
    %p39 = por %p37, %p38
    %p41 = scmp.ne.s32.totalorder %s24, %s40
    %p42 = scmp.eq.s32.totalorder %s16, 0
    %p43 = por %p41, %p42
    %s45 = sadd.s32 %s44, 1
    %p48 = scmp.eq.s32.totalorder %s10, 1
    %p49 = scmp.ne.s32.totalorder %s44, %s46
    %p50 = scmp.eq.s32.totalorder %s10, 0
    %p51 = por %p49, %p50
    %p52 = scmp.ne.s32.totalorder %s44, %s46
    %p53 = scmp.eq.s32.totalorder %s15, 1
    %p54 = por %p52, %p53
    %p55 = scmp.ne.s32.totalorder %s46, %s47
    %p56 = scmp.eq.s32.totalorder %s15, 0
    %p57 = por %p55, %p56
    %p58 = scmp.ne.s32.totalorder %s46, %s47
    %p59 = scmp.eq.s32.totalorder %s16, 1
    %p60 = por %p58, %p59
    %p62 = scmp.ne.s32.totalorder %s47, %s61
    %p63 = scmp.eq.s32.totalorder %s16, 0
    %p64 = por %p62, %p63
    %s66 = sadd.s32 %s65, 1
    %p69 = scmp.eq.s32.totalorder %s10, 1
    %p70 = scmp.ne.s32.totalorder %s65, %s67
    %p71 = scmp.eq.s32.totalorder %s10, 0
    %p72 = por %p70, %p71
    %p73 = scmp.ne.s32.totalorder %s65, %s67
    %p74 = scmp.eq.s32.totalorder %s15, 1
    %p75 = por %p73, %p74
    %p76 = scmp.ne.s32.totalorder %s67, %s68
    %p77 = scmp.eq.s32.totalorder %s15, 0
    %p78 = por %p76, %p77
    %p79 = scmp.ne.s32.totalorder %s67, %s68
    %p80 = scmp.eq.s32.totalorder %s16, 1
    %p81 = por %p79, %p80
    %p83 = scmp.ne.s32.totalorder %s68, %s82
    %p84 = scmp.eq.s32.totalorder %s16, 0
    %p85 = por %p83, %p84
    %s87 = sadd.s32 %s86, 1
    %p90 = scmp.eq.s32.totalorder %s10, 1
    %p91 = scmp.ne.s32.totalorder %s86, %s88
    %p92 = scmp.eq.s32.totalorder %s10, 0
    %p93 = por %p91, %p92
    %p94 = scmp.ne.s32.totalorder %s86, %s88
    %p95 = scmp.eq.s32.totalorder %s15, 1
    %p96 = por %p94, %p95
    %p97 = scmp.ne.s32.totalorder %s88, %s89
    %p98 = scmp.eq.s32.totalorder %s15, 0
    %p99 = por %p97, %p98
    %p100 = scmp.ne.s32.totalorder %s88, %s89
    %p101 = scmp.eq.s32.totalorder %s16, 1
    %p102 = por %p100, %p101
    %p104 = scmp.ne.s32.totalorder %s89, %s103
    %p105 = scmp.eq.s32.totalorder %s16, 0
    %p106 = por %p104, %p105
    %s107 = ssub.s32 %s10, %s17
    %p108 = scmp.eq.s32.totalorder %s107, 0
    %s110 = sadd.s32 %s109, 1
    %s111 = scalar_select %p108, %s109, %s110
    %p114 = pneg %p108
    %p115 = scmp.eq.s32.totalorder %s10, 1
    %p116 = por %p114, %p115
    %p117 = scmp.ne.s32.totalorder %s109, %s112
    %p118 = scmp.eq.s32.totalorder %s10, 0
    %p119 = por %p117, %p118
    %p120 = scmp.ne.s32.totalorder %s109, %s112
    %p121 = scmp.eq.s32.totalorder %s15, 1
    %p122 = por %p120, %p121
    %p123 = scmp.ne.s32.totalorder %s112, %s113
    %p124 = scmp.eq.s32.totalorder %s15, 0
    %p125 = por %p123, %p124
    %p126 = scmp.ne.s32.totalorder %s112, %s113
    %p127 = scmp.eq.s32.totalorder %s16, 1
    %p128 = por %p126, %p127
    %p130 = scmp.ne.s32.totalorder %s113, %s129
    %p131 = scmp.eq.s32.totalorder %s16, 0
    %p132 = por %p130, %p131
    %p133 = scmp.le.s32.totalorder 1, %s10
    %p134 = scmp.lt.s32.totalorder %s10, 3
    %p135 = pnand %p133, %p134
    %p136 = pneg %p135
    // Predicated region
    $region9: #{resnet_forward.11} parent=5 // pred_check
      _
    $region10: #{resnet_forward.11} parent=5 // pred_check_branch
      %138 = sbr.rel (%p135) target = $region12
    $region11: #{resnet_forward.11} parent=5 // pred_region
      %s139 = ssub.s32 %s10, 1
      // Predicated region
      $region13: #{resnet_forward.11} parent=11 // pred_check
        %p140 = pneg %p57
      $region14: #{resnet_forward.11} parent=11 // pred_check_branch
        %142 = sbr.rel (%p140) target = $region16
      $region15: #{resnet_forward.11} parent=11 // pred_region
        _
      $region16: #{resnet_forward.11} parent=11 // pred_fallthru
        _
      // Predicated region
      $region17: #{resnet_forward.11} parent=11 // pred_check
        %p143 = pneg %p78
      $region18: #{resnet_forward.11} parent=11 // pred_check_branch
        %145 = sbr.rel (%p143) target = $region20
      $region19: #{resnet_forward.11} parent=11 // pred_region
        _
      $region20: #{resnet_forward.11} parent=11 // pred_fallthru
        _
      // Predicated region
      $region21: #{resnet_forward.11} parent=11 // pred_check
        %p146 = pneg %p99
      $region22: #{resnet_forward.11} parent=11 // pred_check_branch
        %148 = sbr.rel (%p146) target = $region24
      $region23: #{resnet_forward.11} parent=11 // pred_region
        _
      $region24: #{resnet_forward.11} parent=11 // pred_fallthru
        _
    $region12: #{resnet_forward.11} parent=5 // pred_fallthru
      _
    %p149 = scmp.lt.s32.totalorder %s10, 2
    // Predicated region
    $region25: #{resnet_forward.11} parent=5 // pred_check
      %p150 = pneg %p149
    $region26: #{resnet_forward.11} parent=5 // pred_check_branch
      %152 = sbr.rel (%p150) target = $region28
    $region27: #{resnet_forward.11} parent=5 // pred_region
      // Predicated region
      $region29: #{resnet_forward.11} parent=27 // pred_check
        %p153 = pneg %p30
      $region30: #{resnet_forward.11} parent=27 // pred_check_branch
        %155 = sbr.rel (%p153) target = $region32
      $region31: #{resnet_forward.11} parent=27 // pred_region
        %p156 = scmp.lt.s32.totalorder %s10, 1
        %s157 = scalar_select %p156, %s10, 1
        %s158 = smul.addr %s157, 2
        %s159 = smul.addr %s158, 4
        %s160 = scalar_lea.vmem %s0, %s159
      $region32: #{resnet_forward.11} parent=27 // pred_fallthru
        _
    $region28: #{resnet_forward.11} parent=5 // pred_fallthru
      _
    %p161 = scmp.le.s32.totalorder 1, %s10
    %p162 = scmp.lt.s32.totalorder %s10, 3
    %p163 = pnand %p161, %p162
    %p164 = pneg %p163
    // Predicated region
    $region33: #{resnet_forward.11} parent=5 // pred_check
      _
    $region34: #{resnet_forward.11} parent=5 // pred_check_branch
      %166 = sbr.rel (%p163) target = $region36
    $region35: #{resnet_forward.11} parent=5 // pred_region
      %s167 = ssub.s32 %s10, 1
      %p168 = scmp.lt.s32.totalorder %s15, 1
      %s169 = scalar_select %p168, %s15, 1
      %s170 = smul.addr %s169, 2
      %s171 = smul.addr %s170, 4
      %s172 = scalar_lea.vmem %s0, %s171
      %p173 = pneg %p36
      %p174 = pneg %p33
      %p175 = pneg %p57
      %p176 = pneg %p54
      %p177 = pneg %p78
      %p178 = pneg %p75
      %p179 = pneg %p99
      %p180 = pneg %p96
      %p181 = pneg %p125
      %p182 = pneg %p122
      %p183 = scmp.lt.s32.totalorder %s15, 1
      %s184 = scalar_select %p183, %s15, 1
      %s185 = smul.addr %s184, 2
      %s186 = smul.addr %s185, 8
      %s187 = scalar_lea.vmem %s4, %s186
      %p188 = scmp.lt.s32.totalorder %s15, 1
      %s189 = scalar_select %p188, %s15, 1
      %s190 = smul.addr %s189, 2
      %s191 = smul.addr %s190, 4
      %s192 = scalar_lea.vmem %s0, %s191
      %p193 = scmp.lt.s32.totalorder %s15, 1
      %s194 = scalar_select %p193, %s15, 1
      %s195 = smul.addr %s194, 2
      %s196 = smul.addr %s195, 8
      %s197 = scalar_lea.vmem %s4, %s196
      %198 = vst [vmem:[#allocation2] sm:$0xff] 0.0
      %199 = vst [vmem:[#allocation2 + $0x8] sm:$0xff] 0.0
      %200 = vst [vmem:[#allocation2 + $0x10] sm:$0xff] 0.0
      %201 = vst [vmem:[#allocation2 + $0x18] sm:$0xff] 0.0
      %202 = vst [vmem:[#allocation2 + $0x20] sm:$0xff] 0.0
      %203 = vst [vmem:[#allocation2 + $0x28] sm:$0xff] 0.0
      %204 = vst [vmem:[#allocation2 + $0x30] sm:$0xff] 0.0
      %205 = vst [vmem:[#allocation2 + $0x38] sm:$0xff] 0.0
      %206 = vst [vmem:[#allocation2 + $0x40] sm:$0xff] 0.0
      %207 = vst [vmem:[#allocation2 + $0x48] sm:$0xff] 0.0
      %208 = vst [vmem:[#allocation2 + $0x50] sm:$0xff] 0.0
      %209 = vst [vmem:[#allocation2 + $0x58] sm:$0xff] 0.0
      %210 = vst [vmem:[#allocation2 + $0x60] sm:$0xff] 0.0
      %211 = vst [vmem:[#allocation2 + $0x68] sm:$0xff] 0.0
      %212 = vst [vmem:[#allocation2 + $0x70] sm:$0xff] 0.0
      %213 = vst [vmem:[#allocation2 + $0x78] sm:$0xff] 0.0
      %214 = vst [vmem:[#allocation2 + $0x80] sm:$0xff] 0.0
      %215 = vst [vmem:[#allocation2 + $0x88] sm:$0xff] 0.0
      %216 = vst [vmem:[#allocation2 + $0x90] sm:$0xff] 0.0
      %217 = vst [vmem:[#allocation2 + $0x98] sm:$0xff] 0.0
      %218 = vst [vmem:[#allocation2 + $0xa0] sm:$0xff] 0.0
      %219 = vst [vmem:[#allocation2 + $0xa8] sm:$0xff] 0.0
      %220 = vst [vmem:[#allocation2 + $0xb0] sm:$0xff] 0.0
      %221 = vst [vmem:[#allocation2 + $0xb8] sm:$0xff] 0.0
      %222 = vst [vmem:[#allocation2 + $0xc0] sm:$0xff] 0.0
      %223 = vst [vmem:[#allocation2 + $0xc8] sm:$0xff] 0.0
      %224 = vst [vmem:[#allocation2 + $0xd0] sm:$0xff] 0.0
      %225 = vst [vmem:[#allocation2 + $0xd8] sm:$0xff] 0.0
      %226 = vst [vmem:[#allocation2 + $0xe0] sm:$0xff] 0.0
      %227 = vst [vmem:[#allocation2 + $0xe8] sm:$0xff] 0.0
      %228 = vst [vmem:[#allocation2 + $0xf0] sm:$0xff] 0.0
      %229 = vst [vmem:[#allocation2 + $0xf8] sm:$0xff] 0.0
      %v230 = vld [vmem:[%s192] sm:$0xff]
      %v232 = vcombine.high %v230, %v230
      %233 = vrot.lane.b32.xlu0 %v230, 7
      %v234 = vpop.permute.xlu0 %233
      %235 = vrot.lane.b32.xlu0 %v232, 7
      %v236 = vpop.permute.xlu0 %235
      %vm237 = vcmask 56320
      %v238 = vsel %vm237, %v234, %v236
      %vm241 = vcmask 1043512
      %242 = vst.msk [vmem:[#allocation2] sm:$0xf] %vm241, %v234
      %243 = vst [vmem:[#allocation2 + $0x8] sm:$0xf] %v238
      %v244 = vld [vmem:[%s192] sm:$0xff]
      %v246 = vcombine.high %v244, %v244
      %247 = vrot.lane.b32.xlu0 %v244, 6
      %v248 = vpop.permute.xlu0 %247
      %249 = vrot.lane.b32.xlu0 %v246, 6
      %v250 = vpop.permute.xlu0 %249
      %vm251 = vcmask 48128
      %v252 = vsel %vm251, %v248, %v250
      %vm255 = vcmask 1043504
      %256 = vst.msk [vmem:[#allocation2 + $0x10] sm:$0xf] %vm255, %v248
      %257 = vst [vmem:[#allocation2 + $0x18] sm:$0xf] %v252
      %v258 = vld [vmem:[%s192] sm:$0xff]
      %v260 = vcombine.high %v258, %v258
      %261 = vrot.lane.b32.xlu0 %v258, 5
      %v262 = vpop.permute.xlu0 %261
      %263 = vrot.lane.b32.xlu0 %v260, 5
      %v264 = vpop.permute.xlu0 %263
      %vm265 = vcmask 39936
      %v266 = vsel %vm265, %v262, %v264
      %vm269 = vcmask 1043496
      %270 = vst.msk [vmem:[#allocation2 + $0x20] sm:$0xf] %vm269, %v262
      %271 = vst [vmem:[#allocation2 + $0x28] sm:$0xf] %v266
      %v272 = vld [vmem:[%s192] sm:$0xff]
      %v274 = vcombine.high %v272, %v272
      %275 = vrot.lane.b32.xlu0 %v272, 4
      %v276 = vpop.permute.xlu0 %275
      %277 = vrot.lane.b32.xlu0 %v274, 4
      %v278 = vpop.permute.xlu0 %277
      %vm279 = vcmask 31744
      %v280 = vsel %vm279, %v276, %v278
      %vm283 = vcmask 1043488
      %284 = vst.msk [vmem:[#allocation2 + $0x30] sm:$0xf] %vm283, %v276
      %285 = vst [vmem:[#allocation2 + $0x38] sm:$0xf] %v280
      %v286 = vld [vmem:[%s192] sm:$0xff]
      %v288 = vcombine.high %v286, %v286
      %289 = vrot.lane.b32.xlu0 %v286, 3
      %v290 = vpop.permute.xlu0 %289
      %291 = vrot.lane.b32.xlu0 %v288, 3
      %v292 = vpop.permute.xlu0 %291
      %vm293 = vcmask 23552
      %v294 = vsel %vm293, %v290, %v292
      %vm297 = vcmask 1043480
      %298 = vst.msk [vmem:[#allocation2 + $0x40] sm:$0xf] %vm297, %v290
      %299 = vst [vmem:[#allocation2 + $0x48] sm:$0xf] %v294
      %v300 = vld [vmem:[%s192] sm:$0xff]
      %v302 = vcombine.high %v300, %v300
      %303 = vrot.lane.b32.xlu0 %v300, 2
      %v304 = vpop.permute.xlu0 %303
      %305 = vrot.lane.b32.xlu0 %v302, 2
      %v306 = vpop.permute.xlu0 %305
      %vm307 = vcmask 15360
      %v308 = vsel %vm307, %v304, %v306
      %vm311 = vcmask 1043472
      %312 = vst.msk [vmem:[#allocation2 + $0x50] sm:$0xf] %vm311, %v304
      %313 = vst [vmem:[#allocation2 + $0x58] sm:$0xf] %v308
      %v314 = vld [vmem:[%s192] sm:$0xff]
      %v316 = vcombine.high %v314, %v314
      %317 = vrot.lane.b32.xlu0 %v314, 1
      %v318 = vpop.permute.xlu0 %317
      %319 = vrot.lane.b32.xlu0 %v316, 1
      %v320 = vpop.permute.xlu0 %319
      %vm321 = vcmask 7168
      %v322 = vsel %vm321, %v318, %v320
      %vm325 = vcmask 1043464
      %326 = vst.msk [vmem:[#allocation2 + $0x60] sm:$0xf] %vm325, %v318
      %327 = vst [vmem:[#allocation2 + $0x68] sm:$0xf] %v322
      %v328 = vld [vmem:[%s192] sm:$0xff]
      %v330 = vcombine.high %v328, %v328
      %332 = vst [vmem:[#allocation2 + $0x70] sm:$0xf] %v328
      %333 = vst [vmem:[#allocation2 + $0x78] sm:$0xf] %v330
      %v334 = vld [vmem:[%s192] sm:$0xff]
      %v336 = vcombine.high %v334, %v334
      %337 = vrot.lane.b32.xlu0 %v334, 127
      %v338 = vpop.permute.xlu0 %337
      %339 = vrot.lane.b32.xlu0 %v336, 127
      %v340 = vpop.permute.xlu0 %339
      %vm341 = vcmask 1039360
      %v342 = vsel %vm341, %v338, %v340
      %345 = vst [vmem:[#allocation2 + $0x80] sm:$0xf] %v342
      %vm346 = vcmask 1035264
      %347 = vst.msk [vmem:[#allocation2 + $0x88] sm:$0xf] %vm346, %v340
      %v348 = vld [vmem:[%s192] sm:$0xff]
      %v350 = vcombine.high %v348, %v348
      %351 = vrot.lane.b32.xlu0 %v348, 126
      %v352 = vpop.permute.xlu0 %351
      %353 = vrot.lane.b32.xlu0 %v350, 126
      %v354 = vpop.permute.xlu0 %353
      %vm355 = vcmask 1031168
      %v356 = vsel %vm355, %v352, %v354
      %359 = vst [vmem:[#allocation2 + $0x90] sm:$0xf] %v356
      %vm360 = vcmask 1027072
      %361 = vst.msk [vmem:[#allocation2 + $0x98] sm:$0xf] %vm360, %v354
      %v362 = vld [vmem:[%s192] sm:$0xff]
      %v364 = vcombine.high %v362, %v362
      %365 = vrot.lane.b32.xlu0 %v362, 125
      %v366 = vpop.permute.xlu0 %365
      %367 = vrot.lane.b32.xlu0 %v364, 125
      %v368 = vpop.permute.xlu0 %367
      %vm369 = vcmask 1022976
      %v370 = vsel %vm369, %v366, %v368
      %373 = vst [vmem:[#allocation2 + $0xa0] sm:$0xf] %v370
      %vm374 = vcmask 1018880
      %375 = vst.msk [vmem:[#allocation2 + $0xa8] sm:$0xf] %vm374, %v368
      %v376 = vld [vmem:[%s192] sm:$0xff]
      %v378 = vcombine.high %v376, %v376
      %379 = vrot.lane.b32.xlu0 %v376, 124
      %v380 = vpop.permute.xlu0 %379
      %381 = vrot.lane.b32.xlu0 %v378, 124
      %v382 = vpop.permute.xlu0 %381
      %vm383 = vcmask 1014784
      %v384 = vsel %vm383, %v380, %v382
      %387 = vst [vmem:[#allocation2 + $0xb0] sm:$0xf] %v384
      %vm388 = vcmask 1010688
      %389 = vst.msk [vmem:[#allocation2 + $0xb8] sm:$0xf] %vm388, %v382
      %v390 = vld [vmem:[%s192] sm:$0xff]
      %v392 = vcombine.high %v390, %v390
      %393 = vrot.lane.b32.xlu0 %v390, 123
      %v394 = vpop.permute.xlu0 %393
      %395 = vrot.lane.b32.xlu0 %v392, 123
      %v396 = vpop.permute.xlu0 %395
      %vm397 = vcmask 1006592
      %v398 = vsel %vm397, %v394, %v396
      %401 = vst [vmem:[#allocation2 + $0xc0] sm:$0xf] %v398
      %vm402 = vcmask 1002496
      %403 = vst.msk [vmem:[#allocation2 + $0xc8] sm:$0xf] %vm402, %v396
      %v404 = vld [vmem:[%s192] sm:$0xff]
      %v406 = vcombine.high %v404, %v404
      %407 = vrot.lane.b32.xlu0 %v404, 122
      %v408 = vpop.permute.xlu0 %407
      %409 = vrot.lane.b32.xlu0 %v406, 122
      %v410 = vpop.permute.xlu0 %409
      %vm411 = vcmask 998400
      %v412 = vsel %vm411, %v408, %v410
      %415 = vst [vmem:[#allocation2 + $0xd0] sm:$0xf] %v412
      %vm416 = vcmask 994304
      %417 = vst.msk [vmem:[#allocation2 + $0xd8] sm:$0xf] %vm416, %v410
      %v418 = vld [vmem:[%s192] sm:$0xff]
      %v420 = vcombine.high %v418, %v418
      %421 = vrot.lane.b32.xlu0 %v418, 121
      %v422 = vpop.permute.xlu0 %421
      %423 = vrot.lane.b32.xlu0 %v420, 121
      %v424 = vpop.permute.xlu0 %423
      %vm425 = vcmask 990208
      %v426 = vsel %vm425, %v422, %v424
      %429 = vst [vmem:[#allocation2 + $0xe0] sm:$0xf] %v426
      %vm430 = vcmask 986112
      %431 = vst.msk [vmem:[#allocation2 + $0xe8] sm:$0xf] %vm430, %v424
      %v432 = vld [vmem:[%s192] sm:$0xff]
      %v434 = vcombine.high %v432, %v432
      %435 = vrot.lane.b32.xlu0 %v432, 120
      %v436 = vpop.permute.xlu0 %435
      %437 = vrot.lane.b32.xlu0 %v434, 120
      %v438 = vpop.permute.xlu0 %437
      %vm439 = vcmask 982016
      %v440 = vsel %vm439, %v436, %v438
      %443 = vst [vmem:[#allocation2 + $0xf0] sm:$0xf] %v440
      %vm444 = vcmask 977920
      %445 = vst.msk [vmem:[#allocation2 + $0xf8] sm:$0xf] %vm444, %v438
      %v446 = vld [vmem:[%s1] sm:$0xff]
      %v447 = vld [vmem:[#allocation2] sm:$0xff]
      %v448 = vld [vmem:[#allocation2 + $0x8] sm:$0xff]
      %v449 = vld [vmem:[#allocation2 + $0x10] sm:$0xff]
      %v450 = vld [vmem:[#allocation2 + $0x18] sm:$0xff]
      %v451 = vld [vmem:[#allocation2 + $0x20] sm:$0xff]
      %v452 = vld [vmem:[#allocation2 + $0x28] sm:$0xff]
      %v453 = vld [vmem:[#allocation2 + $0x30] sm:$0xff]
      %v454 = vld [vmem:[#allocation2 + $0x38] sm:$0xff]
      %v455 = vld [vmem:[#allocation2 + $0x40] sm:$0xff]
      %v456 = vld [vmem:[#allocation2 + $0x48] sm:$0xff]
      %v457 = vld [vmem:[#allocation2 + $0x50] sm:$0xff]
      %v458 = vld [vmem:[#allocation2 + $0x58] sm:$0xff]
      %v459 = vld [vmem:[#allocation2 + $0x60] sm:$0xff]
      %v460 = vld [vmem:[#allocation2 + $0x68] sm:$0xff]
      %v461 = vld [vmem:[#allocation2 + $0x70] sm:$0xff]
      %v462 = vld [vmem:[#allocation2 + $0x78] sm:$0xff]
      %v463 = vld [vmem:[#allocation2 + $0x80] sm:$0xff]
      %v464 = vld [vmem:[#allocation2 + $0x88] sm:$0xff]
      %v465 = vld [vmem:[#allocation2 + $0x90] sm:$0xff]
      %v466 = vld [vmem:[#allocation2 + $0x98] sm:$0xff]
      %v467 = vld [vmem:[#allocation2 + $0xa0] sm:$0xff]
      %v468 = vld [vmem:[#allocation2 + $0xa8] sm:$0xff]
      %v469 = vld [vmem:[#allocation2 + $0xb0] sm:$0xff]
      %v470 = vld [vmem:[#allocation2 + $0xb8] sm:$0xff]
      %v471 = vld [vmem:[#allocation2 + $0xc0] sm:$0xff]
      %v472 = vld [vmem:[#allocation2 + $0xc8] sm:$0xff]
      %v473 = vld [vmem:[#allocation2 + $0xd0] sm:$0xff]
      %v474 = vld [vmem:[#allocation2 + $0xd8] sm:$0xff]
      %v475 = vld [vmem:[#allocation2 + $0xe0] sm:$0xff]
      %v476 = vld [vmem:[#allocation2 + $0xe8] sm:$0xff]
      %v477 = vld [vmem:[#allocation2 + $0xf0] sm:$0xff]
      %v478 = vld [vmem:[#allocation2 + $0xf8] sm:$0xff]
      %479 = vmatprep.subr.mxu0 %v448
      %480 = vmatpush1.msra.mxu0 %v447
      %481 = vmatprep.subr.mxu0 %v450
      %482 = vmatpush1.msra.mxu0 %v449
      %483 = vmatprep.subr.mxu0 %v452
      %484 = vmatpush1.msra.mxu0 %v451
      %485 = vmatprep.subr.mxu0 %v454
      %486 = vmatpush1.msra.mxu0 %v453
      %487 = vmatprep.subr.mxu0 %v456
      %488 = vmatpush1.msra.mxu0 %v455
      %489 = vmatprep.subr.mxu0 %v458
      %490 = vmatpush1.msra.mxu0 %v457
      %491 = vmatprep.subr.mxu0 %v460
      %492 = vmatpush1.msra.mxu0 %v459
      %493 = vmatprep.subr.mxu0 %v462
      %494 = vmatpush1.msra.mxu0 %v461
      %495 = vmatprep.subr.mxu0 %v464
      %496 = vmatpush1.msra.mxu0 %v463
      %497 = vmatprep.subr.mxu0 %v466
      %498 = vmatpush1.msra.mxu0 %v465
      %499 = vmatprep.subr.mxu0 %v468
      %500 = vmatpush1.msra.mxu0 %v467
      %501 = vmatprep.subr.mxu0 %v470
      %502 = vmatpush1.msra.mxu0 %v469
      %503 = vmatprep.subr.mxu0 %v472
      %504 = vmatpush1.msra.mxu0 %v471
      %505 = vmatprep.subr.mxu0 %v474
      %506 = vmatpush1.msra.mxu0 %v473
      %507 = vmatprep.subr.mxu0 %v476
      %508 = vmatpush1.msra.mxu0 %v475
      %509 = vmatprep.subr.mxu0 %v478
      %510 = vmatpush1.msra.mxu0 %v477
      %511 = vmatprep.subr.mxu0 0.0
      %512 = vmatpush1.msra.mxu0 0.0
      %513 = vmatprep.subr.mxu0 0.0
      %514 = vmatpush1.msra.mxu0 0.0
      %515 = vmatprep.subr.mxu0 0.0
      %516 = vmatpush1.msra.mxu0 0.0
      %517 = vmatprep.subr.mxu0 0.0
      %518 = vmatpush1.msra.mxu0 0.0
      %519 = vmatprep.subr.mxu0 0.0
      %520 = vmatpush1.msra.mxu0 0.0
      %521 = vmatprep.subr.mxu0 0.0
      %522 = vmatpush1.msra.mxu0 0.0
      %523 = vmatprep.subr.mxu0 0.0
      %524 = vmatpush1.msra.mxu0 0.0
      %525 = vmatprep.subr.mxu0 0.0
      %526 = vmatpush1.msra.mxu0 0.0
      %527 = vmatprep.subr.mxu0 0.0
      %528 = vmatpush1.msra.mxu0 0.0
      %529 = vmatprep.subr.mxu0 0.0
      %530 = vmatpush1.msra.mxu0 0.0
      %531 = vmatprep.subr.mxu0 0.0
      %532 = vmatpush1.msra.mxu0 0.0
      %533 = vmatprep.subr.mxu0 0.0
      %534 = vmatpush1.msra.mxu0 0.0
      %535 = vmatprep.subr.mxu0 0.0
      %536 = vmatpush1.msra.mxu0 0.0
      %537 = vmatprep.subr.mxu0 0.0
      %538 = vmatpush1.msra.mxu0 0.0
      %539 = vmatprep.subr.mxu0 0.0
      %540 = vmatpush1.msra.mxu0 0.0
      %541 = vmatprep.subr.mxu0 0.0
      %542 = vmatpush1.msra.mxu0 0.0
      %543 = vmatprep.mubr.f32.mxu0 0.0
      %544 = vmatmul.mubr.f32.gmra.mrb[0].mxu0 %v446
      %v545 = vpop.f32.mrb[0].mxu0
      %v546 = vadd.f32 0.0, %v545
      %v547 = vpop.f32.mrb[0].mxu0
      %v548 = vadd.f32 0.0, %v547
      %549 = vdwg.mxu0
      %v550 = vld [vmem:[%s2] sm:$0xff]
      %552 = vset.pattern.permute.xlu0 0
      %553 = vperm.xlu0 %552, %v550
      %v554 = vpop.permute.xlu0 %553
      %v556 = vmul.f32 %v546, %v554
      %v557 = vmul.f32 %v548, %v554
      %v558 = vld [vmem:[%s3] sm:$0xff]
      %560 = vset.pattern.permute.xlu0 0
      %561 = vperm.xlu0 %560, %v558
      %v562 = vpop.permute.xlu0 %561
      %v564 = vadd.f32 %v556, %v562
      %v565 = vadd.f32 %v557, %v562
      %v566 = vmax.f32 %v564, 0.0
      %v567 = vmax.f32 %v565, 0.0
      %568 = vst [vmem:[%s197] sm:$0xff] %v566
      %569 = vst [vmem:[%s197 + $0x8] sm:$0xff] %v567
      %p570 = scmp.lt.s32.totalorder %s15, 1
      %s571 = scalar_select %p570, %s15, 1
      %s572 = smul.addr %s571, 2
      %s573 = smul.addr %s572, 8
      %s574 = scalar_lea.vmem %s4, %s573
      // Predicated region
      $region37: #{resnet_forward.11} parent=35 // pred_check
        %p575 = pneg %p122
      $region38: #{resnet_forward.11} parent=35 // pred_check_branch
        %577 = sbr.rel (%p575) target = $region40
      $region39: #{resnet_forward.11} parent=35 // pred_region
        _
      $region40: #{resnet_forward.11} parent=35 // pred_fallthru
        _
    $region36: #{resnet_forward.11} parent=5 // pred_fallthru
      _
    %p578 = scmp.le.s32.totalorder 2, %s10
    // Predicated region
    $region41: #{resnet_forward.11} parent=5 // pred_check
      %p579 = pneg %p578
    $region42: #{resnet_forward.11} parent=5 // pred_check_branch
      %581 = sbr.rel (%p579) target = $region44
    $region43: #{resnet_forward.11} parent=5 // pred_region
      %s582 = ssub.s32 %s10, 2
      // Predicated region
      $region45: #{resnet_forward.11} parent=43 // pred_check
        %p583 = pneg %p128
      $region46: #{resnet_forward.11} parent=43 // pred_check_branch
        %585 = sbr.rel (%p583) target = $region48
      $region47: #{resnet_forward.11} parent=43 // pred_region
        %p586 = scmp.lt.s32.totalorder %s16, 1
        %s587 = scalar_select %p586, %s16, 1
        %s588 = smul.addr %s587, 2
        %s589 = smul.addr %s588, 8
        %s590 = scalar_lea.vmem %s4, %s589
      $region48: #{resnet_forward.11} parent=43 // pred_fallthru
        _
    $region44: #{resnet_forward.11} parent=5 // pred_fallthru
      _
  $region6: #{resnet_forward.11} parent=0 // loop_footer
    %s14 = sadd.s32 1, %s10
  $region7: #{resnet_forward.11} parent=0 // loop_footer_branch
    %9 = sbr.rel target = $region3
  $region8: #{resnet_forward.11} parent=0 // loop_exit
    _

// kernel: resnet_forward.10
$region0: #{resnet_forward.10}
  #allocation0 [shape = 'u32[]', space=smem, size = 0x4, offset = 0x4, fixed_abs, tag = 'smem constant byte address 0x4 - core index']
  #allocation1 [shape = 'u32[144,128]{1,0:T(1,128)}', space=vmem, size = 0x12000, scoped, tag = 'internal scratch']
  #allocation2 [shape = 'f32[128,256]{1,0:T(8,128)}', space=vmem, size = 0x20000, scoped, tag = 'scratch operand']
  %s0 = inlined_call_operand.vmem [shape: f32[2,4,256], index: 0, kind: input, shape index: {}]
  %s1 = inlined_call_operand.vmem [shape: f32[4,128], index: 1, kind: input, shape index: {}]
  %s2 = inlined_call_operand.vmem [shape: f32[4,1], index: 2, kind: input, shape index: {}]
  %s3 = inlined_call_operand.vmem [shape: f32[4,1], index: 3, kind: input, shape index: {}]
  %s4 = inlined_call_operand.vmem [shape: f32[2,4,256], index: 4, kind: output, shape index: {}]
  %s5 = sld [smem:[#allocation0]]
  $region49: #{resnet_forward.10} parent=0
    _
  %s7 = ssub.s32 1, %s5
  %s8 = scalar_select 0, %s7, %s5
  loop: start=0, step=1, limit=4
  $region2: #{resnet_forward.10} parent=0 // loop_pre_header
    _
  $region3: #{resnet_forward.10} parent=0 // loop_header
    %s10 = sphi 0, %s14
    %p11 = scmp.ge.s32.totalorder %s10, 4
    %s20 = sphi 0, %s22
    %s23 = sphi 0, %s20
    %s24 = sphi 0, %s23
    %s40 = sphi 0, %s24
    %s44 = sphi 0, %s44
    %s46 = sphi 0, %s44
    %s47 = sphi 0, %s46
    %s61 = sphi 0, %s47
    %s65 = sphi 0, %s65
    %s67 = sphi 0, %s65
    %s68 = sphi 0, %s67
    %s82 = sphi 0, %s68
    %s86 = sphi 0, %s86
    %s88 = sphi 0, %s86
    %s89 = sphi 0, %s88
    %s103 = sphi 0, %s89
    %s109 = sphi 0, %s111
    %s112 = sphi 0, %s109
    %s113 = sphi 0, %s112
    %s129 = sphi 0, %s113
  $region4: #{resnet_forward.10} parent=0 // loop_header_branch
    %13 = sbr.rel (%p11) target = $region8
  $region5: #{resnet_forward.10} parent=0 // loop_body
    %s15 = ssub.s32 %s10, 1
    %s16 = ssub.s32 %s10, 2
    %s17 = sadd.s32 %s10, 1
    %s18 = ssub.s32 %s10, %s17
    %p19 = scmp.eq.s32.totalorder %s18, 0
    %s21 = sadd.s32 %s20, 1
    %s22 = scalar_select %p19, %s20, %s21
    %p25 = pneg %p19
    %p26 = scmp.eq.s32.totalorder %s10, 1
    %p27 = por %p25, %p26
    %p28 = scmp.ne.s32.totalorder %s20, %s23
    %p29 = scmp.eq.s32.totalorder %s10, 0
    %p30 = por %p28, %p29
    %p31 = scmp.ne.s32.totalorder %s20, %s23
    %p32 = scmp.eq.s32.totalorder %s15, 1
    %p33 = por %p31, %p32
    %p34 = scmp.ne.s32.totalorder %s23, %s24
    %p35 = scmp.eq.s32.totalorder %s15, 0
    %p36 = por %p34, %p35
    %p37 = scmp.ne.s32.totalorder %s23, %s24
    %p38 = scmp.eq.s32.totalorder %s16, 1
    %p39 = por %p37, %p38
    %p41 = scmp.ne.s32.totalorder %s24, %s40
    %p42 = scmp.eq.s32.totalorder %s16, 0
    %p43 = por %p41, %p42
    %s45 = sadd.s32 %s44, 1
    %p48 = scmp.eq.s32.totalorder %s10, 1
    %p49 = scmp.ne.s32.totalorder %s44, %s46
    %p50 = scmp.eq.s32.totalorder %s10, 0
    %p51 = por %p49, %p50
    %p52 = scmp.ne.s32.totalorder %s44, %s46
    %p53 = scmp.eq.s32.totalorder %s15, 1
    %p54 = por %p52, %p53
    %p55 = scmp.ne.s32.totalorder %s46, %s47
    %p56 = scmp.eq.s32.totalorder %s15, 0
    %p57 = por %p55, %p56
    %p58 = scmp.ne.s32.totalorder %s46, %s47
    %p59 = scmp.eq.s32.totalorder %s16, 1
    %p60 = por %p58, %p59
    %p62 = scmp.ne.s32.totalorder %s47, %s61
    %p63 = scmp.eq.s32.totalorder %s16, 0
    %p64 = por %p62, %p63
    %s66 = sadd.s32 %s65, 1
    %p69 = scmp.eq.s32.totalorder %s10, 1
    %p70 = scmp.ne.s32.totalorder %s65, %s67
    %p71 = scmp.eq.s32.totalorder %s10, 0
    %p72 = por %p70, %p71
    %p73 = scmp.ne.s32.totalorder %s65, %s67
    %p74 = scmp.eq.s32.totalorder %s15, 1
    %p75 = por %p73, %p74
    %p76 = scmp.ne.s32.totalorder %s67, %s68
    %p77 = scmp.eq.s32.totalorder %s15, 0
    %p78 = por %p76, %p77
    %p79 = scmp.ne.s32.totalorder %s67, %s68
    %p80 = scmp.eq.s32.totalorder %s16, 1
    %p81 = por %p79, %p80
    %p83 = scmp.ne.s32.totalorder %s68, %s82
    %p84 = scmp.eq.s32.totalorder %s16, 0
    %p85 = por %p83, %p84
    %s87 = sadd.s32 %s86, 1
    %p90 = scmp.eq.s32.totalorder %s10, 1
    %p91 = scmp.ne.s32.totalorder %s86, %s88
    %p92 = scmp.eq.s32.totalorder %s10, 0
    %p93 = por %p91, %p92
    %p94 = scmp.ne.s32.totalorder %s86, %s88
    %p95 = scmp.eq.s32.totalorder %s15, 1
    %p96 = por %p94, %p95
    %p97 = scmp.ne.s32.totalorder %s88, %s89
    %p98 = scmp.eq.s32.totalorder %s15, 0
    %p99 = por %p97, %p98
    %p100 = scmp.ne.s32.totalorder %s88, %s89
    %p101 = scmp.eq.s32.totalorder %s16, 1
    %p102 = por %p100, %p101
    %p104 = scmp.ne.s32.totalorder %s89, %s103
    %p105 = scmp.eq.s32.totalorder %s16, 0
    %p106 = por %p104, %p105
    %s107 = ssub.s32 %s10, %s17
    %p108 = scmp.eq.s32.totalorder %s107, 0
    %s110 = sadd.s32 %s109, 1
    %s111 = scalar_select %p108, %s109, %s110
    %p114 = pneg %p108
    %p115 = scmp.eq.s32.totalorder %s10, 1
    %p116 = por %p114, %p115
    %p117 = scmp.ne.s32.totalorder %s109, %s112
    %p118 = scmp.eq.s32.totalorder %s10, 0
    %p119 = por %p117, %p118
    %p120 = scmp.ne.s32.totalorder %s109, %s112
    %p121 = scmp.eq.s32.totalorder %s15, 1
    %p122 = por %p120, %p121
    %p123 = scmp.ne.s32.totalorder %s112, %s113
    %p124 = scmp.eq.s32.totalorder %s15, 0
    %p125 = por %p123, %p124
    %p126 = scmp.ne.s32.totalorder %s112, %s113
    %p127 = scmp.eq.s32.totalorder %s16, 1
    %p128 = por %p126, %p127
    %p130 = scmp.ne.s32.totalorder %s113, %s129
    %p131 = scmp.eq.s32.totalorder %s16, 0
    %p132 = por %p130, %p131
    %p133 = scmp.le.s32.totalorder 1, %s10
    %p134 = scmp.lt.s32.totalorder %s10, 3
    %p135 = pnand %p133, %p134
    %p136 = pneg %p135
    // Predicated region
    $region9: #{resnet_forward.10} parent=5 // pred_check
      _
    $region10: #{resnet_forward.10} parent=5 // pred_check_branch
      %138 = sbr.rel (%p135) target = $region12
    $region11: #{resnet_forward.10} parent=5 // pred_region
      %s139 = ssub.s32 %s10, 1
      // Predicated region
      $region13: #{resnet_forward.10} parent=11 // pred_check
        %p140 = pneg %p57
      $region14: #{resnet_forward.10} parent=11 // pred_check_branch
        %142 = sbr.rel (%p140) target = $region16
      $region15: #{resnet_forward.10} parent=11 // pred_region
        _
      $region16: #{resnet_forward.10} parent=11 // pred_fallthru
        _
      // Predicated region
      $region17: #{resnet_forward.10} parent=11 // pred_check
        %p143 = pneg %p78
      $region18: #{resnet_forward.10} parent=11 // pred_check_branch
        %145 = sbr.rel (%p143) target = $region20
      $region19: #{resnet_forward.10} parent=11 // pred_region
        _
      $region20: #{resnet_forward.10} parent=11 // pred_fallthru
        _
      // Predicated region
      $region21: #{resnet_forward.10} parent=11 // pred_check
        %p146 = pneg %p99
      $region22: #{resnet_forward.10} parent=11 // pred_check_branch
        %148 = sbr.rel (%p146) target = $region24
      $region23: #{resnet_forward.10} parent=11 // pred_region
        _
      $region24: #{resnet_forward.10} parent=11 // pred_fallthru
        _
    $region12: #{resnet_forward.10} parent=5 // pred_fallthru
      _
    %p149 = scmp.lt.s32.totalorder %s10, 2
    // Predicated region
    $region25: #{resnet_forward.10} parent=5 // pred_check
      %p150 = pneg %p149
    $region26: #{resnet_forward.10} parent=5 // pred_check_branch
      %152 = sbr.rel (%p150) target = $region28
    $region27: #{resnet_forward.10} parent=5 // pred_region
      // Predicated region
      $region29: #{resnet_forward.10} parent=27 // pred_check
        %p153 = pneg %p30
      $region30: #{resnet_forward.10} parent=27 // pred_check_branch
        %155 = sbr.rel (%p153) target = $region32
      $region31: #{resnet_forward.10} parent=27 // pred_region
        %p156 = scmp.lt.s32.totalorder %s10, 1
        %s157 = scalar_select %p156, %s10, 1
        %s158 = smul.addr %s157, 2
        %s159 = smul.addr %s158, 4
        %s160 = scalar_lea.vmem %s0, %s159
      $region32: #{resnet_forward.10} parent=27 // pred_fallthru
        _
    $region28: #{resnet_forward.10} parent=5 // pred_fallthru
      _
    %p161 = scmp.le.s32.totalorder 1, %s10
    %p162 = scmp.lt.s32.totalorder %s10, 3
    %p163 = pnand %p161, %p162
    %p164 = pneg %p163
    // Predicated region
    $region33: #{resnet_forward.10} parent=5 // pred_check
      _
    $region34: #{resnet_forward.10} parent=5 // pred_check_branch
      %166 = sbr.rel (%p163) target = $region36
    $region35: #{resnet_forward.10} parent=5 // pred_region
      %s167 = ssub.s32 %s10, 1
      %p168 = scmp.lt.s32.totalorder %s15, 1
      %s169 = scalar_select %p168, %s15, 1
      %s170 = smul.addr %s169, 2
      %s171 = smul.addr %s170, 4
      %s172 = scalar_lea.vmem %s0, %s171
      %p173 = pneg %p36
      %p174 = pneg %p33
      %p175 = pneg %p57
      %p176 = pneg %p54
      %p177 = pneg %p78
      %p178 = pneg %p75
      %p179 = pneg %p99
      %p180 = pneg %p96
      %p181 = pneg %p125
      %p182 = pneg %p122
      %p183 = scmp.lt.s32.totalorder %s15, 1
      %s184 = scalar_select %p183, %s15, 1
      %s185 = smul.addr %s184, 2
      %s186 = smul.addr %s185, 4
      %s187 = scalar_lea.vmem %s4, %s186
      %p188 = scmp.lt.s32.totalorder %s15, 1
      %s189 = scalar_select %p188, %s15, 1
      %s190 = smul.addr %s189, 2
      %s191 = smul.addr %s190, 4
      %s192 = scalar_lea.vmem %s0, %s191
      %p193 = scmp.lt.s32.totalorder %s15, 1
      %s194 = scalar_select %p193, %s15, 1
      %s195 = smul.addr %s194, 2
      %s196 = smul.addr %s195, 4
      %s197 = scalar_lea.vmem %s4, %s196
      %198 = vst [vmem:[#allocation2] sm:$0xff] 0.0
      %199 = vst [vmem:[#allocation2 + $0x8] sm:$0xff] 0.0
      %200 = vst [vmem:[#allocation2 + $0x10] sm:$0xff] 0.0
      %201 = vst [vmem:[#allocation2 + $0x18] sm:$0xff] 0.0
      %202 = vst [vmem:[#allocation2 + $0x20] sm:$0xff] 0.0
      %203 = vst [vmem:[#allocation2 + $0x28] sm:$0xff] 0.0
      %204 = vst [vmem:[#allocation2 + $0x30] sm:$0xff] 0.0
      %205 = vst [vmem:[#allocation2 + $0x38] sm:$0xff] 0.0
      %206 = vst [vmem:[#allocation2 + $0x40] sm:$0xff] 0.0
      %207 = vst [vmem:[#allocation2 + $0x48] sm:$0xff] 0.0
      %208 = vst [vmem:[#allocation2 + $0x50] sm:$0xff] 0.0
      %209 = vst [vmem:[#allocation2 + $0x58] sm:$0xff] 0.0
      %210 = vst [vmem:[#allocation2 + $0x60] sm:$0xff] 0.0
      %211 = vst [vmem:[#allocation2 + $0x68] sm:$0xff] 0.0
      %212 = vst [vmem:[#allocation2 + $0x70] sm:$0xff] 0.0
      %213 = vst [vmem:[#allocation2 + $0x78] sm:$0xff] 0.0
      %214 = vst [vmem:[#allocation2 + $0x80] sm:$0xff] 0.0
      %215 = vst [vmem:[#allocation2 + $0x88] sm:$0xff] 0.0
      %216 = vst [vmem:[#allocation2 + $0x90] sm:$0xff] 0.0
      %217 = vst [vmem:[#allocation2 + $0x98] sm:$0xff] 0.0
      %218 = vst [vmem:[#allocation2 + $0xa0] sm:$0xff] 0.0
      %219 = vst [vmem:[#allocation2 + $0xa8] sm:$0xff] 0.0
      %220 = vst [vmem:[#allocation2 + $0xb0] sm:$0xff] 0.0
      %221 = vst [vmem:[#allocation2 + $0xb8] sm:$0xff] 0.0
      %222 = vst [vmem:[#allocation2 + $0xc0] sm:$0xff] 0.0
      %223 = vst [vmem:[#allocation2 + $0xc8] sm:$0xff] 0.0
      %224 = vst [vmem:[#allocation2 + $0xd0] sm:$0xff] 0.0
      %225 = vst [vmem:[#allocation2 + $0xd8] sm:$0xff] 0.0
      %226 = vst [vmem:[#allocation2 + $0xe0] sm:$0xff] 0.0
      %227 = vst [vmem:[#allocation2 + $0xe8] sm:$0xff] 0.0
      %228 = vst [vmem:[#allocation2 + $0xf0] sm:$0xff] 0.0
      %229 = vst [vmem:[#allocation2 + $0xf8] sm:$0xff] 0.0
      %v230 = vld [vmem:[%s192] sm:$0xff]
      %v232 = vcombine.high %v230, %v230
      %233 = vrot.lane.b32.xlu0 %v230, 7
      %v234 = vpop.permute.xlu0 %233
      %235 = vrot.lane.b32.xlu0 %v232, 7
      %v236 = vpop.permute.xlu0 %235
      %vm237 = vcmask 56320
      %v238 = vsel %vm237, %v234, %v236
      %vm241 = vcmask 1043512
      %242 = vst.msk [vmem:[#allocation2] sm:$0xf] %vm241, %v234
      %243 = vst [vmem:[#allocation2 + $0x8] sm:$0xf] %v238
      %v244 = vld [vmem:[%s192] sm:$0xff]
      %v246 = vcombine.high %v244, %v244
      %247 = vrot.lane.b32.xlu0 %v244, 6
      %v248 = vpop.permute.xlu0 %247
      %249 = vrot.lane.b32.xlu0 %v246, 6
      %v250 = vpop.permute.xlu0 %249
      %vm251 = vcmask 48128
      %v252 = vsel %vm251, %v248, %v250
      %vm255 = vcmask 1043504
      %256 = vst.msk [vmem:[#allocation2 + $0x10] sm:$0xf] %vm255, %v248
      %257 = vst [vmem:[#allocation2 + $0x18] sm:$0xf] %v252
      %v258 = vld [vmem:[%s192] sm:$0xff]
      %v260 = vcombine.high %v258, %v258
      %261 = vrot.lane.b32.xlu0 %v258, 5
      %v262 = vpop.permute.xlu0 %261
      %263 = vrot.lane.b32.xlu0 %v260, 5
      %v264 = vpop.permute.xlu0 %263
      %vm265 = vcmask 39936
      %v266 = vsel %vm265, %v262, %v264
      %vm269 = vcmask 1043496
      %270 = vst.msk [vmem:[#allocation2 + $0x20] sm:$0xf] %vm269, %v262
      %271 = vst [vmem:[#allocation2 + $0x28] sm:$0xf] %v266
      %v272 = vld [vmem:[%s192] sm:$0xff]
      %v274 = vcombine.high %v272, %v272
      %275 = vrot.lane.b32.xlu0 %v272, 4
      %v276 = vpop.permute.xlu0 %275
      %277 = vrot.lane.b32.xlu0 %v274, 4
      %v278 = vpop.permute.xlu0 %277
      %vm279 = vcmask 31744
      %v280 = vsel %vm279, %v276, %v278
      %vm283 = vcmask 1043488
      %284 = vst.msk [vmem:[#allocation2 + $0x30] sm:$0xf] %vm283, %v276
      %285 = vst [vmem:[#allocation2 + $0x38] sm:$0xf] %v280
      %v286 = vld [vmem:[%s192] sm:$0xff]
      %v288 = vcombine.high %v286, %v286
      %289 = vrot.lane.b32.xlu0 %v286, 3
      %v290 = vpop.permute.xlu0 %289
      %291 = vrot.lane.b32.xlu0 %v288, 3
      %v292 = vpop.permute.xlu0 %291
      %vm293 = vcmask 23552
      %v294 = vsel %vm293, %v290, %v292
      %vm297 = vcmask 1043480
      %298 = vst.msk [vmem:[#allocation2 + $0x40] sm:$0xf] %vm297, %v290
      %299 = vst [vmem:[#allocation2 + $0x48] sm:$0xf] %v294
      %v300 = vld [vmem:[%s192] sm:$0xff]
      %v302 = vcombine.high %v300, %v300
      %303 = vrot.lane.b32.xlu0 %v300, 2
      %v304 = vpop.permute.xlu0 %303
      %305 = vrot.lane.b32.xlu0 %v302, 2
      %v306 = vpop.permute.xlu0 %305
      %vm307 = vcmask 15360
      %v308 = vsel %vm307, %v304, %v306
      %vm311 = vcmask 1043472
      %312 = vst.msk [vmem:[#allocation2 + $0x50] sm:$0xf] %vm311, %v304
      %313 = vst [vmem:[#allocation2 + $0x58] sm:$0xf] %v308
      %v314 = vld [vmem:[%s192] sm:$0xff]
      %v316 = vcombine.high %v314, %v314
      %317 = vrot.lane.b32.xlu0 %v314, 1
      %v318 = vpop.permute.xlu0 %317
      %319 = vrot.lane.b32.xlu0 %v316, 1
      %v320 = vpop.permute.xlu0 %319
      %vm321 = vcmask 7168
      %v322 = vsel %vm321, %v318, %v320
      %vm325 = vcmask 1043464
      %326 = vst.msk [vmem:[#allocation2 + $0x60] sm:$0xf] %vm325, %v318
      %327 = vst [vmem:[#allocation2 + $0x68] sm:$0xf] %v322
      %v328 = vld [vmem:[%s192] sm:$0xff]
      %v330 = vcombine.high %v328, %v328
      %332 = vst [vmem:[#allocation2 + $0x70] sm:$0xf] %v328
      %333 = vst [vmem:[#allocation2 + $0x78] sm:$0xf] %v330
      %v334 = vld [vmem:[%s192] sm:$0xff]
      %v336 = vcombine.high %v334, %v334
      %337 = vrot.lane.b32.xlu0 %v334, 127
      %v338 = vpop.permute.xlu0 %337
      %339 = vrot.lane.b32.xlu0 %v336, 127
      %v340 = vpop.permute.xlu0 %339
      %vm341 = vcmask 1039360
      %v342 = vsel %vm341, %v338, %v340
      %345 = vst [vmem:[#allocation2 + $0x80] sm:$0xf] %v342
      %vm346 = vcmask 1035264
      %347 = vst.msk [vmem:[#allocation2 + $0x88] sm:$0xf] %vm346, %v340
      %v348 = vld [vmem:[%s192] sm:$0xff]
      %v350 = vcombine.high %v348, %v348
      %351 = vrot.lane.b32.xlu0 %v348, 126
      %v352 = vpop.permute.xlu0 %351
      %353 = vrot.lane.b32.xlu0 %v350, 126
      %v354 = vpop.permute.xlu0 %353
      %vm355 = vcmask 1031168
      %v356 = vsel %vm355, %v352, %v354
      %359 = vst [vmem:[#allocation2 + $0x90] sm:$0xf] %v356
      %vm360 = vcmask 1027072
      %361 = vst.msk [vmem:[#allocation2 + $0x98] sm:$0xf] %vm360, %v354
      %v362 = vld [vmem:[%s192] sm:$0xff]
      %v364 = vcombine.high %v362, %v362
      %365 = vrot.lane.b32.xlu0 %v362, 125
      %v366 = vpop.permute.xlu0 %365
      %367 = vrot.lane.b32.xlu0 %v364, 125
      %v368 = vpop.permute.xlu0 %367
      %vm369 = vcmask 1022976
      %v370 = vsel %vm369, %v366, %v368
      %373 = vst [vmem:[#allocation2 + $0xa0] sm:$0xf] %v370
      %vm374 = vcmask 1018880
      %375 = vst.msk [vmem:[#allocation2 + $0xa8] sm:$0xf] %vm374, %v368
      %v376 = vld [vmem:[%s192] sm:$0xff]
      %v378 = vcombine.high %v376, %v376
      %379 = vrot.lane.b32.xlu0 %v376, 124
      %v380 = vpop.permute.xlu0 %379
      %381 = vrot.lane.b32.xlu0 %v378, 124
      %v382 = vpop.permute.xlu0 %381
      %vm383 = vcmask 1014784
      %v384 = vsel %vm383, %v380, %v382
      %387 = vst [vmem:[#allocation2 + $0xb0] sm:$0xf] %v384
      %vm388 = vcmask 1010688
      %389 = vst.msk [vmem:[#allocation2 + $0xb8] sm:$0xf] %vm388, %v382
      %v390 = vld [vmem:[%s192] sm:$0xff]
      %v392 = vcombine.high %v390, %v390
      %393 = vrot.lane.b32.xlu0 %v390, 123
      %v394 = vpop.permute.xlu0 %393
      %395 = vrot.lane.b32.xlu0 %v392, 123
      %v396 = vpop.permute.xlu0 %395
      %vm397 = vcmask 1006592
      %v398 = vsel %vm397, %v394, %v396
      %401 = vst [vmem:[#allocation2 + $0xc0] sm:$0xf] %v398
      %vm402 = vcmask 1002496
      %403 = vst.msk [vmem:[#allocation2 + $0xc8] sm:$0xf] %vm402, %v396
      %v404 = vld [vmem:[%s192] sm:$0xff]
      %v406 = vcombine.high %v404, %v404
      %407 = vrot.lane.b32.xlu0 %v404, 122
      %v408 = vpop.permute.xlu0 %407
      %409 = vrot.lane.b32.xlu0 %v406, 122
      %v410 = vpop.permute.xlu0 %409
      %vm411 = vcmask 998400
      %v412 = vsel %vm411, %v408, %v410
      %415 = vst [vmem:[#allocation2 + $0xd0] sm:$0xf] %v412
      %vm416 = vcmask 994304
      %417 = vst.msk [vmem:[#allocation2 + $0xd8] sm:$0xf] %vm416, %v410
      %v418 = vld [vmem:[%s192] sm:$0xff]
      %v420 = vcombine.high %v418, %v418
      %421 = vrot.lane.b32.xlu0 %v418, 121
      %v422 = vpop.permute.xlu0 %421
      %423 = vrot.lane.b32.xlu0 %v420, 121
      %v424 = vpop.permute.xlu0 %423
      %vm425 = vcmask 990208
      %v426 = vsel %vm425, %v422, %v424
      %429 = vst [vmem:[#allocation2 + $0xe0] sm:$0xf] %v426
      %vm430 = vcmask 986112
      %431 = vst.msk [vmem:[#allocation2 + $0xe8] sm:$0xf] %vm430, %v424
      %v432 = vld [vmem:[%s192] sm:$0xff]
      %v434 = vcombine.high %v432, %v432
      %435 = vrot.lane.b32.xlu0 %v432, 120
      %v436 = vpop.permute.xlu0 %435
      %437 = vrot.lane.b32.xlu0 %v434, 120
      %v438 = vpop.permute.xlu0 %437
      %vm439 = vcmask 982016
      %v440 = vsel %vm439, %v436, %v438
      %443 = vst [vmem:[#allocation2 + $0xf0] sm:$0xf] %v440
      %vm444 = vcmask 977920
      %445 = vst.msk [vmem:[#allocation2 + $0xf8] sm:$0xf] %vm444, %v438
      %v446 = vld [vmem:[%s1] sm:$0xf]
      %v447 = vld [vmem:[#allocation2] sm:$0xff]
      %v448 = vld [vmem:[#allocation2 + $0x8] sm:$0xff]
      %v449 = vld [vmem:[#allocation2 + $0x10] sm:$0xff]
      %v450 = vld [vmem:[#allocation2 + $0x18] sm:$0xff]
      %v451 = vld [vmem:[#allocation2 + $0x20] sm:$0xff]
      %v452 = vld [vmem:[#allocation2 + $0x28] sm:$0xff]
      %v453 = vld [vmem:[#allocation2 + $0x30] sm:$0xff]
      %v454 = vld [vmem:[#allocation2 + $0x38] sm:$0xff]
      %v455 = vld [vmem:[#allocation2 + $0x40] sm:$0xff]
      %v456 = vld [vmem:[#allocation2 + $0x48] sm:$0xff]
      %v457 = vld [vmem:[#allocation2 + $0x50] sm:$0xff]
      %v458 = vld [vmem:[#allocation2 + $0x58] sm:$0xff]
      %v459 = vld [vmem:[#allocation2 + $0x60] sm:$0xff]
      %v460 = vld [vmem:[#allocation2 + $0x68] sm:$0xff]
      %v461 = vld [vmem:[#allocation2 + $0x70] sm:$0xff]
      %v462 = vld [vmem:[#allocation2 + $0x78] sm:$0xff]
      %v463 = vld [vmem:[#allocation2 + $0x80] sm:$0xff]
      %v464 = vld [vmem:[#allocation2 + $0x88] sm:$0xff]
      %v465 = vld [vmem:[#allocation2 + $0x90] sm:$0xff]
      %v466 = vld [vmem:[#allocation2 + $0x98] sm:$0xff]
      %v467 = vld [vmem:[#allocation2 + $0xa0] sm:$0xff]
      %v468 = vld [vmem:[#allocation2 + $0xa8] sm:$0xff]
      %v469 = vld [vmem:[#allocation2 + $0xb0] sm:$0xff]
      %v470 = vld [vmem:[#allocation2 + $0xb8] sm:$0xff]
      %v471 = vld [vmem:[#allocation2 + $0xc0] sm:$0xff]
      %v472 = vld [vmem:[#allocation2 + $0xc8] sm:$0xff]
      %v473 = vld [vmem:[#allocation2 + $0xd0] sm:$0xff]
      %v474 = vld [vmem:[#allocation2 + $0xd8] sm:$0xff]
      %v475 = vld [vmem:[#allocation2 + $0xe0] sm:$0xff]
      %v476 = vld [vmem:[#allocation2 + $0xe8] sm:$0xff]
      %v477 = vld [vmem:[#allocation2 + $0xf0] sm:$0xff]
      %v478 = vld [vmem:[#allocation2 + $0xf8] sm:$0xff]
      %479 = vmatprep.subr.mxu0 %v448
      %480 = vmatpush1.msra.mxu0 %v447
      %481 = vmatprep.subr.mxu0 %v450
      %482 = vmatpush1.msra.mxu0 %v449
      %483 = vmatprep.subr.mxu0 %v452
      %484 = vmatpush1.msra.mxu0 %v451
      %485 = vmatprep.subr.mxu0 %v454
      %486 = vmatpush1.msra.mxu0 %v453
      %487 = vmatprep.subr.mxu0 %v456
      %488 = vmatpush1.msra.mxu0 %v455
      %489 = vmatprep.subr.mxu0 %v458
      %490 = vmatpush1.msra.mxu0 %v457
      %491 = vmatprep.subr.mxu0 %v460
      %492 = vmatpush1.msra.mxu0 %v459
      %493 = vmatprep.subr.mxu0 %v462
      %494 = vmatpush1.msra.mxu0 %v461
      %495 = vmatprep.subr.mxu0 %v464
      %496 = vmatpush1.msra.mxu0 %v463
      %497 = vmatprep.subr.mxu0 %v466
      %498 = vmatpush1.msra.mxu0 %v465
      %499 = vmatprep.subr.mxu0 %v468
      %500 = vmatpush1.msra.mxu0 %v467
      %501 = vmatprep.subr.mxu0 %v470
      %502 = vmatpush1.msra.mxu0 %v469
      %503 = vmatprep.subr.mxu0 %v472
      %504 = vmatpush1.msra.mxu0 %v471
      %505 = vmatprep.subr.mxu0 %v474
      %506 = vmatpush1.msra.mxu0 %v473
      %507 = vmatprep.subr.mxu0 %v476
      %508 = vmatpush1.msra.mxu0 %v475
      %509 = vmatprep.subr.mxu0 %v478
      %510 = vmatpush1.msra.mxu0 %v477
      %511 = vmatprep.subr.mxu0 0.0
      %512 = vmatpush1.msra.mxu0 0.0
      %513 = vmatprep.subr.mxu0 0.0
      %514 = vmatpush1.msra.mxu0 0.0
      %515 = vmatprep.subr.mxu0 0.0
      %516 = vmatpush1.msra.mxu0 0.0
      %517 = vmatprep.subr.mxu0 0.0
      %518 = vmatpush1.msra.mxu0 0.0
      %519 = vmatprep.subr.mxu0 0.0
      %520 = vmatpush1.msra.mxu0 0.0
      %521 = vmatprep.subr.mxu0 0.0
      %522 = vmatpush1.msra.mxu0 0.0
      %523 = vmatprep.subr.mxu0 0.0
      %524 = vmatpush1.msra.mxu0 0.0
      %525 = vmatprep.subr.mxu0 0.0
      %526 = vmatpush1.msra.mxu0 0.0
      %527 = vmatprep.subr.mxu0 0.0
      %528 = vmatpush1.msra.mxu0 0.0
      %529 = vmatprep.subr.mxu0 0.0
      %530 = vmatpush1.msra.mxu0 0.0
      %531 = vmatprep.subr.mxu0 0.0
      %532 = vmatpush1.msra.mxu0 0.0
      %533 = vmatprep.subr.mxu0 0.0
      %534 = vmatpush1.msra.mxu0 0.0
      %535 = vmatprep.subr.mxu0 0.0
      %536 = vmatpush1.msra.mxu0 0.0
      %537 = vmatprep.subr.mxu0 0.0
      %538 = vmatpush1.msra.mxu0 0.0
      %539 = vmatprep.subr.mxu0 0.0
      %540 = vmatpush1.msra.mxu0 0.0
      %541 = vmatprep.subr.mxu0 0.0
      %542 = vmatpush1.msra.mxu0 0.0
      %543 = vmatprep.mubr.f32.mxu0 0.0
      %544 = vmatmul.mubr.f32.gmra.mrb[0].mxu0 %v446
      %v545 = vpop.f32.mrb[0].mxu0
      %v546 = vadd.f32 0.0, %v545
      %v547 = vpop.f32.mrb[0].mxu0
      %v548 = vadd.f32 0.0, %v547
      %549 = vdwg.mxu0
      %v550 = vld [vmem:[%s2] sm:$0xf]
      %552 = vset.pattern.permute.xlu0 0
      %553 = vperm.xlu0 %552, %v550
      %v554 = vpop.permute.xlu0 %553
      %v556 = vmul.f32 %v546, %v554
      %v557 = vmul.f32 %v548, %v554
      %v558 = vld [vmem:[%s3] sm:$0xf]
      %560 = vset.pattern.permute.xlu0 0
      %561 = vperm.xlu0 %560, %v558
      %v562 = vpop.permute.xlu0 %561
      %v564 = vadd.f32 %v556, %v562
      %v565 = vadd.f32 %v557, %v562
      %v566 = vmax.f32 %v564, 0.0
      %v567 = vmax.f32 %v565, 0.0
      %v570 = vcombine.low %v566, %v567
      %572 = vst [vmem:[%s197] sm:$0xff] %v570
      %p573 = scmp.lt.s32.totalorder %s15, 1
      %s574 = scalar_select %p573, %s15, 1
      %s575 = smul.addr %s574, 2
      %s576 = smul.addr %s575, 4
      %s577 = scalar_lea.vmem %s4, %s576
      // Predicated region
      $region37: #{resnet_forward.10} parent=35 // pred_check
        %p578 = pneg %p122
      $region38: #{resnet_forward.10} parent=35 // pred_check_branch
        %580 = sbr.rel (%p578) target = $region40
      $region39: #{resnet_forward.10} parent=35 // pred_region
        _
      $region40: #{resnet_forward.10} parent=35 // pred_fallthru
        _
    $region36: #{resnet_forward.10} parent=5 // pred_fallthru
      _
    %p581 = scmp.le.s32.totalorder 2, %s10
    // Predicated region
    $region41: #{resnet_forward.10} parent=5 // pred_check
      %p582 = pneg %p581
    $region42: #{resnet_forward.10} parent=5 // pred_check_branch
      %584 = sbr.rel (%p582) target = $region44
    $region43: #{resnet_forward.10} parent=5 // pred_region
      %s585 = ssub.s32 %s10, 2
      // Predicated region
      $region45: #{resnet_forward.10} parent=43 // pred_check
        %p586 = pneg %p128
      $region46: #{resnet_forward.10} parent=43 // pred_check_branch
        %588 = sbr.rel (%p586) target = $region48
      $region47: #{resnet_forward.10} parent=43 // pred_region
        %p589 = scmp.lt.s32.totalorder %s16, 1
        %s590 = scalar_select %p589, %s16, 1
        %s591 = smul.addr %s590, 2
        %s592 = smul.addr %s591, 4
        %s593 = scalar_lea.vmem %s4, %s592
      $region48: #{resnet_forward.10} parent=43 // pred_fallthru
        _
    $region44: #{resnet_forward.10} parent=5 // pred_fallthru
      _
  $region6: #{resnet_forward.10} parent=0 // loop_footer
    %s14 = sadd.s32 1, %s10
  $region7: #{resnet_forward.10} parent=0 // loop_footer_branch
    %9 = sbr.rel target = $region3
  $region8: #{resnet_forward.10} parent=0 // loop_exit
    _

// kernel: resnet_forward.12
$region0: #{resnet_forward.12}
  #allocation0 [shape = 'u32[]', space=smem, size = 0x4, offset = 0x4, fixed_abs, tag = 'smem constant byte address 0x4 - core index']
  #allocation1 [shape = 'u32[144,128]{1,0:T(1,128)}', space=vmem, size = 0x12000, scoped, tag = 'internal scratch']
  #allocation2 [shape = 'f32[128,64]{1,0:T(8,128)}', space=vmem, size = 0x10000, scoped, tag = 'scratch operand']
  #allocation3 [shape = 'f32[128,64]{1,0:T(8,128)}', space=vmem, size = 0x10000, scoped, tag = 'scratch operand']
  %s0 = inlined_call_operand.vmem [shape: f32[2,16,64], index: 0, kind: input, shape index: {}]
  %s1 = inlined_call_operand.vmem [shape: f32[2,32,67], index: 1, kind: input, shape index: {}]
  %s2 = inlined_call_operand.vmem [shape: f32[8,128], index: 2, kind: input, shape index: {}]
  %s3 = inlined_call_operand.vmem [shape: f32[8,128], index: 3, kind: input, shape index: {}]
  %s4 = inlined_call_operand.vmem [shape: f32[8,1], index: 4, kind: input, shape index: {}]
  %s5 = inlined_call_operand.vmem [shape: f32[8,1], index: 5, kind: input, shape index: {}]
  %s6 = inlined_call_operand.vmem [shape: f32[2,8,64], index: 6, kind: output, shape index: {0}]
  %s7 = inlined_call_operand.vmem [shape: f32[2,8,64], index: 7, kind: output, shape index: {1}]
  %8 = xla_tuple %s6, %s7
  %s9 = sld [smem:[#allocation0]]
  $region65: #{resnet_forward.12} parent=0
    _
  %s11 = ssub.s32 1, %s9
  %s12 = scalar_select 0, %s11, %s9
  loop: start=0, step=1, limit=4
  $region2: #{resnet_forward.12} parent=0 // loop_pre_header
    _
  $region3: #{resnet_forward.12} parent=0 // loop_header
    %s14 = sphi 0, %s18
    %p15 = scmp.ge.s32.totalorder %s14, 4
    %s24 = sphi 0, %s26
    %s27 = sphi 0, %s24
    %s28 = sphi 0, %s27
    %s44 = sphi 0, %s28
    %s50 = sphi 0, %s52
    %s53 = sphi 0, %s50
    %s54 = sphi 0, %s53
    %s70 = sphi 0, %s54
    %s74 = sphi 0, %s74
    %s76 = sphi 0, %s74
    %s77 = sphi 0, %s76
    %s91 = sphi 0, %s77
    %s95 = sphi 0, %s95
    %s97 = sphi 0, %s95
    %s98 = sphi 0, %s97
    %s112 = sphi 0, %s98
    %s116 = sphi 0, %s116
    %s118 = sphi 0, %s116
    %s119 = sphi 0, %s118
    %s133 = sphi 0, %s119
    %s137 = sphi 0, %s137
    %s139 = sphi 0, %s137
    %s140 = sphi 0, %s139
    %s154 = sphi 0, %s140
    %s160 = sphi 0, %s162
    %s163 = sphi 0, %s160
    %s164 = sphi 0, %s163
    %s180 = sphi 0, %s164
    %s186 = sphi 0, %s188
    %s189 = sphi 0, %s186
    %s190 = sphi 0, %s189
    %s206 = sphi 0, %s190
  $region4: #{resnet_forward.12} parent=0 // loop_header_branch
    %17 = sbr.rel (%p15) target = $region8
  $region5: #{resnet_forward.12} parent=0 // loop_body
    %s19 = ssub.s32 %s14, 1
    %s20 = ssub.s32 %s14, 2
    %s21 = sadd.s32 %s14, 1
    %s22 = ssub.s32 %s14, %s21
    %p23 = scmp.eq.s32.totalorder %s22, 0
    %s25 = sadd.s32 %s24, 1
    %s26 = scalar_select %p23, %s24, %s25
    %p29 = pneg %p23
    %p30 = scmp.eq.s32.totalorder %s14, 1
    %p31 = por %p29, %p30
    %p32 = scmp.ne.s32.totalorder %s24, %s27
    %p33 = scmp.eq.s32.totalorder %s14, 0
    %p34 = por %p32, %p33
    %p35 = scmp.ne.s32.totalorder %s24, %s27
    %p36 = scmp.eq.s32.totalorder %s19, 1
    %p37 = por %p35, %p36
    %p38 = scmp.ne.s32.totalorder %s27, %s28
    %p39 = scmp.eq.s32.totalorder %s19, 0
    %p40 = por %p38, %p39
    %p41 = scmp.ne.s32.totalorder %s27, %s28
    %p42 = scmp.eq.s32.totalorder %s20, 1
    %p43 = por %p41, %p42
    %p45 = scmp.ne.s32.totalorder %s28, %s44
    %p46 = scmp.eq.s32.totalorder %s20, 0
    %p47 = por %p45, %p46
    %s48 = ssub.s32 %s14, %s21
    %p49 = scmp.eq.s32.totalorder %s48, 0
    %s51 = sadd.s32 %s50, 1
    %s52 = scalar_select %p49, %s50, %s51
    %p55 = pneg %p49
    %p56 = scmp.eq.s32.totalorder %s14, 1
    %p57 = por %p55, %p56
    %p58 = scmp.ne.s32.totalorder %s50, %s53
    %p59 = scmp.eq.s32.totalorder %s14, 0
    %p60 = por %p58, %p59
    %p61 = scmp.ne.s32.totalorder %s50, %s53
    %p62 = scmp.eq.s32.totalorder %s19, 1
    %p63 = por %p61, %p62
    %p64 = scmp.ne.s32.totalorder %s53, %s54
    %p65 = scmp.eq.s32.totalorder %s19, 0
    %p66 = por %p64, %p65
    %p67 = scmp.ne.s32.totalorder %s53, %s54
    %p68 = scmp.eq.s32.totalorder %s20, 1
    %p69 = por %p67, %p68
    %p71 = scmp.ne.s32.totalorder %s54, %s70
    %p72 = scmp.eq.s32.totalorder %s20, 0
    %p73 = por %p71, %p72
    %s75 = sadd.s32 %s74, 1
    %p78 = scmp.eq.s32.totalorder %s14, 1
    %p79 = scmp.ne.s32.totalorder %s74, %s76
    %p80 = scmp.eq.s32.totalorder %s14, 0
    %p81 = por %p79, %p80
    %p82 = scmp.ne.s32.totalorder %s74, %s76
    %p83 = scmp.eq.s32.totalorder %s19, 1
    %p84 = por %p82, %p83
    %p85 = scmp.ne.s32.totalorder %s76, %s77
    %p86 = scmp.eq.s32.totalorder %s19, 0
    %p87 = por %p85, %p86
    %p88 = scmp.ne.s32.totalorder %s76, %s77
    %p89 = scmp.eq.s32.totalorder %s20, 1
    %p90 = por %p88, %p89
    %p92 = scmp.ne.s32.totalorder %s77, %s91
    %p93 = scmp.eq.s32.totalorder %s20, 0
    %p94 = por %p92, %p93
    %s96 = sadd.s32 %s95, 1
    %p99 = scmp.eq.s32.totalorder %s14, 1
    %p100 = scmp.ne.s32.totalorder %s95, %s97
    %p101 = scmp.eq.s32.totalorder %s14, 0
    %p102 = por %p100, %p101
    %p103 = scmp.ne.s32.totalorder %s95, %s97
    %p104 = scmp.eq.s32.totalorder %s19, 1
    %p105 = por %p103, %p104
    %p106 = scmp.ne.s32.totalorder %s97, %s98
    %p107 = scmp.eq.s32.totalorder %s19, 0
    %p108 = por %p106, %p107
    %p109 = scmp.ne.s32.totalorder %s97, %s98
    %p110 = scmp.eq.s32.totalorder %s20, 1
    %p111 = por %p109, %p110
    %p113 = scmp.ne.s32.totalorder %s98, %s112
    %p114 = scmp.eq.s32.totalorder %s20, 0
    %p115 = por %p113, %p114
    %s117 = sadd.s32 %s116, 1
    %p120 = scmp.eq.s32.totalorder %s14, 1
    %p121 = scmp.ne.s32.totalorder %s116, %s118
    %p122 = scmp.eq.s32.totalorder %s14, 0
    %p123 = por %p121, %p122
    %p124 = scmp.ne.s32.totalorder %s116, %s118
    %p125 = scmp.eq.s32.totalorder %s19, 1
    %p126 = por %p124, %p125
    %p127 = scmp.ne.s32.totalorder %s118, %s119
    %p128 = scmp.eq.s32.totalorder %s19, 0
    %p129 = por %p127, %p128
    %p130 = scmp.ne.s32.totalorder %s118, %s119
    %p131 = scmp.eq.s32.totalorder %s20, 1
    %p132 = por %p130, %p131
    %p134 = scmp.ne.s32.totalorder %s119, %s133
    %p135 = scmp.eq.s32.totalorder %s20, 0
    %p136 = por %p134, %p135
    %s138 = sadd.s32 %s137, 1
    %p141 = scmp.eq.s32.totalorder %s14, 1
    %p142 = scmp.ne.s32.totalorder %s137, %s139
    %p143 = scmp.eq.s32.totalorder %s14, 0
    %p144 = por %p142, %p143
    %p145 = scmp.ne.s32.totalorder %s137, %s139
    %p146 = scmp.eq.s32.totalorder %s19, 1
    %p147 = por %p145, %p146
    %p148 = scmp.ne.s32.totalorder %s139, %s140
    %p149 = scmp.eq.s32.totalorder %s19, 0
    %p150 = por %p148, %p149
    %p151 = scmp.ne.s32.totalorder %s139, %s140
    %p152 = scmp.eq.s32.totalorder %s20, 1
    %p153 = por %p151, %p152
    %p155 = scmp.ne.s32.totalorder %s140, %s154
    %p156 = scmp.eq.s32.totalorder %s20, 0
    %p157 = por %p155, %p156
    %s158 = ssub.s32 %s14, %s21
    %p159 = scmp.eq.s32.totalorder %s158, 0
    %s161 = sadd.s32 %s160, 1
    %s162 = scalar_select %p159, %s160, %s161
    %p165 = pneg %p159
    %p166 = scmp.eq.s32.totalorder %s14, 1
    %p167 = por %p165, %p166
    %p168 = scmp.ne.s32.totalorder %s160, %s163
    %p169 = scmp.eq.s32.totalorder %s14, 0
    %p170 = por %p168, %p169
    %p171 = scmp.ne.s32.totalorder %s160, %s163
    %p172 = scmp.eq.s32.totalorder %s19, 1
    %p173 = por %p171, %p172
    %p174 = scmp.ne.s32.totalorder %s163, %s164
    %p175 = scmp.eq.s32.totalorder %s19, 0
    %p176 = por %p174, %p175
    %p177 = scmp.ne.s32.totalorder %s163, %s164
    %p178 = scmp.eq.s32.totalorder %s20, 1
    %p179 = por %p177, %p178
    %p181 = scmp.ne.s32.totalorder %s164, %s180
    %p182 = scmp.eq.s32.totalorder %s20, 0
    %p183 = por %p181, %p182
    %s184 = ssub.s32 %s14, %s21
    %p185 = scmp.eq.s32.totalorder %s184, 0
    %s187 = sadd.s32 %s186, 1
    %s188 = scalar_select %p185, %s186, %s187
    %p191 = pneg %p185
    %p192 = scmp.eq.s32.totalorder %s14, 1
    %p193 = por %p191, %p192
    %p194 = scmp.ne.s32.totalorder %s186, %s189
    %p195 = scmp.eq.s32.totalorder %s14, 0
    %p196 = por %p194, %p195
    %p197 = scmp.ne.s32.totalorder %s186, %s189
    %p198 = scmp.eq.s32.totalorder %s19, 1
    %p199 = por %p197, %p198
    %p200 = scmp.ne.s32.totalorder %s189, %s190
    %p201 = scmp.eq.s32.totalorder %s19, 0
    %p202 = por %p200, %p201
    %p203 = scmp.ne.s32.totalorder %s189, %s190
    %p204 = scmp.eq.s32.totalorder %s20, 1
    %p205 = por %p203, %p204
    %p207 = scmp.ne.s32.totalorder %s190, %s206
    %p208 = scmp.eq.s32.totalorder %s20, 0
    %p209 = por %p207, %p208
    %p210 = scmp.le.s32.totalorder 1, %s14
    %p211 = scmp.lt.s32.totalorder %s14, 3
    %p212 = pnand %p210, %p211
    %p213 = pneg %p212
    // Predicated region
    $region9: #{resnet_forward.12} parent=5 // pred_check
      _
    $region10: #{resnet_forward.12} parent=5 // pred_check_branch
      %215 = sbr.rel (%p212) target = $region12
    $region11: #{resnet_forward.12} parent=5 // pred_region
      %s216 = ssub.s32 %s14, 1
      // Predicated region
      $region13: #{resnet_forward.12} parent=11 // pred_check
        %p217 = pneg %p87
      $region14: #{resnet_forward.12} parent=11 // pred_check_branch
        %219 = sbr.rel (%p217) target = $region16
      $region15: #{resnet_forward.12} parent=11 // pred_region
        _
      $region16: #{resnet_forward.12} parent=11 // pred_fallthru
        _
      // Predicated region
      $region17: #{resnet_forward.12} parent=11 // pred_check
        %p220 = pneg %p108
      $region18: #{resnet_forward.12} parent=11 // pred_check_branch
        %222 = sbr.rel (%p220) target = $region20
      $region19: #{resnet_forward.12} parent=11 // pred_region
        _
      $region20: #{resnet_forward.12} parent=11 // pred_fallthru
        _
      // Predicated region
      $region21: #{resnet_forward.12} parent=11 // pred_check
        %p223 = pneg %p129
      $region22: #{resnet_forward.12} parent=11 // pred_check_branch
        %225 = sbr.rel (%p223) target = $region24
      $region23: #{resnet_forward.12} parent=11 // pred_region
        _
      $region24: #{resnet_forward.12} parent=11 // pred_fallthru
        _
      // Predicated region
      $region25: #{resnet_forward.12} parent=11 // pred_check
        %p226 = pneg %p150
      $region26: #{resnet_forward.12} parent=11 // pred_check_branch
        %228 = sbr.rel (%p226) target = $region28
      $region27: #{resnet_forward.12} parent=11 // pred_region
        _
      $region28: #{resnet_forward.12} parent=11 // pred_fallthru
        _
    $region12: #{resnet_forward.12} parent=5 // pred_fallthru
      _
    %p229 = scmp.lt.s32.totalorder %s14, 2
    // Predicated region
    $region29: #{resnet_forward.12} parent=5 // pred_check
      %p230 = pneg %p229
    $region30: #{resnet_forward.12} parent=5 // pred_check_branch
      %232 = sbr.rel (%p230) target = $region32
    $region31: #{resnet_forward.12} parent=5 // pred_region
      // Predicated region
      $region33: #{resnet_forward.12} parent=31 // pred_check
        %p233 = pneg %p34
      $region34: #{resnet_forward.12} parent=31 // pred_check_branch
        %235 = sbr.rel (%p233) target = $region36
      $region35: #{resnet_forward.12} parent=31 // pred_region
        %p236 = scmp.lt.s32.totalorder %s14, 1
        %s237 = scalar_select %p236, %s14, 1
        %s238 = smul.addr %s237, 2
        %s239 = smul.addr %s238, 8
        %s240 = scalar_lea.vmem %s0, %s239
      $region36: #{resnet_forward.12} parent=31 // pred_fallthru
        _
      // Predicated region
      $region37: #{resnet_forward.12} parent=31 // pred_check
        %p241 = pneg %p60
      $region38: #{resnet_forward.12} parent=31 // pred_check_branch
        %243 = sbr.rel (%p241) target = $region40
      $region39: #{resnet_forward.12} parent=31 // pred_region
        %p244 = scmp.lt.s32.totalorder %s14, 1
        %s245 = scalar_select %p244, %s14, 1
        %s246 = smul.addr %s245, 4
        %s247 = smul.addr %s246, 8
        %s248 = scalar_lea.vmem %s1, %s247
      $region40: #{resnet_forward.12} parent=31 // pred_fallthru
        _
    $region32: #{resnet_forward.12} parent=5 // pred_fallthru
      _
    %p249 = scmp.le.s32.totalorder 1, %s14
    %p250 = scmp.lt.s32.totalorder %s14, 3
    %p251 = pnand %p249, %p250
    %p252 = pneg %p251
    // Predicated region
    $region41: #{resnet_forward.12} parent=5 // pred_check
      _
    $region42: #{resnet_forward.12} parent=5 // pred_check_branch
      %254 = sbr.rel (%p251) target = $region44
    $region43: #{resnet_forward.12} parent=5 // pred_region
      %s255 = ssub.s32 %s14, 1
      %p256 = scmp.lt.s32.totalorder %s19, 1
      %s257 = scalar_select %p256, %s19, 1
      %s258 = smul.addr %s257, 2
      %s259 = smul.addr %s258, 8
      %s260 = scalar_lea.vmem %s0, %s259
      %p261 = pneg %p40
      %p262 = pneg %p37
      %p263 = scmp.lt.s32.totalorder %s19, 1
      %s264 = scalar_select %p263, %s19, 1
      %s265 = smul.addr %s264, 4
      %s266 = smul.addr %s265, 8
      %s267 = scalar_lea.vmem %s1, %s266
      %p268 = pneg %p66
      %p269 = pneg %p63
      %p270 = pneg %p87
      %p271 = pneg %p84
      %p272 = pneg %p108
      %p273 = pneg %p105
      %p274 = pneg %p129
      %p275 = pneg %p126
      %p276 = pneg %p150
      %p277 = pneg %p147
      %p278 = pneg %p176
      %p279 = pneg %p173
      %p280 = scmp.lt.s32.totalorder %s19, 1
      %s281 = scalar_select %p280, %s19, 1
      %s282 = smul.addr %s281, 8
      %s283 = scalar_lea.vmem %s6, %s282
      %p284 = pneg %p202
      %p285 = pneg %p199
      %p286 = scmp.lt.s32.totalorder %s19, 1
      %s287 = scalar_select %p286, %s19, 1
      %s288 = smul.addr %s287, 8
      %s289 = scalar_lea.vmem %s7, %s288
      %p290 = scmp.lt.s32.totalorder %s19, 1
      %s291 = scalar_select %p290, %s19, 1
      %s292 = smul.addr %s291, 2
      %s293 = smul.addr %s292, 8
      %s294 = scalar_lea.vmem %s0, %s293
      %p295 = scmp.lt.s32.totalorder %s19, 1
      %s296 = scalar_select %p295, %s19, 1
      %s297 = smul.addr %s296, 4
      %s298 = smul.addr %s297, 8
      %s299 = scalar_lea.vmem %s1, %s298
      %p300 = scmp.lt.s32.totalorder %s19, 1
      %s301 = scalar_select %p300, %s19, 1
      %s302 = smul.addr %s301, 8
      %s303 = scalar_lea.vmem %s6, %s302
      %p304 = scmp.lt.s32.totalorder %s19, 1
      %s305 = scalar_select %p304, %s19, 1
      %s306 = smul.addr %s305, 8
      %s307 = scalar_lea.vmem %s7, %s306
      %v308 = vld [vmem:[%s294] sm:$0xf]
      %v309 = vld [vmem:[%s294 + $0x4] sm:$0xf]
      %v310 = vmax.f32 %v308, %v309
      %v311 = vld [vmem:[%s294 + $0x8] sm:$0xf]
      %v312 = vmax.f32 %v310, %v311
      %v313 = vld [vmem:[%s294 + $0xc] sm:$0xf]
      %v314 = vmax.f32 %v312, %v313
      %vm315 = vcmask 523264
      %316 = vst.msk [vmem:[#allocation2] sm:$0xff] %vm315, 0.0
      %317 = vst.msk [vmem:[#allocation2 + $0x8] sm:$0xff] %vm315, 0.0
      %318 = vst.msk [vmem:[#allocation2 + $0x10] sm:$0xff] %vm315, 0.0
      %319 = vst.msk [vmem:[#allocation2 + $0x18] sm:$0xff] %vm315, 0.0
      %320 = vst.msk [vmem:[#allocation2 + $0x20] sm:$0xff] %vm315, 0.0
      %321 = vst.msk [vmem:[#allocation2 + $0x28] sm:$0xff] %vm315, 0.0
      %322 = vst.msk [vmem:[#allocation2 + $0x30] sm:$0xff] %vm315, 0.0
      %323 = vst.msk [vmem:[#allocation2 + $0x38] sm:$0xff] %vm315, 0.0
      %324 = vst.msk [vmem:[#allocation2 + $0x40] sm:$0xff] %vm315, 0.0
      %325 = vst.msk [vmem:[#allocation2 + $0x48] sm:$0xff] %vm315, 0.0
      %326 = vst.msk [vmem:[#allocation2 + $0x50] sm:$0xff] %vm315, 0.0
      %327 = vst.msk [vmem:[#allocation2 + $0x58] sm:$0xff] %vm315, 0.0
      %328 = vst.msk [vmem:[#allocation2 + $0x60] sm:$0xff] %vm315, 0.0
      %329 = vst.msk [vmem:[#allocation2 + $0x68] sm:$0xff] %vm315, 0.0
      %330 = vst.msk [vmem:[#allocation2 + $0x70] sm:$0xff] %vm315, 0.0
      %331 = vst.msk [vmem:[#allocation2 + $0x78] sm:$0xff] %vm315, 0.0
      %333 = vrot.lane.b32.xlu0 %v314, 7
      %v334 = vpop.permute.xlu0 %333
      %vm336 = vcmask 519224
      %337 = vst.msk [vmem:[#allocation2] sm:$0xf] %vm336, %v334
      %338 = vrot.lane.b32.xlu0 %v314, 6
      %v339 = vpop.permute.xlu0 %338
      %vm341 = vcmask 519216
      %342 = vst.msk [vmem:[#allocation2 + $0x8] sm:$0xf] %vm341, %v339
      %343 = vrot.lane.b32.xlu0 %v314, 5
      %v344 = vpop.permute.xlu0 %343
      %vm346 = vcmask 519208
      %347 = vst.msk [vmem:[#allocation2 + $0x10] sm:$0xf] %vm346, %v344
      %348 = vrot.lane.b32.xlu0 %v314, 4
      %v349 = vpop.permute.xlu0 %348
      %vm351 = vcmask 519200
      %352 = vst.msk [vmem:[#allocation2 + $0x18] sm:$0xf] %vm351, %v349
      %353 = vrot.lane.b32.xlu0 %v314, 3
      %v354 = vpop.permute.xlu0 %353
      %vm356 = vcmask 519192
      %357 = vst.msk [vmem:[#allocation2 + $0x20] sm:$0xf] %vm356, %v354
      %358 = vrot.lane.b32.xlu0 %v314, 2
      %v359 = vpop.permute.xlu0 %358
      %vm361 = vcmask 519184
      %362 = vst.msk [vmem:[#allocation2 + $0x28] sm:$0xf] %vm361, %v359
      %363 = vrot.lane.b32.xlu0 %v314, 1
      %v364 = vpop.permute.xlu0 %363
      %vm366 = vcmask 519176
      %367 = vst.msk [vmem:[#allocation2 + $0x30] sm:$0xf] %vm366, %v364
      %vm368 = vcmask 519168
      %369 = vst.msk [vmem:[#allocation2 + $0x38] sm:$0xf] %vm368, %v314
      %370 = vrot.lane.b32.xlu0 %v314, 127
      %v371 = vpop.permute.xlu0 %370
      %vm373 = vcmask 510976
      %374 = vst.msk [vmem:[#allocation2 + $0x40] sm:$0xf] %vm373, %v371
      %375 = vrot.lane.b32.xlu0 %v314, 126
      %v376 = vpop.permute.xlu0 %375
      %vm378 = vcmask 502784
      %379 = vst.msk [vmem:[#allocation2 + $0x48] sm:$0xf] %vm378, %v376
      %380 = vrot.lane.b32.xlu0 %v314, 125
      %v381 = vpop.permute.xlu0 %380
      %vm383 = vcmask 494592
      %384 = vst.msk [vmem:[#allocation2 + $0x50] sm:$0xf] %vm383, %v381
      %385 = vrot.lane.b32.xlu0 %v314, 124
      %v386 = vpop.permute.xlu0 %385
      %vm388 = vcmask 486400
      %389 = vst.msk [vmem:[#allocation2 + $0x58] sm:$0xf] %vm388, %v386
      %390 = vrot.lane.b32.xlu0 %v314, 123
      %v391 = vpop.permute.xlu0 %390
      %vm393 = vcmask 478208
      %394 = vst.msk [vmem:[#allocation2 + $0x60] sm:$0xf] %vm393, %v391
      %395 = vrot.lane.b32.xlu0 %v314, 122
      %v396 = vpop.permute.xlu0 %395
      %vm398 = vcmask 470016
      %399 = vst.msk [vmem:[#allocation2 + $0x68] sm:$0xf] %vm398, %v396
      %400 = vrot.lane.b32.xlu0 %v314, 121
      %v401 = vpop.permute.xlu0 %400
      %vm403 = vcmask 461824
      %404 = vst.msk [vmem:[#allocation2 + $0x70] sm:$0xf] %vm403, %v401
      %405 = vrot.lane.b32.xlu0 %v314, 120
      %v406 = vpop.permute.xlu0 %405
      %vm408 = vcmask 453632
      %409 = vst.msk [vmem:[#allocation2 + $0x78] sm:$0xf] %vm408, %v406
      %v410 = vld [vmem:[%s2] sm:$0xff]
      %v411 = vld [vmem:[#allocation2] sm:$0xff]
      %v412 = vld [vmem:[#allocation2 + $0x8] sm:$0xff]
      %v413 = vld [vmem:[#allocation2 + $0x10] sm:$0xff]
      %v414 = vld [vmem:[#allocation2 + $0x18] sm:$0xff]
      %v415 = vld [vmem:[#allocation2 + $0x20] sm:$0xff]
      %v416 = vld [vmem:[#allocation2 + $0x28] sm:$0xff]
      %v417 = vld [vmem:[#allocation2 + $0x30] sm:$0xff]
      %v418 = vld [vmem:[#allocation2 + $0x38] sm:$0xff]
      %v419 = vld [vmem:[#allocation2 + $0x40] sm:$0xff]
      %v420 = vld [vmem:[#allocation2 + $0x48] sm:$0xff]
      %v421 = vld [vmem:[#allocation2 + $0x50] sm:$0xff]
      %v422 = vld [vmem:[#allocation2 + $0x58] sm:$0xff]
      %v423 = vld [vmem:[#allocation2 + $0x60] sm:$0xff]
      %v424 = vld [vmem:[#allocation2 + $0x68] sm:$0xff]
      %v425 = vld [vmem:[#allocation2 + $0x70] sm:$0xff]
      %v426 = vld [vmem:[#allocation2 + $0x78] sm:$0xff]
      %427 = vmatprep.subr.mxu0 0.0
      %428 = vmatpush1.msra.mxu0 %v411
      %429 = vmatprep.subr.mxu0 0.0
      %430 = vmatpush1.msra.mxu0 %v412
      %431 = vmatprep.subr.mxu0 0.0
      %432 = vmatpush1.msra.mxu0 %v413
      %433 = vmatprep.subr.mxu0 0.0
      %434 = vmatpush1.msra.mxu0 %v414
      %435 = vmatprep.subr.mxu0 0.0
      %436 = vmatpush1.msra.mxu0 %v415
      %437 = vmatprep.subr.mxu0 0.0
      %438 = vmatpush1.msra.mxu0 %v416
      %439 = vmatprep.subr.mxu0 0.0
      %440 = vmatpush1.msra.mxu0 %v417
      %441 = vmatprep.subr.mxu0 0.0
      %442 = vmatpush1.msra.mxu0 %v418
      %443 = vmatprep.subr.mxu0 0.0
      %444 = vmatpush1.msra.mxu0 %v419
      %445 = vmatprep.subr.mxu0 0.0
      %446 = vmatpush1.msra.mxu0 %v420
      %447 = vmatprep.subr.mxu0 0.0
      %448 = vmatpush1.msra.mxu0 %v421
      %449 = vmatprep.subr.mxu0 0.0
      %450 = vmatpush1.msra.mxu0 %v422
      %451 = vmatprep.subr.mxu0 0.0
      %452 = vmatpush1.msra.mxu0 %v423
      %453 = vmatprep.subr.mxu0 0.0
      %454 = vmatpush1.msra.mxu0 %v424
      %455 = vmatprep.subr.mxu0 0.0
      %456 = vmatpush1.msra.mxu0 %v425
      %457 = vmatprep.subr.mxu0 0.0
      %458 = vmatpush1.msra.mxu0 %v426
      %459 = vmatprep.subr.mxu0 0.0
      %460 = vmatpush1.msra.mxu0 0.0
      %461 = vmatprep.subr.mxu0 0.0
      %462 = vmatpush1.msra.mxu0 0.0
      %463 = vmatprep.subr.mxu0 0.0
      %464 = vmatpush1.msra.mxu0 0.0
      %465 = vmatprep.subr.mxu0 0.0
      %466 = vmatpush1.msra.mxu0 0.0
      %467 = vmatprep.subr.mxu0 0.0
      %468 = vmatpush1.msra.mxu0 0.0
      %469 = vmatprep.subr.mxu0 0.0
      %470 = vmatpush1.msra.mxu0 0.0
      %471 = vmatprep.subr.mxu0 0.0
      %472 = vmatpush1.msra.mxu0 0.0
      %473 = vmatprep.subr.mxu0 0.0
      %474 = vmatpush1.msra.mxu0 0.0
      %475 = vmatprep.subr.mxu0 0.0
      %476 = vmatpush1.msra.mxu0 0.0
      %477 = vmatprep.subr.mxu0 0.0
      %478 = vmatpush1.msra.mxu0 0.0
      %479 = vmatprep.subr.mxu0 0.0
      %480 = vmatpush1.msra.mxu0 0.0
      %481 = vmatprep.subr.mxu0 0.0
      %482 = vmatpush1.msra.mxu0 0.0
      %483 = vmatprep.subr.mxu0 0.0
      %484 = vmatpush1.msra.mxu0 0.0
      %485 = vmatprep.subr.mxu0 0.0
      %486 = vmatpush1.msra.mxu0 0.0
      %487 = vmatprep.subr.mxu0 0.0
      %488 = vmatpush1.msra.mxu0 0.0
      %489 = vmatprep.subr.mxu0 0.0
      %490 = vmatpush1.msra.mxu0 0.0
      %491 = vmatprep.mubr.f32.mxu0 0.0
      %492 = vmatmul.mubr.f32.gmra.mrb[0].mxu0 %v410
      %v493 = vpop.f32.mrb[0].mxu0
      %v494 = vadd.f32 0.0, %v493
      %v495 = vpop.f32.mrb[0].mxu0
      %496 = vdwg.mxu0
      %v497 = vld [vmem:[%s299] sm:$0xff]
      %v498 = vld [vmem:[%s299 + $0x8] sm:$0xff]
      %v499 = vld [vmem:[%s299 + $0x10] sm:$0xff]
      %v500 = vld [vmem:[%s299 + $0x18] sm:$0xff]
      %501 = vst.msk [vmem:[#allocation3] sm:$0xff] %vm315, %v497
      %502 = vst.msk [vmem:[#allocation3 + $0x8] sm:$0xff] %vm315, %v498
      %503 = vst.msk [vmem:[#allocation3 + $0x10] sm:$0xff] %vm315, %v499
      %504 = vst.msk [vmem:[#allocation3 + $0x18] sm:$0xff] %vm315, %v500
      %v505 = vld [vmem:[%s299] sm:$0xff]
      %v506 = vld [vmem:[%s299 + $0x8] sm:$0xff]
      %v507 = vld [vmem:[%s299 + $0x10] sm:$0xff]
      %v508 = vld [vmem:[%s299 + $0x18] sm:$0xff]
      %513 = vrot.lane.b32.xlu0 %v505, 127
      %v514 = vpop.permute.xlu0 %513
      %515 = vrot.lane.b32.xlu0 %v506, 127
      %v516 = vpop.permute.xlu0 %515
      %517 = vrot.lane.b32.xlu0 %v507, 127
      %v518 = vpop.permute.xlu0 %517
      %519 = vrot.lane.b32.xlu0 %v508, 127
      %v520 = vpop.permute.xlu0 %519
      %525 = vst.msk [vmem:[#allocation3 + $0x20] sm:$0xff] %vm315, %v514
      %526 = vst.msk [vmem:[#allocation3 + $0x28] sm:$0xff] %vm315, %v516
      %527 = vst.msk [vmem:[#allocation3 + $0x30] sm:$0xff] %vm315, %v518
      %528 = vst.msk [vmem:[#allocation3 + $0x38] sm:$0xff] %vm315, %v520
      %v529 = vld [vmem:[%s299] sm:$0xff]
      %v530 = vld [vmem:[%s299 + $0x8] sm:$0xff]
      %v531 = vld [vmem:[%s299 + $0x10] sm:$0xff]
      %v532 = vld [vmem:[%s299 + $0x18] sm:$0xff]
      %537 = vrot.lane.b32.xlu0 %v529, 126
      %v538 = vpop.permute.xlu0 %537
      %539 = vrot.lane.b32.xlu0 %v530, 126
      %v540 = vpop.permute.xlu0 %539
      %541 = vrot.lane.b32.xlu0 %v531, 126
      %v542 = vpop.permute.xlu0 %541
      %543 = vrot.lane.b32.xlu0 %v532, 126
      %v544 = vpop.permute.xlu0 %543
      %549 = vst.msk [vmem:[#allocation3 + $0x40] sm:$0xff] %vm315, %v538
      %550 = vst.msk [vmem:[#allocation3 + $0x48] sm:$0xff] %vm315, %v540
      %551 = vst.msk [vmem:[#allocation3 + $0x50] sm:$0xff] %vm315, %v542
      %552 = vst.msk [vmem:[#allocation3 + $0x58] sm:$0xff] %vm315, %v544
      %v553 = vld [vmem:[%s299] sm:$0xff]
      %v554 = vld [vmem:[%s299 + $0x8] sm:$0xff]
      %v555 = vld [vmem:[%s299 + $0x10] sm:$0xff]
      %v556 = vld [vmem:[%s299 + $0x18] sm:$0xff]
      %561 = vrot.lane.b32.xlu0 %v553, 125
      %v562 = vpop.permute.xlu0 %561
      %563 = vrot.lane.b32.xlu0 %v554, 125
      %v564 = vpop.permute.xlu0 %563
      %565 = vrot.lane.b32.xlu0 %v555, 125
      %v566 = vpop.permute.xlu0 %565
      %567 = vrot.lane.b32.xlu0 %v556, 125
      %v568 = vpop.permute.xlu0 %567
      %573 = vst.msk [vmem:[#allocation3 + $0x60] sm:$0xff] %vm315, %v562
      %574 = vst.msk [vmem:[#allocation3 + $0x68] sm:$0xff] %vm315, %v564
      %575 = vst.msk [vmem:[#allocation3 + $0x70] sm:$0xff] %vm315, %v566
      %576 = vst.msk [vmem:[#allocation3 + $0x78] sm:$0xff] %vm315, %v568
      %v577 = vld [vmem:[%s3] sm:$0xff]
      %v578 = vld [vmem:[#allocation3] sm:$0xff]
      %v579 = vld [vmem:[#allocation3 + $0x8] sm:$0xff]
      %v580 = vld [vmem:[#allocation3 + $0x10] sm:$0xff]
      %v581 = vld [vmem:[#allocation3 + $0x18] sm:$0xff]
      %v582 = vld [vmem:[#allocation3 + $0x20] sm:$0xff]
      %v583 = vld [vmem:[#allocation3 + $0x28] sm:$0xff]
      %v584 = vld [vmem:[#allocation3 + $0x30] sm:$0xff]
      %v585 = vld [vmem:[#allocation3 + $0x38] sm:$0xff]
      %v586 = vld [vmem:[#allocation3 + $0x40] sm:$0xff]
      %v587 = vld [vmem:[#allocation3 + $0x48] sm:$0xff]
      %v588 = vld [vmem:[#allocation3 + $0x50] sm:$0xff]
      %v589 = vld [vmem:[#allocation3 + $0x58] sm:$0xff]
      %v590 = vld [vmem:[#allocation3 + $0x60] sm:$0xff]
      %v591 = vld [vmem:[#allocation3 + $0x68] sm:$0xff]
      %v592 = vld [vmem:[#allocation3 + $0x70] sm:$0xff]
      %v593 = vld [vmem:[#allocation3 + $0x78] sm:$0xff]
      %594 = vmatprep.subr.mxu0 0.0
      %595 = vmatpush1.msra.mxu0 %v578
      %596 = vmatprep.subr.mxu0 0.0
      %597 = vmatpush1.msra.mxu0 %v579
      %598 = vmatprep.subr.mxu0 0.0
      %599 = vmatpush1.msra.mxu0 %v580
      %600 = vmatprep.subr.mxu0 0.0
      %601 = vmatpush1.msra.mxu0 %v581
      %602 = vmatprep.subr.mxu0 0.0
      %603 = vmatpush1.msra.mxu0 %v582
      %604 = vmatprep.subr.mxu0 0.0
      %605 = vmatpush1.msra.mxu0 %v583
      %606 = vmatprep.subr.mxu0 0.0
      %607 = vmatpush1.msra.mxu0 %v584
      %608 = vmatprep.subr.mxu0 0.0
      %609 = vmatpush1.msra.mxu0 %v585
      %610 = vmatprep.subr.mxu0 0.0
      %611 = vmatpush1.msra.mxu0 %v586
      %612 = vmatprep.subr.mxu0 0.0
      %613 = vmatpush1.msra.mxu0 %v587
      %614 = vmatprep.subr.mxu0 0.0
      %615 = vmatpush1.msra.mxu0 %v588
      %616 = vmatprep.subr.mxu0 0.0
      %617 = vmatpush1.msra.mxu0 %v589
      %618 = vmatprep.subr.mxu0 0.0
      %619 = vmatpush1.msra.mxu0 %v590
      %620 = vmatprep.subr.mxu0 0.0
      %621 = vmatpush1.msra.mxu0 %v591
      %622 = vmatprep.subr.mxu0 0.0
      %623 = vmatpush1.msra.mxu0 %v592
      %624 = vmatprep.subr.mxu0 0.0
      %625 = vmatpush1.msra.mxu0 %v593
      %626 = vmatprep.subr.mxu0 0.0
      %627 = vmatpush1.msra.mxu0 0.0
      %628 = vmatprep.subr.mxu0 0.0
      %629 = vmatpush1.msra.mxu0 0.0
      %630 = vmatprep.subr.mxu0 0.0
      %631 = vmatpush1.msra.mxu0 0.0
      %632 = vmatprep.subr.mxu0 0.0
      %633 = vmatpush1.msra.mxu0 0.0
      %634 = vmatprep.subr.mxu0 0.0
      %635 = vmatpush1.msra.mxu0 0.0
      %636 = vmatprep.subr.mxu0 0.0
      %637 = vmatpush1.msra.mxu0 0.0
      %638 = vmatprep.subr.mxu0 0.0
      %639 = vmatpush1.msra.mxu0 0.0
      %640 = vmatprep.subr.mxu0 0.0
      %641 = vmatpush1.msra.mxu0 0.0
      %642 = vmatprep.subr.mxu0 0.0
      %643 = vmatpush1.msra.mxu0 0.0
      %644 = vmatprep.subr.mxu0 0.0
      %645 = vmatpush1.msra.mxu0 0.0
      %646 = vmatprep.subr.mxu0 0.0
      %647 = vmatpush1.msra.mxu0 0.0
      %648 = vmatprep.subr.mxu0 0.0
      %649 = vmatpush1.msra.mxu0 0.0
      %650 = vmatprep.subr.mxu0 0.0
      %651 = vmatpush1.msra.mxu0 0.0
      %652 = vmatprep.subr.mxu0 0.0
      %653 = vmatpush1.msra.mxu0 0.0
      %654 = vmatprep.subr.mxu0 0.0
      %655 = vmatpush1.msra.mxu0 0.0
      %656 = vmatprep.subr.mxu0 0.0
      %657 = vmatpush1.msra.mxu0 0.0
      %658 = vmatprep.mubr.f32.mxu0 0.0
      %659 = vmatmul.mubr.f32.gmra.mrb[0].mxu0 %v577
      %v660 = vpop.f32.mrb[0].mxu0
      %v661 = vadd.f32 0.0, %v660
      %v662 = vpop.f32.mrb[0].mxu0
      %663 = vdwg.mxu0
      %v664 = vadd.f32 %v661, %v494
      %v665 = vld [vmem:[%s4] sm:$0xff]
      %667 = vset.pattern.permute.xlu0 0
      %668 = vperm.xlu0 %667, %v665
      %v669 = vpop.permute.xlu0 %668
      %v671 = vmul.f32 %v664, %v669
      %v672 = vld [vmem:[%s5] sm:$0xff]
      %674 = vset.pattern.permute.xlu0 0
      %675 = vperm.xlu0 %674, %v672
      %v676 = vpop.permute.xlu0 %675
      %v678 = vadd.f32 %v671, %v676
      %v679 = vmax.f32 %v678, 0.0
      %680 = vst.msk [vmem:[%s303] sm:$0xff] %vm315, %v679
      %681 = vst.msk [vmem:[%s307] sm:$0xff] %vm315, %v661
      %p682 = scmp.lt.s32.totalorder %s19, 1
      %s683 = scalar_select %p682, %s19, 1
      %s684 = smul.addr %s683, 8
      %s685 = scalar_lea.vmem %s6, %s684
      %p686 = scmp.lt.s32.totalorder %s19, 1
      %s687 = scalar_select %p686, %s19, 1
      %s688 = smul.addr %s687, 8
      %s689 = scalar_lea.vmem %s7, %s688
      // Predicated region
      $region45: #{resnet_forward.12} parent=43 // pred_check
        %p690 = pneg %p173
      $region46: #{resnet_forward.12} parent=43 // pred_check_branch
        %692 = sbr.rel (%p690) target = $region48
      $region47: #{resnet_forward.12} parent=43 // pred_region
        _
      $region48: #{resnet_forward.12} parent=43 // pred_fallthru
        _
      // Predicated region
      $region49: #{resnet_forward.12} parent=43 // pred_check
        %p693 = pneg %p199
      $region50: #{resnet_forward.12} parent=43 // pred_check_branch
        %695 = sbr.rel (%p693) target = $region52
      $region51: #{resnet_forward.12} parent=43 // pred_region
        _
      $region52: #{resnet_forward.12} parent=43 // pred_fallthru
        _
    $region44: #{resnet_forward.12} parent=5 // pred_fallthru
      _
    %p696 = scmp.le.s32.totalorder 2, %s14
    // Predicated region
    $region53: #{resnet_forward.12} parent=5 // pred_check
      %p697 = pneg %p696
    $region54: #{resnet_forward.12} parent=5 // pred_check_branch
      %699 = sbr.rel (%p697) target = $region56
    $region55: #{resnet_forward.12} parent=5 // pred_region
      %s700 = ssub.s32 %s14, 2
      // Predicated region
      $region57: #{resnet_forward.12} parent=55 // pred_check
        %p701 = pneg %p179
      $region58: #{resnet_forward.12} parent=55 // pred_check_branch
        %703 = sbr.rel (%p701) target = $region60
      $region59: #{resnet_forward.12} parent=55 // pred_region
        %p704 = scmp.lt.s32.totalorder %s20, 1
        %s705 = scalar_select %p704, %s20, 1
        %s706 = smul.addr %s705, 8
        %s707 = scalar_lea.vmem %s6, %s706
      $region60: #{resnet_forward.12} parent=55 // pred_fallthru
        _
      // Predicated region
      $region61: #{resnet_forward.12} parent=55 // pred_check
        %p708 = pneg %p205
      $region62: #{resnet_forward.12} parent=55 // pred_check_branch
        %710 = sbr.rel (%p708) target = $region64
      $region63: #{resnet_forward.12} parent=55 // pred_region
        %p711 = scmp.lt.s32.totalorder %s20, 1
        %s712 = scalar_select %p711, %s20, 1
        %s713 = smul.addr %s712, 8
        %s714 = scalar_lea.vmem %s7, %s713
      $region64: #{resnet_forward.12} parent=55 // pred_fallthru
        _
    $region56: #{resnet_forward.12} parent=5 // pred_fallthru
      _
  $region6: #{resnet_forward.12} parent=0 // loop_footer
    %s18 = sadd.s32 1, %s14
  $region7: #{resnet_forward.12} parent=0 // loop_footer_branch
    %13 = sbr.rel target = $region3
  $region8: #{resnet_forward.12} parent=0 // loop_exit
    _

// kernel: resnet_forward.13
$region0: #{resnet_forward.13}
  #allocation0 [shape = 'u32[]', space=smem, size = 0x4, offset = 0x4, fixed_abs, tag = 'smem constant byte address 0x4 - core index']
  #allocation1 [shape = 'u32[144,128]{1,0:T(1,128)}', space=vmem, size = 0x12000, scoped, tag = 'internal scratch']
  #allocation2 [shape = 'f32[128,64]{1,0:T(8,128)}', space=vmem, size = 0x10000, scoped, tag = 'scratch operand']
  %s0 = inlined_call_operand.vmem [shape: f32[2,8,64], index: 0, kind: input, shape index: {}]
  %s1 = inlined_call_operand.vmem [shape: f32[12,128], index: 1, kind: input, shape index: {}]
  %s2 = inlined_call_operand.vmem [shape: f32[12,1], index: 2, kind: input, shape index: {}]
  %s3 = inlined_call_operand.vmem [shape: f32[12,1], index: 3, kind: input, shape index: {}]
  %s4 = inlined_call_operand.vmem [shape: f32[2,12,64], index: 4, kind: output, shape index: {}]
  %s5 = sld [smem:[#allocation0]]
  $region49: #{resnet_forward.13} parent=0
    _
  %s7 = ssub.s32 1, %s5
  %s8 = scalar_select 0, %s7, %s5
  loop: start=0, step=1, limit=4
  $region2: #{resnet_forward.13} parent=0 // loop_pre_header
    _
  $region3: #{resnet_forward.13} parent=0 // loop_header
    %s10 = sphi 0, %s14
    %p11 = scmp.ge.s32.totalorder %s10, 4
    %s20 = sphi 0, %s22
    %s23 = sphi 0, %s20
    %s24 = sphi 0, %s23
    %s40 = sphi 0, %s24
    %s44 = sphi 0, %s44
    %s46 = sphi 0, %s44
    %s47 = sphi 0, %s46
    %s61 = sphi 0, %s47
    %s65 = sphi 0, %s65
    %s67 = sphi 0, %s65
    %s68 = sphi 0, %s67
    %s82 = sphi 0, %s68
    %s86 = sphi 0, %s86
    %s88 = sphi 0, %s86
    %s89 = sphi 0, %s88
    %s103 = sphi 0, %s89
    %s109 = sphi 0, %s111
    %s112 = sphi 0, %s109
    %s113 = sphi 0, %s112
    %s129 = sphi 0, %s113
  $region4: #{resnet_forward.13} parent=0 // loop_header_branch
    %13 = sbr.rel (%p11) target = $region8
  $region5: #{resnet_forward.13} parent=0 // loop_body
    %s15 = ssub.s32 %s10, 1
    %s16 = ssub.s32 %s10, 2
    %s17 = sadd.s32 %s10, 1
    %s18 = ssub.s32 %s10, %s17
    %p19 = scmp.eq.s32.totalorder %s18, 0
    %s21 = sadd.s32 %s20, 1
    %s22 = scalar_select %p19, %s20, %s21
    %p25 = pneg %p19
    %p26 = scmp.eq.s32.totalorder %s10, 1
    %p27 = por %p25, %p26
    %p28 = scmp.ne.s32.totalorder %s20, %s23
    %p29 = scmp.eq.s32.totalorder %s10, 0
    %p30 = por %p28, %p29
    %p31 = scmp.ne.s32.totalorder %s20, %s23
    %p32 = scmp.eq.s32.totalorder %s15, 1
    %p33 = por %p31, %p32
    %p34 = scmp.ne.s32.totalorder %s23, %s24
    %p35 = scmp.eq.s32.totalorder %s15, 0
    %p36 = por %p34, %p35
    %p37 = scmp.ne.s32.totalorder %s23, %s24
    %p38 = scmp.eq.s32.totalorder %s16, 1
    %p39 = por %p37, %p38
    %p41 = scmp.ne.s32.totalorder %s24, %s40
    %p42 = scmp.eq.s32.totalorder %s16, 0
    %p43 = por %p41, %p42
    %s45 = sadd.s32 %s44, 1
    %p48 = scmp.eq.s32.totalorder %s10, 1
    %p49 = scmp.ne.s32.totalorder %s44, %s46
    %p50 = scmp.eq.s32.totalorder %s10, 0
    %p51 = por %p49, %p50
    %p52 = scmp.ne.s32.totalorder %s44, %s46
    %p53 = scmp.eq.s32.totalorder %s15, 1
    %p54 = por %p52, %p53
    %p55 = scmp.ne.s32.totalorder %s46, %s47
    %p56 = scmp.eq.s32.totalorder %s15, 0
    %p57 = por %p55, %p56
    %p58 = scmp.ne.s32.totalorder %s46, %s47
    %p59 = scmp.eq.s32.totalorder %s16, 1
    %p60 = por %p58, %p59
    %p62 = scmp.ne.s32.totalorder %s47, %s61
    %p63 = scmp.eq.s32.totalorder %s16, 0
    %p64 = por %p62, %p63
    %s66 = sadd.s32 %s65, 1
    %p69 = scmp.eq.s32.totalorder %s10, 1
    %p70 = scmp.ne.s32.totalorder %s65, %s67
    %p71 = scmp.eq.s32.totalorder %s10, 0
    %p72 = por %p70, %p71
    %p73 = scmp.ne.s32.totalorder %s65, %s67
    %p74 = scmp.eq.s32.totalorder %s15, 1
    %p75 = por %p73, %p74
    %p76 = scmp.ne.s32.totalorder %s67, %s68
    %p77 = scmp.eq.s32.totalorder %s15, 0
    %p78 = por %p76, %p77
    %p79 = scmp.ne.s32.totalorder %s67, %s68
    %p80 = scmp.eq.s32.totalorder %s16, 1
    %p81 = por %p79, %p80
    %p83 = scmp.ne.s32.totalorder %s68, %s82
    %p84 = scmp.eq.s32.totalorder %s16, 0
    %p85 = por %p83, %p84
    %s87 = sadd.s32 %s86, 1
    %p90 = scmp.eq.s32.totalorder %s10, 1
    %p91 = scmp.ne.s32.totalorder %s86, %s88
    %p92 = scmp.eq.s32.totalorder %s10, 0
    %p93 = por %p91, %p92
    %p94 = scmp.ne.s32.totalorder %s86, %s88
    %p95 = scmp.eq.s32.totalorder %s15, 1
    %p96 = por %p94, %p95
    %p97 = scmp.ne.s32.totalorder %s88, %s89
    %p98 = scmp.eq.s32.totalorder %s15, 0
    %p99 = por %p97, %p98
    %p100 = scmp.ne.s32.totalorder %s88, %s89
    %p101 = scmp.eq.s32.totalorder %s16, 1
    %p102 = por %p100, %p101
    %p104 = scmp.ne.s32.totalorder %s89, %s103
    %p105 = scmp.eq.s32.totalorder %s16, 0
    %p106 = por %p104, %p105
    %s107 = ssub.s32 %s10, %s17
    %p108 = scmp.eq.s32.totalorder %s107, 0
    %s110 = sadd.s32 %s109, 1
    %s111 = scalar_select %p108, %s109, %s110
    %p114 = pneg %p108
    %p115 = scmp.eq.s32.totalorder %s10, 1
    %p116 = por %p114, %p115
    %p117 = scmp.ne.s32.totalorder %s109, %s112
    %p118 = scmp.eq.s32.totalorder %s10, 0
    %p119 = por %p117, %p118
    %p120 = scmp.ne.s32.totalorder %s109, %s112
    %p121 = scmp.eq.s32.totalorder %s15, 1
    %p122 = por %p120, %p121
    %p123 = scmp.ne.s32.totalorder %s112, %s113
    %p124 = scmp.eq.s32.totalorder %s15, 0
    %p125 = por %p123, %p124
    %p126 = scmp.ne.s32.totalorder %s112, %s113
    %p127 = scmp.eq.s32.totalorder %s16, 1
    %p128 = por %p126, %p127
    %p130 = scmp.ne.s32.totalorder %s113, %s129
    %p131 = scmp.eq.s32.totalorder %s16, 0
    %p132 = por %p130, %p131
    %p133 = scmp.le.s32.totalorder 1, %s10
    %p134 = scmp.lt.s32.totalorder %s10, 3
    %p135 = pnand %p133, %p134
    %p136 = pneg %p135
    // Predicated region
    $region9: #{resnet_forward.13} parent=5 // pred_check
      _
    $region10: #{resnet_forward.13} parent=5 // pred_check_branch
      %138 = sbr.rel (%p135) target = $region12
    $region11: #{resnet_forward.13} parent=5 // pred_region
      %s139 = ssub.s32 %s10, 1
      // Predicated region
      $region13: #{resnet_forward.13} parent=11 // pred_check
        %p140 = pneg %p57
      $region14: #{resnet_forward.13} parent=11 // pred_check_branch
        %142 = sbr.rel (%p140) target = $region16
      $region15: #{resnet_forward.13} parent=11 // pred_region
        _
      $region16: #{resnet_forward.13} parent=11 // pred_fallthru
        _
      // Predicated region
      $region17: #{resnet_forward.13} parent=11 // pred_check
        %p143 = pneg %p78
      $region18: #{resnet_forward.13} parent=11 // pred_check_branch
        %145 = sbr.rel (%p143) target = $region20
      $region19: #{resnet_forward.13} parent=11 // pred_region
        _
      $region20: #{resnet_forward.13} parent=11 // pred_fallthru
        _
      // Predicated region
      $region21: #{resnet_forward.13} parent=11 // pred_check
        %p146 = pneg %p99
      $region22: #{resnet_forward.13} parent=11 // pred_check_branch
        %148 = sbr.rel (%p146) target = $region24
      $region23: #{resnet_forward.13} parent=11 // pred_region
        _
      $region24: #{resnet_forward.13} parent=11 // pred_fallthru
        _
    $region12: #{resnet_forward.13} parent=5 // pred_fallthru
      _
    %p149 = scmp.lt.s32.totalorder %s10, 2
    // Predicated region
    $region25: #{resnet_forward.13} parent=5 // pred_check
      %p150 = pneg %p149
    $region26: #{resnet_forward.13} parent=5 // pred_check_branch
      %152 = sbr.rel (%p150) target = $region28
    $region27: #{resnet_forward.13} parent=5 // pred_region
      // Predicated region
      $region29: #{resnet_forward.13} parent=27 // pred_check
        %p153 = pneg %p30
      $region30: #{resnet_forward.13} parent=27 // pred_check_branch
        %155 = sbr.rel (%p153) target = $region32
      $region31: #{resnet_forward.13} parent=27 // pred_region
        %p156 = scmp.lt.s32.totalorder %s10, 1
        %s157 = scalar_select %p156, %s10, 1
        %s158 = smul.addr %s157, 8
        %s159 = scalar_lea.vmem %s0, %s158
      $region32: #{resnet_forward.13} parent=27 // pred_fallthru
        _
    $region28: #{resnet_forward.13} parent=5 // pred_fallthru
      _
    %p160 = scmp.le.s32.totalorder 1, %s10
    %p161 = scmp.lt.s32.totalorder %s10, 3
    %p162 = pnand %p160, %p161
    %p163 = pneg %p162
    // Predicated region
    $region33: #{resnet_forward.13} parent=5 // pred_check
      _
    $region34: #{resnet_forward.13} parent=5 // pred_check_branch
      %165 = sbr.rel (%p162) target = $region36
    $region35: #{resnet_forward.13} parent=5 // pred_region
      %s166 = ssub.s32 %s10, 1
      %p167 = scmp.lt.s32.totalorder %s15, 1
      %s168 = scalar_select %p167, %s15, 1
      %s169 = smul.addr %s168, 8
      %s170 = scalar_lea.vmem %s0, %s169
      %p171 = pneg %p36
      %p172 = pneg %p33
      %p173 = pneg %p57
      %p174 = pneg %p54
      %p175 = pneg %p78
      %p176 = pneg %p75
      %p177 = pneg %p99
      %p178 = pneg %p96
      %p179 = pneg %p125
      %p180 = pneg %p122
      %p181 = scmp.lt.s32.totalorder %s15, 1
      %s182 = scalar_select %p181, %s15, 1
      %s183 = smul.addr %s182, 2
      %s184 = smul.addr %s183, 8
      %s185 = scalar_lea.vmem %s4, %s184
      %p186 = scmp.lt.s32.totalorder %s15, 1
      %s187 = scalar_select %p186, %s15, 1
      %s188 = smul.addr %s187, 8
      %s189 = scalar_lea.vmem %s0, %s188
      %p190 = scmp.lt.s32.totalorder %s15, 1
      %s191 = scalar_select %p190, %s15, 1
      %s192 = smul.addr %s191, 2
      %s193 = smul.addr %s192, 8
      %s194 = scalar_lea.vmem %s4, %s193
      %vm195 = vcmask 523264
      %196 = vst.msk [vmem:[#allocation2] sm:$0xff] %vm195, 0.0
      %197 = vst.msk [vmem:[#allocation2 + $0x8] sm:$0xff] %vm195, 0.0
      %198 = vst.msk [vmem:[#allocation2 + $0x10] sm:$0xff] %vm195, 0.0
      %199 = vst.msk [vmem:[#allocation2 + $0x18] sm:$0xff] %vm195, 0.0
      %200 = vst.msk [vmem:[#allocation2 + $0x20] sm:$0xff] %vm195, 0.0
      %201 = vst.msk [vmem:[#allocation2 + $0x28] sm:$0xff] %vm195, 0.0
      %202 = vst.msk [vmem:[#allocation2 + $0x30] sm:$0xff] %vm195, 0.0
      %203 = vst.msk [vmem:[#allocation2 + $0x38] sm:$0xff] %vm195, 0.0
      %204 = vst.msk [vmem:[#allocation2 + $0x40] sm:$0xff] %vm195, 0.0
      %205 = vst.msk [vmem:[#allocation2 + $0x48] sm:$0xff] %vm195, 0.0
      %206 = vst.msk [vmem:[#allocation2 + $0x50] sm:$0xff] %vm195, 0.0
      %207 = vst.msk [vmem:[#allocation2 + $0x58] sm:$0xff] %vm195, 0.0
      %208 = vst.msk [vmem:[#allocation2 + $0x60] sm:$0xff] %vm195, 0.0
      %209 = vst.msk [vmem:[#allocation2 + $0x68] sm:$0xff] %vm195, 0.0
      %210 = vst.msk [vmem:[#allocation2 + $0x70] sm:$0xff] %vm195, 0.0
      %211 = vst.msk [vmem:[#allocation2 + $0x78] sm:$0xff] %vm195, 0.0
      %v212 = vld [vmem:[%s189] sm:$0xff]
      %214 = vrot.lane.b32.xlu0 %v212, 7
      %v215 = vpop.permute.xlu0 %214
      %vm217 = vcmask 523320
      %218 = vst.msk [vmem:[#allocation2] sm:$0xff] %vm217, %v215
      %v219 = vld [vmem:[%s189] sm:$0xff]
      %221 = vrot.lane.b32.xlu0 %v219, 6
      %v222 = vpop.permute.xlu0 %221
      %vm224 = vcmask 523312
      %225 = vst.msk [vmem:[#allocation2 + $0x8] sm:$0xff] %vm224, %v222
      %v226 = vld [vmem:[%s189] sm:$0xff]
      %228 = vrot.lane.b32.xlu0 %v226, 5
      %v229 = vpop.permute.xlu0 %228
      %vm231 = vcmask 523304
      %232 = vst.msk [vmem:[#allocation2 + $0x10] sm:$0xff] %vm231, %v229
      %v233 = vld [vmem:[%s189] sm:$0xff]
      %235 = vrot.lane.b32.xlu0 %v233, 4
      %v236 = vpop.permute.xlu0 %235
      %vm238 = vcmask 523296
      %239 = vst.msk [vmem:[#allocation2 + $0x18] sm:$0xff] %vm238, %v236
      %v240 = vld [vmem:[%s189] sm:$0xff]
      %242 = vrot.lane.b32.xlu0 %v240, 3
      %v243 = vpop.permute.xlu0 %242
      %vm245 = vcmask 523288
      %246 = vst.msk [vmem:[#allocation2 + $0x20] sm:$0xff] %vm245, %v243
      %v247 = vld [vmem:[%s189] sm:$0xff]
      %249 = vrot.lane.b32.xlu0 %v247, 2
      %v250 = vpop.permute.xlu0 %249
      %vm252 = vcmask 523280
      %253 = vst.msk [vmem:[#allocation2 + $0x28] sm:$0xff] %vm252, %v250
      %v254 = vld [vmem:[%s189] sm:$0xff]
      %256 = vrot.lane.b32.xlu0 %v254, 1
      %v257 = vpop.permute.xlu0 %256
      %vm259 = vcmask 523272
      %260 = vst.msk [vmem:[#allocation2 + $0x30] sm:$0xff] %vm259, %v257
      %v261 = vld [vmem:[%s189] sm:$0xff]
      %262 = vst.msk [vmem:[#allocation2 + $0x38] sm:$0xff] %vm195, %v261
      %v263 = vld [vmem:[%s189] sm:$0xff]
      %265 = vrot.lane.b32.xlu0 %v263, 127
      %v266 = vpop.permute.xlu0 %265
      %vm268 = vcmask 515072
      %269 = vst.msk [vmem:[#allocation2 + $0x40] sm:$0xff] %vm268, %v266
      %v270 = vld [vmem:[%s189] sm:$0xff]
      %272 = vrot.lane.b32.xlu0 %v270, 126
      %v273 = vpop.permute.xlu0 %272
      %vm275 = vcmask 506880
      %276 = vst.msk [vmem:[#allocation2 + $0x48] sm:$0xff] %vm275, %v273
      %v277 = vld [vmem:[%s189] sm:$0xff]
      %279 = vrot.lane.b32.xlu0 %v277, 125
      %v280 = vpop.permute.xlu0 %279
      %vm282 = vcmask 498688
      %283 = vst.msk [vmem:[#allocation2 + $0x50] sm:$0xff] %vm282, %v280
      %v284 = vld [vmem:[%s189] sm:$0xff]
      %286 = vrot.lane.b32.xlu0 %v284, 124
      %v287 = vpop.permute.xlu0 %286
      %vm289 = vcmask 490496
      %290 = vst.msk [vmem:[#allocation2 + $0x58] sm:$0xff] %vm289, %v287
      %v291 = vld [vmem:[%s189] sm:$0xff]
      %293 = vrot.lane.b32.xlu0 %v291, 123
      %v294 = vpop.permute.xlu0 %293
      %vm296 = vcmask 482304
      %297 = vst.msk [vmem:[#allocation2 + $0x60] sm:$0xff] %vm296, %v294
      %v298 = vld [vmem:[%s189] sm:$0xff]
      %300 = vrot.lane.b32.xlu0 %v298, 122
      %v301 = vpop.permute.xlu0 %300
      %vm303 = vcmask 474112
      %304 = vst.msk [vmem:[#allocation2 + $0x68] sm:$0xff] %vm303, %v301
      %v305 = vld [vmem:[%s189] sm:$0xff]
      %307 = vrot.lane.b32.xlu0 %v305, 121
      %v308 = vpop.permute.xlu0 %307
      %vm310 = vcmask 465920
      %311 = vst.msk [vmem:[#allocation2 + $0x70] sm:$0xff] %vm310, %v308
      %v312 = vld [vmem:[%s189] sm:$0xff]
      %314 = vrot.lane.b32.xlu0 %v312, 120
      %v315 = vpop.permute.xlu0 %314
      %vm317 = vcmask 457728
      %318 = vst.msk [vmem:[#allocation2 + $0x78] sm:$0xff] %vm317, %v315
      %v319 = vld [vmem:[%s1] sm:$0xff]
      %v320 = vld [vmem:[%s1 + $0x8] sm:$0xf]
      %v321 = vld [vmem:[#allocation2] sm:$0xff]
      %v322 = vld [vmem:[#allocation2 + $0x8] sm:$0xff]
      %v323 = vld [vmem:[#allocation2 + $0x10] sm:$0xff]
      %v324 = vld [vmem:[#allocation2 + $0x18] sm:$0xff]
      %v325 = vld [vmem:[#allocation2 + $0x20] sm:$0xff]
      %v326 = vld [vmem:[#allocation2 + $0x28] sm:$0xff]
      %v327 = vld [vmem:[#allocation2 + $0x30] sm:$0xff]
      %v328 = vld [vmem:[#allocation2 + $0x38] sm:$0xff]
      %v329 = vld [vmem:[#allocation2 + $0x40] sm:$0xff]
      %v330 = vld [vmem:[#allocation2 + $0x48] sm:$0xff]
      %v331 = vld [vmem:[#allocation2 + $0x50] sm:$0xff]
      %v332 = vld [vmem:[#allocation2 + $0x58] sm:$0xff]
      %v333 = vld [vmem:[#allocation2 + $0x60] sm:$0xff]
      %v334 = vld [vmem:[#allocation2 + $0x68] sm:$0xff]
      %v335 = vld [vmem:[#allocation2 + $0x70] sm:$0xff]
      %v336 = vld [vmem:[#allocation2 + $0x78] sm:$0xff]
      %337 = vmatprep.subr.mxu0 0.0
      %338 = vmatpush1.msra.mxu0 %v321
      %339 = vmatprep.subr.mxu0 0.0
      %340 = vmatpush1.msra.mxu0 %v322
      %341 = vmatprep.subr.mxu0 0.0
      %342 = vmatpush1.msra.mxu0 %v323
      %343 = vmatprep.subr.mxu0 0.0
      %344 = vmatpush1.msra.mxu0 %v324
      %345 = vmatprep.subr.mxu0 0.0
      %346 = vmatpush1.msra.mxu0 %v325
      %347 = vmatprep.subr.mxu0 0.0
      %348 = vmatpush1.msra.mxu0 %v326
      %349 = vmatprep.subr.mxu0 0.0
      %350 = vmatpush1.msra.mxu0 %v327
      %351 = vmatprep.subr.mxu0 0.0
      %352 = vmatpush1.msra.mxu0 %v328
      %353 = vmatprep.subr.mxu0 0.0
      %354 = vmatpush1.msra.mxu0 %v329
      %355 = vmatprep.subr.mxu0 0.0
      %356 = vmatpush1.msra.mxu0 %v330
      %357 = vmatprep.subr.mxu0 0.0
      %358 = vmatpush1.msra.mxu0 %v331
      %359 = vmatprep.subr.mxu0 0.0
      %360 = vmatpush1.msra.mxu0 %v332
      %361 = vmatprep.subr.mxu0 0.0
      %362 = vmatpush1.msra.mxu0 %v333
      %363 = vmatprep.subr.mxu0 0.0
      %364 = vmatpush1.msra.mxu0 %v334
      %365 = vmatprep.subr.mxu0 0.0
      %366 = vmatpush1.msra.mxu0 %v335
      %367 = vmatprep.subr.mxu0 0.0
      %368 = vmatpush1.msra.mxu0 %v336
      %369 = vmatprep.subr.mxu0 0.0
      %370 = vmatpush1.msra.mxu0 0.0
      %371 = vmatprep.subr.mxu0 0.0
      %372 = vmatpush1.msra.mxu0 0.0
      %373 = vmatprep.subr.mxu0 0.0
      %374 = vmatpush1.msra.mxu0 0.0
      %375 = vmatprep.subr.mxu0 0.0
      %376 = vmatpush1.msra.mxu0 0.0
      %377 = vmatprep.subr.mxu0 0.0
      %378 = vmatpush1.msra.mxu0 0.0
      %379 = vmatprep.subr.mxu0 0.0
      %380 = vmatpush1.msra.mxu0 0.0
      %381 = vmatprep.subr.mxu0 0.0
      %382 = vmatpush1.msra.mxu0 0.0
      %383 = vmatprep.subr.mxu0 0.0
      %384 = vmatpush1.msra.mxu0 0.0
      %385 = vmatprep.subr.mxu0 0.0
      %386 = vmatpush1.msra.mxu0 0.0
      %387 = vmatprep.subr.mxu0 0.0
      %388 = vmatpush1.msra.mxu0 0.0
      %389 = vmatprep.subr.mxu0 0.0
      %390 = vmatpush1.msra.mxu0 0.0
      %391 = vmatprep.subr.mxu0 0.0
      %392 = vmatpush1.msra.mxu0 0.0
      %393 = vmatprep.subr.mxu0 0.0
      %394 = vmatpush1.msra.mxu0 0.0
      %395 = vmatprep.subr.mxu0 0.0
      %396 = vmatpush1.msra.mxu0 0.0
      %397 = vmatprep.subr.mxu0 0.0
      %398 = vmatpush1.msra.mxu0 0.0
      %399 = vmatprep.subr.mxu0 0.0
      %400 = vmatpush1.msra.mxu0 0.0
      %401 = vmatprep.mubr.f32.mxu0 0.0
      %402 = vmatmul.mubr.f32.gmra.mrb[0].mxu0 %v319
      %v403 = vpop.f32.mrb[0].mxu0
      %v404 = vadd.f32 0.0, %v403
      %v405 = vpop.f32.mrb[0].mxu0
      %406 = vmatprep.mubr.f32.mxu0 0.0
      %407 = vmatmul.mubr.f32.gmra.mrb[0].mxu0 %v320
      %v408 = vpop.f32.mrb[0].mxu0
      %v409 = vadd.f32 0.0, %v408
      %v410 = vpop.f32.mrb[0].mxu0
      %411 = vdwg.mxu0
      %v412 = vld [vmem:[%s2] sm:$0xff]
      %v413 = vld [vmem:[%s2 + $0x8] sm:$0xf]
      %415 = vset.pattern.permute.xlu0 0
      %416 = vperm.xlu0 %415, %v412
      %v417 = vpop.permute.xlu0 %416
      %420 = vset.pattern.permute.xlu0 0
      %421 = vperm.xlu0 %420, %v413
      %v422 = vpop.permute.xlu0 %421
      %v424 = vmul.f32 %v404, %v417
      %v425 = vmul.f32 %v409, %v422
      %v426 = vld [vmem:[%s3] sm:$0xff]
      %v427 = vld [vmem:[%s3 + $0x8] sm:$0xf]
      %429 = vset.pattern.permute.xlu0 0
      %430 = vperm.xlu0 %429, %v426
      %v431 = vpop.permute.xlu0 %430
      %434 = vset.pattern.permute.xlu0 0
      %435 = vperm.xlu0 %434, %v427
      %v436 = vpop.permute.xlu0 %435
      %v438 = vadd.f32 %v424, %v431
      %v439 = vadd.f32 %v425, %v436
      %v440 = vmax.f32 %v438, 0.0
      %v441 = vmax.f32 %v439, 0.0
      %442 = vst.msk [vmem:[%s194] sm:$0xff] %vm195, %v440
      %vm443 = vcmask 519168
      %444 = vst.msk [vmem:[%s194 + $0x8] sm:$0xf] %vm443, %v441
      %p445 = scmp.lt.s32.totalorder %s15, 1
      %s446 = scalar_select %p445, %s15, 1
      %s447 = smul.addr %s446, 2
      %s448 = smul.addr %s447, 8
      %s449 = scalar_lea.vmem %s4, %s448
      // Predicated region
      $region37: #{resnet_forward.13} parent=35 // pred_check
        %p450 = pneg %p122
      $region38: #{resnet_forward.13} parent=35 // pred_check_branch
        %452 = sbr.rel (%p450) target = $region40
      $region39: #{resnet_forward.13} parent=35 // pred_region
        _
      $region40: #{resnet_forward.13} parent=35 // pred_fallthru
        _
    $region36: #{resnet_forward.13} parent=5 // pred_fallthru
      _
    %p453 = scmp.le.s32.totalorder 2, %s10
    // Predicated region
    $region41: #{resnet_forward.13} parent=5 // pred_check
      %p454 = pneg %p453
    $region42: #{resnet_forward.13} parent=5 // pred_check_branch
      %456 = sbr.rel (%p454) target = $region44
    $region43: #{resnet_forward.13} parent=5 // pred_region
      %s457 = ssub.s32 %s10, 2
      // Predicated region
      $region45: #{resnet_forward.13} parent=43 // pred_check
        %p458 = pneg %p128
      $region46: #{resnet_forward.13} parent=43 // pred_check_branch
        %460 = sbr.rel (%p458) target = $region48
      $region47: #{resnet_forward.13} parent=43 // pred_region
        %p461 = scmp.lt.s32.totalorder %s16, 1
        %s462 = scalar_select %p461, %s16, 1
        %s463 = smul.addr %s462, 2
        %s464 = smul.addr %s463, 8
        %s465 = scalar_lea.vmem %s4, %s464
      $region48: #{resnet_forward.13} parent=43 // pred_fallthru
        _
    $region44: #{resnet_forward.13} parent=5 // pred_fallthru
      _
  $region6: #{resnet_forward.13} parent=0 // loop_footer
    %s14 = sadd.s32 1, %s10
  $region7: #{resnet_forward.13} parent=0 // loop_footer_branch
    %9 = sbr.rel target = $region3
  $region8: #{resnet_forward.13} parent=0 // loop_exit
    _

// kernel: resnet_forward.14
$region0: #{resnet_forward.14}
  #allocation0 [shape = 'u32[]', space=smem, size = 0x4, offset = 0x4, fixed_abs, tag = 'smem constant byte address 0x4 - core index']
  #allocation1 [shape = 'u32[144,128]{1,0:T(1,128)}', space=vmem, size = 0x12000, scoped, tag = 'internal scratch']
  #allocation2 [shape = 'f32[128,16]{1,0:T(8,128)}', space=vmem, size = 0x10000, scoped, tag = 'scratch operand']
  #allocation3 [shape = 'f32[192,16]{1,0:T(8,128)}', space=vmem, size = 0x18000, scoped, tag = 'scratch operand']
  %s0 = inlined_call_operand.vmem [shape: f32[2,32,16], index: 0, kind: input, shape index: {}]
  %s1 = inlined_call_operand.vmem [shape: f32[2,48,19], index: 1, kind: input, shape index: {}]
  %s2 = inlined_call_operand.vmem [shape: f32[12,128], index: 2, kind: input, shape index: {}]
  %s3 = inlined_call_operand.vmem [shape: f32[12,192], index: 3, kind: input, shape index: {}]
  %s4 = inlined_call_operand.vmem [shape: f32[12,1], index: 4, kind: input, shape index: {}]
  %s5 = inlined_call_operand.vmem [shape: f32[12,1], index: 5, kind: input, shape index: {}]
  %s6 = inlined_call_operand.vmem [shape: f32[2,12,16], index: 6, kind: output, shape index: {0}]
  %s7 = inlined_call_operand.vmem [shape: f32[2,12,16], index: 7, kind: output, shape index: {1}]
  %8 = xla_tuple %s6, %s7
  %s9 = sld [smem:[#allocation0]]
  $region65: #{resnet_forward.14} parent=0
    _
  %s11 = ssub.s32 1, %s9
  %s12 = scalar_select 0, %s11, %s9
  loop: start=0, step=1, limit=4
  $region2: #{resnet_forward.14} parent=0 // loop_pre_header
    _
  $region3: #{resnet_forward.14} parent=0 // loop_header
    %s14 = sphi 0, %s18
    %p15 = scmp.ge.s32.totalorder %s14, 4
    %s24 = sphi 0, %s26
    %s27 = sphi 0, %s24
    %s28 = sphi 0, %s27
    %s44 = sphi 0, %s28
    %s50 = sphi 0, %s52
    %s53 = sphi 0, %s50
    %s54 = sphi 0, %s53
    %s70 = sphi 0, %s54
    %s74 = sphi 0, %s74
    %s76 = sphi 0, %s74
    %s77 = sphi 0, %s76
    %s91 = sphi 0, %s77
    %s95 = sphi 0, %s95
    %s97 = sphi 0, %s95
    %s98 = sphi 0, %s97
    %s112 = sphi 0, %s98
    %s116 = sphi 0, %s116
    %s118 = sphi 0, %s116
    %s119 = sphi 0, %s118
    %s133 = sphi 0, %s119
    %s137 = sphi 0, %s137
    %s139 = sphi 0, %s137
    %s140 = sphi 0, %s139
    %s154 = sphi 0, %s140
    %s160 = sphi 0, %s162
    %s163 = sphi 0, %s160
    %s164 = sphi 0, %s163
    %s180 = sphi 0, %s164
    %s186 = sphi 0, %s188
    %s189 = sphi 0, %s186
    %s190 = sphi 0, %s189
    %s206 = sphi 0, %s190
  $region4: #{resnet_forward.14} parent=0 // loop_header_branch
    %17 = sbr.rel (%p15) target = $region8
  $region5: #{resnet_forward.14} parent=0 // loop_body
    %s19 = ssub.s32 %s14, 1
    %s20 = ssub.s32 %s14, 2
    %s21 = sadd.s32 %s14, 1
    %s22 = ssub.s32 %s14, %s21
    %p23 = scmp.eq.s32.totalorder %s22, 0
    %s25 = sadd.s32 %s24, 1
    %s26 = scalar_select %p23, %s24, %s25
    %p29 = pneg %p23
    %p30 = scmp.eq.s32.totalorder %s14, 1
    %p31 = por %p29, %p30
    %p32 = scmp.ne.s32.totalorder %s24, %s27
    %p33 = scmp.eq.s32.totalorder %s14, 0
    %p34 = por %p32, %p33
    %p35 = scmp.ne.s32.totalorder %s24, %s27
    %p36 = scmp.eq.s32.totalorder %s19, 1
    %p37 = por %p35, %p36
    %p38 = scmp.ne.s32.totalorder %s27, %s28
    %p39 = scmp.eq.s32.totalorder %s19, 0
    %p40 = por %p38, %p39
    %p41 = scmp.ne.s32.totalorder %s27, %s28
    %p42 = scmp.eq.s32.totalorder %s20, 1
    %p43 = por %p41, %p42
    %p45 = scmp.ne.s32.totalorder %s28, %s44
    %p46 = scmp.eq.s32.totalorder %s20, 0
    %p47 = por %p45, %p46
    %s48 = ssub.s32 %s14, %s21
    %p49 = scmp.eq.s32.totalorder %s48, 0
    %s51 = sadd.s32 %s50, 1
    %s52 = scalar_select %p49, %s50, %s51
    %p55 = pneg %p49
    %p56 = scmp.eq.s32.totalorder %s14, 1
    %p57 = por %p55, %p56
    %p58 = scmp.ne.s32.totalorder %s50, %s53
    %p59 = scmp.eq.s32.totalorder %s14, 0
    %p60 = por %p58, %p59
    %p61 = scmp.ne.s32.totalorder %s50, %s53
    %p62 = scmp.eq.s32.totalorder %s19, 1
    %p63 = por %p61, %p62
    %p64 = scmp.ne.s32.totalorder %s53, %s54
    %p65 = scmp.eq.s32.totalorder %s19, 0
    %p66 = por %p64, %p65
    %p67 = scmp.ne.s32.totalorder %s53, %s54
    %p68 = scmp.eq.s32.totalorder %s20, 1
    %p69 = por %p67, %p68
    %p71 = scmp.ne.s32.totalorder %s54, %s70
    %p72 = scmp.eq.s32.totalorder %s20, 0
    %p73 = por %p71, %p72
    %s75 = sadd.s32 %s74, 1
    %p78 = scmp.eq.s32.totalorder %s14, 1
    %p79 = scmp.ne.s32.totalorder %s74, %s76
    %p80 = scmp.eq.s32.totalorder %s14, 0
    %p81 = por %p79, %p80
    %p82 = scmp.ne.s32.totalorder %s74, %s76
    %p83 = scmp.eq.s32.totalorder %s19, 1
    %p84 = por %p82, %p83
    %p85 = scmp.ne.s32.totalorder %s76, %s77
    %p86 = scmp.eq.s32.totalorder %s19, 0
    %p87 = por %p85, %p86
    %p88 = scmp.ne.s32.totalorder %s76, %s77
    %p89 = scmp.eq.s32.totalorder %s20, 1
    %p90 = por %p88, %p89
    %p92 = scmp.ne.s32.totalorder %s77, %s91
    %p93 = scmp.eq.s32.totalorder %s20, 0
    %p94 = por %p92, %p93
    %s96 = sadd.s32 %s95, 1
    %p99 = scmp.eq.s32.totalorder %s14, 1
    %p100 = scmp.ne.s32.totalorder %s95, %s97
    %p101 = scmp.eq.s32.totalorder %s14, 0
    %p102 = por %p100, %p101
    %p103 = scmp.ne.s32.totalorder %s95, %s97
    %p104 = scmp.eq.s32.totalorder %s19, 1
    %p105 = por %p103, %p104
    %p106 = scmp.ne.s32.totalorder %s97, %s98
    %p107 = scmp.eq.s32.totalorder %s19, 0
    %p108 = por %p106, %p107
    %p109 = scmp.ne.s32.totalorder %s97, %s98
    %p110 = scmp.eq.s32.totalorder %s20, 1
    %p111 = por %p109, %p110
    %p113 = scmp.ne.s32.totalorder %s98, %s112
    %p114 = scmp.eq.s32.totalorder %s20, 0
    %p115 = por %p113, %p114
    %s117 = sadd.s32 %s116, 1
    %p120 = scmp.eq.s32.totalorder %s14, 1
    %p121 = scmp.ne.s32.totalorder %s116, %s118
    %p122 = scmp.eq.s32.totalorder %s14, 0
    %p123 = por %p121, %p122
    %p124 = scmp.ne.s32.totalorder %s116, %s118
    %p125 = scmp.eq.s32.totalorder %s19, 1
    %p126 = por %p124, %p125
    %p127 = scmp.ne.s32.totalorder %s118, %s119
    %p128 = scmp.eq.s32.totalorder %s19, 0
    %p129 = por %p127, %p128
    %p130 = scmp.ne.s32.totalorder %s118, %s119
    %p131 = scmp.eq.s32.totalorder %s20, 1
    %p132 = por %p130, %p131
    %p134 = scmp.ne.s32.totalorder %s119, %s133
    %p135 = scmp.eq.s32.totalorder %s20, 0
    %p136 = por %p134, %p135
    %s138 = sadd.s32 %s137, 1
    %p141 = scmp.eq.s32.totalorder %s14, 1
    %p142 = scmp.ne.s32.totalorder %s137, %s139
    %p143 = scmp.eq.s32.totalorder %s14, 0
    %p144 = por %p142, %p143
    %p145 = scmp.ne.s32.totalorder %s137, %s139
    %p146 = scmp.eq.s32.totalorder %s19, 1
    %p147 = por %p145, %p146
    %p148 = scmp.ne.s32.totalorder %s139, %s140
    %p149 = scmp.eq.s32.totalorder %s19, 0
    %p150 = por %p148, %p149
    %p151 = scmp.ne.s32.totalorder %s139, %s140
    %p152 = scmp.eq.s32.totalorder %s20, 1
    %p153 = por %p151, %p152
    %p155 = scmp.ne.s32.totalorder %s140, %s154
    %p156 = scmp.eq.s32.totalorder %s20, 0
    %p157 = por %p155, %p156
    %s158 = ssub.s32 %s14, %s21
    %p159 = scmp.eq.s32.totalorder %s158, 0
    %s161 = sadd.s32 %s160, 1
    %s162 = scalar_select %p159, %s160, %s161
    %p165 = pneg %p159
    %p166 = scmp.eq.s32.totalorder %s14, 1
    %p167 = por %p165, %p166
    %p168 = scmp.ne.s32.totalorder %s160, %s163
    %p169 = scmp.eq.s32.totalorder %s14, 0
    %p170 = por %p168, %p169
    %p171 = scmp.ne.s32.totalorder %s160, %s163
    %p172 = scmp.eq.s32.totalorder %s19, 1
    %p173 = por %p171, %p172
    %p174 = scmp.ne.s32.totalorder %s163, %s164
    %p175 = scmp.eq.s32.totalorder %s19, 0
    %p176 = por %p174, %p175
    %p177 = scmp.ne.s32.totalorder %s163, %s164
    %p178 = scmp.eq.s32.totalorder %s20, 1
    %p179 = por %p177, %p178
    %p181 = scmp.ne.s32.totalorder %s164, %s180
    %p182 = scmp.eq.s32.totalorder %s20, 0
    %p183 = por %p181, %p182
    %s184 = ssub.s32 %s14, %s21
    %p185 = scmp.eq.s32.totalorder %s184, 0
    %s187 = sadd.s32 %s186, 1
    %s188 = scalar_select %p185, %s186, %s187
    %p191 = pneg %p185
    %p192 = scmp.eq.s32.totalorder %s14, 1
    %p193 = por %p191, %p192
    %p194 = scmp.ne.s32.totalorder %s186, %s189
    %p195 = scmp.eq.s32.totalorder %s14, 0
    %p196 = por %p194, %p195
    %p197 = scmp.ne.s32.totalorder %s186, %s189
    %p198 = scmp.eq.s32.totalorder %s19, 1
    %p199 = por %p197, %p198
    %p200 = scmp.ne.s32.totalorder %s189, %s190
    %p201 = scmp.eq.s32.totalorder %s19, 0
    %p202 = por %p200, %p201
    %p203 = scmp.ne.s32.totalorder %s189, %s190
    %p204 = scmp.eq.s32.totalorder %s20, 1
    %p205 = por %p203, %p204
    %p207 = scmp.ne.s32.totalorder %s190, %s206
    %p208 = scmp.eq.s32.totalorder %s20, 0
    %p209 = por %p207, %p208
    %p210 = scmp.le.s32.totalorder 1, %s14
    %p211 = scmp.lt.s32.totalorder %s14, 3
    %p212 = pnand %p210, %p211
    %p213 = pneg %p212
    // Predicated region
    $region9: #{resnet_forward.14} parent=5 // pred_check
      _
    $region10: #{resnet_forward.14} parent=5 // pred_check_branch
      %215 = sbr.rel (%p212) target = $region12
    $region11: #{resnet_forward.14} parent=5 // pred_region
      %s216 = ssub.s32 %s14, 1
      // Predicated region
      $region13: #{resnet_forward.14} parent=11 // pred_check
        %p217 = pneg %p87
      $region14: #{resnet_forward.14} parent=11 // pred_check_branch
        %219 = sbr.rel (%p217) target = $region16
      $region15: #{resnet_forward.14} parent=11 // pred_region
        _
      $region16: #{resnet_forward.14} parent=11 // pred_fallthru
        _
      // Predicated region
      $region17: #{resnet_forward.14} parent=11 // pred_check
        %p220 = pneg %p108
      $region18: #{resnet_forward.14} parent=11 // pred_check_branch
        %222 = sbr.rel (%p220) target = $region20
      $region19: #{resnet_forward.14} parent=11 // pred_region
        _
      $region20: #{resnet_forward.14} parent=11 // pred_fallthru
        _
      // Predicated region
      $region21: #{resnet_forward.14} parent=11 // pred_check
        %p223 = pneg %p129
      $region22: #{resnet_forward.14} parent=11 // pred_check_branch
        %225 = sbr.rel (%p223) target = $region24
      $region23: #{resnet_forward.14} parent=11 // pred_region
        _
      $region24: #{resnet_forward.14} parent=11 // pred_fallthru
        _
      // Predicated region
      $region25: #{resnet_forward.14} parent=11 // pred_check
        %p226 = pneg %p150
      $region26: #{resnet_forward.14} parent=11 // pred_check_branch
        %228 = sbr.rel (%p226) target = $region28
      $region27: #{resnet_forward.14} parent=11 // pred_region
        _
      $region28: #{resnet_forward.14} parent=11 // pred_fallthru
        _
    $region12: #{resnet_forward.14} parent=5 // pred_fallthru
      _
    %p229 = scmp.lt.s32.totalorder %s14, 2
    // Predicated region
    $region29: #{resnet_forward.14} parent=5 // pred_check
      %p230 = pneg %p229
    $region30: #{resnet_forward.14} parent=5 // pred_check_branch
      %232 = sbr.rel (%p230) target = $region32
    $region31: #{resnet_forward.14} parent=5 // pred_region
      // Predicated region
      $region33: #{resnet_forward.14} parent=31 // pred_check
        %p233 = pneg %p34
      $region34: #{resnet_forward.14} parent=31 // pred_check_branch
        %235 = sbr.rel (%p233) target = $region36
      $region35: #{resnet_forward.14} parent=31 // pred_region
        %p236 = scmp.lt.s32.totalorder %s14, 1
        %s237 = scalar_select %p236, %s14, 1
        %s238 = smul.addr %s237, 4
        %s239 = smul.addr %s238, 8
        %s240 = scalar_lea.vmem %s0, %s239
      $region36: #{resnet_forward.14} parent=31 // pred_fallthru
        _
      // Predicated region
      $region37: #{resnet_forward.14} parent=31 // pred_check
        %p241 = pneg %p60
      $region38: #{resnet_forward.14} parent=31 // pred_check_branch
        %243 = sbr.rel (%p241) target = $region40
      $region39: #{resnet_forward.14} parent=31 // pred_region
        %p244 = scmp.lt.s32.totalorder %s14, 1
        %s245 = scalar_select %p244, %s14, 1
        %s246 = smul.addr %s245, 6
        %s247 = smul.addr %s246, 8
        %s248 = scalar_lea.vmem %s1, %s247
      $region40: #{resnet_forward.14} parent=31 // pred_fallthru
        _
    $region32: #{resnet_forward.14} parent=5 // pred_fallthru
      _
    %p249 = scmp.le.s32.totalorder 1, %s14
    %p250 = scmp.lt.s32.totalorder %s14, 3
    %p251 = pnand %p249, %p250
    %p252 = pneg %p251
    // Predicated region
    $region41: #{resnet_forward.14} parent=5 // pred_check
      _
    $region42: #{resnet_forward.14} parent=5 // pred_check_branch
      %254 = sbr.rel (%p251) target = $region44
    $region43: #{resnet_forward.14} parent=5 // pred_region
      %s255 = ssub.s32 %s14, 1
      %p256 = scmp.lt.s32.totalorder %s19, 1
      %s257 = scalar_select %p256, %s19, 1
      %s258 = smul.addr %s257, 4
      %s259 = smul.addr %s258, 8
      %s260 = scalar_lea.vmem %s0, %s259
      %p261 = pneg %p40
      %p262 = pneg %p37
      %p263 = scmp.lt.s32.totalorder %s19, 1
      %s264 = scalar_select %p263, %s19, 1
      %s265 = smul.addr %s264, 6
      %s266 = smul.addr %s265, 8
      %s267 = scalar_lea.vmem %s1, %s266
      %p268 = pneg %p66
      %p269 = pneg %p63
      %p270 = pneg %p87
      %p271 = pneg %p84
      %p272 = pneg %p108
      %p273 = pneg %p105
      %p274 = pneg %p129
      %p275 = pneg %p126
      %p276 = pneg %p150
      %p277 = pneg %p147
      %p278 = pneg %p176
      %p279 = pneg %p173
      %p280 = scmp.lt.s32.totalorder %s19, 1
      %s281 = scalar_select %p280, %s19, 1
      %s282 = smul.addr %s281, 2
      %s283 = smul.addr %s282, 8
      %s284 = scalar_lea.vmem %s6, %s283
      %p285 = pneg %p202
      %p286 = pneg %p199
      %p287 = scmp.lt.s32.totalorder %s19, 1
      %s288 = scalar_select %p287, %s19, 1
      %s289 = smul.addr %s288, 2
      %s290 = smul.addr %s289, 8
      %s291 = scalar_lea.vmem %s7, %s290
      %p292 = scmp.lt.s32.totalorder %s19, 1
      %s293 = scalar_select %p292, %s19, 1
      %s294 = smul.addr %s293, 4
      %s295 = smul.addr %s294, 8
      %s296 = scalar_lea.vmem %s0, %s295
      %p297 = scmp.lt.s32.totalorder %s19, 1
      %s298 = scalar_select %p297, %s19, 1
      %s299 = smul.addr %s298, 6
      %s300 = smul.addr %s299, 8
      %s301 = scalar_lea.vmem %s1, %s300
      %p302 = scmp.lt.s32.totalorder %s19, 1
      %s303 = scalar_select %p302, %s19, 1
      %s304 = smul.addr %s303, 2
      %s305 = smul.addr %s304, 8
      %s306 = scalar_lea.vmem %s6, %s305
      %p307 = scmp.lt.s32.totalorder %s19, 1
      %s308 = scalar_select %p307, %s19, 1
      %s309 = smul.addr %s308, 2
      %s310 = smul.addr %s309, 8
      %s311 = scalar_lea.vmem %s7, %s310
      %v312 = vld [vmem:[%s296] sm:$0xff]
      %v313 = vld [vmem:[%s296 + $0x8] sm:$0xff]
      %v314 = vmax.f32 %v312, %v313
      %v315 = vld [vmem:[%s296 + $0x10] sm:$0xff]
      %v316 = vmax.f32 %v314, %v315
      %v317 = vld [vmem:[%s296 + $0x18] sm:$0xff]
      %v318 = vmax.f32 %v316, %v317
      %vm319 = vcmask 130048
      %320 = vst.msk [vmem:[#allocation2] sm:$0xff] %vm319, 0.0
      %321 = vst.msk [vmem:[#allocation2 + $0x8] sm:$0xff] %vm319, 0.0
      %322 = vst.msk [vmem:[#allocation2 + $0x10] sm:$0xff] %vm319, 0.0
      %323 = vst.msk [vmem:[#allocation2 + $0x18] sm:$0xff] %vm319, 0.0
      %324 = vst.msk [vmem:[#allocation2 + $0x20] sm:$0xff] %vm319, 0.0
      %325 = vst.msk [vmem:[#allocation2 + $0x28] sm:$0xff] %vm319, 0.0
      %326 = vst.msk [vmem:[#allocation2 + $0x30] sm:$0xff] %vm319, 0.0
      %327 = vst.msk [vmem:[#allocation2 + $0x38] sm:$0xff] %vm319, 0.0
      %328 = vst.msk [vmem:[#allocation2 + $0x40] sm:$0xff] %vm319, 0.0
      %329 = vst.msk [vmem:[#allocation2 + $0x48] sm:$0xff] %vm319, 0.0
      %330 = vst.msk [vmem:[#allocation2 + $0x50] sm:$0xff] %vm319, 0.0
      %331 = vst.msk [vmem:[#allocation2 + $0x58] sm:$0xff] %vm319, 0.0
      %332 = vst.msk [vmem:[#allocation2 + $0x60] sm:$0xff] %vm319, 0.0
      %333 = vst.msk [vmem:[#allocation2 + $0x68] sm:$0xff] %vm319, 0.0
      %334 = vst.msk [vmem:[#allocation2 + $0x70] sm:$0xff] %vm319, 0.0
      %335 = vst.msk [vmem:[#allocation2 + $0x78] sm:$0xff] %vm319, 0.0
      %337 = vrot.lane.b32.xlu0 %v318, 7
      %v338 = vpop.permute.xlu0 %337
      %vm340 = vcmask 130104
      %341 = vst.msk [vmem:[#allocation2] sm:$0xff] %vm340, %v338
      %342 = vrot.lane.b32.xlu0 %v318, 6
      %v343 = vpop.permute.xlu0 %342
      %vm345 = vcmask 130096
      %346 = vst.msk [vmem:[#allocation2 + $0x8] sm:$0xff] %vm345, %v343
      %347 = vrot.lane.b32.xlu0 %v318, 5
      %v348 = vpop.permute.xlu0 %347
      %vm350 = vcmask 130088
      %351 = vst.msk [vmem:[#allocation2 + $0x10] sm:$0xff] %vm350, %v348
      %352 = vrot.lane.b32.xlu0 %v318, 4
      %v353 = vpop.permute.xlu0 %352
      %vm355 = vcmask 130080
      %356 = vst.msk [vmem:[#allocation2 + $0x18] sm:$0xff] %vm355, %v353
      %357 = vrot.lane.b32.xlu0 %v318, 3
      %v358 = vpop.permute.xlu0 %357
      %vm360 = vcmask 130072
      %361 = vst.msk [vmem:[#allocation2 + $0x20] sm:$0xff] %vm360, %v358
      %362 = vrot.lane.b32.xlu0 %v318, 2
      %v363 = vpop.permute.xlu0 %362
      %vm365 = vcmask 130064
      %366 = vst.msk [vmem:[#allocation2 + $0x28] sm:$0xff] %vm365, %v363
      %367 = vrot.lane.b32.xlu0 %v318, 1
      %v368 = vpop.permute.xlu0 %367
      %vm370 = vcmask 130056
      %371 = vst.msk [vmem:[#allocation2 + $0x30] sm:$0xff] %vm370, %v368
      %372 = vst.msk [vmem:[#allocation2 + $0x38] sm:$0xff] %vm319, %v318
      %373 = vrot.lane.b32.xlu0 %v318, 127
      %v374 = vpop.permute.xlu0 %373
      %vm376 = vcmask 121856
      %377 = vst.msk [vmem:[#allocation2 + $0x40] sm:$0xff] %vm376, %v374
      %378 = vrot.lane.b32.xlu0 %v318, 126
      %v379 = vpop.permute.xlu0 %378
      %vm381 = vcmask 113664
      %382 = vst.msk [vmem:[#allocation2 + $0x48] sm:$0xff] %vm381, %v379
      %383 = vrot.lane.b32.xlu0 %v318, 125
      %v384 = vpop.permute.xlu0 %383
      %vm386 = vcmask 105472
      %387 = vst.msk [vmem:[#allocation2 + $0x50] sm:$0xff] %vm386, %v384
      %388 = vrot.lane.b32.xlu0 %v318, 124
      %v389 = vpop.permute.xlu0 %388
      %vm391 = vcmask 97280
      %392 = vst.msk [vmem:[#allocation2 + $0x58] sm:$0xff] %vm391, %v389
      %393 = vrot.lane.b32.xlu0 %v318, 123
      %v394 = vpop.permute.xlu0 %393
      %vm396 = vcmask 89088
      %397 = vst.msk [vmem:[#allocation2 + $0x60] sm:$0xff] %vm396, %v394
      %398 = vrot.lane.b32.xlu0 %v318, 122
      %v399 = vpop.permute.xlu0 %398
      %vm401 = vcmask 80896
      %402 = vst.msk [vmem:[#allocation2 + $0x68] sm:$0xff] %vm401, %v399
      %403 = vrot.lane.b32.xlu0 %v318, 121
      %v404 = vpop.permute.xlu0 %403
      %vm406 = vcmask 72704
      %407 = vst.msk [vmem:[#allocation2 + $0x70] sm:$0xff] %vm406, %v404
      %408 = vrot.lane.b32.xlu0 %v318, 120
      %v409 = vpop.permute.xlu0 %408
      %vm411 = vcmask 64512
      %412 = vst.msk [vmem:[#allocation2 + $0x78] sm:$0xff] %vm411, %v409
      %v413 = vld [vmem:[%s2] sm:$0xff]
      %v414 = vld [vmem:[%s2 + $0x8] sm:$0xf]
      %v415 = vld [vmem:[#allocation2] sm:$0xff]
      %v416 = vld [vmem:[#allocation2 + $0x8] sm:$0xff]
      %v417 = vld [vmem:[#allocation2 + $0x10] sm:$0xff]
      %v418 = vld [vmem:[#allocation2 + $0x18] sm:$0xff]
      %v419 = vld [vmem:[#allocation2 + $0x20] sm:$0xff]
      %v420 = vld [vmem:[#allocation2 + $0x28] sm:$0xff]
      %v421 = vld [vmem:[#allocation2 + $0x30] sm:$0xff]
      %v422 = vld [vmem:[#allocation2 + $0x38] sm:$0xff]
      %v423 = vld [vmem:[#allocation2 + $0x40] sm:$0xff]
      %v424 = vld [vmem:[#allocation2 + $0x48] sm:$0xff]
      %v425 = vld [vmem:[#allocation2 + $0x50] sm:$0xff]
      %v426 = vld [vmem:[#allocation2 + $0x58] sm:$0xff]
      %v427 = vld [vmem:[#allocation2 + $0x60] sm:$0xff]
      %v428 = vld [vmem:[#allocation2 + $0x68] sm:$0xff]
      %v429 = vld [vmem:[#allocation2 + $0x70] sm:$0xff]
      %v430 = vld [vmem:[#allocation2 + $0x78] sm:$0xff]
      %431 = vmatprep.subr.mxu0 0.0
      %432 = vmatpush1.msra.mxu0 %v415
      %433 = vmatprep.subr.mxu0 0.0
      %434 = vmatpush1.msra.mxu0 %v416
      %435 = vmatprep.subr.mxu0 0.0
      %436 = vmatpush1.msra.mxu0 %v417
      %437 = vmatprep.subr.mxu0 0.0
      %438 = vmatpush1.msra.mxu0 %v418
      %439 = vmatprep.subr.mxu0 0.0
      %440 = vmatpush1.msra.mxu0 %v419
      %441 = vmatprep.subr.mxu0 0.0
      %442 = vmatpush1.msra.mxu0 %v420
      %443 = vmatprep.subr.mxu0 0.0
      %444 = vmatpush1.msra.mxu0 %v421
      %445 = vmatprep.subr.mxu0 0.0
      %446 = vmatpush1.msra.mxu0 %v422
      %447 = vmatprep.subr.mxu0 0.0
      %448 = vmatpush1.msra.mxu0 %v423
      %449 = vmatprep.subr.mxu0 0.0
      %450 = vmatpush1.msra.mxu0 %v424
      %451 = vmatprep.subr.mxu0 0.0
      %452 = vmatpush1.msra.mxu0 %v425
      %453 = vmatprep.subr.mxu0 0.0
      %454 = vmatpush1.msra.mxu0 %v426
      %455 = vmatprep.subr.mxu0 0.0
      %456 = vmatpush1.msra.mxu0 %v427
      %457 = vmatprep.subr.mxu0 0.0
      %458 = vmatpush1.msra.mxu0 %v428
      %459 = vmatprep.subr.mxu0 0.0
      %460 = vmatpush1.msra.mxu0 %v429
      %461 = vmatprep.subr.mxu0 0.0
      %462 = vmatpush1.msra.mxu0 %v430
      %463 = vmatprep.subr.mxu0 0.0
      %464 = vmatpush1.msra.mxu0 0.0
      %465 = vmatprep.subr.mxu0 0.0
      %466 = vmatpush1.msra.mxu0 0.0
      %467 = vmatprep.subr.mxu0 0.0
      %468 = vmatpush1.msra.mxu0 0.0
      %469 = vmatprep.subr.mxu0 0.0
      %470 = vmatpush1.msra.mxu0 0.0
      %471 = vmatprep.subr.mxu0 0.0
      %472 = vmatpush1.msra.mxu0 0.0
      %473 = vmatprep.subr.mxu0 0.0
      %474 = vmatpush1.msra.mxu0 0.0
      %475 = vmatprep.subr.mxu0 0.0
      %476 = vmatpush1.msra.mxu0 0.0
      %477 = vmatprep.subr.mxu0 0.0
      %478 = vmatpush1.msra.mxu0 0.0
      %479 = vmatprep.subr.mxu0 0.0
      %480 = vmatpush1.msra.mxu0 0.0
      %481 = vmatprep.subr.mxu0 0.0
      %482 = vmatpush1.msra.mxu0 0.0
      %483 = vmatprep.subr.mxu0 0.0
      %484 = vmatpush1.msra.mxu0 0.0
      %485 = vmatprep.subr.mxu0 0.0
      %486 = vmatpush1.msra.mxu0 0.0
      %487 = vmatprep.subr.mxu0 0.0
      %488 = vmatpush1.msra.mxu0 0.0
      %489 = vmatprep.subr.mxu0 0.0
      %490 = vmatpush1.msra.mxu0 0.0
      %491 = vmatprep.subr.mxu0 0.0
      %492 = vmatpush1.msra.mxu0 0.0
      %493 = vmatprep.subr.mxu0 0.0
      %494 = vmatpush1.msra.mxu0 0.0
      %495 = vmatprep.mubr.f32.mxu0 0.0
      %496 = vmatmul.mubr.f32.gmra.mrb[0].mxu0 %v413
      %v497 = vpop.f32.mrb[0].mxu0
      %v498 = vadd.f32 0.0, %v497
      %v499 = vpop.f32.mrb[0].mxu0
      %500 = vmatprep.mubr.f32.mxu0 0.0
      %501 = vmatmul.mubr.f32.gmra.mrb[0].mxu0 %v414
      %v502 = vpop.f32.mrb[0].mxu0
      %v503 = vadd.f32 0.0, %v502
      %v504 = vpop.f32.mrb[0].mxu0
      %505 = vdwg.mxu0
      %v506 = vld [vmem:[%s301] sm:$0xff]
      %v507 = vld [vmem:[%s301 + $0x8] sm:$0xff]
      %v508 = vld [vmem:[%s301 + $0x10] sm:$0xff]
      %v509 = vld [vmem:[%s301 + $0x18] sm:$0xff]
      %v510 = vld [vmem:[%s301 + $0x20] sm:$0xff]
      %v511 = vld [vmem:[%s301 + $0x28] sm:$0xff]
      %512 = vst.msk [vmem:[#allocation3] sm:$0xff] %vm319, %v506
      %513 = vst.msk [vmem:[#allocation3 + $0x8] sm:$0xff] %vm319, %v507
      %514 = vst.msk [vmem:[#allocation3 + $0x10] sm:$0xff] %vm319, %v508
      %515 = vst.msk [vmem:[#allocation3 + $0x18] sm:$0xff] %vm319, %v509
      %516 = vst.msk [vmem:[#allocation3 + $0x20] sm:$0xff] %vm319, %v510
      %517 = vst.msk [vmem:[#allocation3 + $0x28] sm:$0xff] %vm319, %v511
      %v518 = vld [vmem:[%s301] sm:$0xff]
      %v519 = vld [vmem:[%s301 + $0x8] sm:$0xff]
      %v520 = vld [vmem:[%s301 + $0x10] sm:$0xff]
      %v521 = vld [vmem:[%s301 + $0x18] sm:$0xff]
      %v522 = vld [vmem:[%s301 + $0x20] sm:$0xff]
      %v523 = vld [vmem:[%s301 + $0x28] sm:$0xff]
      %530 = vrot.lane.b32.xlu0 %v518, 127
      %v531 = vpop.permute.xlu0 %530
      %532 = vrot.lane.b32.xlu0 %v519, 127
      %v533 = vpop.permute.xlu0 %532
      %534 = vrot.lane.b32.xlu0 %v520, 127
      %v535 = vpop.permute.xlu0 %534
      %536 = vrot.lane.b32.xlu0 %v521, 127
      %v537 = vpop.permute.xlu0 %536
      %538 = vrot.lane.b32.xlu0 %v522, 127
      %v539 = vpop.permute.xlu0 %538
      %540 = vrot.lane.b32.xlu0 %v523, 127
      %v541 = vpop.permute.xlu0 %540
      %548 = vst.msk [vmem:[#allocation3 + $0x30] sm:$0xff] %vm319, %v531
      %549 = vst.msk [vmem:[#allocation3 + $0x38] sm:$0xff] %vm319, %v533
      %550 = vst.msk [vmem:[#allocation3 + $0x40] sm:$0xff] %vm319, %v535
      %551 = vst.msk [vmem:[#allocation3 + $0x48] sm:$0xff] %vm319, %v537
      %552 = vst.msk [vmem:[#allocation3 + $0x50] sm:$0xff] %vm319, %v539
      %553 = vst.msk [vmem:[#allocation3 + $0x58] sm:$0xff] %vm319, %v541
      %v554 = vld [vmem:[%s301] sm:$0xff]
      %v555 = vld [vmem:[%s301 + $0x8] sm:$0xff]
      %v556 = vld [vmem:[%s301 + $0x10] sm:$0xff]
      %v557 = vld [vmem:[%s301 + $0x18] sm:$0xff]
      %v558 = vld [vmem:[%s301 + $0x20] sm:$0xff]
      %v559 = vld [vmem:[%s301 + $0x28] sm:$0xff]
      %566 = vrot.lane.b32.xlu0 %v554, 126
      %v567 = vpop.permute.xlu0 %566
      %568 = vrot.lane.b32.xlu0 %v555, 126
      %v569 = vpop.permute.xlu0 %568
      %570 = vrot.lane.b32.xlu0 %v556, 126
      %v571 = vpop.permute.xlu0 %570
      %572 = vrot.lane.b32.xlu0 %v557, 126
      %v573 = vpop.permute.xlu0 %572
      %574 = vrot.lane.b32.xlu0 %v558, 126
      %v575 = vpop.permute.xlu0 %574
      %576 = vrot.lane.b32.xlu0 %v559, 126
      %v577 = vpop.permute.xlu0 %576
      %584 = vst.msk [vmem:[#allocation3 + $0x60] sm:$0xff] %vm319, %v567
      %585 = vst.msk [vmem:[#allocation3 + $0x68] sm:$0xff] %vm319, %v569
      %586 = vst.msk [vmem:[#allocation3 + $0x70] sm:$0xff] %vm319, %v571
      %587 = vst.msk [vmem:[#allocation3 + $0x78] sm:$0xff] %vm319, %v573
      %588 = vst.msk [vmem:[#allocation3 + $0x80] sm:$0xff] %vm319, %v575
      %589 = vst.msk [vmem:[#allocation3 + $0x88] sm:$0xff] %vm319, %v577
      %v590 = vld [vmem:[%s301] sm:$0xff]
      %v591 = vld [vmem:[%s301 + $0x8] sm:$0xff]
      %v592 = vld [vmem:[%s301 + $0x10] sm:$0xff]
      %v593 = vld [vmem:[%s301 + $0x18] sm:$0xff]
      %v594 = vld [vmem:[%s301 + $0x20] sm:$0xff]
      %v595 = vld [vmem:[%s301 + $0x28] sm:$0xff]
      %602 = vrot.lane.b32.xlu0 %v590, 125
      %v603 = vpop.permute.xlu0 %602
      %604 = vrot.lane.b32.xlu0 %v591, 125
      %v605 = vpop.permute.xlu0 %604
      %606 = vrot.lane.b32.xlu0 %v592, 125
      %v607 = vpop.permute.xlu0 %606
      %608 = vrot.lane.b32.xlu0 %v593, 125
      %v609 = vpop.permute.xlu0 %608
      %610 = vrot.lane.b32.xlu0 %v594, 125
      %v611 = vpop.permute.xlu0 %610
      %612 = vrot.lane.b32.xlu0 %v595, 125
      %v613 = vpop.permute.xlu0 %612
      %620 = vst.msk [vmem:[#allocation3 + $0x90] sm:$0xff] %vm319, %v603
      %621 = vst.msk [vmem:[#allocation3 + $0x98] sm:$0xff] %vm319, %v605
      %622 = vst.msk [vmem:[#allocation3 + $0xa0] sm:$0xff] %vm319, %v607
      %623 = vst.msk [vmem:[#allocation3 + $0xa8] sm:$0xff] %vm319, %v609
      %624 = vst.msk [vmem:[#allocation3 + $0xb0] sm:$0xff] %vm319, %v611
      %625 = vst.msk [vmem:[#allocation3 + $0xb8] sm:$0xff] %vm319, %v613
      %v626 = vld [vmem:[%s3] sm:$0xff]
      %v627 = vld [vmem:[%s3 + $0x8] sm:$0xff]
      %v628 = vld [vmem:[%s3 + $0x10] sm:$0xf]
      %v629 = vld [vmem:[%s3 + $0x18] sm:$0xf]
      %v630 = vld [vmem:[#allocation3] sm:$0xff]
      %v631 = vld [vmem:[#allocation3 + $0x8] sm:$0xff]
      %v632 = vld [vmem:[#allocation3 + $0x10] sm:$0xff]
      %v633 = vld [vmem:[#allocation3 + $0x18] sm:$0xff]
      %v634 = vld [vmem:[#allocation3 + $0x20] sm:$0xff]
      %v635 = vld [vmem:[#allocation3 + $0x28] sm:$0xff]
      %v636 = vld [vmem:[#allocation3 + $0x30] sm:$0xff]
      %v637 = vld [vmem:[#allocation3 + $0x38] sm:$0xff]
      %v638 = vld [vmem:[#allocation3 + $0x40] sm:$0xff]
      %v639 = vld [vmem:[#allocation3 + $0x48] sm:$0xff]
      %v640 = vld [vmem:[#allocation3 + $0x50] sm:$0xff]
      %v641 = vld [vmem:[#allocation3 + $0x58] sm:$0xff]
      %v642 = vld [vmem:[#allocation3 + $0x60] sm:$0xff]
      %v643 = vld [vmem:[#allocation3 + $0x68] sm:$0xff]
      %v644 = vld [vmem:[#allocation3 + $0x70] sm:$0xff]
      %v645 = vld [vmem:[#allocation3 + $0x78] sm:$0xff]
      %v646 = vld [vmem:[#allocation3 + $0x80] sm:$0xff]
      %v647 = vld [vmem:[#allocation3 + $0x88] sm:$0xff]
      %v648 = vld [vmem:[#allocation3 + $0x90] sm:$0xff]
      %v649 = vld [vmem:[#allocation3 + $0x98] sm:$0xff]
      %v650 = vld [vmem:[#allocation3 + $0xa0] sm:$0xff]
      %v651 = vld [vmem:[#allocation3 + $0xa8] sm:$0xff]
      %v652 = vld [vmem:[#allocation3 + $0xb0] sm:$0xff]
      %v653 = vld [vmem:[#allocation3 + $0xb8] sm:$0xff]
      %vm654 = vcmask 523264
      %v656 = vsel %vm654, %v627, 0
      %v659 = vsel %vm654, %v629, 0
      %661 = vmatprep.subr.mxu0 0.0
      %662 = vmatpush1.msra.mxu0 %v630
      %663 = vmatprep.subr.mxu0 0.0
      %664 = vmatpush1.msra.mxu0 %v631
      %665 = vmatprep.subr.mxu0 0.0
      %666 = vmatpush1.msra.mxu0 %v632
      %667 = vmatprep.subr.mxu0 0.0
      %668 = vmatpush1.msra.mxu0 %v633
      %669 = vmatprep.subr.mxu0 0.0
      %670 = vmatpush1.msra.mxu0 %v634
      %671 = vmatprep.subr.mxu0 0.0
      %672 = vmatpush1.msra.mxu0 %v635
      %673 = vmatprep.subr.mxu0 0.0
      %674 = vmatpush1.msra.mxu0 %v636
      %675 = vmatprep.subr.mxu0 0.0
      %676 = vmatpush1.msra.mxu0 %v637
      %677 = vmatprep.subr.mxu0 0.0
      %678 = vmatpush1.msra.mxu0 %v638
      %679 = vmatprep.subr.mxu0 0.0
      %680 = vmatpush1.msra.mxu0 %v639
      %681 = vmatprep.subr.mxu0 0.0
      %682 = vmatpush1.msra.mxu0 %v640
      %683 = vmatprep.subr.mxu0 0.0
      %684 = vmatpush1.msra.mxu0 %v641
      %685 = vmatprep.subr.mxu0 0.0
      %686 = vmatpush1.msra.mxu0 %v642
      %687 = vmatprep.subr.mxu0 0.0
      %688 = vmatpush1.msra.mxu0 %v643
      %689 = vmatprep.subr.mxu0 0.0
      %690 = vmatpush1.msra.mxu0 %v644
      %691 = vmatprep.subr.mxu0 0.0
      %692 = vmatpush1.msra.mxu0 %v645
      %693 = vmatprep.subr.mxu0 0.0
      %694 = vmatpush1.msra.mxu0 %v646
      %695 = vmatprep.subr.mxu0 0.0
      %696 = vmatpush1.msra.mxu0 %v647
      %697 = vmatprep.subr.mxu0 0.0
      %698 = vmatpush1.msra.mxu0 %v648
      %699 = vmatprep.subr.mxu0 0.0
      %700 = vmatpush1.msra.mxu0 %v649
      %701 = vmatprep.subr.mxu0 0.0
      %702 = vmatpush1.msra.mxu0 %v650
      %703 = vmatprep.subr.mxu0 0.0
      %704 = vmatpush1.msra.mxu0 %v651
      %705 = vmatprep.subr.mxu0 0.0
      %706 = vmatpush1.msra.mxu0 %v652
      %707 = vmatprep.subr.mxu0 0.0
      %708 = vmatpush1.msra.mxu0 %v653
      %709 = vmatprep.subr.mxu0 0.0
      %710 = vmatpush1.msra.mxu0 0.0
      %711 = vmatprep.subr.mxu0 0.0
      %712 = vmatpush1.msra.mxu0 0.0
      %713 = vmatprep.subr.mxu0 0.0
      %714 = vmatpush1.msra.mxu0 0.0
      %715 = vmatprep.subr.mxu0 0.0
      %716 = vmatpush1.msra.mxu0 0.0
      %717 = vmatprep.subr.mxu0 0.0
      %718 = vmatpush1.msra.mxu0 0.0
      %719 = vmatprep.subr.mxu0 0.0
      %720 = vmatpush1.msra.mxu0 0.0
      %721 = vmatprep.subr.mxu0 0.0
      %722 = vmatpush1.msra.mxu0 0.0
      %723 = vmatprep.subr.mxu0 0.0
      %724 = vmatpush1.msra.mxu0 0.0
      %725 = vmatprep.mubr.f32.mxu0 %v656
      %726 = vmatmul.mubr.f32.gmra.mrb[0].mxu0 %v626
      %v727 = vpop.f32.mrb[0].mxu0
      %v728 = vadd.f32 0.0, %v727
      %v729 = vpop.f32.mrb[0].mxu0
      %730 = vmatprep.mubr.f32.mxu0 %v659
      %731 = vmatmul.mubr.f32.gmra.mrb[0].mxu0 %v628
      %v732 = vpop.f32.mrb[0].mxu0
      %v733 = vadd.f32 0.0, %v732
      %v734 = vpop.f32.mrb[0].mxu0
      %735 = vdwg.mxu0
      %v736 = vadd.f32 %v728, %v498
      %v737 = vadd.f32 %v733, %v503
      %v738 = vld [vmem:[%s4] sm:$0xff]
      %v739 = vld [vmem:[%s4 + $0x8] sm:$0xf]
      %741 = vset.pattern.permute.xlu0 0
      %742 = vperm.xlu0 %741, %v738
      %v743 = vpop.permute.xlu0 %742
      %746 = vset.pattern.permute.xlu0 0
      %747 = vperm.xlu0 %746, %v739
      %v748 = vpop.permute.xlu0 %747
      %v750 = vmul.f32 %v736, %v743
      %v751 = vmul.f32 %v737, %v748
      %v752 = vld [vmem:[%s5] sm:$0xff]
      %v753 = vld [vmem:[%s5 + $0x8] sm:$0xf]
      %755 = vset.pattern.permute.xlu0 0
      %756 = vperm.xlu0 %755, %v752
      %v757 = vpop.permute.xlu0 %756
      %760 = vset.pattern.permute.xlu0 0
      %761 = vperm.xlu0 %760, %v753
      %v762 = vpop.permute.xlu0 %761
      %v764 = vadd.f32 %v750, %v757
      %v765 = vadd.f32 %v751, %v762
      %v766 = vmax.f32 %v764, 0.0
      %v767 = vmax.f32 %v765, 0.0
      %768 = vst.msk [vmem:[%s306] sm:$0xff] %vm319, %v766
      %vm769 = vcmask 125952
      %770 = vst.msk [vmem:[%s306 + $0x8] sm:$0xf] %vm769, %v767
      %771 = vst.msk [vmem:[%s311] sm:$0xff] %vm319, %v728
      %772 = vst.msk [vmem:[%s311 + $0x8] sm:$0xf] %vm769, %v733
      %p773 = scmp.lt.s32.totalorder %s19, 1
      %s774 = scalar_select %p773, %s19, 1
      %s775 = smul.addr %s774, 2
      %s776 = smul.addr %s775, 8
      %s777 = scalar_lea.vmem %s6, %s776
      %p778 = scmp.lt.s32.totalorder %s19, 1
      %s779 = scalar_select %p778, %s19, 1
      %s780 = smul.addr %s779, 2
      %s781 = smul.addr %s780, 8
      %s782 = scalar_lea.vmem %s7, %s781
      // Predicated region
      $region45: #{resnet_forward.14} parent=43 // pred_check
        %p783 = pneg %p173
      $region46: #{resnet_forward.14} parent=43 // pred_check_branch
        %785 = sbr.rel (%p783) target = $region48
      $region47: #{resnet_forward.14} parent=43 // pred_region
        _
      $region48: #{resnet_forward.14} parent=43 // pred_fallthru
        _
      // Predicated region
      $region49: #{resnet_forward.14} parent=43 // pred_check
        %p786 = pneg %p199
      $region50: #{resnet_forward.14} parent=43 // pred_check_branch
        %788 = sbr.rel (%p786) target = $region52
      $region51: #{resnet_forward.14} parent=43 // pred_region
        _
      $region52: #{resnet_forward.14} parent=43 // pred_fallthru
        _
    $region44: #{resnet_forward.14} parent=5 // pred_fallthru
      _
    %p789 = scmp.le.s32.totalorder 2, %s14
    // Predicated region
    $region53: #{resnet_forward.14} parent=5 // pred_check
      %p790 = pneg %p789
    $region54: #{resnet_forward.14} parent=5 // pred_check_branch
      %792 = sbr.rel (%p790) target = $region56
    $region55: #{resnet_forward.14} parent=5 // pred_region
      %s793 = ssub.s32 %s14, 2
      // Predicated region
      $region57: #{resnet_forward.14} parent=55 // pred_check
        %p794 = pneg %p179
      $region58: #{resnet_forward.14} parent=55 // pred_check_branch
        %796 = sbr.rel (%p794) target = $region60
      $region59: #{resnet_forward.14} parent=55 // pred_region
        %p797 = scmp.lt.s32.totalorder %s20, 1
        %s798 = scalar_select %p797, %s20, 1
        %s799 = smul.addr %s798, 2
        %s800 = smul.addr %s799, 8
        %s801 = scalar_lea.vmem %s6, %s800
      $region60: #{resnet_forward.14} parent=55 // pred_fallthru
        _
      // Predicated region
      $region61: #{resnet_forward.14} parent=55 // pred_check
        %p802 = pneg %p205
      $region62: #{resnet_forward.14} parent=55 // pred_check_branch
        %804 = sbr.rel (%p802) target = $region64
      $region63: #{resnet_forward.14} parent=55 // pred_region
        %p805 = scmp.lt.s32.totalorder %s20, 1
        %s806 = scalar_select %p805, %s20, 1
        %s807 = smul.addr %s806, 2
        %s808 = smul.addr %s807, 8
        %s809 = scalar_lea.vmem %s7, %s808
      $region64: #{resnet_forward.14} parent=55 // pred_fallthru
        _
    $region56: #{resnet_forward.14} parent=5 // pred_fallthru
      _
  $region6: #{resnet_forward.14} parent=0 // loop_footer
    %s18 = sadd.s32 1, %s14
  $region7: #{resnet_forward.14} parent=0 // loop_footer_branch
    %13 = sbr.rel target = $region3
  $region8: #{resnet_forward.14} parent=0 // loop_exit
    _

// kernel: resnet_forward.15
$region0: #{resnet_forward.15}
  #allocation0 [shape = 'u32[]', space=smem, size = 0x4, offset = 0x4, fixed_abs, tag = 'smem constant byte address 0x4 - core index']
  #allocation1 [shape = 'u32[144,128]{1,0:T(1,128)}', space=vmem, size = 0x12000, scoped, tag = 'internal scratch']
  #allocation2 [shape = 'f32[256,16]{1,0:T(8,128)}', space=vmem, size = 0x20000, scoped, tag = 'scratch operand']
  %s0 = inlined_call_operand.vmem [shape: f32[2,12,16], index: 0, kind: input, shape index: {}]
  %s1 = inlined_call_operand.vmem [shape: f32[16,256], index: 1, kind: input, shape index: {}]
  %s2 = inlined_call_operand.vmem [shape: f32[16,1], index: 2, kind: input, shape index: {}]
  %s3 = inlined_call_operand.vmem [shape: f32[16,1], index: 3, kind: input, shape index: {}]
  %s4 = inlined_call_operand.vmem [shape: f32[2,16,16], index: 4, kind: output, shape index: {}]
  %s5 = sld [smem:[#allocation0]]
  $region49: #{resnet_forward.15} parent=0
    _
  %s7 = ssub.s32 1, %s5
  %s8 = scalar_select 0, %s7, %s5
  loop: start=0, step=1, limit=4
  $region2: #{resnet_forward.15} parent=0 // loop_pre_header
    _
  $region3: #{resnet_forward.15} parent=0 // loop_header
    %s10 = sphi 0, %s14
    %p11 = scmp.ge.s32.totalorder %s10, 4
    %s20 = sphi 0, %s22
    %s23 = sphi 0, %s20
    %s24 = sphi 0, %s23
    %s40 = sphi 0, %s24
    %s44 = sphi 0, %s44
    %s46 = sphi 0, %s44
    %s47 = sphi 0, %s46
    %s61 = sphi 0, %s47
    %s65 = sphi 0, %s65
    %s67 = sphi 0, %s65
    %s68 = sphi 0, %s67
    %s82 = sphi 0, %s68
    %s86 = sphi 0, %s86
    %s88 = sphi 0, %s86
    %s89 = sphi 0, %s88
    %s103 = sphi 0, %s89
    %s109 = sphi 0, %s111
    %s112 = sphi 0, %s109
    %s113 = sphi 0, %s112
    %s129 = sphi 0, %s113
  $region4: #{resnet_forward.15} parent=0 // loop_header_branch
    %13 = sbr.rel (%p11) target = $region8
  $region5: #{resnet_forward.15} parent=0 // loop_body
    %s15 = ssub.s32 %s10, 1
    %s16 = ssub.s32 %s10, 2
    %s17 = sadd.s32 %s10, 1
    %s18 = ssub.s32 %s10, %s17
    %p19 = scmp.eq.s32.totalorder %s18, 0
    %s21 = sadd.s32 %s20, 1
    %s22 = scalar_select %p19, %s20, %s21
    %p25 = pneg %p19
    %p26 = scmp.eq.s32.totalorder %s10, 1
    %p27 = por %p25, %p26
    %p28 = scmp.ne.s32.totalorder %s20, %s23
    %p29 = scmp.eq.s32.totalorder %s10, 0
    %p30 = por %p28, %p29
    %p31 = scmp.ne.s32.totalorder %s20, %s23
    %p32 = scmp.eq.s32.totalorder %s15, 1
    %p33 = por %p31, %p32
    %p34 = scmp.ne.s32.totalorder %s23, %s24
    %p35 = scmp.eq.s32.totalorder %s15, 0
    %p36 = por %p34, %p35
    %p37 = scmp.ne.s32.totalorder %s23, %s24
    %p38 = scmp.eq.s32.totalorder %s16, 1
    %p39 = por %p37, %p38
    %p41 = scmp.ne.s32.totalorder %s24, %s40
    %p42 = scmp.eq.s32.totalorder %s16, 0
    %p43 = por %p41, %p42
    %s45 = sadd.s32 %s44, 1
    %p48 = scmp.eq.s32.totalorder %s10, 1
    %p49 = scmp.ne.s32.totalorder %s44, %s46
    %p50 = scmp.eq.s32.totalorder %s10, 0
    %p51 = por %p49, %p50
    %p52 = scmp.ne.s32.totalorder %s44, %s46
    %p53 = scmp.eq.s32.totalorder %s15, 1
    %p54 = por %p52, %p53
    %p55 = scmp.ne.s32.totalorder %s46, %s47
    %p56 = scmp.eq.s32.totalorder %s15, 0
    %p57 = por %p55, %p56
    %p58 = scmp.ne.s32.totalorder %s46, %s47
    %p59 = scmp.eq.s32.totalorder %s16, 1
    %p60 = por %p58, %p59
    %p62 = scmp.ne.s32.totalorder %s47, %s61
    %p63 = scmp.eq.s32.totalorder %s16, 0
    %p64 = por %p62, %p63
    %s66 = sadd.s32 %s65, 1
    %p69 = scmp.eq.s32.totalorder %s10, 1
    %p70 = scmp.ne.s32.totalorder %s65, %s67
    %p71 = scmp.eq.s32.totalorder %s10, 0
    %p72 = por %p70, %p71
    %p73 = scmp.ne.s32.totalorder %s65, %s67
    %p74 = scmp.eq.s32.totalorder %s15, 1
    %p75 = por %p73, %p74
    %p76 = scmp.ne.s32.totalorder %s67, %s68
    %p77 = scmp.eq.s32.totalorder %s15, 0
    %p78 = por %p76, %p77
    %p79 = scmp.ne.s32.totalorder %s67, %s68
    %p80 = scmp.eq.s32.totalorder %s16, 1
    %p81 = por %p79, %p80
    %p83 = scmp.ne.s32.totalorder %s68, %s82
    %p84 = scmp.eq.s32.totalorder %s16, 0
    %p85 = por %p83, %p84
    %s87 = sadd.s32 %s86, 1
    %p90 = scmp.eq.s32.totalorder %s10, 1
    %p91 = scmp.ne.s32.totalorder %s86, %s88
    %p92 = scmp.eq.s32.totalorder %s10, 0
    %p93 = por %p91, %p92
    %p94 = scmp.ne.s32.totalorder %s86, %s88
    %p95 = scmp.eq.s32.totalorder %s15, 1
    %p96 = por %p94, %p95
    %p97 = scmp.ne.s32.totalorder %s88, %s89
    %p98 = scmp.eq.s32.totalorder %s15, 0
    %p99 = por %p97, %p98
    %p100 = scmp.ne.s32.totalorder %s88, %s89
    %p101 = scmp.eq.s32.totalorder %s16, 1
    %p102 = por %p100, %p101
    %p104 = scmp.ne.s32.totalorder %s89, %s103
    %p105 = scmp.eq.s32.totalorder %s16, 0
    %p106 = por %p104, %p105
    %s107 = ssub.s32 %s10, %s17
    %p108 = scmp.eq.s32.totalorder %s107, 0
    %s110 = sadd.s32 %s109, 1
    %s111 = scalar_select %p108, %s109, %s110
    %p114 = pneg %p108
    %p115 = scmp.eq.s32.totalorder %s10, 1
    %p116 = por %p114, %p115
    %p117 = scmp.ne.s32.totalorder %s109, %s112
    %p118 = scmp.eq.s32.totalorder %s10, 0
    %p119 = por %p117, %p118
    %p120 = scmp.ne.s32.totalorder %s109, %s112
    %p121 = scmp.eq.s32.totalorder %s15, 1
    %p122 = por %p120, %p121
    %p123 = scmp.ne.s32.totalorder %s112, %s113
    %p124 = scmp.eq.s32.totalorder %s15, 0
    %p125 = por %p123, %p124
    %p126 = scmp.ne.s32.totalorder %s112, %s113
    %p127 = scmp.eq.s32.totalorder %s16, 1
    %p128 = por %p126, %p127
    %p130 = scmp.ne.s32.totalorder %s113, %s129
    %p131 = scmp.eq.s32.totalorder %s16, 0
    %p132 = por %p130, %p131
    %p133 = scmp.le.s32.totalorder 1, %s10
    %p134 = scmp.lt.s32.totalorder %s10, 3
    %p135 = pnand %p133, %p134
    %p136 = pneg %p135
    // Predicated region
    $region9: #{resnet_forward.15} parent=5 // pred_check
      _
    $region10: #{resnet_forward.15} parent=5 // pred_check_branch
      %138 = sbr.rel (%p135) target = $region12
    $region11: #{resnet_forward.15} parent=5 // pred_region
      %s139 = ssub.s32 %s10, 1
      // Predicated region
      $region13: #{resnet_forward.15} parent=11 // pred_check
        %p140 = pneg %p57
      $region14: #{resnet_forward.15} parent=11 // pred_check_branch
        %142 = sbr.rel (%p140) target = $region16
      $region15: #{resnet_forward.15} parent=11 // pred_region
        _
      $region16: #{resnet_forward.15} parent=11 // pred_fallthru
        _
      // Predicated region
      $region17: #{resnet_forward.15} parent=11 // pred_check
        %p143 = pneg %p78
      $region18: #{resnet_forward.15} parent=11 // pred_check_branch
        %145 = sbr.rel (%p143) target = $region20
      $region19: #{resnet_forward.15} parent=11 // pred_region
        _
      $region20: #{resnet_forward.15} parent=11 // pred_fallthru
        _
      // Predicated region
      $region21: #{resnet_forward.15} parent=11 // pred_check
        %p146 = pneg %p99
      $region22: #{resnet_forward.15} parent=11 // pred_check_branch
        %148 = sbr.rel (%p146) target = $region24
      $region23: #{resnet_forward.15} parent=11 // pred_region
        _
      $region24: #{resnet_forward.15} parent=11 // pred_fallthru
        _
    $region12: #{resnet_forward.15} parent=5 // pred_fallthru
      _
    %p149 = scmp.lt.s32.totalorder %s10, 2
    // Predicated region
    $region25: #{resnet_forward.15} parent=5 // pred_check
      %p150 = pneg %p149
    $region26: #{resnet_forward.15} parent=5 // pred_check_branch
      %152 = sbr.rel (%p150) target = $region28
    $region27: #{resnet_forward.15} parent=5 // pred_region
      // Predicated region
      $region29: #{resnet_forward.15} parent=27 // pred_check
        %p153 = pneg %p30
      $region30: #{resnet_forward.15} parent=27 // pred_check_branch
        %155 = sbr.rel (%p153) target = $region32
      $region31: #{resnet_forward.15} parent=27 // pred_region
        %p156 = scmp.lt.s32.totalorder %s10, 1
        %s157 = scalar_select %p156, %s10, 1
        %s158 = smul.addr %s157, 2
        %s159 = smul.addr %s158, 8
        %s160 = scalar_lea.vmem %s0, %s159
      $region32: #{resnet_forward.15} parent=27 // pred_fallthru
        _
    $region28: #{resnet_forward.15} parent=5 // pred_fallthru
      _
    %p161 = scmp.le.s32.totalorder 1, %s10
    %p162 = scmp.lt.s32.totalorder %s10, 3
    %p163 = pnand %p161, %p162
    %p164 = pneg %p163
    // Predicated region
    $region33: #{resnet_forward.15} parent=5 // pred_check
      _
    $region34: #{resnet_forward.15} parent=5 // pred_check_branch
      %166 = sbr.rel (%p163) target = $region36
    $region35: #{resnet_forward.15} parent=5 // pred_region
      %s167 = ssub.s32 %s10, 1
      %p168 = scmp.lt.s32.totalorder %s15, 1
      %s169 = scalar_select %p168, %s15, 1
      %s170 = smul.addr %s169, 2
      %s171 = smul.addr %s170, 8
      %s172 = scalar_lea.vmem %s0, %s171
      %p173 = pneg %p36
      %p174 = pneg %p33
      %p175 = pneg %p57
      %p176 = pneg %p54
      %p177 = pneg %p78
      %p178 = pneg %p75
      %p179 = pneg %p99
      %p180 = pneg %p96
      %p181 = pneg %p125
      %p182 = pneg %p122
      %p183 = scmp.lt.s32.totalorder %s15, 1
      %s184 = scalar_select %p183, %s15, 1
      %s185 = smul.addr %s184, 2
      %s186 = smul.addr %s185, 8
      %s187 = scalar_lea.vmem %s4, %s186
      %p188 = scmp.lt.s32.totalorder %s15, 1
      %s189 = scalar_select %p188, %s15, 1
      %s190 = smul.addr %s189, 2
      %s191 = smul.addr %s190, 8
      %s192 = scalar_lea.vmem %s0, %s191
      %p193 = scmp.lt.s32.totalorder %s15, 1
      %s194 = scalar_select %p193, %s15, 1
      %s195 = smul.addr %s194, 2
      %s196 = smul.addr %s195, 8
      %s197 = scalar_lea.vmem %s4, %s196
      %vm198 = vcmask 130048
      %199 = vst.msk [vmem:[#allocation2] sm:$0xff] %vm198, 0.0
      %200 = vst.msk [vmem:[#allocation2 + $0x8] sm:$0xff] %vm198, 0.0
      %201 = vst.msk [vmem:[#allocation2 + $0x10] sm:$0xff] %vm198, 0.0
      %202 = vst.msk [vmem:[#allocation2 + $0x18] sm:$0xff] %vm198, 0.0
      %203 = vst.msk [vmem:[#allocation2 + $0x20] sm:$0xff] %vm198, 0.0
      %204 = vst.msk [vmem:[#allocation2 + $0x28] sm:$0xff] %vm198, 0.0
      %205 = vst.msk [vmem:[#allocation2 + $0x30] sm:$0xff] %vm198, 0.0
      %206 = vst.msk [vmem:[#allocation2 + $0x38] sm:$0xff] %vm198, 0.0
      %207 = vst.msk [vmem:[#allocation2 + $0x40] sm:$0xff] %vm198, 0.0
      %208 = vst.msk [vmem:[#allocation2 + $0x48] sm:$0xff] %vm198, 0.0
      %209 = vst.msk [vmem:[#allocation2 + $0x50] sm:$0xff] %vm198, 0.0
      %210 = vst.msk [vmem:[#allocation2 + $0x58] sm:$0xff] %vm198, 0.0
      %211 = vst.msk [vmem:[#allocation2 + $0x60] sm:$0xff] %vm198, 0.0
      %212 = vst.msk [vmem:[#allocation2 + $0x68] sm:$0xff] %vm198, 0.0
      %213 = vst.msk [vmem:[#allocation2 + $0x70] sm:$0xff] %vm198, 0.0
      %214 = vst.msk [vmem:[#allocation2 + $0x78] sm:$0xff] %vm198, 0.0
      %215 = vst.msk [vmem:[#allocation2 + $0x80] sm:$0xff] %vm198, 0.0
      %216 = vst.msk [vmem:[#allocation2 + $0x88] sm:$0xff] %vm198, 0.0
      %217 = vst.msk [vmem:[#allocation2 + $0x90] sm:$0xff] %vm198, 0.0
      %218 = vst.msk [vmem:[#allocation2 + $0x98] sm:$0xff] %vm198, 0.0
      %219 = vst.msk [vmem:[#allocation2 + $0xa0] sm:$0xff] %vm198, 0.0
      %220 = vst.msk [vmem:[#allocation2 + $0xa8] sm:$0xff] %vm198, 0.0
      %221 = vst.msk [vmem:[#allocation2 + $0xb0] sm:$0xff] %vm198, 0.0
      %222 = vst.msk [vmem:[#allocation2 + $0xb8] sm:$0xff] %vm198, 0.0
      %223 = vst.msk [vmem:[#allocation2 + $0xc0] sm:$0xff] %vm198, 0.0
      %224 = vst.msk [vmem:[#allocation2 + $0xc8] sm:$0xff] %vm198, 0.0
      %225 = vst.msk [vmem:[#allocation2 + $0xd0] sm:$0xff] %vm198, 0.0
      %226 = vst.msk [vmem:[#allocation2 + $0xd8] sm:$0xff] %vm198, 0.0
      %227 = vst.msk [vmem:[#allocation2 + $0xe0] sm:$0xff] %vm198, 0.0
      %228 = vst.msk [vmem:[#allocation2 + $0xe8] sm:$0xff] %vm198, 0.0
      %229 = vst.msk [vmem:[#allocation2 + $0xf0] sm:$0xff] %vm198, 0.0
      %230 = vst.msk [vmem:[#allocation2 + $0xf8] sm:$0xff] %vm198, 0.0
      %v231 = vld [vmem:[%s192] sm:$0xff]
      %v232 = vld [vmem:[%s192 + $0x8] sm:$0xf]
      %235 = vrot.lane.b32.xlu0 %v231, 7
      %v236 = vpop.permute.xlu0 %235
      %237 = vrot.lane.b32.xlu0 %v232, 7
      %v238 = vpop.permute.xlu0 %237
      %vm241 = vcmask 130104
      %242 = vst.msk [vmem:[#allocation2] sm:$0xff] %vm241, %v236
      %vm243 = vcmask 126008
      %244 = vst.msk [vmem:[#allocation2 + $0x8] sm:$0xf] %vm243, %v238
      %v245 = vld [vmem:[%s192] sm:$0xff]
      %v246 = vld [vmem:[%s192 + $0x8] sm:$0xf]
      %249 = vrot.lane.b32.xlu0 %v245, 6
      %v250 = vpop.permute.xlu0 %249
      %251 = vrot.lane.b32.xlu0 %v246, 6
      %v252 = vpop.permute.xlu0 %251
      %vm255 = vcmask 130096
      %256 = vst.msk [vmem:[#allocation2 + $0x10] sm:$0xff] %vm255, %v250
      %vm257 = vcmask 126000
      %258 = vst.msk [vmem:[#allocation2 + $0x18] sm:$0xf] %vm257, %v252
      %v259 = vld [vmem:[%s192] sm:$0xff]
      %v260 = vld [vmem:[%s192 + $0x8] sm:$0xf]
      %263 = vrot.lane.b32.xlu0 %v259, 5
      %v264 = vpop.permute.xlu0 %263
      %265 = vrot.lane.b32.xlu0 %v260, 5
      %v266 = vpop.permute.xlu0 %265
      %vm269 = vcmask 130088
      %270 = vst.msk [vmem:[#allocation2 + $0x20] sm:$0xff] %vm269, %v264
      %vm271 = vcmask 125992
      %272 = vst.msk [vmem:[#allocation2 + $0x28] sm:$0xf] %vm271, %v266
      %v273 = vld [vmem:[%s192] sm:$0xff]
      %v274 = vld [vmem:[%s192 + $0x8] sm:$0xf]
      %277 = vrot.lane.b32.xlu0 %v273, 4
      %v278 = vpop.permute.xlu0 %277
      %279 = vrot.lane.b32.xlu0 %v274, 4
      %v280 = vpop.permute.xlu0 %279
      %vm283 = vcmask 130080
      %284 = vst.msk [vmem:[#allocation2 + $0x30] sm:$0xff] %vm283, %v278
      %vm285 = vcmask 125984
      %286 = vst.msk [vmem:[#allocation2 + $0x38] sm:$0xf] %vm285, %v280
      %v287 = vld [vmem:[%s192] sm:$0xff]
      %v288 = vld [vmem:[%s192 + $0x8] sm:$0xf]
      %291 = vrot.lane.b32.xlu0 %v287, 3
      %v292 = vpop.permute.xlu0 %291
      %293 = vrot.lane.b32.xlu0 %v288, 3
      %v294 = vpop.permute.xlu0 %293
      %vm297 = vcmask 130072
      %298 = vst.msk [vmem:[#allocation2 + $0x40] sm:$0xff] %vm297, %v292
      %vm299 = vcmask 125976
      %300 = vst.msk [vmem:[#allocation2 + $0x48] sm:$0xf] %vm299, %v294
      %v301 = vld [vmem:[%s192] sm:$0xff]
      %v302 = vld [vmem:[%s192 + $0x8] sm:$0xf]
      %305 = vrot.lane.b32.xlu0 %v301, 2
      %v306 = vpop.permute.xlu0 %305
      %307 = vrot.lane.b32.xlu0 %v302, 2
      %v308 = vpop.permute.xlu0 %307
      %vm311 = vcmask 130064
      %312 = vst.msk [vmem:[#allocation2 + $0x50] sm:$0xff] %vm311, %v306
      %vm313 = vcmask 125968
      %314 = vst.msk [vmem:[#allocation2 + $0x58] sm:$0xf] %vm313, %v308
      %v315 = vld [vmem:[%s192] sm:$0xff]
      %v316 = vld [vmem:[%s192 + $0x8] sm:$0xf]
      %319 = vrot.lane.b32.xlu0 %v315, 1
      %v320 = vpop.permute.xlu0 %319
      %321 = vrot.lane.b32.xlu0 %v316, 1
      %v322 = vpop.permute.xlu0 %321
      %vm325 = vcmask 130056
      %326 = vst.msk [vmem:[#allocation2 + $0x60] sm:$0xff] %vm325, %v320
      %vm327 = vcmask 125960
      %328 = vst.msk [vmem:[#allocation2 + $0x68] sm:$0xf] %vm327, %v322
      %v329 = vld [vmem:[%s192] sm:$0xff]
      %v330 = vld [vmem:[%s192 + $0x8] sm:$0xf]
      %331 = vst.msk [vmem:[#allocation2 + $0x70] sm:$0xff] %vm198, %v329
      %vm332 = vcmask 125952
      %333 = vst.msk [vmem:[#allocation2 + $0x78] sm:$0xf] %vm332, %v330
      %v334 = vld [vmem:[%s192] sm:$0xff]
      %v335 = vld [vmem:[%s192 + $0x8] sm:$0xf]
      %338 = vrot.lane.b32.xlu0 %v334, 127
      %v339 = vpop.permute.xlu0 %338
      %340 = vrot.lane.b32.xlu0 %v335, 127
      %v341 = vpop.permute.xlu0 %340
      %vm344 = vcmask 121856
      %345 = vst.msk [vmem:[#allocation2 + $0x80] sm:$0xff] %vm344, %v339
      %vm346 = vcmask 117760
      %347 = vst.msk [vmem:[#allocation2 + $0x88] sm:$0xf] %vm346, %v341
      %v348 = vld [vmem:[%s192] sm:$0xff]
      %v349 = vld [vmem:[%s192 + $0x8] sm:$0xf]
      %352 = vrot.lane.b32.xlu0 %v348, 126
      %v353 = vpop.permute.xlu0 %352
      %354 = vrot.lane.b32.xlu0 %v349, 126
      %v355 = vpop.permute.xlu0 %354
      %vm358 = vcmask 113664
      %359 = vst.msk [vmem:[#allocation2 + $0x90] sm:$0xff] %vm358, %v353
      %vm360 = vcmask 109568
      %361 = vst.msk [vmem:[#allocation2 + $0x98] sm:$0xf] %vm360, %v355
      %v362 = vld [vmem:[%s192] sm:$0xff]
      %v363 = vld [vmem:[%s192 + $0x8] sm:$0xf]
      %366 = vrot.lane.b32.xlu0 %v362, 125
      %v367 = vpop.permute.xlu0 %366
      %368 = vrot.lane.b32.xlu0 %v363, 125
      %v369 = vpop.permute.xlu0 %368
      %vm372 = vcmask 105472
      %373 = vst.msk [vmem:[#allocation2 + $0xa0] sm:$0xff] %vm372, %v367
      %vm374 = vcmask 101376
      %375 = vst.msk [vmem:[#allocation2 + $0xa8] sm:$0xf] %vm374, %v369
      %v376 = vld [vmem:[%s192] sm:$0xff]
      %v377 = vld [vmem:[%s192 + $0x8] sm:$0xf]
      %380 = vrot.lane.b32.xlu0 %v376, 124
      %v381 = vpop.permute.xlu0 %380
      %382 = vrot.lane.b32.xlu0 %v377, 124
      %v383 = vpop.permute.xlu0 %382
      %vm386 = vcmask 97280
      %387 = vst.msk [vmem:[#allocation2 + $0xb0] sm:$0xff] %vm386, %v381
      %vm388 = vcmask 93184
      %389 = vst.msk [vmem:[#allocation2 + $0xb8] sm:$0xf] %vm388, %v383
      %v390 = vld [vmem:[%s192] sm:$0xff]
      %v391 = vld [vmem:[%s192 + $0x8] sm:$0xf]
      %394 = vrot.lane.b32.xlu0 %v390, 123
      %v395 = vpop.permute.xlu0 %394
      %396 = vrot.lane.b32.xlu0 %v391, 123
      %v397 = vpop.permute.xlu0 %396
      %vm400 = vcmask 89088
      %401 = vst.msk [vmem:[#allocation2 + $0xc0] sm:$0xff] %vm400, %v395
      %vm402 = vcmask 84992
      %403 = vst.msk [vmem:[#allocation2 + $0xc8] sm:$0xf] %vm402, %v397
      %v404 = vld [vmem:[%s192] sm:$0xff]
      %v405 = vld [vmem:[%s192 + $0x8] sm:$0xf]
      %408 = vrot.lane.b32.xlu0 %v404, 122
      %v409 = vpop.permute.xlu0 %408
      %410 = vrot.lane.b32.xlu0 %v405, 122
      %v411 = vpop.permute.xlu0 %410
      %vm414 = vcmask 80896
      %415 = vst.msk [vmem:[#allocation2 + $0xd0] sm:$0xff] %vm414, %v409
      %vm416 = vcmask 76800
      %417 = vst.msk [vmem:[#allocation2 + $0xd8] sm:$0xf] %vm416, %v411
      %v418 = vld [vmem:[%s192] sm:$0xff]
      %v419 = vld [vmem:[%s192 + $0x8] sm:$0xf]
      %422 = vrot.lane.b32.xlu0 %v418, 121
      %v423 = vpop.permute.xlu0 %422
      %424 = vrot.lane.b32.xlu0 %v419, 121
      %v425 = vpop.permute.xlu0 %424
      %vm428 = vcmask 72704
      %429 = vst.msk [vmem:[#allocation2 + $0xe0] sm:$0xff] %vm428, %v423
      %vm430 = vcmask 68608
      %431 = vst.msk [vmem:[#allocation2 + $0xe8] sm:$0xf] %vm430, %v425
      %v432 = vld [vmem:[%s192] sm:$0xff]
      %v433 = vld [vmem:[%s192 + $0x8] sm:$0xf]
      %436 = vrot.lane.b32.xlu0 %v432, 120
      %v437 = vpop.permute.xlu0 %436
      %438 = vrot.lane.b32.xlu0 %v433, 120
      %v439 = vpop.permute.xlu0 %438
      %vm442 = vcmask 64512
      %443 = vst.msk [vmem:[#allocation2 + $0xf0] sm:$0xff] %vm442, %v437
      %vm444 = vcmask 60416
      %445 = vst.msk [vmem:[#allocation2 + $0xf8] sm:$0xf] %vm444, %v439
      %v446 = vld [vmem:[%s1] sm:$0xff]
      %v447 = vld [vmem:[%s1 + $0x8] sm:$0xff]
      %v448 = vld [vmem:[%s1 + $0x10] sm:$0xff]
      %v449 = vld [vmem:[%s1 + $0x18] sm:$0xff]
      %v450 = vld [vmem:[#allocation2] sm:$0xff]
      %v451 = vld [vmem:[#allocation2 + $0x8] sm:$0xff]
      %v452 = vld [vmem:[#allocation2 + $0x10] sm:$0xff]
      %v453 = vld [vmem:[#allocation2 + $0x18] sm:$0xff]
      %v454 = vld [vmem:[#allocation2 + $0x20] sm:$0xff]
      %v455 = vld [vmem:[#allocation2 + $0x28] sm:$0xff]
      %v456 = vld [vmem:[#allocation2 + $0x30] sm:$0xff]
      %v457 = vld [vmem:[#allocation2 + $0x38] sm:$0xff]
      %v458 = vld [vmem:[#allocation2 + $0x40] sm:$0xff]
      %v459 = vld [vmem:[#allocation2 + $0x48] sm:$0xff]
      %v460 = vld [vmem:[#allocation2 + $0x50] sm:$0xff]
      %v461 = vld [vmem:[#allocation2 + $0x58] sm:$0xff]
      %v462 = vld [vmem:[#allocation2 + $0x60] sm:$0xff]
      %v463 = vld [vmem:[#allocation2 + $0x68] sm:$0xff]
      %v464 = vld [vmem:[#allocation2 + $0x70] sm:$0xff]
      %v465 = vld [vmem:[#allocation2 + $0x78] sm:$0xff]
      %v466 = vld [vmem:[#allocation2 + $0x80] sm:$0xff]
      %v467 = vld [vmem:[#allocation2 + $0x88] sm:$0xff]
      %v468 = vld [vmem:[#allocation2 + $0x90] sm:$0xff]
      %v469 = vld [vmem:[#allocation2 + $0x98] sm:$0xff]
      %v470 = vld [vmem:[#allocation2 + $0xa0] sm:$0xff]
      %v471 = vld [vmem:[#allocation2 + $0xa8] sm:$0xff]
      %v472 = vld [vmem:[#allocation2 + $0xb0] sm:$0xff]
      %v473 = vld [vmem:[#allocation2 + $0xb8] sm:$0xff]
      %v474 = vld [vmem:[#allocation2 + $0xc0] sm:$0xff]
      %v475 = vld [vmem:[#allocation2 + $0xc8] sm:$0xff]
      %v476 = vld [vmem:[#allocation2 + $0xd0] sm:$0xff]
      %v477 = vld [vmem:[#allocation2 + $0xd8] sm:$0xff]
      %v478 = vld [vmem:[#allocation2 + $0xe0] sm:$0xff]
      %v479 = vld [vmem:[#allocation2 + $0xe8] sm:$0xff]
      %v480 = vld [vmem:[#allocation2 + $0xf0] sm:$0xff]
      %v481 = vld [vmem:[#allocation2 + $0xf8] sm:$0xff]
      %482 = vmatprep.subr.mxu0 0.0
      %483 = vmatpush1.msra.mxu0 %v450
      %484 = vmatprep.subr.mxu0 0.0
      %485 = vmatpush1.msra.mxu0 %v451
      %486 = vmatprep.subr.mxu0 0.0
      %487 = vmatpush1.msra.mxu0 %v452
      %488 = vmatprep.subr.mxu0 0.0
      %489 = vmatpush1.msra.mxu0 %v453
      %490 = vmatprep.subr.mxu0 0.0
      %491 = vmatpush1.msra.mxu0 %v454
      %492 = vmatprep.subr.mxu0 0.0
      %493 = vmatpush1.msra.mxu0 %v455
      %494 = vmatprep.subr.mxu0 0.0
      %495 = vmatpush1.msra.mxu0 %v456
      %496 = vmatprep.subr.mxu0 0.0
      %497 = vmatpush1.msra.mxu0 %v457
      %498 = vmatprep.subr.mxu0 0.0
      %499 = vmatpush1.msra.mxu0 %v458
      %500 = vmatprep.subr.mxu0 0.0
      %501 = vmatpush1.msra.mxu0 %v459
      %502 = vmatprep.subr.mxu0 0.0
      %503 = vmatpush1.msra.mxu0 %v460
      %504 = vmatprep.subr.mxu0 0.0
      %505 = vmatpush1.msra.mxu0 %v461
      %506 = vmatprep.subr.mxu0 0.0
      %507 = vmatpush1.msra.mxu0 %v462
      %508 = vmatprep.subr.mxu0 0.0
      %509 = vmatpush1.msra.mxu0 %v463
      %510 = vmatprep.subr.mxu0 0.0
      %511 = vmatpush1.msra.mxu0 %v464
      %512 = vmatprep.subr.mxu0 0.0
      %513 = vmatpush1.msra.mxu0 %v465
      %514 = vmatprep.subr.mxu0 0.0
      %515 = vmatpush1.msra.mxu0 %v466
      %516 = vmatprep.subr.mxu0 0.0
      %517 = vmatpush1.msra.mxu0 %v467
      %518 = vmatprep.subr.mxu0 0.0
      %519 = vmatpush1.msra.mxu0 %v468
      %520 = vmatprep.subr.mxu0 0.0
      %521 = vmatpush1.msra.mxu0 %v469
      %522 = vmatprep.subr.mxu0 0.0
      %523 = vmatpush1.msra.mxu0 %v470
      %524 = vmatprep.subr.mxu0 0.0
      %525 = vmatpush1.msra.mxu0 %v471
      %526 = vmatprep.subr.mxu0 0.0
      %527 = vmatpush1.msra.mxu0 %v472
      %528 = vmatprep.subr.mxu0 0.0
      %529 = vmatpush1.msra.mxu0 %v473
      %530 = vmatprep.subr.mxu0 0.0
      %531 = vmatpush1.msra.mxu0 %v474
      %532 = vmatprep.subr.mxu0 0.0
      %533 = vmatpush1.msra.mxu0 %v475
      %534 = vmatprep.subr.mxu0 0.0
      %535 = vmatpush1.msra.mxu0 %v476
      %536 = vmatprep.subr.mxu0 0.0
      %537 = vmatpush1.msra.mxu0 %v477
      %538 = vmatprep.subr.mxu0 0.0
      %539 = vmatpush1.msra.mxu0 %v478
      %540 = vmatprep.subr.mxu0 0.0
      %541 = vmatpush1.msra.mxu0 %v479
      %542 = vmatprep.subr.mxu0 0.0
      %543 = vmatpush1.msra.mxu0 %v480
      %544 = vmatprep.subr.mxu0 0.0
      %545 = vmatpush1.msra.mxu0 %v481
      %546 = vmatprep.mubr.f32.mxu0 %v447
      %547 = vmatmul.mubr.f32.gmra.mrb[0].mxu0 %v446
      %v548 = vpop.f32.mrb[0].mxu0
      %v549 = vadd.f32 0.0, %v548
      %v550 = vpop.f32.mrb[0].mxu0
      %551 = vmatprep.mubr.f32.mxu0 %v449
      %552 = vmatmul.mubr.f32.gmra.mrb[0].mxu0 %v448
      %v553 = vpop.f32.mrb[0].mxu0
      %v554 = vadd.f32 0.0, %v553
      %v555 = vpop.f32.mrb[0].mxu0
      %556 = vdwg.mxu0
      %v557 = vld [vmem:[%s2] sm:$0xff]
      %v558 = vld [vmem:[%s2 + $0x8] sm:$0xff]
      %560 = vset.pattern.permute.xlu0 0
      %561 = vperm.xlu0 %560, %v557
      %v562 = vpop.permute.xlu0 %561
      %565 = vset.pattern.permute.xlu0 0
      %566 = vperm.xlu0 %565, %v558
      %v567 = vpop.permute.xlu0 %566
      %v569 = vmul.f32 %v549, %v562
      %v570 = vmul.f32 %v554, %v567
      %v571 = vld [vmem:[%s3] sm:$0xff]
      %v572 = vld [vmem:[%s3 + $0x8] sm:$0xff]
      %574 = vset.pattern.permute.xlu0 0
      %575 = vperm.xlu0 %574, %v571
      %v576 = vpop.permute.xlu0 %575
      %579 = vset.pattern.permute.xlu0 0
      %580 = vperm.xlu0 %579, %v572
      %v581 = vpop.permute.xlu0 %580
      %v583 = vadd.f32 %v569, %v576
      %v584 = vadd.f32 %v570, %v581
      %v585 = vmax.f32 %v583, 0.0
      %v586 = vmax.f32 %v584, 0.0
      %587 = vst.msk [vmem:[%s197] sm:$0xff] %vm198, %v585
      %588 = vst.msk [vmem:[%s197 + $0x8] sm:$0xff] %vm198, %v586
      %p589 = scmp.lt.s32.totalorder %s15, 1
      %s590 = scalar_select %p589, %s15, 1
      %s591 = smul.addr %s590, 2
      %s592 = smul.addr %s591, 8
      %s593 = scalar_lea.vmem %s4, %s592
      // Predicated region
      $region37: #{resnet_forward.15} parent=35 // pred_check
        %p594 = pneg %p122
      $region38: #{resnet_forward.15} parent=35 // pred_check_branch
        %596 = sbr.rel (%p594) target = $region40
      $region39: #{resnet_forward.15} parent=35 // pred_region
        _
      $region40: #{resnet_forward.15} parent=35 // pred_fallthru
        _
    $region36: #{resnet_forward.15} parent=5 // pred_fallthru
      _
    %p597 = scmp.le.s32.totalorder 2, %s10
    // Predicated region
    $region41: #{resnet_forward.15} parent=5 // pred_check
      %p598 = pneg %p597
    $region42: #{resnet_forward.15} parent=5 // pred_check_branch
      %600 = sbr.rel (%p598) target = $region44
    $region43: #{resnet_forward.15} parent=5 // pred_region
      %s601 = ssub.s32 %s10, 2
      // Predicated region
      $region45: #{resnet_forward.15} parent=43 // pred_check
        %p602 = pneg %p128
      $region46: #{resnet_forward.15} parent=43 // pred_check_branch
        %604 = sbr.rel (%p602) target = $region48
      $region47: #{resnet_forward.15} parent=43 // pred_region
        %p605 = scmp.lt.s32.totalorder %s16, 1
        %s606 = scalar_select %p605, %s16, 1
        %s607 = smul.addr %s606, 2
        %s608 = smul.addr %s607, 8
        %s609 = scalar_lea.vmem %s4, %s608
      $region48: #{resnet_forward.15} parent=43 // pred_fallthru
        _
    $region44: #{resnet_forward.15} parent=5 // pred_fallthru
      _
  $region6: #{resnet_forward.15} parent=0 // loop_footer
    %s14 = sadd.s32 1, %s10
  $region7: #{resnet_forward.15} parent=0 // loop_footer_branch
    %9 = sbr.rel target = $region3
  $region8: #{resnet_forward.15} parent=0 // loop_exit
    _

// kernel: resnet_forward.16
$region0: #{resnet_forward.16}
  #allocation0 [shape = 'u32[]', space=smem, size = 0x4, offset = 0x4, fixed_abs, tag = 'smem constant byte address 0x4 - core index']
  #allocation1 [shape = 'u32[144,128]{1,0:T(1,128)}', space=vmem, size = 0x12000, scoped, tag = 'internal scratch']
  #allocation2 [shape = 'f32[256,4]{1,0:T(8,128)}', space=vmem, size = 0x20000, scoped, tag = 'scratch operand']
  #allocation3 [shape = 'f32[256,4]{1,0:T(8,128)}', space=vmem, size = 0x20000, scoped, tag = 'scratch operand']
  %s0 = inlined_call_operand.vmem [shape: f32[2,48,4], index: 0, kind: input, shape index: {}]
  %s1 = inlined_call_operand.vmem [shape: f32[2,64,7], index: 1, kind: input, shape index: {}]
  %s2 = inlined_call_operand.vmem [shape: f32[16,256], index: 2, kind: input, shape index: {}]
  %s3 = inlined_call_operand.vmem [shape: f32[16,256], index: 3, kind: input, shape index: {}]
  %s4 = inlined_call_operand.vmem [shape: f32[16,1], index: 4, kind: input, shape index: {}]
  %s5 = inlined_call_operand.vmem [shape: f32[16,1], index: 5, kind: input, shape index: {}]
  %s6 = inlined_call_operand.vmem [shape: f32[2,16,4], index: 6, kind: output, shape index: {0}]
  %s7 = inlined_call_operand.vmem [shape: f32[2,16,4], index: 7, kind: output, shape index: {1}]
  %8 = xla_tuple %s6, %s7
  %s9 = sld [smem:[#allocation0]]
  $region65: #{resnet_forward.16} parent=0
    _
  %s11 = ssub.s32 1, %s9
  %s12 = scalar_select 0, %s11, %s9
  loop: start=0, step=1, limit=4
  $region2: #{resnet_forward.16} parent=0 // loop_pre_header
    _
  $region3: #{resnet_forward.16} parent=0 // loop_header
    %s14 = sphi 0, %s18
    %p15 = scmp.ge.s32.totalorder %s14, 4
    %s24 = sphi 0, %s26
    %s27 = sphi 0, %s24
    %s28 = sphi 0, %s27
    %s44 = sphi 0, %s28
    %s50 = sphi 0, %s52
    %s53 = sphi 0, %s50
    %s54 = sphi 0, %s53
    %s70 = sphi 0, %s54
    %s74 = sphi 0, %s74
    %s76 = sphi 0, %s74
    %s77 = sphi 0, %s76
    %s91 = sphi 0, %s77
    %s95 = sphi 0, %s95
    %s97 = sphi 0, %s95
    %s98 = sphi 0, %s97
    %s112 = sphi 0, %s98
    %s116 = sphi 0, %s116
    %s118 = sphi 0, %s116
    %s119 = sphi 0, %s118
    %s133 = sphi 0, %s119
    %s137 = sphi 0, %s137
    %s139 = sphi 0, %s137
    %s140 = sphi 0, %s139
    %s154 = sphi 0, %s140
    %s160 = sphi 0, %s162
    %s163 = sphi 0, %s160
    %s164 = sphi 0, %s163
    %s180 = sphi 0, %s164
    %s186 = sphi 0, %s188
    %s189 = sphi 0, %s186
    %s190 = sphi 0, %s189
    %s206 = sphi 0, %s190
  $region4: #{resnet_forward.16} parent=0 // loop_header_branch
    %17 = sbr.rel (%p15) target = $region8
  $region5: #{resnet_forward.16} parent=0 // loop_body
    %s19 = ssub.s32 %s14, 1
    %s20 = ssub.s32 %s14, 2
    %s21 = sadd.s32 %s14, 1
    %s22 = ssub.s32 %s14, %s21
    %p23 = scmp.eq.s32.totalorder %s22, 0
    %s25 = sadd.s32 %s24, 1
    %s26 = scalar_select %p23, %s24, %s25
    %p29 = pneg %p23
    %p30 = scmp.eq.s32.totalorder %s14, 1
    %p31 = por %p29, %p30
    %p32 = scmp.ne.s32.totalorder %s24, %s27
    %p33 = scmp.eq.s32.totalorder %s14, 0
    %p34 = por %p32, %p33
    %p35 = scmp.ne.s32.totalorder %s24, %s27
    %p36 = scmp.eq.s32.totalorder %s19, 1
    %p37 = por %p35, %p36
    %p38 = scmp.ne.s32.totalorder %s27, %s28
    %p39 = scmp.eq.s32.totalorder %s19, 0
    %p40 = por %p38, %p39
    %p41 = scmp.ne.s32.totalorder %s27, %s28
    %p42 = scmp.eq.s32.totalorder %s20, 1
    %p43 = por %p41, %p42
    %p45 = scmp.ne.s32.totalorder %s28, %s44
    %p46 = scmp.eq.s32.totalorder %s20, 0
    %p47 = por %p45, %p46
    %s48 = ssub.s32 %s14, %s21
    %p49 = scmp.eq.s32.totalorder %s48, 0
    %s51 = sadd.s32 %s50, 1
    %s52 = scalar_select %p49, %s50, %s51
    %p55 = pneg %p49
    %p56 = scmp.eq.s32.totalorder %s14, 1
    %p57 = por %p55, %p56
    %p58 = scmp.ne.s32.totalorder %s50, %s53
    %p59 = scmp.eq.s32.totalorder %s14, 0
    %p60 = por %p58, %p59
    %p61 = scmp.ne.s32.totalorder %s50, %s53
    %p62 = scmp.eq.s32.totalorder %s19, 1
    %p63 = por %p61, %p62
    %p64 = scmp.ne.s32.totalorder %s53, %s54
    %p65 = scmp.eq.s32.totalorder %s19, 0
    %p66 = por %p64, %p65
    %p67 = scmp.ne.s32.totalorder %s53, %s54
    %p68 = scmp.eq.s32.totalorder %s20, 1
    %p69 = por %p67, %p68
    %p71 = scmp.ne.s32.totalorder %s54, %s70
    %p72 = scmp.eq.s32.totalorder %s20, 0
    %p73 = por %p71, %p72
    %s75 = sadd.s32 %s74, 1
    %p78 = scmp.eq.s32.totalorder %s14, 1
    %p79 = scmp.ne.s32.totalorder %s74, %s76
    %p80 = scmp.eq.s32.totalorder %s14, 0
    %p81 = por %p79, %p80
    %p82 = scmp.ne.s32.totalorder %s74, %s76
    %p83 = scmp.eq.s32.totalorder %s19, 1
    %p84 = por %p82, %p83
    %p85 = scmp.ne.s32.totalorder %s76, %s77
    %p86 = scmp.eq.s32.totalorder %s19, 0
    %p87 = por %p85, %p86
    %p88 = scmp.ne.s32.totalorder %s76, %s77
    %p89 = scmp.eq.s32.totalorder %s20, 1
    %p90 = por %p88, %p89
    %p92 = scmp.ne.s32.totalorder %s77, %s91
    %p93 = scmp.eq.s32.totalorder %s20, 0
    %p94 = por %p92, %p93
    %s96 = sadd.s32 %s95, 1
    %p99 = scmp.eq.s32.totalorder %s14, 1
    %p100 = scmp.ne.s32.totalorder %s95, %s97
    %p101 = scmp.eq.s32.totalorder %s14, 0
    %p102 = por %p100, %p101
    %p103 = scmp.ne.s32.totalorder %s95, %s97
    %p104 = scmp.eq.s32.totalorder %s19, 1
    %p105 = por %p103, %p104
    %p106 = scmp.ne.s32.totalorder %s97, %s98
    %p107 = scmp.eq.s32.totalorder %s19, 0
    %p108 = por %p106, %p107
    %p109 = scmp.ne.s32.totalorder %s97, %s98
    %p110 = scmp.eq.s32.totalorder %s20, 1
    %p111 = por %p109, %p110
    %p113 = scmp.ne.s32.totalorder %s98, %s112
    %p114 = scmp.eq.s32.totalorder %s20, 0
    %p115 = por %p113, %p114
    %s117 = sadd.s32 %s116, 1
    %p120 = scmp.eq.s32.totalorder %s14, 1
    %p121 = scmp.ne.s32.totalorder %s116, %s118
    %p122 = scmp.eq.s32.totalorder %s14, 0
    %p123 = por %p121, %p122
    %p124 = scmp.ne.s32.totalorder %s116, %s118
    %p125 = scmp.eq.s32.totalorder %s19, 1
    %p126 = por %p124, %p125
    %p127 = scmp.ne.s32.totalorder %s118, %s119
    %p128 = scmp.eq.s32.totalorder %s19, 0
    %p129 = por %p127, %p128
    %p130 = scmp.ne.s32.totalorder %s118, %s119
    %p131 = scmp.eq.s32.totalorder %s20, 1
    %p132 = por %p130, %p131
    %p134 = scmp.ne.s32.totalorder %s119, %s133
    %p135 = scmp.eq.s32.totalorder %s20, 0
    %p136 = por %p134, %p135
    %s138 = sadd.s32 %s137, 1
    %p141 = scmp.eq.s32.totalorder %s14, 1
    %p142 = scmp.ne.s32.totalorder %s137, %s139
    %p143 = scmp.eq.s32.totalorder %s14, 0
    %p144 = por %p142, %p143
    %p145 = scmp.ne.s32.totalorder %s137, %s139
    %p146 = scmp.eq.s32.totalorder %s19, 1
    %p147 = por %p145, %p146
    %p148 = scmp.ne.s32.totalorder %s139, %s140
    %p149 = scmp.eq.s32.totalorder %s19, 0
    %p150 = por %p148, %p149
    %p151 = scmp.ne.s32.totalorder %s139, %s140
    %p152 = scmp.eq.s32.totalorder %s20, 1
    %p153 = por %p151, %p152
    %p155 = scmp.ne.s32.totalorder %s140, %s154
    %p156 = scmp.eq.s32.totalorder %s20, 0
    %p157 = por %p155, %p156
    %s158 = ssub.s32 %s14, %s21
    %p159 = scmp.eq.s32.totalorder %s158, 0
    %s161 = sadd.s32 %s160, 1
    %s162 = scalar_select %p159, %s160, %s161
    %p165 = pneg %p159
    %p166 = scmp.eq.s32.totalorder %s14, 1
    %p167 = por %p165, %p166
    %p168 = scmp.ne.s32.totalorder %s160, %s163
    %p169 = scmp.eq.s32.totalorder %s14, 0
    %p170 = por %p168, %p169
    %p171 = scmp.ne.s32.totalorder %s160, %s163
    %p172 = scmp.eq.s32.totalorder %s19, 1
    %p173 = por %p171, %p172
    %p174 = scmp.ne.s32.totalorder %s163, %s164
    %p175 = scmp.eq.s32.totalorder %s19, 0
    %p176 = por %p174, %p175
    %p177 = scmp.ne.s32.totalorder %s163, %s164
    %p178 = scmp.eq.s32.totalorder %s20, 1
    %p179 = por %p177, %p178
    %p181 = scmp.ne.s32.totalorder %s164, %s180
    %p182 = scmp.eq.s32.totalorder %s20, 0
    %p183 = por %p181, %p182
    %s184 = ssub.s32 %s14, %s21
    %p185 = scmp.eq.s32.totalorder %s184, 0
    %s187 = sadd.s32 %s186, 1
    %s188 = scalar_select %p185, %s186, %s187
    %p191 = pneg %p185
    %p192 = scmp.eq.s32.totalorder %s14, 1
    %p193 = por %p191, %p192
    %p194 = scmp.ne.s32.totalorder %s186, %s189
    %p195 = scmp.eq.s32.totalorder %s14, 0
    %p196 = por %p194, %p195
    %p197 = scmp.ne.s32.totalorder %s186, %s189
    %p198 = scmp.eq.s32.totalorder %s19, 1
    %p199 = por %p197, %p198
    %p200 = scmp.ne.s32.totalorder %s189, %s190
    %p201 = scmp.eq.s32.totalorder %s19, 0
    %p202 = por %p200, %p201
    %p203 = scmp.ne.s32.totalorder %s189, %s190
    %p204 = scmp.eq.s32.totalorder %s20, 1
    %p205 = por %p203, %p204
    %p207 = scmp.ne.s32.totalorder %s190, %s206
    %p208 = scmp.eq.s32.totalorder %s20, 0
    %p209 = por %p207, %p208
    %p210 = scmp.le.s32.totalorder 1, %s14
    %p211 = scmp.lt.s32.totalorder %s14, 3
    %p212 = pnand %p210, %p211
    %p213 = pneg %p212
    // Predicated region
    $region9: #{resnet_forward.16} parent=5 // pred_check
      _
    $region10: #{resnet_forward.16} parent=5 // pred_check_branch
      %215 = sbr.rel (%p212) target = $region12
    $region11: #{resnet_forward.16} parent=5 // pred_region
      %s216 = ssub.s32 %s14, 1
      // Predicated region
      $region13: #{resnet_forward.16} parent=11 // pred_check
        %p217 = pneg %p87
      $region14: #{resnet_forward.16} parent=11 // pred_check_branch
        %219 = sbr.rel (%p217) target = $region16
      $region15: #{resnet_forward.16} parent=11 // pred_region
        _
      $region16: #{resnet_forward.16} parent=11 // pred_fallthru
        _
      // Predicated region
      $region17: #{resnet_forward.16} parent=11 // pred_check
        %p220 = pneg %p108
      $region18: #{resnet_forward.16} parent=11 // pred_check_branch
        %222 = sbr.rel (%p220) target = $region20
      $region19: #{resnet_forward.16} parent=11 // pred_region
        _
      $region20: #{resnet_forward.16} parent=11 // pred_fallthru
        _
      // Predicated region
      $region21: #{resnet_forward.16} parent=11 // pred_check
        %p223 = pneg %p129
      $region22: #{resnet_forward.16} parent=11 // pred_check_branch
        %225 = sbr.rel (%p223) target = $region24
      $region23: #{resnet_forward.16} parent=11 // pred_region
        _
      $region24: #{resnet_forward.16} parent=11 // pred_fallthru
        _
      // Predicated region
      $region25: #{resnet_forward.16} parent=11 // pred_check
        %p226 = pneg %p150
      $region26: #{resnet_forward.16} parent=11 // pred_check_branch
        %228 = sbr.rel (%p226) target = $region28
      $region27: #{resnet_forward.16} parent=11 // pred_region
        _
      $region28: #{resnet_forward.16} parent=11 // pred_fallthru
        _
    $region12: #{resnet_forward.16} parent=5 // pred_fallthru
      _
    %p229 = scmp.lt.s32.totalorder %s14, 2
    // Predicated region
    $region29: #{resnet_forward.16} parent=5 // pred_check
      %p230 = pneg %p229
    $region30: #{resnet_forward.16} parent=5 // pred_check_branch
      %232 = sbr.rel (%p230) target = $region32
    $region31: #{resnet_forward.16} parent=5 // pred_region
      // Predicated region
      $region33: #{resnet_forward.16} parent=31 // pred_check
        %p233 = pneg %p34
      $region34: #{resnet_forward.16} parent=31 // pred_check_branch
        %235 = sbr.rel (%p233) target = $region36
      $region35: #{resnet_forward.16} parent=31 // pred_region
        %p236 = scmp.lt.s32.totalorder %s14, 1
        %s237 = scalar_select %p236, %s14, 1
        %s238 = smul.addr %s237, 6
        %s239 = smul.addr %s238, 8
        %s240 = scalar_lea.vmem %s0, %s239
      $region36: #{resnet_forward.16} parent=31 // pred_fallthru
        _
      // Predicated region
      $region37: #{resnet_forward.16} parent=31 // pred_check
        %p241 = pneg %p60
      $region38: #{resnet_forward.16} parent=31 // pred_check_branch
        %243 = sbr.rel (%p241) target = $region40
      $region39: #{resnet_forward.16} parent=31 // pred_region
        %p244 = scmp.lt.s32.totalorder %s14, 1
        %s245 = scalar_select %p244, %s14, 1
        %s246 = smul.addr %s245, 8
        %s247 = smul.addr %s246, 8
        %s248 = scalar_lea.vmem %s1, %s247
      $region40: #{resnet_forward.16} parent=31 // pred_fallthru
        _
    $region32: #{resnet_forward.16} parent=5 // pred_fallthru
      _
    %p249 = scmp.le.s32.totalorder 1, %s14
    %p250 = scmp.lt.s32.totalorder %s14, 3
    %p251 = pnand %p249, %p250
    %p252 = pneg %p251
    // Predicated region
    $region41: #{resnet_forward.16} parent=5 // pred_check
      _
    $region42: #{resnet_forward.16} parent=5 // pred_check_branch
      %254 = sbr.rel (%p251) target = $region44
    $region43: #{resnet_forward.16} parent=5 // pred_region
      %s255 = ssub.s32 %s14, 1
      %p256 = scmp.lt.s32.totalorder %s19, 1
      %s257 = scalar_select %p256, %s19, 1
      %s258 = smul.addr %s257, 6
      %s259 = smul.addr %s258, 8
      %s260 = scalar_lea.vmem %s0, %s259
      %p261 = pneg %p40
      %p262 = pneg %p37
      %p263 = scmp.lt.s32.totalorder %s19, 1
      %s264 = scalar_select %p263, %s19, 1
      %s265 = smul.addr %s264, 8
      %s266 = smul.addr %s265, 8
      %s267 = scalar_lea.vmem %s1, %s266
      %p268 = pneg %p66
      %p269 = pneg %p63
      %p270 = pneg %p87
      %p271 = pneg %p84
      %p272 = pneg %p108
      %p273 = pneg %p105
      %p274 = pneg %p129
      %p275 = pneg %p126
      %p276 = pneg %p150
      %p277 = pneg %p147
      %p278 = pneg %p176
      %p279 = pneg %p173
      %p280 = scmp.lt.s32.totalorder %s19, 1
      %s281 = scalar_select %p280, %s19, 1
      %s282 = smul.addr %s281, 2
      %s283 = smul.addr %s282, 8
      %s284 = scalar_lea.vmem %s6, %s283
      %p285 = pneg %p202
      %p286 = pneg %p199
      %p287 = scmp.lt.s32.totalorder %s19, 1
      %s288 = scalar_select %p287, %s19, 1
      %s289 = smul.addr %s288, 2
      %s290 = smul.addr %s289, 8
      %s291 = scalar_lea.vmem %s7, %s290
      %p292 = scmp.lt.s32.totalorder %s19, 1
      %s293 = scalar_select %p292, %s19, 1
      %s294 = smul.addr %s293, 6
      %s295 = smul.addr %s294, 8
      %s296 = scalar_lea.vmem %s0, %s295
      %p297 = scmp.lt.s32.totalorder %s19, 1
      %s298 = scalar_select %p297, %s19, 1
      %s299 = smul.addr %s298, 8
      %s300 = smul.addr %s299, 8
      %s301 = scalar_lea.vmem %s1, %s300
      %p302 = scmp.lt.s32.totalorder %s19, 1
      %s303 = scalar_select %p302, %s19, 1
      %s304 = smul.addr %s303, 2
      %s305 = smul.addr %s304, 8
      %s306 = scalar_lea.vmem %s6, %s305
      %p307 = scmp.lt.s32.totalorder %s19, 1
      %s308 = scalar_select %p307, %s19, 1
      %s309 = smul.addr %s308, 2
      %s310 = smul.addr %s309, 8
      %s311 = scalar_lea.vmem %s7, %s310
      %v312 = vld [vmem:[%s296] sm:$0xff]
      %v313 = vld [vmem:[%s296 + $0x8] sm:$0xf]
      %v314 = vld [vmem:[%s296 + $0xc] sm:$0xff]
      %v315 = vld [vmem:[%s296 + $0x14] sm:$0xf]
      %v316 = vmax.f32 %v312, %v314
      %v317 = vmax.f32 %v313, %v315
      %v318 = vld [vmem:[%s296 + $0x18] sm:$0xff]
      %v319 = vld [vmem:[%s296 + $0x20] sm:$0xf]
      %v320 = vmax.f32 %v316, %v318
      %v321 = vmax.f32 %v317, %v319
      %v322 = vld [vmem:[%s296 + $0x24] sm:$0xff]
      %v323 = vld [vmem:[%s296 + $0x2c] sm:$0xf]
      %v324 = vmax.f32 %v320, %v322
      %v325 = vmax.f32 %v321, %v323
      %vm326 = vcmask 31744
      %327 = vst.msk [vmem:[#allocation2] sm:$0xff] %vm326, 0.0
      %328 = vst.msk [vmem:[#allocation2 + $0x8] sm:$0xff] %vm326, 0.0
      %329 = vst.msk [vmem:[#allocation2 + $0x10] sm:$0xff] %vm326, 0.0
      %330 = vst.msk [vmem:[#allocation2 + $0x18] sm:$0xff] %vm326, 0.0
      %331 = vst.msk [vmem:[#allocation2 + $0x20] sm:$0xff] %vm326, 0.0
      %332 = vst.msk [vmem:[#allocation2 + $0x28] sm:$0xff] %vm326, 0.0
      %333 = vst.msk [vmem:[#allocation2 + $0x30] sm:$0xff] %vm326, 0.0
      %334 = vst.msk [vmem:[#allocation2 + $0x38] sm:$0xff] %vm326, 0.0
      %335 = vst.msk [vmem:[#allocation2 + $0x40] sm:$0xff] %vm326, 0.0
      %336 = vst.msk [vmem:[#allocation2 + $0x48] sm:$0xff] %vm326, 0.0
      %337 = vst.msk [vmem:[#allocation2 + $0x50] sm:$0xff] %vm326, 0.0
      %338 = vst.msk [vmem:[#allocation2 + $0x58] sm:$0xff] %vm326, 0.0
      %339 = vst.msk [vmem:[#allocation2 + $0x60] sm:$0xff] %vm326, 0.0
      %340 = vst.msk [vmem:[#allocation2 + $0x68] sm:$0xff] %vm326, 0.0
      %341 = vst.msk [vmem:[#allocation2 + $0x70] sm:$0xff] %vm326, 0.0
      %342 = vst.msk [vmem:[#allocation2 + $0x78] sm:$0xff] %vm326, 0.0
      %343 = vst.msk [vmem:[#allocation2 + $0x80] sm:$0xff] %vm326, 0.0
      %344 = vst.msk [vmem:[#allocation2 + $0x88] sm:$0xff] %vm326, 0.0
      %345 = vst.msk [vmem:[#allocation2 + $0x90] sm:$0xff] %vm326, 0.0
      %346 = vst.msk [vmem:[#allocation2 + $0x98] sm:$0xff] %vm326, 0.0
      %347 = vst.msk [vmem:[#allocation2 + $0xa0] sm:$0xff] %vm326, 0.0
      %348 = vst.msk [vmem:[#allocation2 + $0xa8] sm:$0xff] %vm326, 0.0
      %349 = vst.msk [vmem:[#allocation2 + $0xb0] sm:$0xff] %vm326, 0.0
      %350 = vst.msk [vmem:[#allocation2 + $0xb8] sm:$0xff] %vm326, 0.0
      %351 = vst.msk [vmem:[#allocation2 + $0xc0] sm:$0xff] %vm326, 0.0
      %352 = vst.msk [vmem:[#allocation2 + $0xc8] sm:$0xff] %vm326, 0.0
      %353 = vst.msk [vmem:[#allocation2 + $0xd0] sm:$0xff] %vm326, 0.0
      %354 = vst.msk [vmem:[#allocation2 + $0xd8] sm:$0xff] %vm326, 0.0
      %355 = vst.msk [vmem:[#allocation2 + $0xe0] sm:$0xff] %vm326, 0.0
      %356 = vst.msk [vmem:[#allocation2 + $0xe8] sm:$0xff] %vm326, 0.0
      %357 = vst.msk [vmem:[#allocation2 + $0xf0] sm:$0xff] %vm326, 0.0
      %358 = vst.msk [vmem:[#allocation2 + $0xf8] sm:$0xff] %vm326, 0.0
      %361 = vrot.lane.b32.xlu0 %v324, 3
      %v362 = vpop.permute.xlu0 %361
      %363 = vrot.lane.b32.xlu0 %v325, 3
      %v364 = vpop.permute.xlu0 %363
      %vm367 = vcmask 31768
      %368 = vst.msk [vmem:[#allocation2 + $0x40] sm:$0xff] %vm367, %v362
      %vm369 = vcmask 27672
      %370 = vst.msk [vmem:[#allocation2 + $0x48] sm:$0xf] %vm369, %v364
      %371 = vrot.lane.b32.xlu0 %v324, 2
      %v372 = vpop.permute.xlu0 %371
      %373 = vrot.lane.b32.xlu0 %v325, 2
      %v374 = vpop.permute.xlu0 %373
      %vm377 = vcmask 31760
      %378 = vst.msk [vmem:[#allocation2 + $0x50] sm:$0xff] %vm377, %v372
      %vm379 = vcmask 27664
      %380 = vst.msk [vmem:[#allocation2 + $0x58] sm:$0xf] %vm379, %v374
      %381 = vrot.lane.b32.xlu0 %v324, 1
      %v382 = vpop.permute.xlu0 %381
      %383 = vrot.lane.b32.xlu0 %v325, 1
      %v384 = vpop.permute.xlu0 %383
      %vm387 = vcmask 31752
      %388 = vst.msk [vmem:[#allocation2 + $0x60] sm:$0xff] %vm387, %v382
      %vm389 = vcmask 27656
      %390 = vst.msk [vmem:[#allocation2 + $0x68] sm:$0xf] %vm389, %v384
      %391 = vst.msk [vmem:[#allocation2 + $0x70] sm:$0xff] %vm326, %v324
      %vm392 = vcmask 27648
      %393 = vst.msk [vmem:[#allocation2 + $0x78] sm:$0xf] %vm392, %v325
      %394 = vrot.lane.b32.xlu0 %v324, 127
      %v395 = vpop.permute.xlu0 %394
      %396 = vrot.lane.b32.xlu0 %v325, 127
      %v397 = vpop.permute.xlu0 %396
      %vm400 = vcmask 23552
      %401 = vst.msk [vmem:[#allocation2 + $0x80] sm:$0xff] %vm400, %v395
      %vm402 = vcmask 19456
      %403 = vst.msk [vmem:[#allocation2 + $0x88] sm:$0xf] %vm402, %v397
      %404 = vrot.lane.b32.xlu0 %v324, 126
      %v405 = vpop.permute.xlu0 %404
      %406 = vrot.lane.b32.xlu0 %v325, 126
      %v407 = vpop.permute.xlu0 %406
      %vm410 = vcmask 15360
      %411 = vst.msk [vmem:[#allocation2 + $0x90] sm:$0xff] %vm410, %v405
      %vm412 = vcmask 11264
      %413 = vst.msk [vmem:[#allocation2 + $0x98] sm:$0xf] %vm412, %v407
      %414 = vrot.lane.b32.xlu0 %v324, 125
      %v415 = vpop.permute.xlu0 %414
      %416 = vrot.lane.b32.xlu0 %v325, 125
      %v417 = vpop.permute.xlu0 %416
      %vm420 = vcmask 7168
      %421 = vst.msk [vmem:[#allocation2 + $0xa0] sm:$0xff] %vm420, %v415
      %vm422 = vcmask 3072
      %423 = vst.msk [vmem:[#allocation2 + $0xa8] sm:$0xf] %vm422, %v417
      %v424 = vld [vmem:[%s2] sm:$0xff]
      %v425 = vld [vmem:[%s2 + $0x8] sm:$0xff]
      %v426 = vld [vmem:[%s2 + $0x10] sm:$0xff]
      %v427 = vld [vmem:[%s2 + $0x18] sm:$0xff]
      %v428 = vld [vmem:[#allocation2] sm:$0xff]
      %v429 = vld [vmem:[#allocation2 + $0x8] sm:$0xff]
      %v430 = vld [vmem:[#allocation2 + $0x10] sm:$0xff]
      %v431 = vld [vmem:[#allocation2 + $0x18] sm:$0xff]
      %v432 = vld [vmem:[#allocation2 + $0x20] sm:$0xff]
      %v433 = vld [vmem:[#allocation2 + $0x28] sm:$0xff]
      %v434 = vld [vmem:[#allocation2 + $0x30] sm:$0xff]
      %v435 = vld [vmem:[#allocation2 + $0x38] sm:$0xff]
      %v436 = vld [vmem:[#allocation2 + $0x40] sm:$0xff]
      %v437 = vld [vmem:[#allocation2 + $0x48] sm:$0xff]
      %v438 = vld [vmem:[#allocation2 + $0x50] sm:$0xff]
      %v439 = vld [vmem:[#allocation2 + $0x58] sm:$0xff]
      %v440 = vld [vmem:[#allocation2 + $0x60] sm:$0xff]
      %v441 = vld [vmem:[#allocation2 + $0x68] sm:$0xff]
      %v442 = vld [vmem:[#allocation2 + $0x70] sm:$0xff]
      %v443 = vld [vmem:[#allocation2 + $0x78] sm:$0xff]
      %v444 = vld [vmem:[#allocation2 + $0x80] sm:$0xff]
      %v445 = vld [vmem:[#allocation2 + $0x88] sm:$0xff]
      %v446 = vld [vmem:[#allocation2 + $0x90] sm:$0xff]
      %v447 = vld [vmem:[#allocation2 + $0x98] sm:$0xff]
      %v448 = vld [vmem:[#allocation2 + $0xa0] sm:$0xff]
      %v449 = vld [vmem:[#allocation2 + $0xa8] sm:$0xff]
      %v450 = vld [vmem:[#allocation2 + $0xb0] sm:$0xff]
      %v451 = vld [vmem:[#allocation2 + $0xb8] sm:$0xff]
      %v452 = vld [vmem:[#allocation2 + $0xc0] sm:$0xff]
      %v453 = vld [vmem:[#allocation2 + $0xc8] sm:$0xff]
      %v454 = vld [vmem:[#allocation2 + $0xd0] sm:$0xff]
      %v455 = vld [vmem:[#allocation2 + $0xd8] sm:$0xff]
      %v456 = vld [vmem:[#allocation2 + $0xe0] sm:$0xff]
      %v457 = vld [vmem:[#allocation2 + $0xe8] sm:$0xff]
      %v458 = vld [vmem:[#allocation2 + $0xf0] sm:$0xff]
      %v459 = vld [vmem:[#allocation2 + $0xf8] sm:$0xff]
      %460 = vmatprep.subr.mxu0 0.0
      %461 = vmatpush1.msra.mxu0 %v428
      %462 = vmatprep.subr.mxu0 0.0
      %463 = vmatpush1.msra.mxu0 %v429
      %464 = vmatprep.subr.mxu0 0.0
      %465 = vmatpush1.msra.mxu0 %v430
      %466 = vmatprep.subr.mxu0 0.0
      %467 = vmatpush1.msra.mxu0 %v431
      %468 = vmatprep.subr.mxu0 0.0
      %469 = vmatpush1.msra.mxu0 %v432
      %470 = vmatprep.subr.mxu0 0.0
      %471 = vmatpush1.msra.mxu0 %v433
      %472 = vmatprep.subr.mxu0 0.0
      %473 = vmatpush1.msra.mxu0 %v434
      %474 = vmatprep.subr.mxu0 0.0
      %475 = vmatpush1.msra.mxu0 %v435
      %476 = vmatprep.subr.mxu0 0.0
      %477 = vmatpush1.msra.mxu0 %v436
      %478 = vmatprep.subr.mxu0 0.0
      %479 = vmatpush1.msra.mxu0 %v437
      %480 = vmatprep.subr.mxu0 0.0
      %481 = vmatpush1.msra.mxu0 %v438
      %482 = vmatprep.subr.mxu0 0.0
      %483 = vmatpush1.msra.mxu0 %v439
      %484 = vmatprep.subr.mxu0 0.0
      %485 = vmatpush1.msra.mxu0 %v440
      %486 = vmatprep.subr.mxu0 0.0
      %487 = vmatpush1.msra.mxu0 %v441
      %488 = vmatprep.subr.mxu0 0.0
      %489 = vmatpush1.msra.mxu0 %v442
      %490 = vmatprep.subr.mxu0 0.0
      %491 = vmatpush1.msra.mxu0 %v443
      %492 = vmatprep.subr.mxu0 0.0
      %493 = vmatpush1.msra.mxu0 %v444
      %494 = vmatprep.subr.mxu0 0.0
      %495 = vmatpush1.msra.mxu0 %v445
      %496 = vmatprep.subr.mxu0 0.0
      %497 = vmatpush1.msra.mxu0 %v446
      %498 = vmatprep.subr.mxu0 0.0
      %499 = vmatpush1.msra.mxu0 %v447
      %500 = vmatprep.subr.mxu0 0.0
      %501 = vmatpush1.msra.mxu0 %v448
      %502 = vmatprep.subr.mxu0 0.0
      %503 = vmatpush1.msra.mxu0 %v449
      %504 = vmatprep.subr.mxu0 0.0
      %505 = vmatpush1.msra.mxu0 %v450
      %506 = vmatprep.subr.mxu0 0.0
      %507 = vmatpush1.msra.mxu0 %v451
      %508 = vmatprep.subr.mxu0 0.0
      %509 = vmatpush1.msra.mxu0 %v452
      %510 = vmatprep.subr.mxu0 0.0
      %511 = vmatpush1.msra.mxu0 %v453
      %512 = vmatprep.subr.mxu0 0.0
      %513 = vmatpush1.msra.mxu0 %v454
      %514 = vmatprep.subr.mxu0 0.0
      %515 = vmatpush1.msra.mxu0 %v455
      %516 = vmatprep.subr.mxu0 0.0
      %517 = vmatpush1.msra.mxu0 %v456
      %518 = vmatprep.subr.mxu0 0.0
      %519 = vmatpush1.msra.mxu0 %v457
      %520 = vmatprep.subr.mxu0 0.0
      %521 = vmatpush1.msra.mxu0 %v458
      %522 = vmatprep.subr.mxu0 0.0
      %523 = vmatpush1.msra.mxu0 %v459
      %524 = vmatprep.mubr.f32.mxu0 %v425
      %525 = vmatmul.mubr.f32.gmra.mrb[0].mxu0 %v424
      %v526 = vpop.f32.mrb[0].mxu0
      %v527 = vadd.f32 0.0, %v526
      %v528 = vpop.f32.mrb[0].mxu0
      %529 = vmatprep.mubr.f32.mxu0 %v427
      %530 = vmatmul.mubr.f32.gmra.mrb[0].mxu0 %v426
      %v531 = vpop.f32.mrb[0].mxu0
      %v532 = vadd.f32 0.0, %v531
      %v533 = vpop.f32.mrb[0].mxu0
      %534 = vdwg.mxu0
      %v535 = vld [vmem:[%s301] sm:$0xff]
      %v536 = vld [vmem:[%s301 + $0x8] sm:$0xff]
      %v537 = vld [vmem:[%s301 + $0x10] sm:$0xff]
      %v538 = vld [vmem:[%s301 + $0x18] sm:$0xff]
      %v539 = vld [vmem:[%s301 + $0x20] sm:$0xff]
      %v540 = vld [vmem:[%s301 + $0x28] sm:$0xff]
      %v541 = vld [vmem:[%s301 + $0x30] sm:$0xff]
      %v542 = vld [vmem:[%s301 + $0x38] sm:$0xff]
      %543 = vst.msk [vmem:[#allocation3] sm:$0xff] %vm326, %v535
      %544 = vst.msk [vmem:[#allocation3 + $0x8] sm:$0xff] %vm326, %v536
      %545 = vst.msk [vmem:[#allocation3 + $0x10] sm:$0xff] %vm326, %v537
      %546 = vst.msk [vmem:[#allocation3 + $0x18] sm:$0xff] %vm326, %v538
      %547 = vst.msk [vmem:[#allocation3 + $0x20] sm:$0xff] %vm326, %v539
      %548 = vst.msk [vmem:[#allocation3 + $0x28] sm:$0xff] %vm326, %v540
      %549 = vst.msk [vmem:[#allocation3 + $0x30] sm:$0xff] %vm326, %v541
      %550 = vst.msk [vmem:[#allocation3 + $0x38] sm:$0xff] %vm326, %v542
      %v551 = vld [vmem:[%s301] sm:$0xff]
      %v552 = vld [vmem:[%s301 + $0x8] sm:$0xff]
      %v553 = vld [vmem:[%s301 + $0x10] sm:$0xff]
      %v554 = vld [vmem:[%s301 + $0x18] sm:$0xff]
      %v555 = vld [vmem:[%s301 + $0x20] sm:$0xff]
      %v556 = vld [vmem:[%s301 + $0x28] sm:$0xff]
      %v557 = vld [vmem:[%s301 + $0x30] sm:$0xff]
      %v558 = vld [vmem:[%s301 + $0x38] sm:$0xff]
      %567 = vrot.lane.b32.xlu0 %v551, 127
      %v568 = vpop.permute.xlu0 %567
      %569 = vrot.lane.b32.xlu0 %v552, 127
      %v570 = vpop.permute.xlu0 %569
      %571 = vrot.lane.b32.xlu0 %v553, 127
      %v572 = vpop.permute.xlu0 %571
      %573 = vrot.lane.b32.xlu0 %v554, 127
      %v574 = vpop.permute.xlu0 %573
      %575 = vrot.lane.b32.xlu0 %v555, 127
      %v576 = vpop.permute.xlu0 %575
      %577 = vrot.lane.b32.xlu0 %v556, 127
      %v578 = vpop.permute.xlu0 %577
      %579 = vrot.lane.b32.xlu0 %v557, 127
      %v580 = vpop.permute.xlu0 %579
      %581 = vrot.lane.b32.xlu0 %v558, 127
      %v582 = vpop.permute.xlu0 %581
      %591 = vst.msk [vmem:[#allocation3 + $0x40] sm:$0xff] %vm326, %v568
      %592 = vst.msk [vmem:[#allocation3 + $0x48] sm:$0xff] %vm326, %v570
      %593 = vst.msk [vmem:[#allocation3 + $0x50] sm:$0xff] %vm326, %v572
      %594 = vst.msk [vmem:[#allocation3 + $0x58] sm:$0xff] %vm326, %v574
      %595 = vst.msk [vmem:[#allocation3 + $0x60] sm:$0xff] %vm326, %v576
      %596 = vst.msk [vmem:[#allocation3 + $0x68] sm:$0xff] %vm326, %v578
      %597 = vst.msk [vmem:[#allocation3 + $0x70] sm:$0xff] %vm326, %v580
      %598 = vst.msk [vmem:[#allocation3 + $0x78] sm:$0xff] %vm326, %v582
      %v599 = vld [vmem:[%s301] sm:$0xff]
      %v600 = vld [vmem:[%s301 + $0x8] sm:$0xff]
      %v601 = vld [vmem:[%s301 + $0x10] sm:$0xff]
      %v602 = vld [vmem:[%s301 + $0x18] sm:$0xff]
      %v603 = vld [vmem:[%s301 + $0x20] sm:$0xff]
      %v604 = vld [vmem:[%s301 + $0x28] sm:$0xff]
      %v605 = vld [vmem:[%s301 + $0x30] sm:$0xff]
      %v606 = vld [vmem:[%s301 + $0x38] sm:$0xff]
      %615 = vrot.lane.b32.xlu0 %v599, 126
      %v616 = vpop.permute.xlu0 %615
      %617 = vrot.lane.b32.xlu0 %v600, 126
      %v618 = vpop.permute.xlu0 %617
      %619 = vrot.lane.b32.xlu0 %v601, 126
      %v620 = vpop.permute.xlu0 %619
      %621 = vrot.lane.b32.xlu0 %v602, 126
      %v622 = vpop.permute.xlu0 %621
      %623 = vrot.lane.b32.xlu0 %v603, 126
      %v624 = vpop.permute.xlu0 %623
      %625 = vrot.lane.b32.xlu0 %v604, 126
      %v626 = vpop.permute.xlu0 %625
      %627 = vrot.lane.b32.xlu0 %v605, 126
      %v628 = vpop.permute.xlu0 %627
      %629 = vrot.lane.b32.xlu0 %v606, 126
      %v630 = vpop.permute.xlu0 %629
      %639 = vst.msk [vmem:[#allocation3 + $0x80] sm:$0xff] %vm326, %v616
      %640 = vst.msk [vmem:[#allocation3 + $0x88] sm:$0xff] %vm326, %v618
      %641 = vst.msk [vmem:[#allocation3 + $0x90] sm:$0xff] %vm326, %v620
      %642 = vst.msk [vmem:[#allocation3 + $0x98] sm:$0xff] %vm326, %v622
      %643 = vst.msk [vmem:[#allocation3 + $0xa0] sm:$0xff] %vm326, %v624
      %644 = vst.msk [vmem:[#allocation3 + $0xa8] sm:$0xff] %vm326, %v626
      %645 = vst.msk [vmem:[#allocation3 + $0xb0] sm:$0xff] %vm326, %v628
      %646 = vst.msk [vmem:[#allocation3 + $0xb8] sm:$0xff] %vm326, %v630
      %v647 = vld [vmem:[%s301] sm:$0xff]
      %v648 = vld [vmem:[%s301 + $0x8] sm:$0xff]
      %v649 = vld [vmem:[%s301 + $0x10] sm:$0xff]
      %v650 = vld [vmem:[%s301 + $0x18] sm:$0xff]
      %v651 = vld [vmem:[%s301 + $0x20] sm:$0xff]
      %v652 = vld [vmem:[%s301 + $0x28] sm:$0xff]
      %v653 = vld [vmem:[%s301 + $0x30] sm:$0xff]
      %v654 = vld [vmem:[%s301 + $0x38] sm:$0xff]
      %663 = vrot.lane.b32.xlu0 %v647, 125
      %v664 = vpop.permute.xlu0 %663
      %665 = vrot.lane.b32.xlu0 %v648, 125
      %v666 = vpop.permute.xlu0 %665
      %667 = vrot.lane.b32.xlu0 %v649, 125
      %v668 = vpop.permute.xlu0 %667
      %669 = vrot.lane.b32.xlu0 %v650, 125
      %v670 = vpop.permute.xlu0 %669
      %671 = vrot.lane.b32.xlu0 %v651, 125
      %v672 = vpop.permute.xlu0 %671
      %673 = vrot.lane.b32.xlu0 %v652, 125
      %v674 = vpop.permute.xlu0 %673
      %675 = vrot.lane.b32.xlu0 %v653, 125
      %v676 = vpop.permute.xlu0 %675
      %677 = vrot.lane.b32.xlu0 %v654, 125
      %v678 = vpop.permute.xlu0 %677
      %687 = vst.msk [vmem:[#allocation3 + $0xc0] sm:$0xff] %vm326, %v664
      %688 = vst.msk [vmem:[#allocation3 + $0xc8] sm:$0xff] %vm326, %v666
      %689 = vst.msk [vmem:[#allocation3 + $0xd0] sm:$0xff] %vm326, %v668
      %690 = vst.msk [vmem:[#allocation3 + $0xd8] sm:$0xff] %vm326, %v670
      %691 = vst.msk [vmem:[#allocation3 + $0xe0] sm:$0xff] %vm326, %v672
      %692 = vst.msk [vmem:[#allocation3 + $0xe8] sm:$0xff] %vm326, %v674
      %693 = vst.msk [vmem:[#allocation3 + $0xf0] sm:$0xff] %vm326, %v676
      %694 = vst.msk [vmem:[#allocation3 + $0xf8] sm:$0xff] %vm326, %v678
      %v695 = vld [vmem:[%s3] sm:$0xff]
      %v696 = vld [vmem:[%s3 + $0x8] sm:$0xff]
      %v697 = vld [vmem:[%s3 + $0x10] sm:$0xff]
      %v698 = vld [vmem:[%s3 + $0x18] sm:$0xff]
      %v699 = vld [vmem:[#allocation3] sm:$0xff]
      %v700 = vld [vmem:[#allocation3 + $0x8] sm:$0xff]
      %v701 = vld [vmem:[#allocation3 + $0x10] sm:$0xff]
      %v702 = vld [vmem:[#allocation3 + $0x18] sm:$0xff]
      %v703 = vld [vmem:[#allocation3 + $0x20] sm:$0xff]
      %v704 = vld [vmem:[#allocation3 + $0x28] sm:$0xff]
      %v705 = vld [vmem:[#allocation3 + $0x30] sm:$0xff]
      %v706 = vld [vmem:[#allocation3 + $0x38] sm:$0xff]
      %v707 = vld [vmem:[#allocation3 + $0x40] sm:$0xff]
      %v708 = vld [vmem:[#allocation3 + $0x48] sm:$0xff]
      %v709 = vld [vmem:[#allocation3 + $0x50] sm:$0xff]
      %v710 = vld [vmem:[#allocation3 + $0x58] sm:$0xff]
      %v711 = vld [vmem:[#allocation3 + $0x60] sm:$0xff]
      %v712 = vld [vmem:[#allocation3 + $0x68] sm:$0xff]
      %v713 = vld [vmem:[#allocation3 + $0x70] sm:$0xff]
      %v714 = vld [vmem:[#allocation3 + $0x78] sm:$0xff]
      %v715 = vld [vmem:[#allocation3 + $0x80] sm:$0xff]
      %v716 = vld [vmem:[#allocation3 + $0x88] sm:$0xff]
      %v717 = vld [vmem:[#allocation3 + $0x90] sm:$0xff]
      %v718 = vld [vmem:[#allocation3 + $0x98] sm:$0xff]
      %v719 = vld [vmem:[#allocation3 + $0xa0] sm:$0xff]
      %v720 = vld [vmem:[#allocation3 + $0xa8] sm:$0xff]
      %v721 = vld [vmem:[#allocation3 + $0xb0] sm:$0xff]
      %v722 = vld [vmem:[#allocation3 + $0xb8] sm:$0xff]
      %v723 = vld [vmem:[#allocation3 + $0xc0] sm:$0xff]
      %v724 = vld [vmem:[#allocation3 + $0xc8] sm:$0xff]
      %v725 = vld [vmem:[#allocation3 + $0xd0] sm:$0xff]
      %v726 = vld [vmem:[#allocation3 + $0xd8] sm:$0xff]
      %v727 = vld [vmem:[#allocation3 + $0xe0] sm:$0xff]
      %v728 = vld [vmem:[#allocation3 + $0xe8] sm:$0xff]
      %v729 = vld [vmem:[#allocation3 + $0xf0] sm:$0xff]
      %v730 = vld [vmem:[#allocation3 + $0xf8] sm:$0xff]
      %731 = vmatprep.subr.mxu0 0.0
      %732 = vmatpush1.msra.mxu0 %v699
      %733 = vmatprep.subr.mxu0 0.0
      %734 = vmatpush1.msra.mxu0 %v700
      %735 = vmatprep.subr.mxu0 0.0
      %736 = vmatpush1.msra.mxu0 %v701
      %737 = vmatprep.subr.mxu0 0.0
      %738 = vmatpush1.msra.mxu0 %v702
      %739 = vmatprep.subr.mxu0 0.0
      %740 = vmatpush1.msra.mxu0 %v703
      %741 = vmatprep.subr.mxu0 0.0
      %742 = vmatpush1.msra.mxu0 %v704
      %743 = vmatprep.subr.mxu0 0.0
      %744 = vmatpush1.msra.mxu0 %v705
      %745 = vmatprep.subr.mxu0 0.0
      %746 = vmatpush1.msra.mxu0 %v706
      %747 = vmatprep.subr.mxu0 0.0
      %748 = vmatpush1.msra.mxu0 %v707
      %749 = vmatprep.subr.mxu0 0.0
      %750 = vmatpush1.msra.mxu0 %v708
      %751 = vmatprep.subr.mxu0 0.0
      %752 = vmatpush1.msra.mxu0 %v709
      %753 = vmatprep.subr.mxu0 0.0
      %754 = vmatpush1.msra.mxu0 %v710
      %755 = vmatprep.subr.mxu0 0.0
      %756 = vmatpush1.msra.mxu0 %v711
      %757 = vmatprep.subr.mxu0 0.0
      %758 = vmatpush1.msra.mxu0 %v712
      %759 = vmatprep.subr.mxu0 0.0
      %760 = vmatpush1.msra.mxu0 %v713
      %761 = vmatprep.subr.mxu0 0.0
      %762 = vmatpush1.msra.mxu0 %v714
      %763 = vmatprep.subr.mxu0 0.0
      %764 = vmatpush1.msra.mxu0 %v715
      %765 = vmatprep.subr.mxu0 0.0
      %766 = vmatpush1.msra.mxu0 %v716
      %767 = vmatprep.subr.mxu0 0.0
      %768 = vmatpush1.msra.mxu0 %v717
      %769 = vmatprep.subr.mxu0 0.0
      %770 = vmatpush1.msra.mxu0 %v718
      %771 = vmatprep.subr.mxu0 0.0
      %772 = vmatpush1.msra.mxu0 %v719
      %773 = vmatprep.subr.mxu0 0.0
      %774 = vmatpush1.msra.mxu0 %v720
      %775 = vmatprep.subr.mxu0 0.0
      %776 = vmatpush1.msra.mxu0 %v721
      %777 = vmatprep.subr.mxu0 0.0
      %778 = vmatpush1.msra.mxu0 %v722
      %779 = vmatprep.subr.mxu0 0.0
      %780 = vmatpush1.msra.mxu0 %v723
      %781 = vmatprep.subr.mxu0 0.0
      %782 = vmatpush1.msra.mxu0 %v724
      %783 = vmatprep.subr.mxu0 0.0
      %784 = vmatpush1.msra.mxu0 %v725
      %785 = vmatprep.subr.mxu0 0.0
      %786 = vmatpush1.msra.mxu0 %v726
      %787 = vmatprep.subr.mxu0 0.0
      %788 = vmatpush1.msra.mxu0 %v727
      %789 = vmatprep.subr.mxu0 0.0
      %790 = vmatpush1.msra.mxu0 %v728
      %791 = vmatprep.subr.mxu0 0.0
      %792 = vmatpush1.msra.mxu0 %v729
      %793 = vmatprep.subr.mxu0 0.0
      %794 = vmatpush1.msra.mxu0 %v730
      %795 = vmatprep.mubr.f32.mxu0 %v696
      %796 = vmatmul.mubr.f32.gmra.mrb[0].mxu0 %v695
      %v797 = vpop.f32.mrb[0].mxu0
      %v798 = vadd.f32 0.0, %v797
      %v799 = vpop.f32.mrb[0].mxu0
      %800 = vmatprep.mubr.f32.mxu0 %v698
      %801 = vmatmul.mubr.f32.gmra.mrb[0].mxu0 %v697
      %v802 = vpop.f32.mrb[0].mxu0
      %v803 = vadd.f32 0.0, %v802
      %v804 = vpop.f32.mrb[0].mxu0
      %805 = vdwg.mxu0
      %v806 = vadd.f32 %v798, %v527
      %v807 = vadd.f32 %v803, %v532
      %v808 = vld [vmem:[%s4] sm:$0xff]
      %v809 = vld [vmem:[%s4 + $0x8] sm:$0xff]
      %811 = vset.pattern.permute.xlu0 0
      %812 = vperm.xlu0 %811, %v808
      %v813 = vpop.permute.xlu0 %812
      %816 = vset.pattern.permute.xlu0 0
      %817 = vperm.xlu0 %816, %v809
      %v818 = vpop.permute.xlu0 %817
      %v820 = vmul.f32 %v806, %v813
      %v821 = vmul.f32 %v807, %v818
      %v822 = vld [vmem:[%s5] sm:$0xff]
      %v823 = vld [vmem:[%s5 + $0x8] sm:$0xff]
      %825 = vset.pattern.permute.xlu0 0
      %826 = vperm.xlu0 %825, %v822
      %v827 = vpop.permute.xlu0 %826
      %830 = vset.pattern.permute.xlu0 0
      %831 = vperm.xlu0 %830, %v823
      %v832 = vpop.permute.xlu0 %831
      %v834 = vadd.f32 %v820, %v827
      %v835 = vadd.f32 %v821, %v832
      %v836 = vmax.f32 %v834, 0.0
      %v837 = vmax.f32 %v835, 0.0
      %838 = vst.msk [vmem:[%s306] sm:$0xff] %vm326, %v836
      %839 = vst.msk [vmem:[%s306 + $0x8] sm:$0xff] %vm326, %v837
      %840 = vst.msk [vmem:[%s311] sm:$0xff] %vm326, %v798
      %841 = vst.msk [vmem:[%s311 + $0x8] sm:$0xff] %vm326, %v803
      %p842 = scmp.lt.s32.totalorder %s19, 1
      %s843 = scalar_select %p842, %s19, 1
      %s844 = smul.addr %s843, 2
      %s845 = smul.addr %s844, 8
      %s846 = scalar_lea.vmem %s6, %s845
      %p847 = scmp.lt.s32.totalorder %s19, 1
      %s848 = scalar_select %p847, %s19, 1
      %s849 = smul.addr %s848, 2
      %s850 = smul.addr %s849, 8
      %s851 = scalar_lea.vmem %s7, %s850
      // Predicated region
      $region45: #{resnet_forward.16} parent=43 // pred_check
        %p852 = pneg %p173
      $region46: #{resnet_forward.16} parent=43 // pred_check_branch
        %854 = sbr.rel (%p852) target = $region48
      $region47: #{resnet_forward.16} parent=43 // pred_region
        _
      $region48: #{resnet_forward.16} parent=43 // pred_fallthru
        _
      // Predicated region
      $region49: #{resnet_forward.16} parent=43 // pred_check
        %p855 = pneg %p199
      $region50: #{resnet_forward.16} parent=43 // pred_check_branch
        %857 = sbr.rel (%p855) target = $region52
      $region51: #{resnet_forward.16} parent=43 // pred_region
        _
      $region52: #{resnet_forward.16} parent=43 // pred_fallthru
        _
    $region44: #{resnet_forward.16} parent=5 // pred_fallthru
      _
    %p858 = scmp.le.s32.totalorder 2, %s14
    // Predicated region
    $region53: #{resnet_forward.16} parent=5 // pred_check
      %p859 = pneg %p858
    $region54: #{resnet_forward.16} parent=5 // pred_check_branch
      %861 = sbr.rel (%p859) target = $region56
    $region55: #{resnet_forward.16} parent=5 // pred_region
      %s862 = ssub.s32 %s14, 2
      // Predicated region
      $region57: #{resnet_forward.16} parent=55 // pred_check
        %p863 = pneg %p179
      $region58: #{resnet_forward.16} parent=55 // pred_check_branch
        %865 = sbr.rel (%p863) target = $region60
      $region59: #{resnet_forward.16} parent=55 // pred_region
        %p866 = scmp.lt.s32.totalorder %s20, 1
        %s867 = scalar_select %p866, %s20, 1
        %s868 = smul.addr %s867, 2
        %s869 = smul.addr %s868, 8
        %s870 = scalar_lea.vmem %s6, %s869
      $region60: #{resnet_forward.16} parent=55 // pred_fallthru
        _
      // Predicated region
      $region61: #{resnet_forward.16} parent=55 // pred_check
        %p871 = pneg %p205
      $region62: #{resnet_forward.16} parent=55 // pred_check_branch
        %873 = sbr.rel (%p871) target = $region64
      $region63: #{resnet_forward.16} parent=55 // pred_region
        %p874 = scmp.lt.s32.totalorder %s20, 1
        %s875 = scalar_select %p874, %s20, 1
        %s876 = smul.addr %s875, 2
        %s877 = smul.addr %s876, 8
        %s878 = scalar_lea.vmem %s7, %s877
      $region64: #{resnet_forward.16} parent=55 // pred_fallthru
        _
    $region56: #{resnet_forward.16} parent=5 // pred_fallthru
      _
  $region6: #{resnet_forward.16} parent=0 // loop_footer
    %s18 = sadd.s32 1, %s14
  $region7: #{resnet_forward.16} parent=0 // loop_footer_branch
    %13 = sbr.rel target = $region3
  $region8: #{resnet_forward.16} parent=0 // loop_exit
    _

// kernel: resnet_forward.17
$region0: #{resnet_forward.17}
  #allocation0 [shape = 'u32[]', space=smem, size = 0x4, offset = 0x4, fixed_abs, tag = 'smem constant byte address 0x4 - core index']
  #allocation1 [shape = 'u32[144,128]{1,0:T(1,128)}', space=vmem, size = 0x12000, scoped, tag = 'internal scratch']
  #allocation2 [shape = 'f32[256,4]{1,0:T(8,128)}', space=vmem, size = 0x20000, scoped, tag = 'scratch operand']
  %s0 = inlined_call_operand.vmem [shape: f32[2,16,4], index: 0, kind: input, shape index: {}]
  %s1 = inlined_call_operand.vmem [shape: f32[20,256], index: 1, kind: input, shape index: {}]
  %s2 = inlined_call_operand.vmem [shape: f32[20,1], index: 2, kind: input, shape index: {}]
  %s3 = inlined_call_operand.vmem [shape: f32[20,1], index: 3, kind: input, shape index: {}]
  %s4 = inlined_call_operand.vmem [shape: f32[2,20,4], index: 4, kind: output, shape index: {}]
  %s5 = sld [smem:[#allocation0]]
  $region49: #{resnet_forward.17} parent=0
    _
  %s7 = ssub.s32 1, %s5
  %s8 = scalar_select 0, %s7, %s5
  loop: start=0, step=1, limit=4
  $region2: #{resnet_forward.17} parent=0 // loop_pre_header
    _
  $region3: #{resnet_forward.17} parent=0 // loop_header
    %s10 = sphi 0, %s14
    %p11 = scmp.ge.s32.totalorder %s10, 4
    %s20 = sphi 0, %s22
    %s23 = sphi 0, %s20
    %s24 = sphi 0, %s23
    %s40 = sphi 0, %s24
    %s44 = sphi 0, %s44
    %s46 = sphi 0, %s44
    %s47 = sphi 0, %s46
    %s61 = sphi 0, %s47
    %s65 = sphi 0, %s65
    %s67 = sphi 0, %s65
    %s68 = sphi 0, %s67
    %s82 = sphi 0, %s68
    %s86 = sphi 0, %s86
    %s88 = sphi 0, %s86
    %s89 = sphi 0, %s88
    %s103 = sphi 0, %s89
    %s109 = sphi 0, %s111
    %s112 = sphi 0, %s109
    %s113 = sphi 0, %s112
    %s129 = sphi 0, %s113
  $region4: #{resnet_forward.17} parent=0 // loop_header_branch
    %13 = sbr.rel (%p11) target = $region8
  $region5: #{resnet_forward.17} parent=0 // loop_body
    %s15 = ssub.s32 %s10, 1
    %s16 = ssub.s32 %s10, 2
    %s17 = sadd.s32 %s10, 1
    %s18 = ssub.s32 %s10, %s17
    %p19 = scmp.eq.s32.totalorder %s18, 0
    %s21 = sadd.s32 %s20, 1
    %s22 = scalar_select %p19, %s20, %s21
    %p25 = pneg %p19
    %p26 = scmp.eq.s32.totalorder %s10, 1
    %p27 = por %p25, %p26
    %p28 = scmp.ne.s32.totalorder %s20, %s23
    %p29 = scmp.eq.s32.totalorder %s10, 0
    %p30 = por %p28, %p29
    %p31 = scmp.ne.s32.totalorder %s20, %s23
    %p32 = scmp.eq.s32.totalorder %s15, 1
    %p33 = por %p31, %p32
    %p34 = scmp.ne.s32.totalorder %s23, %s24
    %p35 = scmp.eq.s32.totalorder %s15, 0
    %p36 = por %p34, %p35
    %p37 = scmp.ne.s32.totalorder %s23, %s24
    %p38 = scmp.eq.s32.totalorder %s16, 1
    %p39 = por %p37, %p38
    %p41 = scmp.ne.s32.totalorder %s24, %s40
    %p42 = scmp.eq.s32.totalorder %s16, 0
    %p43 = por %p41, %p42
    %s45 = sadd.s32 %s44, 1
    %p48 = scmp.eq.s32.totalorder %s10, 1
    %p49 = scmp.ne.s32.totalorder %s44, %s46
    %p50 = scmp.eq.s32.totalorder %s10, 0
    %p51 = por %p49, %p50
    %p52 = scmp.ne.s32.totalorder %s44, %s46
    %p53 = scmp.eq.s32.totalorder %s15, 1
    %p54 = por %p52, %p53
    %p55 = scmp.ne.s32.totalorder %s46, %s47
    %p56 = scmp.eq.s32.totalorder %s15, 0
    %p57 = por %p55, %p56
    %p58 = scmp.ne.s32.totalorder %s46, %s47
    %p59 = scmp.eq.s32.totalorder %s16, 1
    %p60 = por %p58, %p59
    %p62 = scmp.ne.s32.totalorder %s47, %s61
    %p63 = scmp.eq.s32.totalorder %s16, 0
    %p64 = por %p62, %p63
    %s66 = sadd.s32 %s65, 1
    %p69 = scmp.eq.s32.totalorder %s10, 1
    %p70 = scmp.ne.s32.totalorder %s65, %s67
    %p71 = scmp.eq.s32.totalorder %s10, 0
    %p72 = por %p70, %p71
    %p73 = scmp.ne.s32.totalorder %s65, %s67
    %p74 = scmp.eq.s32.totalorder %s15, 1
    %p75 = por %p73, %p74
    %p76 = scmp.ne.s32.totalorder %s67, %s68
    %p77 = scmp.eq.s32.totalorder %s15, 0
    %p78 = por %p76, %p77
    %p79 = scmp.ne.s32.totalorder %s67, %s68
    %p80 = scmp.eq.s32.totalorder %s16, 1
    %p81 = por %p79, %p80
    %p83 = scmp.ne.s32.totalorder %s68, %s82
    %p84 = scmp.eq.s32.totalorder %s16, 0
    %p85 = por %p83, %p84
    %s87 = sadd.s32 %s86, 1
    %p90 = scmp.eq.s32.totalorder %s10, 1
    %p91 = scmp.ne.s32.totalorder %s86, %s88
    %p92 = scmp.eq.s32.totalorder %s10, 0
    %p93 = por %p91, %p92
    %p94 = scmp.ne.s32.totalorder %s86, %s88
    %p95 = scmp.eq.s32.totalorder %s15, 1
    %p96 = por %p94, %p95
    %p97 = scmp.ne.s32.totalorder %s88, %s89
    %p98 = scmp.eq.s32.totalorder %s15, 0
    %p99 = por %p97, %p98
    %p100 = scmp.ne.s32.totalorder %s88, %s89
    %p101 = scmp.eq.s32.totalorder %s16, 1
    %p102 = por %p100, %p101
    %p104 = scmp.ne.s32.totalorder %s89, %s103
    %p105 = scmp.eq.s32.totalorder %s16, 0
    %p106 = por %p104, %p105
    %s107 = ssub.s32 %s10, %s17
    %p108 = scmp.eq.s32.totalorder %s107, 0
    %s110 = sadd.s32 %s109, 1
    %s111 = scalar_select %p108, %s109, %s110
    %p114 = pneg %p108
    %p115 = scmp.eq.s32.totalorder %s10, 1
    %p116 = por %p114, %p115
    %p117 = scmp.ne.s32.totalorder %s109, %s112
    %p118 = scmp.eq.s32.totalorder %s10, 0
    %p119 = por %p117, %p118
    %p120 = scmp.ne.s32.totalorder %s109, %s112
    %p121 = scmp.eq.s32.totalorder %s15, 1
    %p122 = por %p120, %p121
    %p123 = scmp.ne.s32.totalorder %s112, %s113
    %p124 = scmp.eq.s32.totalorder %s15, 0
    %p125 = por %p123, %p124
    %p126 = scmp.ne.s32.totalorder %s112, %s113
    %p127 = scmp.eq.s32.totalorder %s16, 1
    %p128 = por %p126, %p127
    %p130 = scmp.ne.s32.totalorder %s113, %s129
    %p131 = scmp.eq.s32.totalorder %s16, 0
    %p132 = por %p130, %p131
    %p133 = scmp.le.s32.totalorder 1, %s10
    %p134 = scmp.lt.s32.totalorder %s10, 3
    %p135 = pnand %p133, %p134
    %p136 = pneg %p135
    // Predicated region
    $region9: #{resnet_forward.17} parent=5 // pred_check
      _
    $region10: #{resnet_forward.17} parent=5 // pred_check_branch
      %138 = sbr.rel (%p135) target = $region12
    $region11: #{resnet_forward.17} parent=5 // pred_region
      %s139 = ssub.s32 %s10, 1
      // Predicated region
      $region13: #{resnet_forward.17} parent=11 // pred_check
        %p140 = pneg %p57
      $region14: #{resnet_forward.17} parent=11 // pred_check_branch
        %142 = sbr.rel (%p140) target = $region16
      $region15: #{resnet_forward.17} parent=11 // pred_region
        _
      $region16: #{resnet_forward.17} parent=11 // pred_fallthru
        _
      // Predicated region
      $region17: #{resnet_forward.17} parent=11 // pred_check
        %p143 = pneg %p78
      $region18: #{resnet_forward.17} parent=11 // pred_check_branch
        %145 = sbr.rel (%p143) target = $region20
      $region19: #{resnet_forward.17} parent=11 // pred_region
        _
      $region20: #{resnet_forward.17} parent=11 // pred_fallthru
        _
      // Predicated region
      $region21: #{resnet_forward.17} parent=11 // pred_check
        %p146 = pneg %p99
      $region22: #{resnet_forward.17} parent=11 // pred_check_branch
        %148 = sbr.rel (%p146) target = $region24
      $region23: #{resnet_forward.17} parent=11 // pred_region
        _
      $region24: #{resnet_forward.17} parent=11 // pred_fallthru
        _
    $region12: #{resnet_forward.17} parent=5 // pred_fallthru
      _
    %p149 = scmp.lt.s32.totalorder %s10, 2
    // Predicated region
    $region25: #{resnet_forward.17} parent=5 // pred_check
      %p150 = pneg %p149
    $region26: #{resnet_forward.17} parent=5 // pred_check_branch
      %152 = sbr.rel (%p150) target = $region28
    $region27: #{resnet_forward.17} parent=5 // pred_region
      // Predicated region
      $region29: #{resnet_forward.17} parent=27 // pred_check
        %p153 = pneg %p30
      $region30: #{resnet_forward.17} parent=27 // pred_check_branch
        %155 = sbr.rel (%p153) target = $region32
      $region31: #{resnet_forward.17} parent=27 // pred_region
        %p156 = scmp.lt.s32.totalorder %s10, 1
        %s157 = scalar_select %p156, %s10, 1
        %s158 = smul.addr %s157, 2
        %s159 = smul.addr %s158, 8
        %s160 = scalar_lea.vmem %s0, %s159
      $region32: #{resnet_forward.17} parent=27 // pred_fallthru
        _
    $region28: #{resnet_forward.17} parent=5 // pred_fallthru
      _
    %p161 = scmp.le.s32.totalorder 1, %s10
    %p162 = scmp.lt.s32.totalorder %s10, 3
    %p163 = pnand %p161, %p162
    %p164 = pneg %p163
    // Predicated region
    $region33: #{resnet_forward.17} parent=5 // pred_check
      _
    $region34: #{resnet_forward.17} parent=5 // pred_check_branch
      %166 = sbr.rel (%p163) target = $region36
    $region35: #{resnet_forward.17} parent=5 // pred_region
      %s167 = ssub.s32 %s10, 1
      %p168 = scmp.lt.s32.totalorder %s15, 1
      %s169 = scalar_select %p168, %s15, 1
      %s170 = smul.addr %s169, 2
      %s171 = smul.addr %s170, 8
      %s172 = scalar_lea.vmem %s0, %s171
      %p173 = pneg %p36
      %p174 = pneg %p33
      %p175 = pneg %p57
      %p176 = pneg %p54
      %p177 = pneg %p78
      %p178 = pneg %p75
      %p179 = pneg %p99
      %p180 = pneg %p96
      %p181 = pneg %p125
      %p182 = pneg %p122
      %p183 = scmp.lt.s32.totalorder %s15, 1
      %s184 = scalar_select %p183, %s15, 1
      %s185 = smul.addr %s184, 3
      %s186 = smul.addr %s185, 8
      %s187 = scalar_lea.vmem %s4, %s186
      %p188 = scmp.lt.s32.totalorder %s15, 1
      %s189 = scalar_select %p188, %s15, 1
      %s190 = smul.addr %s189, 2
      %s191 = smul.addr %s190, 8
      %s192 = scalar_lea.vmem %s0, %s191
      %p193 = scmp.lt.s32.totalorder %s15, 1
      %s194 = scalar_select %p193, %s15, 1
      %s195 = smul.addr %s194, 3
      %s196 = smul.addr %s195, 8
      %s197 = scalar_lea.vmem %s4, %s196
      %vm198 = vcmask 31744
      %199 = vst.msk [vmem:[#allocation2] sm:$0xff] %vm198, 0.0
      %200 = vst.msk [vmem:[#allocation2 + $0x8] sm:$0xff] %vm198, 0.0
      %201 = vst.msk [vmem:[#allocation2 + $0x10] sm:$0xff] %vm198, 0.0
      %202 = vst.msk [vmem:[#allocation2 + $0x18] sm:$0xff] %vm198, 0.0
      %203 = vst.msk [vmem:[#allocation2 + $0x20] sm:$0xff] %vm198, 0.0
      %204 = vst.msk [vmem:[#allocation2 + $0x28] sm:$0xff] %vm198, 0.0
      %205 = vst.msk [vmem:[#allocation2 + $0x30] sm:$0xff] %vm198, 0.0
      %206 = vst.msk [vmem:[#allocation2 + $0x38] sm:$0xff] %vm198, 0.0
      %207 = vst.msk [vmem:[#allocation2 + $0x40] sm:$0xff] %vm198, 0.0
      %208 = vst.msk [vmem:[#allocation2 + $0x48] sm:$0xff] %vm198, 0.0
      %209 = vst.msk [vmem:[#allocation2 + $0x50] sm:$0xff] %vm198, 0.0
      %210 = vst.msk [vmem:[#allocation2 + $0x58] sm:$0xff] %vm198, 0.0
      %211 = vst.msk [vmem:[#allocation2 + $0x60] sm:$0xff] %vm198, 0.0
      %212 = vst.msk [vmem:[#allocation2 + $0x68] sm:$0xff] %vm198, 0.0
      %213 = vst.msk [vmem:[#allocation2 + $0x70] sm:$0xff] %vm198, 0.0
      %214 = vst.msk [vmem:[#allocation2 + $0x78] sm:$0xff] %vm198, 0.0
      %215 = vst.msk [vmem:[#allocation2 + $0x80] sm:$0xff] %vm198, 0.0
      %216 = vst.msk [vmem:[#allocation2 + $0x88] sm:$0xff] %vm198, 0.0
      %217 = vst.msk [vmem:[#allocation2 + $0x90] sm:$0xff] %vm198, 0.0
      %218 = vst.msk [vmem:[#allocation2 + $0x98] sm:$0xff] %vm198, 0.0
      %219 = vst.msk [vmem:[#allocation2 + $0xa0] sm:$0xff] %vm198, 0.0
      %220 = vst.msk [vmem:[#allocation2 + $0xa8] sm:$0xff] %vm198, 0.0
      %221 = vst.msk [vmem:[#allocation2 + $0xb0] sm:$0xff] %vm198, 0.0
      %222 = vst.msk [vmem:[#allocation2 + $0xb8] sm:$0xff] %vm198, 0.0
      %223 = vst.msk [vmem:[#allocation2 + $0xc0] sm:$0xff] %vm198, 0.0
      %224 = vst.msk [vmem:[#allocation2 + $0xc8] sm:$0xff] %vm198, 0.0
      %225 = vst.msk [vmem:[#allocation2 + $0xd0] sm:$0xff] %vm198, 0.0
      %226 = vst.msk [vmem:[#allocation2 + $0xd8] sm:$0xff] %vm198, 0.0
      %227 = vst.msk [vmem:[#allocation2 + $0xe0] sm:$0xff] %vm198, 0.0
      %228 = vst.msk [vmem:[#allocation2 + $0xe8] sm:$0xff] %vm198, 0.0
      %229 = vst.msk [vmem:[#allocation2 + $0xf0] sm:$0xff] %vm198, 0.0
      %230 = vst.msk [vmem:[#allocation2 + $0xf8] sm:$0xff] %vm198, 0.0
      %v231 = vld [vmem:[%s192] sm:$0xff]
      %v232 = vld [vmem:[%s192 + $0x8] sm:$0xff]
      %235 = vrot.lane.b32.xlu0 %v231, 3
      %v236 = vpop.permute.xlu0 %235
      %237 = vrot.lane.b32.xlu0 %v232, 3
      %v238 = vpop.permute.xlu0 %237
      %vm241 = vcmask 31768
      %242 = vst.msk [vmem:[#allocation2 + $0x40] sm:$0xff] %vm241, %v236
      %243 = vst.msk [vmem:[#allocation2 + $0x48] sm:$0xff] %vm241, %v238
      %v244 = vld [vmem:[%s192] sm:$0xff]
      %v245 = vld [vmem:[%s192 + $0x8] sm:$0xff]
      %248 = vrot.lane.b32.xlu0 %v244, 2
      %v249 = vpop.permute.xlu0 %248
      %250 = vrot.lane.b32.xlu0 %v245, 2
      %v251 = vpop.permute.xlu0 %250
      %vm254 = vcmask 31760
      %255 = vst.msk [vmem:[#allocation2 + $0x50] sm:$0xff] %vm254, %v249
      %256 = vst.msk [vmem:[#allocation2 + $0x58] sm:$0xff] %vm254, %v251
      %v257 = vld [vmem:[%s192] sm:$0xff]
      %v258 = vld [vmem:[%s192 + $0x8] sm:$0xff]
      %261 = vrot.lane.b32.xlu0 %v257, 1
      %v262 = vpop.permute.xlu0 %261
      %263 = vrot.lane.b32.xlu0 %v258, 1
      %v264 = vpop.permute.xlu0 %263
      %vm267 = vcmask 31752
      %268 = vst.msk [vmem:[#allocation2 + $0x60] sm:$0xff] %vm267, %v262
      %269 = vst.msk [vmem:[#allocation2 + $0x68] sm:$0xff] %vm267, %v264
      %v270 = vld [vmem:[%s192] sm:$0xff]
      %v271 = vld [vmem:[%s192 + $0x8] sm:$0xff]
      %272 = vst.msk [vmem:[#allocation2 + $0x70] sm:$0xff] %vm198, %v270
      %273 = vst.msk [vmem:[#allocation2 + $0x78] sm:$0xff] %vm198, %v271
      %v274 = vld [vmem:[%s192] sm:$0xff]
      %v275 = vld [vmem:[%s192 + $0x8] sm:$0xff]
      %278 = vrot.lane.b32.xlu0 %v274, 127
      %v279 = vpop.permute.xlu0 %278
      %280 = vrot.lane.b32.xlu0 %v275, 127
      %v281 = vpop.permute.xlu0 %280
      %vm284 = vcmask 23552
      %285 = vst.msk [vmem:[#allocation2 + $0x80] sm:$0xff] %vm284, %v279
      %286 = vst.msk [vmem:[#allocation2 + $0x88] sm:$0xff] %vm284, %v281
      %v287 = vld [vmem:[%s192] sm:$0xff]
      %v288 = vld [vmem:[%s192 + $0x8] sm:$0xff]
      %291 = vrot.lane.b32.xlu0 %v287, 126
      %v292 = vpop.permute.xlu0 %291
      %293 = vrot.lane.b32.xlu0 %v288, 126
      %v294 = vpop.permute.xlu0 %293
      %vm297 = vcmask 15360
      %298 = vst.msk [vmem:[#allocation2 + $0x90] sm:$0xff] %vm297, %v292
      %299 = vst.msk [vmem:[#allocation2 + $0x98] sm:$0xff] %vm297, %v294
      %v300 = vld [vmem:[%s192] sm:$0xff]
      %v301 = vld [vmem:[%s192 + $0x8] sm:$0xff]
      %304 = vrot.lane.b32.xlu0 %v300, 125
      %v305 = vpop.permute.xlu0 %304
      %306 = vrot.lane.b32.xlu0 %v301, 125
      %v307 = vpop.permute.xlu0 %306
      %vm310 = vcmask 7168
      %311 = vst.msk [vmem:[#allocation2 + $0xa0] sm:$0xff] %vm310, %v305
      %312 = vst.msk [vmem:[#allocation2 + $0xa8] sm:$0xff] %vm310, %v307
      %v313 = vld [vmem:[%s1] sm:$0xff]
      %v314 = vld [vmem:[%s1 + $0x8] sm:$0xff]
      %v315 = vld [vmem:[%s1 + $0x10] sm:$0xff]
      %v316 = vld [vmem:[%s1 + $0x18] sm:$0xff]
      %v317 = vld [vmem:[%s1 + $0x20] sm:$0xf]
      %v318 = vld [vmem:[%s1 + $0x28] sm:$0xf]
      %v319 = vld [vmem:[#allocation2] sm:$0xff]
      %v320 = vld [vmem:[#allocation2 + $0x8] sm:$0xff]
      %v321 = vld [vmem:[#allocation2 + $0x10] sm:$0xff]
      %v322 = vld [vmem:[#allocation2 + $0x18] sm:$0xff]
      %v323 = vld [vmem:[#allocation2 + $0x20] sm:$0xff]
      %v324 = vld [vmem:[#allocation2 + $0x28] sm:$0xff]
      %v325 = vld [vmem:[#allocation2 + $0x30] sm:$0xff]
      %v326 = vld [vmem:[#allocation2 + $0x38] sm:$0xff]
      %v327 = vld [vmem:[#allocation2 + $0x40] sm:$0xff]
      %v328 = vld [vmem:[#allocation2 + $0x48] sm:$0xff]
      %v329 = vld [vmem:[#allocation2 + $0x50] sm:$0xff]
      %v330 = vld [vmem:[#allocation2 + $0x58] sm:$0xff]
      %v331 = vld [vmem:[#allocation2 + $0x60] sm:$0xff]
      %v332 = vld [vmem:[#allocation2 + $0x68] sm:$0xff]
      %v333 = vld [vmem:[#allocation2 + $0x70] sm:$0xff]
      %v334 = vld [vmem:[#allocation2 + $0x78] sm:$0xff]
      %v335 = vld [vmem:[#allocation2 + $0x80] sm:$0xff]
      %v336 = vld [vmem:[#allocation2 + $0x88] sm:$0xff]
      %v337 = vld [vmem:[#allocation2 + $0x90] sm:$0xff]
      %v338 = vld [vmem:[#allocation2 + $0x98] sm:$0xff]
      %v339 = vld [vmem:[#allocation2 + $0xa0] sm:$0xff]
      %v340 = vld [vmem:[#allocation2 + $0xa8] sm:$0xff]
      %v341 = vld [vmem:[#allocation2 + $0xb0] sm:$0xff]
      %v342 = vld [vmem:[#allocation2 + $0xb8] sm:$0xff]
      %v343 = vld [vmem:[#allocation2 + $0xc0] sm:$0xff]
      %v344 = vld [vmem:[#allocation2 + $0xc8] sm:$0xff]
      %v345 = vld [vmem:[#allocation2 + $0xd0] sm:$0xff]
      %v346 = vld [vmem:[#allocation2 + $0xd8] sm:$0xff]
      %v347 = vld [vmem:[#allocation2 + $0xe0] sm:$0xff]
      %v348 = vld [vmem:[#allocation2 + $0xe8] sm:$0xff]
      %v349 = vld [vmem:[#allocation2 + $0xf0] sm:$0xff]
      %v350 = vld [vmem:[#allocation2 + $0xf8] sm:$0xff]
      %351 = vmatprep.subr.mxu0 0.0
      %352 = vmatpush1.msra.mxu0 %v319
      %353 = vmatprep.subr.mxu0 0.0
      %354 = vmatpush1.msra.mxu0 %v320
      %355 = vmatprep.subr.mxu0 0.0
      %356 = vmatpush1.msra.mxu0 %v321
      %357 = vmatprep.subr.mxu0 0.0
      %358 = vmatpush1.msra.mxu0 %v322
      %359 = vmatprep.subr.mxu0 0.0
      %360 = vmatpush1.msra.mxu0 %v323
      %361 = vmatprep.subr.mxu0 0.0
      %362 = vmatpush1.msra.mxu0 %v324
      %363 = vmatprep.subr.mxu0 0.0
      %364 = vmatpush1.msra.mxu0 %v325
      %365 = vmatprep.subr.mxu0 0.0
      %366 = vmatpush1.msra.mxu0 %v326
      %367 = vmatprep.subr.mxu0 0.0
      %368 = vmatpush1.msra.mxu0 %v327
      %369 = vmatprep.subr.mxu0 0.0
      %370 = vmatpush1.msra.mxu0 %v328
      %371 = vmatprep.subr.mxu0 0.0
      %372 = vmatpush1.msra.mxu0 %v329
      %373 = vmatprep.subr.mxu0 0.0
      %374 = vmatpush1.msra.mxu0 %v330
      %375 = vmatprep.subr.mxu0 0.0
      %376 = vmatpush1.msra.mxu0 %v331
      %377 = vmatprep.subr.mxu0 0.0
      %378 = vmatpush1.msra.mxu0 %v332
      %379 = vmatprep.subr.mxu0 0.0
      %380 = vmatpush1.msra.mxu0 %v333
      %381 = vmatprep.subr.mxu0 0.0
      %382 = vmatpush1.msra.mxu0 %v334
      %383 = vmatprep.subr.mxu0 0.0
      %384 = vmatpush1.msra.mxu0 %v335
      %385 = vmatprep.subr.mxu0 0.0
      %386 = vmatpush1.msra.mxu0 %v336
      %387 = vmatprep.subr.mxu0 0.0
      %388 = vmatpush1.msra.mxu0 %v337
      %389 = vmatprep.subr.mxu0 0.0
      %390 = vmatpush1.msra.mxu0 %v338
      %391 = vmatprep.subr.mxu0 0.0
      %392 = vmatpush1.msra.mxu0 %v339
      %393 = vmatprep.subr.mxu0 0.0
      %394 = vmatpush1.msra.mxu0 %v340
      %395 = vmatprep.subr.mxu0 0.0
      %396 = vmatpush1.msra.mxu0 %v341
      %397 = vmatprep.subr.mxu0 0.0
      %398 = vmatpush1.msra.mxu0 %v342
      %399 = vmatprep.subr.mxu0 0.0
      %400 = vmatpush1.msra.mxu0 %v343
      %401 = vmatprep.subr.mxu0 0.0
      %402 = vmatpush1.msra.mxu0 %v344
      %403 = vmatprep.subr.mxu0 0.0
      %404 = vmatpush1.msra.mxu0 %v345
      %405 = vmatprep.subr.mxu0 0.0
      %406 = vmatpush1.msra.mxu0 %v346
      %407 = vmatprep.subr.mxu0 0.0
      %408 = vmatpush1.msra.mxu0 %v347
      %409 = vmatprep.subr.mxu0 0.0
      %410 = vmatpush1.msra.mxu0 %v348
      %411 = vmatprep.subr.mxu0 0.0
      %412 = vmatpush1.msra.mxu0 %v349
      %413 = vmatprep.subr.mxu0 0.0
      %414 = vmatpush1.msra.mxu0 %v350
      %415 = vmatprep.mubr.f32.mxu0 %v314
      %416 = vmatmul.mubr.f32.gmra.mrb[0].mxu0 %v313
      %v417 = vpop.f32.mrb[0].mxu0
      %v418 = vadd.f32 0.0, %v417
      %v419 = vpop.f32.mrb[0].mxu0
      %420 = vmatprep.mubr.f32.mxu0 %v316
      %421 = vmatmul.mubr.f32.gmra.mrb[0].mxu0 %v315
      %v422 = vpop.f32.mrb[0].mxu0
      %v423 = vadd.f32 0.0, %v422
      %v424 = vpop.f32.mrb[0].mxu0
      %425 = vmatprep.mubr.f32.mxu0 %v318
      %426 = vmatmul.mubr.f32.gmra.mrb[0].mxu0 %v317
      %v427 = vpop.f32.mrb[0].mxu0
      %v428 = vadd.f32 0.0, %v427
      %v429 = vpop.f32.mrb[0].mxu0
      %430 = vdwg.mxu0
      %v431 = vld [vmem:[%s2] sm:$0xff]
      %v432 = vld [vmem:[%s2 + $0x8] sm:$0xff]
      %v433 = vld [vmem:[%s2 + $0x10] sm:$0xf]
      %435 = vset.pattern.permute.xlu0 0
      %436 = vperm.xlu0 %435, %v431
      %v437 = vpop.permute.xlu0 %436
      %440 = vset.pattern.permute.xlu0 0
      %441 = vperm.xlu0 %440, %v432
      %v442 = vpop.permute.xlu0 %441
      %445 = vset.pattern.permute.xlu0 0
      %446 = vperm.xlu0 %445, %v433
      %v447 = vpop.permute.xlu0 %446
      %v449 = vmul.f32 %v418, %v437
      %v450 = vmul.f32 %v423, %v442
      %v451 = vmul.f32 %v428, %v447
      %v452 = vld [vmem:[%s3] sm:$0xff]
      %v453 = vld [vmem:[%s3 + $0x8] sm:$0xff]
      %v454 = vld [vmem:[%s3 + $0x10] sm:$0xf]
      %456 = vset.pattern.permute.xlu0 0
      %457 = vperm.xlu0 %456, %v452
      %v458 = vpop.permute.xlu0 %457
      %461 = vset.pattern.permute.xlu0 0
      %462 = vperm.xlu0 %461, %v453
      %v463 = vpop.permute.xlu0 %462
      %466 = vset.pattern.permute.xlu0 0
      %467 = vperm.xlu0 %466, %v454
      %v468 = vpop.permute.xlu0 %467
      %v470 = vadd.f32 %v449, %v458
      %v471 = vadd.f32 %v450, %v463
      %v472 = vadd.f32 %v451, %v468
      %v473 = vmax.f32 %v470, 0.0
      %v474 = vmax.f32 %v471, 0.0
      %v475 = vmax.f32 %v472, 0.0
      %476 = vst.msk [vmem:[%s197] sm:$0xff] %vm198, %v473
      %477 = vst.msk [vmem:[%s197 + $0x8] sm:$0xff] %vm198, %v474
      %vm478 = vcmask 27648
      %479 = vst.msk [vmem:[%s197 + $0x10] sm:$0xf] %vm478, %v475
      %p480 = scmp.lt.s32.totalorder %s15, 1
      %s481 = scalar_select %p480, %s15, 1
      %s482 = smul.addr %s481, 3
      %s483 = smul.addr %s482, 8
      %s484 = scalar_lea.vmem %s4, %s483
      // Predicated region
      $region37: #{resnet_forward.17} parent=35 // pred_check
        %p485 = pneg %p122
      $region38: #{resnet_forward.17} parent=35 // pred_check_branch
        %487 = sbr.rel (%p485) target = $region40
      $region39: #{resnet_forward.17} parent=35 // pred_region
        _
      $region40: #{resnet_forward.17} parent=35 // pred_fallthru
        _
    $region36: #{resnet_forward.17} parent=5 // pred_fallthru
      _
    %p488 = scmp.le.s32.totalorder 2, %s10
    // Predicated region
    $region41: #{resnet_forward.17} parent=5 // pred_check
      %p489 = pneg %p488
    $region42: #{resnet_forward.17} parent=5 // pred_check_branch
      %491 = sbr.rel (%p489) target = $region44
    $region43: #{resnet_forward.17} parent=5 // pred_region
      %s492 = ssub.s32 %s10, 2
      // Predicated region
      $region45: #{resnet_forward.17} parent=43 // pred_check
        %p493 = pneg %p128
      $region46: #{resnet_forward.17} parent=43 // pred_check_branch
        %495 = sbr.rel (%p493) target = $region48
      $region47: #{resnet_forward.17} parent=43 // pred_region
        %p496 = scmp.lt.s32.totalorder %s16, 1
        %s497 = scalar_select %p496, %s16, 1
        %s498 = smul.addr %s497, 3
        %s499 = smul.addr %s498, 8
        %s500 = scalar_lea.vmem %s4, %s499
      $region48: #{resnet_forward.17} parent=43 // pred_fallthru
        _
    $region44: #{resnet_forward.17} parent=5 // pred_fallthru
      _
  $region6: #{resnet_forward.17} parent=0 // loop_footer
    %s14 = sadd.s32 1, %s10
  $region7: #{resnet_forward.17} parent=0 // loop_footer_branch
    %9 = sbr.rel target = $region3
  $region8: #{resnet_forward.17} parent=0 // loop_exit
    _

// kernel: resnet_forward.18
$region0: #{resnet_forward.18}
  #allocation0 [shape = 'u32[]', space=smem, size = 0x4, offset = 0x4, fixed_abs, tag = 'smem constant byte address 0x4 - core index']
  #allocation1 [shape = 'u32[144,128]{1,0:T(1,128)}', space=vmem, size = 0x12000, scoped, tag = 'internal scratch']
  #allocation2 [shape = 'f32[256,1]{1,0:T(8,128)}', space=vmem, size = 0x20000, scoped, tag = 'scratch operand']
  #allocation3 [shape = 'f32[320,1]{1,0:T(8,128)}', space=vmem, size = 0x28000, scoped, tag = 'scratch operand']
  %s0 = inlined_call_operand.vmem [shape: f32[2,64,1], index: 0, kind: input, shape index: {}]
  %s1 = inlined_call_operand.vmem [shape: f32[2,80,4], index: 1, kind: input, shape index: {}]
  %s2 = inlined_call_operand.vmem [shape: f32[20,256], index: 2, kind: input, shape index: {}]
  %s3 = inlined_call_operand.vmem [shape: f32[20,320], index: 3, kind: input, shape index: {}]
  %s4 = inlined_call_operand.vmem [shape: f32[20,1], index: 4, kind: input, shape index: {}]
  %s5 = inlined_call_operand.vmem [shape: f32[20,1], index: 5, kind: input, shape index: {}]
  %s6 = inlined_call_operand.vmem [shape: f32[2,20,1], index: 6, kind: output, shape index: {0}]
  %s7 = inlined_call_operand.hbm [shape: f32[2,20,1], index: 7, kind: output, shape index: {1}]
  %8 = xla_tuple %s6, %s7
  %s9 = sld [smem:[#allocation0]]
  $region65: #{resnet_forward.18} parent=0
    _
  %s11 = ssub.s32 1, %s9
  %s12 = scalar_select 0, %s11, %s9
  $region1: #{resnet_forward.18} parent=0
    #allocation4 [shape = 'u8[24576]{0}', space=vmem, size = 0x6000, scoped, tag = 'output window, operand 1']
    #allocation5 [shape = 's32[2]{0}', space=sflag, size = 0x8, scoped, tag = 'scoped memory for resnet_forward.18']
    %13 = vsyncpa [#allocation5], 0
    %s14 = scalar_lea.sflag [#allocation5], 1
    %15 = vsyncpa %s14, 0
    loop: start=0, step=1, limit=4
    $region2: #{resnet_forward.18} parent=1 // loop_pre_header
      _
    $region3: #{resnet_forward.18} parent=1 // loop_header
      %s17 = sphi 0, %s21
      %p18 = scmp.ge.s32.totalorder %s17, 4
      %s27 = sphi 0, %s29
      %s30 = sphi 0, %s27
      %s31 = sphi 0, %s30
      %s47 = sphi 0, %s31
      %s53 = sphi 0, %s55
      %s56 = sphi 0, %s53
      %s57 = sphi 0, %s56
      %s73 = sphi 0, %s57
      %s77 = sphi 0, %s77
      %s79 = sphi 0, %s77
      %s80 = sphi 0, %s79
      %s94 = sphi 0, %s80
      %s98 = sphi 0, %s98
      %s100 = sphi 0, %s98
      %s101 = sphi 0, %s100
      %s115 = sphi 0, %s101
      %s119 = sphi 0, %s119
      %s121 = sphi 0, %s119
      %s122 = sphi 0, %s121
      %s136 = sphi 0, %s122
      %s140 = sphi 0, %s140
      %s142 = sphi 0, %s140
      %s143 = sphi 0, %s142
      %s157 = sphi 0, %s143
      %s163 = sphi 0, %s165
      %s166 = sphi 0, %s163
      %s167 = sphi 0, %s166
      %s183 = sphi 0, %s167
      %s189 = sphi 0, %s191
      %s192 = sphi 0, %s189
      %s193 = sphi 0, %s192
      %s209 = sphi 0, %s193
    $region4: #{resnet_forward.18} parent=1 // loop_header_branch
      %20 = sbr.rel (%p18) target = $region8
    $region5: #{resnet_forward.18} parent=1 // loop_body
      %s22 = ssub.s32 %s17, 1
      %s23 = ssub.s32 %s17, 2
      %s24 = sadd.s32 %s17, 1
      %s25 = ssub.s32 %s17, %s24
      %p26 = scmp.eq.s32.totalorder %s25, 0
      %s28 = sadd.s32 %s27, 1
      %s29 = scalar_select %p26, %s27, %s28
      %p32 = pneg %p26
      %p33 = scmp.eq.s32.totalorder %s17, 1
      %p34 = por %p32, %p33
      %p35 = scmp.ne.s32.totalorder %s27, %s30
      %p36 = scmp.eq.s32.totalorder %s17, 0
      %p37 = por %p35, %p36
      %p38 = scmp.ne.s32.totalorder %s27, %s30
      %p39 = scmp.eq.s32.totalorder %s22, 1
      %p40 = por %p38, %p39
      %p41 = scmp.ne.s32.totalorder %s30, %s31
      %p42 = scmp.eq.s32.totalorder %s22, 0
      %p43 = por %p41, %p42
      %p44 = scmp.ne.s32.totalorder %s30, %s31
      %p45 = scmp.eq.s32.totalorder %s23, 1
      %p46 = por %p44, %p45
      %p48 = scmp.ne.s32.totalorder %s31, %s47
      %p49 = scmp.eq.s32.totalorder %s23, 0
      %p50 = por %p48, %p49
      %s51 = ssub.s32 %s17, %s24
      %p52 = scmp.eq.s32.totalorder %s51, 0
      %s54 = sadd.s32 %s53, 1
      %s55 = scalar_select %p52, %s53, %s54
      %p58 = pneg %p52
      %p59 = scmp.eq.s32.totalorder %s17, 1
      %p60 = por %p58, %p59
      %p61 = scmp.ne.s32.totalorder %s53, %s56
      %p62 = scmp.eq.s32.totalorder %s17, 0
      %p63 = por %p61, %p62
      %p64 = scmp.ne.s32.totalorder %s53, %s56
      %p65 = scmp.eq.s32.totalorder %s22, 1
      %p66 = por %p64, %p65
      %p67 = scmp.ne.s32.totalorder %s56, %s57
      %p68 = scmp.eq.s32.totalorder %s22, 0
      %p69 = por %p67, %p68
      %p70 = scmp.ne.s32.totalorder %s56, %s57
      %p71 = scmp.eq.s32.totalorder %s23, 1
      %p72 = por %p70, %p71
      %p74 = scmp.ne.s32.totalorder %s57, %s73
      %p75 = scmp.eq.s32.totalorder %s23, 0
      %p76 = por %p74, %p75
      %s78 = sadd.s32 %s77, 1
      %p81 = scmp.eq.s32.totalorder %s17, 1
      %p82 = scmp.ne.s32.totalorder %s77, %s79
      %p83 = scmp.eq.s32.totalorder %s17, 0
      %p84 = por %p82, %p83
      %p85 = scmp.ne.s32.totalorder %s77, %s79
      %p86 = scmp.eq.s32.totalorder %s22, 1
      %p87 = por %p85, %p86
      %p88 = scmp.ne.s32.totalorder %s79, %s80
      %p89 = scmp.eq.s32.totalorder %s22, 0
      %p90 = por %p88, %p89
      %p91 = scmp.ne.s32.totalorder %s79, %s80
      %p92 = scmp.eq.s32.totalorder %s23, 1
      %p93 = por %p91, %p92
      %p95 = scmp.ne.s32.totalorder %s80, %s94
      %p96 = scmp.eq.s32.totalorder %s23, 0
      %p97 = por %p95, %p96
      %s99 = sadd.s32 %s98, 1
      %p102 = scmp.eq.s32.totalorder %s17, 1
      %p103 = scmp.ne.s32.totalorder %s98, %s100
      %p104 = scmp.eq.s32.totalorder %s17, 0
      %p105 = por %p103, %p104
      %p106 = scmp.ne.s32.totalorder %s98, %s100
      %p107 = scmp.eq.s32.totalorder %s22, 1
      %p108 = por %p106, %p107
      %p109 = scmp.ne.s32.totalorder %s100, %s101
      %p110 = scmp.eq.s32.totalorder %s22, 0
      %p111 = por %p109, %p110
      %p112 = scmp.ne.s32.totalorder %s100, %s101
      %p113 = scmp.eq.s32.totalorder %s23, 1
      %p114 = por %p112, %p113
      %p116 = scmp.ne.s32.totalorder %s101, %s115
      %p117 = scmp.eq.s32.totalorder %s23, 0
      %p118 = por %p116, %p117
      %s120 = sadd.s32 %s119, 1
      %p123 = scmp.eq.s32.totalorder %s17, 1
      %p124 = scmp.ne.s32.totalorder %s119, %s121
      %p125 = scmp.eq.s32.totalorder %s17, 0
      %p126 = por %p124, %p125
      %p127 = scmp.ne.s32.totalorder %s119, %s121
      %p128 = scmp.eq.s32.totalorder %s22, 1
      %p129 = por %p127, %p128
      %p130 = scmp.ne.s32.totalorder %s121, %s122
      %p131 = scmp.eq.s32.totalorder %s22, 0
      %p132 = por %p130, %p131
      %p133 = scmp.ne.s32.totalorder %s121, %s122
      %p134 = scmp.eq.s32.totalorder %s23, 1
      %p135 = por %p133, %p134
      %p137 = scmp.ne.s32.totalorder %s122, %s136
      %p138 = scmp.eq.s32.totalorder %s23, 0
      %p139 = por %p137, %p138
      %s141 = sadd.s32 %s140, 1
      %p144 = scmp.eq.s32.totalorder %s17, 1
      %p145 = scmp.ne.s32.totalorder %s140, %s142
      %p146 = scmp.eq.s32.totalorder %s17, 0
      %p147 = por %p145, %p146
      %p148 = scmp.ne.s32.totalorder %s140, %s142
      %p149 = scmp.eq.s32.totalorder %s22, 1
      %p150 = por %p148, %p149
      %p151 = scmp.ne.s32.totalorder %s142, %s143
      %p152 = scmp.eq.s32.totalorder %s22, 0
      %p153 = por %p151, %p152
      %p154 = scmp.ne.s32.totalorder %s142, %s143
      %p155 = scmp.eq.s32.totalorder %s23, 1
      %p156 = por %p154, %p155
      %p158 = scmp.ne.s32.totalorder %s143, %s157
      %p159 = scmp.eq.s32.totalorder %s23, 0
      %p160 = por %p158, %p159
      %s161 = ssub.s32 %s17, %s24
      %p162 = scmp.eq.s32.totalorder %s161, 0
      %s164 = sadd.s32 %s163, 1
      %s165 = scalar_select %p162, %s163, %s164
      %p168 = pneg %p162
      %p169 = scmp.eq.s32.totalorder %s17, 1
      %p170 = por %p168, %p169
      %p171 = scmp.ne.s32.totalorder %s163, %s166
      %p172 = scmp.eq.s32.totalorder %s17, 0
      %p173 = por %p171, %p172
      %p174 = scmp.ne.s32.totalorder %s163, %s166
      %p175 = scmp.eq.s32.totalorder %s22, 1
      %p176 = por %p174, %p175
      %p177 = scmp.ne.s32.totalorder %s166, %s167
      %p178 = scmp.eq.s32.totalorder %s22, 0
      %p179 = por %p177, %p178
      %p180 = scmp.ne.s32.totalorder %s166, %s167
      %p181 = scmp.eq.s32.totalorder %s23, 1
      %p182 = por %p180, %p181
      %p184 = scmp.ne.s32.totalorder %s167, %s183
      %p185 = scmp.eq.s32.totalorder %s23, 0
      %p186 = por %p184, %p185
      %s187 = ssub.s32 %s17, %s24
      %p188 = scmp.eq.s32.totalorder %s187, 0
      %s190 = sadd.s32 %s189, 1
      %s191 = scalar_select %p188, %s189, %s190
      %p194 = pneg %p188
      %p195 = scmp.eq.s32.totalorder %s17, 1
      %p196 = por %p194, %p195
      %p197 = scmp.ne.s32.totalorder %s189, %s192
      %p198 = scmp.eq.s32.totalorder %s17, 0
      %p199 = por %p197, %p198
      %p200 = scmp.ne.s32.totalorder %s189, %s192
      %p201 = scmp.eq.s32.totalorder %s22, 1
      %p202 = por %p200, %p201
      %p203 = scmp.ne.s32.totalorder %s192, %s193
      %p204 = scmp.eq.s32.totalorder %s22, 0
      %p205 = por %p203, %p204
      %p206 = scmp.ne.s32.totalorder %s192, %s193
      %p207 = scmp.eq.s32.totalorder %s23, 1
      %p208 = por %p206, %p207
      %p210 = scmp.ne.s32.totalorder %s193, %s209
      %p211 = scmp.eq.s32.totalorder %s23, 0
      %p212 = por %p210, %p211
      %p213 = scmp.le.s32.totalorder 1, %s17
      %p214 = scmp.lt.s32.totalorder %s17, 3
      %p215 = pnand %p213, %p214
      %p216 = pneg %p215
      // Predicated region
      $region9: #{resnet_forward.18} parent=5 // pred_check
        _
      $region10: #{resnet_forward.18} parent=5 // pred_check_branch
        %218 = sbr.rel (%p215) target = $region12
      $region11: #{resnet_forward.18} parent=5 // pred_region
        %s219 = ssub.s32 %s17, 1
        // Predicated region
        $region13: #{resnet_forward.18} parent=11 // pred_check
          %p220 = pneg %p90
        $region14: #{resnet_forward.18} parent=11 // pred_check_branch
          %222 = sbr.rel (%p220) target = $region16
        $region15: #{resnet_forward.18} parent=11 // pred_region
          _
        $region16: #{resnet_forward.18} parent=11 // pred_fallthru
          _
        // Predicated region
        $region17: #{resnet_forward.18} parent=11 // pred_check
          %p223 = pneg %p111
        $region18: #{resnet_forward.18} parent=11 // pred_check_branch
          %225 = sbr.rel (%p223) target = $region20
        $region19: #{resnet_forward.18} parent=11 // pred_region
          _
        $region20: #{resnet_forward.18} parent=11 // pred_fallthru
          _
        // Predicated region
        $region21: #{resnet_forward.18} parent=11 // pred_check
          %p226 = pneg %p132
        $region22: #{resnet_forward.18} parent=11 // pred_check_branch
          %228 = sbr.rel (%p226) target = $region24
        $region23: #{resnet_forward.18} parent=11 // pred_region
          _
        $region24: #{resnet_forward.18} parent=11 // pred_fallthru
          _
        // Predicated region
        $region25: #{resnet_forward.18} parent=11 // pred_check
          %p229 = pneg %p153
        $region26: #{resnet_forward.18} parent=11 // pred_check_branch
          %231 = sbr.rel (%p229) target = $region28
        $region27: #{resnet_forward.18} parent=11 // pred_region
          _
        $region28: #{resnet_forward.18} parent=11 // pred_fallthru
          _
      $region12: #{resnet_forward.18} parent=5 // pred_fallthru
        _
      %p232 = scmp.lt.s32.totalorder %s17, 2
      // Predicated region
      $region29: #{resnet_forward.18} parent=5 // pred_check
        %p233 = pneg %p232
      $region30: #{resnet_forward.18} parent=5 // pred_check_branch
        %235 = sbr.rel (%p233) target = $region32
      $region31: #{resnet_forward.18} parent=5 // pred_region
        // Predicated region
        $region33: #{resnet_forward.18} parent=31 // pred_check
          %p236 = pneg %p37
        $region34: #{resnet_forward.18} parent=31 // pred_check_branch
          %238 = sbr.rel (%p236) target = $region36
        $region35: #{resnet_forward.18} parent=31 // pred_region
          %p239 = scmp.lt.s32.totalorder %s17, 1
          %s240 = scalar_select %p239, %s17, 1
          %s241 = smul.addr %s240, 8
          %s242 = smul.addr %s241, 8
          %s243 = scalar_lea.vmem %s0, %s242
        $region36: #{resnet_forward.18} parent=31 // pred_fallthru
          _
        // Predicated region
        $region37: #{resnet_forward.18} parent=31 // pred_check
          %p244 = pneg %p63
        $region38: #{resnet_forward.18} parent=31 // pred_check_branch
          %246 = sbr.rel (%p244) target = $region40
        $region39: #{resnet_forward.18} parent=31 // pred_region
          %p247 = scmp.lt.s32.totalorder %s17, 1
          %s248 = scalar_select %p247, %s17, 1
          %s249 = smul.addr %s248, 10
          %s250 = smul.addr %s249, 8
          %s251 = scalar_lea.vmem %s1, %s250
        $region40: #{resnet_forward.18} parent=31 // pred_fallthru
          _
      $region32: #{resnet_forward.18} parent=5 // pred_fallthru
        _
      %p252 = scmp.le.s32.totalorder 1, %s17
      %p253 = scmp.lt.s32.totalorder %s17, 3
      %p254 = pnand %p252, %p253
      %p255 = pneg %p254
      // Predicated region
      $region41: #{resnet_forward.18} parent=5 // pred_check
        _
      $region42: #{resnet_forward.18} parent=5 // pred_check_branch
        %257 = sbr.rel (%p254) target = $region44
      $region43: #{resnet_forward.18} parent=5 // pred_region
        %s258 = ssub.s32 %s17, 1
        %p259 = scmp.lt.s32.totalorder %s22, 1
        %s260 = scalar_select %p259, %s22, 1
        %s261 = smul.addr %s260, 8
        %s262 = smul.addr %s261, 8
        %s263 = scalar_lea.vmem %s0, %s262
        %p264 = pneg %p43
        %p265 = pneg %p40
        %p266 = scmp.lt.s32.totalorder %s22, 1
        %s267 = scalar_select %p266, %s22, 1
        %s268 = smul.addr %s267, 10
        %s269 = smul.addr %s268, 8
        %s270 = scalar_lea.vmem %s1, %s269
        %p271 = pneg %p69
        %p272 = pneg %p66
        %p273 = pneg %p90
        %p274 = pneg %p87
        %p275 = pneg %p111
        %p276 = pneg %p108
        %p277 = pneg %p132
        %p278 = pneg %p129
        %p279 = pneg %p153
        %p280 = pneg %p150
        %p281 = pneg %p179
        %p282 = pneg %p176
        %p283 = scmp.lt.s32.totalorder %s22, 1
        %s284 = scalar_select %p283, %s22, 1
        %s285 = smul.addr %s284, 3
        %s286 = smul.addr %s285, 8
        %s287 = scalar_lea.vmem %s6, %s286
        %p288 = pneg %p205
        %p289 = pneg %p202
        %s290 = sand.u32 %s192, 1
        %s291 = scalar_lea.sflag [#allocation5], %s290
        %s292 = sand.u32 %s192, 1
        %s293 = smul.addr %s292, 24
        %s294 = scalar_lea.vmem [#allocation4], %s293
        %p295 = scmp.lt.s32.totalorder %s22, 1
        %s296 = scalar_select %p295, %s22, 1
        %s297 = smul.addr %s296, 8
        %s298 = smul.addr %s297, 8
        %s299 = scalar_lea.vmem %s0, %s298
        %p300 = scmp.lt.s32.totalorder %s22, 1
        %s301 = scalar_select %p300, %s22, 1
        %s302 = smul.addr %s301, 10
        %s303 = smul.addr %s302, 8
        %s304 = scalar_lea.vmem %s1, %s303
        %p305 = scmp.lt.s32.totalorder %s22, 1
        %s306 = scalar_select %p305, %s22, 1
        %s307 = smul.addr %s306, 3
        %s308 = smul.addr %s307, 8
        %s309 = scalar_lea.vmem %s6, %s308
        %v310 = vld [vmem:[%s299] sm:$0xff]
        %v311 = vld [vmem:[%s299 + $0x8] sm:$0xff]
        %v312 = vld [vmem:[%s299 + $0x10] sm:$0xff]
        %v313 = vld [vmem:[%s299 + $0x18] sm:$0xff]
        %v314 = vmax.f32 %v310, %v312
        %v315 = vmax.f32 %v311, %v313
        %v316 = vld [vmem:[%s299 + $0x20] sm:$0xff]
        %v317 = vld [vmem:[%s299 + $0x28] sm:$0xff]
        %v318 = vmax.f32 %v314, %v316
        %v319 = vmax.f32 %v315, %v317
        %v320 = vld [vmem:[%s299 + $0x30] sm:$0xff]
        %v321 = vld [vmem:[%s299 + $0x38] sm:$0xff]
        %v322 = vmax.f32 %v318, %v320
        %v323 = vmax.f32 %v319, %v321
        %vm324 = vcmask 7168
        %325 = vst.msk [vmem:[#allocation2] sm:$0xff] %vm324, 0.0
        %326 = vst.msk [vmem:[#allocation2 + $0x8] sm:$0xff] %vm324, 0.0
        %327 = vst.msk [vmem:[#allocation2 + $0x10] sm:$0xff] %vm324, 0.0
        %328 = vst.msk [vmem:[#allocation2 + $0x18] sm:$0xff] %vm324, 0.0
        %329 = vst.msk [vmem:[#allocation2 + $0x20] sm:$0xff] %vm324, 0.0
        %330 = vst.msk [vmem:[#allocation2 + $0x28] sm:$0xff] %vm324, 0.0
        %331 = vst.msk [vmem:[#allocation2 + $0x30] sm:$0xff] %vm324, 0.0
        %332 = vst.msk [vmem:[#allocation2 + $0x38] sm:$0xff] %vm324, 0.0
        %333 = vst.msk [vmem:[#allocation2 + $0x40] sm:$0xff] %vm324, 0.0
        %334 = vst.msk [vmem:[#allocation2 + $0x48] sm:$0xff] %vm324, 0.0
        %335 = vst.msk [vmem:[#allocation2 + $0x50] sm:$0xff] %vm324, 0.0
        %336 = vst.msk [vmem:[#allocation2 + $0x58] sm:$0xff] %vm324, 0.0
        %337 = vst.msk [vmem:[#allocation2 + $0x60] sm:$0xff] %vm324, 0.0
        %338 = vst.msk [vmem:[#allocation2 + $0x68] sm:$0xff] %vm324, 0.0
        %339 = vst.msk [vmem:[#allocation2 + $0x70] sm:$0xff] %vm324, 0.0
        %340 = vst.msk [vmem:[#allocation2 + $0x78] sm:$0xff] %vm324, 0.0
        %341 = vst.msk [vmem:[#allocation2 + $0x80] sm:$0xff] %vm324, 0.0
        %342 = vst.msk [vmem:[#allocation2 + $0x88] sm:$0xff] %vm324, 0.0
        %343 = vst.msk [vmem:[#allocation2 + $0x90] sm:$0xff] %vm324, 0.0
        %344 = vst.msk [vmem:[#allocation2 + $0x98] sm:$0xff] %vm324, 0.0
        %345 = vst.msk [vmem:[#allocation2 + $0xa0] sm:$0xff] %vm324, 0.0
        %346 = vst.msk [vmem:[#allocation2 + $0xa8] sm:$0xff] %vm324, 0.0
        %347 = vst.msk [vmem:[#allocation2 + $0xb0] sm:$0xff] %vm324, 0.0
        %348 = vst.msk [vmem:[#allocation2 + $0xb8] sm:$0xff] %vm324, 0.0
        %349 = vst.msk [vmem:[#allocation2 + $0xc0] sm:$0xff] %vm324, 0.0
        %350 = vst.msk [vmem:[#allocation2 + $0xc8] sm:$0xff] %vm324, 0.0
        %351 = vst.msk [vmem:[#allocation2 + $0xd0] sm:$0xff] %vm324, 0.0
        %352 = vst.msk [vmem:[#allocation2 + $0xd8] sm:$0xff] %vm324, 0.0
        %353 = vst.msk [vmem:[#allocation2 + $0xe0] sm:$0xff] %vm324, 0.0
        %354 = vst.msk [vmem:[#allocation2 + $0xe8] sm:$0xff] %vm324, 0.0
        %355 = vst.msk [vmem:[#allocation2 + $0xf0] sm:$0xff] %vm324, 0.0
        %356 = vst.msk [vmem:[#allocation2 + $0xf8] sm:$0xff] %vm324, 0.0
        %357 = vst.msk [vmem:[#allocation2 + $0x70] sm:$0xff] %vm324, %v322
        %358 = vst.msk [vmem:[#allocation2 + $0x78] sm:$0xff] %vm324, %v323
        %v359 = vld [vmem:[%s2] sm:$0xff]
        %v360 = vld [vmem:[%s2 + $0x8] sm:$0xff]
        %v361 = vld [vmem:[%s2 + $0x10] sm:$0xff]
        %v362 = vld [vmem:[%s2 + $0x18] sm:$0xff]
        %v363 = vld [vmem:[%s2 + $0x20] sm:$0xf]
        %v364 = vld [vmem:[%s2 + $0x28] sm:$0xf]
        %v365 = vld [vmem:[#allocation2] sm:$0xff]
        %v366 = vld [vmem:[#allocation2 + $0x8] sm:$0xff]
        %v367 = vld [vmem:[#allocation2 + $0x10] sm:$0xff]
        %v368 = vld [vmem:[#allocation2 + $0x18] sm:$0xff]
        %v369 = vld [vmem:[#allocation2 + $0x20] sm:$0xff]
        %v370 = vld [vmem:[#allocation2 + $0x28] sm:$0xff]
        %v371 = vld [vmem:[#allocation2 + $0x30] sm:$0xff]
        %v372 = vld [vmem:[#allocation2 + $0x38] sm:$0xff]
        %v373 = vld [vmem:[#allocation2 + $0x40] sm:$0xff]
        %v374 = vld [vmem:[#allocation2 + $0x48] sm:$0xff]
        %v375 = vld [vmem:[#allocation2 + $0x50] sm:$0xff]
        %v376 = vld [vmem:[#allocation2 + $0x58] sm:$0xff]
        %v377 = vld [vmem:[#allocation2 + $0x60] sm:$0xff]
        %v378 = vld [vmem:[#allocation2 + $0x68] sm:$0xff]
        %v379 = vld [vmem:[#allocation2 + $0x70] sm:$0xff]
        %v380 = vld [vmem:[#allocation2 + $0x78] sm:$0xff]
        %v381 = vld [vmem:[#allocation2 + $0x80] sm:$0xff]
        %v382 = vld [vmem:[#allocation2 + $0x88] sm:$0xff]
        %v383 = vld [vmem:[#allocation2 + $0x90] sm:$0xff]
        %v384 = vld [vmem:[#allocation2 + $0x98] sm:$0xff]
        %v385 = vld [vmem:[#allocation2 + $0xa0] sm:$0xff]
        %v386 = vld [vmem:[#allocation2 + $0xa8] sm:$0xff]
        %v387 = vld [vmem:[#allocation2 + $0xb0] sm:$0xff]
        %v388 = vld [vmem:[#allocation2 + $0xb8] sm:$0xff]
        %v389 = vld [vmem:[#allocation2 + $0xc0] sm:$0xff]
        %v390 = vld [vmem:[#allocation2 + $0xc8] sm:$0xff]
        %v391 = vld [vmem:[#allocation2 + $0xd0] sm:$0xff]
        %v392 = vld [vmem:[#allocation2 + $0xd8] sm:$0xff]
        %v393 = vld [vmem:[#allocation2 + $0xe0] sm:$0xff]
        %v394 = vld [vmem:[#allocation2 + $0xe8] sm:$0xff]
        %v395 = vld [vmem:[#allocation2 + $0xf0] sm:$0xff]
        %v396 = vld [vmem:[#allocation2 + $0xf8] sm:$0xff]
        %397 = vmatprep.subr.mxu0 0.0
        %398 = vmatpush1.msra.mxu0 %v365
        %399 = vmatprep.subr.mxu0 0.0
        %400 = vmatpush1.msra.mxu0 %v366
        %401 = vmatprep.subr.mxu0 0.0
        %402 = vmatpush1.msra.mxu0 %v367
        %403 = vmatprep.subr.mxu0 0.0
        %404 = vmatpush1.msra.mxu0 %v368
        %405 = vmatprep.subr.mxu0 0.0
        %406 = vmatpush1.msra.mxu0 %v369
        %407 = vmatprep.subr.mxu0 0.0
        %408 = vmatpush1.msra.mxu0 %v370
        %409 = vmatprep.subr.mxu0 0.0
        %410 = vmatpush1.msra.mxu0 %v371
        %411 = vmatprep.subr.mxu0 0.0
        %412 = vmatpush1.msra.mxu0 %v372
        %413 = vmatprep.subr.mxu0 0.0
        %414 = vmatpush1.msra.mxu0 %v373
        %415 = vmatprep.subr.mxu0 0.0
        %416 = vmatpush1.msra.mxu0 %v374
        %417 = vmatprep.subr.mxu0 0.0
        %418 = vmatpush1.msra.mxu0 %v375
        %419 = vmatprep.subr.mxu0 0.0
        %420 = vmatpush1.msra.mxu0 %v376
        %421 = vmatprep.subr.mxu0 0.0
        %422 = vmatpush1.msra.mxu0 %v377
        %423 = vmatprep.subr.mxu0 0.0
        %424 = vmatpush1.msra.mxu0 %v378
        %425 = vmatprep.subr.mxu0 0.0
        %426 = vmatpush1.msra.mxu0 %v379
        %427 = vmatprep.subr.mxu0 0.0
        %428 = vmatpush1.msra.mxu0 %v380
        %429 = vmatprep.subr.mxu0 0.0
        %430 = vmatpush1.msra.mxu0 %v381
        %431 = vmatprep.subr.mxu0 0.0
        %432 = vmatpush1.msra.mxu0 %v382
        %433 = vmatprep.subr.mxu0 0.0
        %434 = vmatpush1.msra.mxu0 %v383
        %435 = vmatprep.subr.mxu0 0.0
        %436 = vmatpush1.msra.mxu0 %v384
        %437 = vmatprep.subr.mxu0 0.0
        %438 = vmatpush1.msra.mxu0 %v385
        %439 = vmatprep.subr.mxu0 0.0
        %440 = vmatpush1.msra.mxu0 %v386
        %441 = vmatprep.subr.mxu0 0.0
        %442 = vmatpush1.msra.mxu0 %v387
        %443 = vmatprep.subr.mxu0 0.0
        %444 = vmatpush1.msra.mxu0 %v388
        %445 = vmatprep.subr.mxu0 0.0
        %446 = vmatpush1.msra.mxu0 %v389
        %447 = vmatprep.subr.mxu0 0.0
        %448 = vmatpush1.msra.mxu0 %v390
        %449 = vmatprep.subr.mxu0 0.0
        %450 = vmatpush1.msra.mxu0 %v391
        %451 = vmatprep.subr.mxu0 0.0
        %452 = vmatpush1.msra.mxu0 %v392
        %453 = vmatprep.subr.mxu0 0.0
        %454 = vmatpush1.msra.mxu0 %v393
        %455 = vmatprep.subr.mxu0 0.0
        %456 = vmatpush1.msra.mxu0 %v394
        %457 = vmatprep.subr.mxu0 0.0
        %458 = vmatpush1.msra.mxu0 %v395
        %459 = vmatprep.subr.mxu0 0.0
        %460 = vmatpush1.msra.mxu0 %v396
        %461 = vmatprep.mubr.f32.mxu0 %v360
        %462 = vmatmul.mubr.f32.gmra.mrb[0].mxu0 %v359
        %v463 = vpop.f32.mrb[0].mxu0
        %v464 = vadd.f32 0.0, %v463
        %v465 = vpop.f32.mrb[0].mxu0
        %466 = vmatprep.mubr.f32.mxu0 %v362
        %467 = vmatmul.mubr.f32.gmra.mrb[0].mxu0 %v361
        %v468 = vpop.f32.mrb[0].mxu0
        %v469 = vadd.f32 0.0, %v468
        %v470 = vpop.f32.mrb[0].mxu0
        %471 = vmatprep.mubr.f32.mxu0 %v364
        %472 = vmatmul.mubr.f32.gmra.mrb[0].mxu0 %v363
        %v473 = vpop.f32.mrb[0].mxu0
        %v474 = vadd.f32 0.0, %v473
        %v475 = vpop.f32.mrb[0].mxu0
        %476 = vdwg.mxu0
        %v477 = vld [vmem:[%s304] sm:$0xff]
        %v478 = vld [vmem:[%s304 + $0x8] sm:$0xff]
        %v479 = vld [vmem:[%s304 + $0x10] sm:$0xff]
        %v480 = vld [vmem:[%s304 + $0x18] sm:$0xff]
        %v481 = vld [vmem:[%s304 + $0x20] sm:$0xff]
        %v482 = vld [vmem:[%s304 + $0x28] sm:$0xff]
        %v483 = vld [vmem:[%s304 + $0x30] sm:$0xff]
        %v484 = vld [vmem:[%s304 + $0x38] sm:$0xff]
        %v485 = vld [vmem:[%s304 + $0x40] sm:$0xff]
        %v486 = vld [vmem:[%s304 + $0x48] sm:$0xff]
        %487 = vst.msk [vmem:[#allocation3] sm:$0xff] %vm324, %v477
        %488 = vst.msk [vmem:[#allocation3 + $0x8] sm:$0xff] %vm324, %v478
        %489 = vst.msk [vmem:[#allocation3 + $0x10] sm:$0xff] %vm324, %v479
        %490 = vst.msk [vmem:[#allocation3 + $0x18] sm:$0xff] %vm324, %v480
        %491 = vst.msk [vmem:[#allocation3 + $0x20] sm:$0xff] %vm324, %v481
        %492 = vst.msk [vmem:[#allocation3 + $0x28] sm:$0xff] %vm324, %v482
        %493 = vst.msk [vmem:[#allocation3 + $0x30] sm:$0xff] %vm324, %v483
        %494 = vst.msk [vmem:[#allocation3 + $0x38] sm:$0xff] %vm324, %v484
        %495 = vst.msk [vmem:[#allocation3 + $0x40] sm:$0xff] %vm324, %v485
        %496 = vst.msk [vmem:[#allocation3 + $0x48] sm:$0xff] %vm324, %v486
        %v497 = vld [vmem:[%s304] sm:$0xff]
        %v498 = vld [vmem:[%s304 + $0x8] sm:$0xff]
        %v499 = vld [vmem:[%s304 + $0x10] sm:$0xff]
        %v500 = vld [vmem:[%s304 + $0x18] sm:$0xff]
        %v501 = vld [vmem:[%s304 + $0x20] sm:$0xff]
        %v502 = vld [vmem:[%s304 + $0x28] sm:$0xff]
        %v503 = vld [vmem:[%s304 + $0x30] sm:$0xff]
        %v504 = vld [vmem:[%s304 + $0x38] sm:$0xff]
        %v505 = vld [vmem:[%s304 + $0x40] sm:$0xff]
        %v506 = vld [vmem:[%s304 + $0x48] sm:$0xff]
        %517 = vrot.lane.b32.xlu0 %v497, 127
        %v518 = vpop.permute.xlu0 %517
        %519 = vrot.lane.b32.xlu0 %v498, 127
        %v520 = vpop.permute.xlu0 %519
        %521 = vrot.lane.b32.xlu0 %v499, 127
        %v522 = vpop.permute.xlu0 %521
        %523 = vrot.lane.b32.xlu0 %v500, 127
        %v524 = vpop.permute.xlu0 %523
        %525 = vrot.lane.b32.xlu0 %v501, 127
        %v526 = vpop.permute.xlu0 %525
        %527 = vrot.lane.b32.xlu0 %v502, 127
        %v528 = vpop.permute.xlu0 %527
        %529 = vrot.lane.b32.xlu0 %v503, 127
        %v530 = vpop.permute.xlu0 %529
        %531 = vrot.lane.b32.xlu0 %v504, 127
        %v532 = vpop.permute.xlu0 %531
        %533 = vrot.lane.b32.xlu0 %v505, 127
        %v534 = vpop.permute.xlu0 %533
        %535 = vrot.lane.b32.xlu0 %v506, 127
        %v536 = vpop.permute.xlu0 %535
        %547 = vst.msk [vmem:[#allocation3 + $0x50] sm:$0xff] %vm324, %v518
        %548 = vst.msk [vmem:[#allocation3 + $0x58] sm:$0xff] %vm324, %v520
        %549 = vst.msk [vmem:[#allocation3 + $0x60] sm:$0xff] %vm324, %v522
        %550 = vst.msk [vmem:[#allocation3 + $0x68] sm:$0xff] %vm324, %v524
        %551 = vst.msk [vmem:[#allocation3 + $0x70] sm:$0xff] %vm324, %v526
        %552 = vst.msk [vmem:[#allocation3 + $0x78] sm:$0xff] %vm324, %v528
        %553 = vst.msk [vmem:[#allocation3 + $0x80] sm:$0xff] %vm324, %v530
        %554 = vst.msk [vmem:[#allocation3 + $0x88] sm:$0xff] %vm324, %v532
        %555 = vst.msk [vmem:[#allocation3 + $0x90] sm:$0xff] %vm324, %v534
        %556 = vst.msk [vmem:[#allocation3 + $0x98] sm:$0xff] %vm324, %v536
        %v557 = vld [vmem:[%s304] sm:$0xff]
        %v558 = vld [vmem:[%s304 + $0x8] sm:$0xff]
        %v559 = vld [vmem:[%s304 + $0x10] sm:$0xff]
        %v560 = vld [vmem:[%s304 + $0x18] sm:$0xff]
        %v561 = vld [vmem:[%s304 + $0x20] sm:$0xff]
        %v562 = vld [vmem:[%s304 + $0x28] sm:$0xff]
        %v563 = vld [vmem:[%s304 + $0x30] sm:$0xff]
        %v564 = vld [vmem:[%s304 + $0x38] sm:$0xff]
        %v565 = vld [vmem:[%s304 + $0x40] sm:$0xff]
        %v566 = vld [vmem:[%s304 + $0x48] sm:$0xff]
        %577 = vrot.lane.b32.xlu0 %v557, 126
        %v578 = vpop.permute.xlu0 %577
        %579 = vrot.lane.b32.xlu0 %v558, 126
        %v580 = vpop.permute.xlu0 %579
        %581 = vrot.lane.b32.xlu0 %v559, 126
        %v582 = vpop.permute.xlu0 %581
        %583 = vrot.lane.b32.xlu0 %v560, 126
        %v584 = vpop.permute.xlu0 %583
        %585 = vrot.lane.b32.xlu0 %v561, 126
        %v586 = vpop.permute.xlu0 %585
        %587 = vrot.lane.b32.xlu0 %v562, 126
        %v588 = vpop.permute.xlu0 %587
        %589 = vrot.lane.b32.xlu0 %v563, 126
        %v590 = vpop.permute.xlu0 %589
        %591 = vrot.lane.b32.xlu0 %v564, 126
        %v592 = vpop.permute.xlu0 %591
        %593 = vrot.lane.b32.xlu0 %v565, 126
        %v594 = vpop.permute.xlu0 %593
        %595 = vrot.lane.b32.xlu0 %v566, 126
        %v596 = vpop.permute.xlu0 %595
        %607 = vst.msk [vmem:[#allocation3 + $0xa0] sm:$0xff] %vm324, %v578
        %608 = vst.msk [vmem:[#allocation3 + $0xa8] sm:$0xff] %vm324, %v580
        %609 = vst.msk [vmem:[#allocation3 + $0xb0] sm:$0xff] %vm324, %v582
        %610 = vst.msk [vmem:[#allocation3 + $0xb8] sm:$0xff] %vm324, %v584
        %611 = vst.msk [vmem:[#allocation3 + $0xc0] sm:$0xff] %vm324, %v586
        %612 = vst.msk [vmem:[#allocation3 + $0xc8] sm:$0xff] %vm324, %v588
        %613 = vst.msk [vmem:[#allocation3 + $0xd0] sm:$0xff] %vm324, %v590
        %614 = vst.msk [vmem:[#allocation3 + $0xd8] sm:$0xff] %vm324, %v592
        %615 = vst.msk [vmem:[#allocation3 + $0xe0] sm:$0xff] %vm324, %v594
        %616 = vst.msk [vmem:[#allocation3 + $0xe8] sm:$0xff] %vm324, %v596
        %v617 = vld [vmem:[%s304] sm:$0xff]
        %v618 = vld [vmem:[%s304 + $0x8] sm:$0xff]
        %v619 = vld [vmem:[%s304 + $0x10] sm:$0xff]
        %v620 = vld [vmem:[%s304 + $0x18] sm:$0xff]
        %v621 = vld [vmem:[%s304 + $0x20] sm:$0xff]
        %v622 = vld [vmem:[%s304 + $0x28] sm:$0xff]
        %v623 = vld [vmem:[%s304 + $0x30] sm:$0xff]
        %v624 = vld [vmem:[%s304 + $0x38] sm:$0xff]
        %v625 = vld [vmem:[%s304 + $0x40] sm:$0xff]
        %v626 = vld [vmem:[%s304 + $0x48] sm:$0xff]
        %637 = vrot.lane.b32.xlu0 %v617, 125
        %v638 = vpop.permute.xlu0 %637
        %639 = vrot.lane.b32.xlu0 %v618, 125
        %v640 = vpop.permute.xlu0 %639
        %641 = vrot.lane.b32.xlu0 %v619, 125
        %v642 = vpop.permute.xlu0 %641
        %643 = vrot.lane.b32.xlu0 %v620, 125
        %v644 = vpop.permute.xlu0 %643
        %645 = vrot.lane.b32.xlu0 %v621, 125
        %v646 = vpop.permute.xlu0 %645
        %647 = vrot.lane.b32.xlu0 %v622, 125
        %v648 = vpop.permute.xlu0 %647
        %649 = vrot.lane.b32.xlu0 %v623, 125
        %v650 = vpop.permute.xlu0 %649
        %651 = vrot.lane.b32.xlu0 %v624, 125
        %v652 = vpop.permute.xlu0 %651
        %653 = vrot.lane.b32.xlu0 %v625, 125
        %v654 = vpop.permute.xlu0 %653
        %655 = vrot.lane.b32.xlu0 %v626, 125
        %v656 = vpop.permute.xlu0 %655
        %667 = vst.msk [vmem:[#allocation3 + $0xf0] sm:$0xff] %vm324, %v638
        %668 = vst.msk [vmem:[#allocation3 + $0xf8] sm:$0xff] %vm324, %v640
        %669 = vst.msk [vmem:[#allocation3 + $0x100] sm:$0xff] %vm324, %v642
        %670 = vst.msk [vmem:[#allocation3 + $0x108] sm:$0xff] %vm324, %v644
        %671 = vst.msk [vmem:[#allocation3 + $0x110] sm:$0xff] %vm324, %v646
        %672 = vst.msk [vmem:[#allocation3 + $0x118] sm:$0xff] %vm324, %v648
        %673 = vst.msk [vmem:[#allocation3 + $0x120] sm:$0xff] %vm324, %v650
        %674 = vst.msk [vmem:[#allocation3 + $0x128] sm:$0xff] %vm324, %v652
        %675 = vst.msk [vmem:[#allocation3 + $0x130] sm:$0xff] %vm324, %v654
        %676 = vst.msk [vmem:[#allocation3 + $0x138] sm:$0xff] %vm324, %v656
        %v677 = vld [vmem:[%s3] sm:$0xff]
        %v678 = vld [vmem:[%s3 + $0x8] sm:$0xff]
        %v679 = vld [vmem:[%s3 + $0x10] sm:$0xff]
        %v680 = vld [vmem:[%s3 + $0x18] sm:$0xff]
        %v681 = vld [vmem:[%s3 + $0x20] sm:$0xff]
        %v682 = vld [vmem:[%s3 + $0x28] sm:$0xff]
        %v683 = vld [vmem:[%s3 + $0x30] sm:$0xf]
        %v684 = vld [vmem:[%s3 + $0x38] sm:$0xf]
        %v685 = vld [vmem:[%s3 + $0x40] sm:$0xf]
        %v686 = vld [vmem:[#allocation3] sm:$0xff]
        %v687 = vld [vmem:[#allocation3 + $0x8] sm:$0xff]
        %v688 = vld [vmem:[#allocation3 + $0x10] sm:$0xff]
        %v689 = vld [vmem:[#allocation3 + $0x18] sm:$0xff]
        %v690 = vld [vmem:[#allocation3 + $0x20] sm:$0xff]
        %v691 = vld [vmem:[#allocation3 + $0x28] sm:$0xff]
        %v692 = vld [vmem:[#allocation3 + $0x30] sm:$0xff]
        %v693 = vld [vmem:[#allocation3 + $0x38] sm:$0xff]
        %v694 = vld [vmem:[#allocation3 + $0x40] sm:$0xff]
        %v695 = vld [vmem:[#allocation3 + $0x48] sm:$0xff]
        %v696 = vld [vmem:[#allocation3 + $0x50] sm:$0xff]
        %v697 = vld [vmem:[#allocation3 + $0x58] sm:$0xff]
        %v698 = vld [vmem:[#allocation3 + $0x60] sm:$0xff]
        %v699 = vld [vmem:[#allocation3 + $0x68] sm:$0xff]
        %v700 = vld [vmem:[#allocation3 + $0x70] sm:$0xff]
        %v701 = vld [vmem:[#allocation3 + $0x78] sm:$0xff]
        %v702 = vld [vmem:[#allocation3 + $0x80] sm:$0xff]
        %v703 = vld [vmem:[#allocation3 + $0x88] sm:$0xff]
        %v704 = vld [vmem:[#allocation3 + $0x90] sm:$0xff]
        %v705 = vld [vmem:[#allocation3 + $0x98] sm:$0xff]
        %v706 = vld [vmem:[#allocation3 + $0xa0] sm:$0xff]
        %v707 = vld [vmem:[#allocation3 + $0xa8] sm:$0xff]
        %v708 = vld [vmem:[#allocation3 + $0xb0] sm:$0xff]
        %v709 = vld [vmem:[#allocation3 + $0xb8] sm:$0xff]
        %v710 = vld [vmem:[#allocation3 + $0xc0] sm:$0xff]
        %v711 = vld [vmem:[#allocation3 + $0xc8] sm:$0xff]
        %v712 = vld [vmem:[#allocation3 + $0xd0] sm:$0xff]
        %v713 = vld [vmem:[#allocation3 + $0xd8] sm:$0xff]
        %v714 = vld [vmem:[#allocation3 + $0xe0] sm:$0xff]
        %v715 = vld [vmem:[#allocation3 + $0xe8] sm:$0xff]
        %v716 = vld [vmem:[#allocation3 + $0xf0] sm:$0xff]
        %v717 = vld [vmem:[#allocation3 + $0xf8] sm:$0xff]
        %v718 = vld [vmem:[#allocation3 + $0x100] sm:$0xff]
        %v719 = vld [vmem:[#allocation3 + $0x108] sm:$0xff]
        %v720 = vld [vmem:[#allocation3 + $0x110] sm:$0xff]
        %v721 = vld [vmem:[#allocation3 + $0x118] sm:$0xff]
        %v722 = vld [vmem:[#allocation3 + $0x120] sm:$0xff]
        %v723 = vld [vmem:[#allocation3 + $0x128] sm:$0xff]
        %v724 = vld [vmem:[#allocation3 + $0x130] sm:$0xff]
        %v725 = vld [vmem:[#allocation3 + $0x138] sm:$0xff]
        %vm726 = vcmask 523264
        %v728 = vsel %vm726, %v679, 0
        %v731 = vsel %vm726, %v682, 0
        %v734 = vsel %vm726, %v685, 0
        %736 = vmatprep.subr.mxu0 0.0
        %737 = vmatpush1.msra.mxu0 %v686
        %738 = vmatprep.subr.mxu0 0.0
        %739 = vmatpush1.msra.mxu0 %v687
        %740 = vmatprep.subr.mxu0 0.0
        %741 = vmatpush1.msra.mxu0 %v688
        %742 = vmatprep.subr.mxu0 0.0
        %743 = vmatpush1.msra.mxu0 %v689
        %744 = vmatprep.subr.mxu0 0.0
        %745 = vmatpush1.msra.mxu0 %v690
        %746 = vmatprep.subr.mxu0 0.0
        %747 = vmatpush1.msra.mxu0 %v691
        %748 = vmatprep.subr.mxu0 0.0
        %749 = vmatpush1.msra.mxu0 %v692
        %750 = vmatprep.subr.mxu0 0.0
        %751 = vmatpush1.msra.mxu0 %v693
        %752 = vmatprep.subr.mxu0 0.0
        %753 = vmatpush1.msra.mxu0 %v694
        %754 = vmatprep.subr.mxu0 0.0
        %755 = vmatpush1.msra.mxu0 %v695
        %756 = vmatprep.subr.mxu0 0.0
        %757 = vmatpush1.msra.mxu0 %v696
        %758 = vmatprep.subr.mxu0 0.0
        %759 = vmatpush1.msra.mxu0 %v697
        %760 = vmatprep.subr.mxu0 0.0
        %761 = vmatpush1.msra.mxu0 %v698
        %762 = vmatprep.subr.mxu0 0.0
        %763 = vmatpush1.msra.mxu0 %v699
        %764 = vmatprep.subr.mxu0 0.0
        %765 = vmatpush1.msra.mxu0 %v700
        %766 = vmatprep.subr.mxu0 0.0
        %767 = vmatpush1.msra.mxu0 %v701
        %768 = vmatprep.subr.mxu0 0.0
        %769 = vmatpush1.msra.mxu0 %v702
        %770 = vmatprep.subr.mxu0 0.0
        %771 = vmatpush1.msra.mxu0 %v703
        %772 = vmatprep.subr.mxu0 0.0
        %773 = vmatpush1.msra.mxu0 %v704
        %774 = vmatprep.subr.mxu0 0.0
        %775 = vmatpush1.msra.mxu0 %v705
        %776 = vmatprep.subr.mxu0 0.0
        %777 = vmatpush1.msra.mxu0 %v706
        %778 = vmatprep.subr.mxu0 0.0
        %779 = vmatpush1.msra.mxu0 %v707
        %780 = vmatprep.subr.mxu0 0.0
        %781 = vmatpush1.msra.mxu0 %v708
        %782 = vmatprep.subr.mxu0 0.0
        %783 = vmatpush1.msra.mxu0 %v709
        %784 = vmatprep.subr.mxu0 0.0
        %785 = vmatpush1.msra.mxu0 %v710
        %786 = vmatprep.subr.mxu0 0.0
        %787 = vmatpush1.msra.mxu0 %v711
        %788 = vmatprep.subr.mxu0 0.0
        %789 = vmatpush1.msra.mxu0 %v712
        %790 = vmatprep.subr.mxu0 0.0
        %791 = vmatpush1.msra.mxu0 %v713
        %792 = vmatprep.subr.mxu0 0.0
        %793 = vmatpush1.msra.mxu0 %v714
        %794 = vmatprep.subr.mxu0 0.0
        %795 = vmatpush1.msra.mxu0 %v715
        %796 = vmatprep.subr.mxu0 0.0
        %797 = vmatpush1.msra.mxu0 %v716
        %798 = vmatprep.subr.mxu0 0.0
        %799 = vmatpush1.msra.mxu0 %v717
        %800 = vmatprep.mubr.f32.mxu0 %v678
        %801 = vmatmul.mubr.f32.gmra.mrb[0].mxu0 %v677
        %v802 = vpop.f32.mrb[0].mxu0
        %v803 = vadd.f32 0.0, %v802
        %v804 = vpop.f32.mrb[0].mxu0
        %805 = vmatprep.mubr.f32.mxu0 %v681
        %806 = vmatmul.mubr.f32.gmra.mrb[0].mxu0 %v680
        %v807 = vpop.f32.mrb[0].mxu0
        %v808 = vadd.f32 0.0, %v807
        %v809 = vpop.f32.mrb[0].mxu0
        %810 = vmatprep.mubr.f32.mxu0 %v684
        %811 = vmatmul.mubr.f32.gmra.mrb[0].mxu0 %v683
        %v812 = vpop.f32.mrb[0].mxu0
        %v813 = vadd.f32 0.0, %v812
        %v814 = vpop.f32.mrb[0].mxu0
        %815 = vdwg.mxu0
        %816 = vmatprep.subr.mxu0 0.0
        %817 = vmatpush1.msra.mxu0 %v718
        %818 = vmatprep.subr.mxu0 0.0
        %819 = vmatpush1.msra.mxu0 %v719
        %820 = vmatprep.subr.mxu0 0.0
        %821 = vmatpush1.msra.mxu0 %v720
        %822 = vmatprep.subr.mxu0 0.0
        %823 = vmatpush1.msra.mxu0 %v721
        %824 = vmatprep.subr.mxu0 0.0
        %825 = vmatpush1.msra.mxu0 %v722
        %826 = vmatprep.subr.mxu0 0.0
        %827 = vmatpush1.msra.mxu0 %v723
        %828 = vmatprep.subr.mxu0 0.0
        %829 = vmatpush1.msra.mxu0 %v724
        %830 = vmatprep.subr.mxu0 0.0
        %831 = vmatpush1.msra.mxu0 %v725
        %832 = vmatprep.subr.mxu0 0.0
        %833 = vmatpush1.msra.mxu0 0.0
        %834 = vmatprep.subr.mxu0 0.0
        %835 = vmatpush1.msra.mxu0 0.0
        %836 = vmatprep.subr.mxu0 0.0
        %837 = vmatpush1.msra.mxu0 0.0
        %838 = vmatprep.subr.mxu0 0.0
        %839 = vmatpush1.msra.mxu0 0.0
        %840 = vmatprep.subr.mxu0 0.0
        %841 = vmatpush1.msra.mxu0 0.0
        %842 = vmatprep.subr.mxu0 0.0
        %843 = vmatpush1.msra.mxu0 0.0
        %844 = vmatprep.subr.mxu0 0.0
        %845 = vmatpush1.msra.mxu0 0.0
        %846 = vmatprep.subr.mxu0 0.0
        %847 = vmatpush1.msra.mxu0 0.0
        %848 = vmatprep.subr.mxu0 0.0
        %849 = vmatpush1.msra.mxu0 0.0
        %850 = vmatprep.subr.mxu0 0.0
        %851 = vmatpush1.msra.mxu0 0.0
        %852 = vmatprep.subr.mxu0 0.0
        %853 = vmatpush1.msra.mxu0 0.0
        %854 = vmatprep.subr.mxu0 0.0
        %855 = vmatpush1.msra.mxu0 0.0
        %856 = vmatprep.subr.mxu0 0.0
        %857 = vmatpush1.msra.mxu0 0.0
        %858 = vmatprep.subr.mxu0 0.0
        %859 = vmatpush1.msra.mxu0 0.0
        %860 = vmatprep.subr.mxu0 0.0
        %861 = vmatpush1.msra.mxu0 0.0
        %862 = vmatprep.subr.mxu0 0.0
        %863 = vmatpush1.msra.mxu0 0.0
        %864 = vmatprep.subr.mxu0 0.0
        %865 = vmatpush1.msra.mxu0 0.0
        %866 = vmatprep.subr.mxu0 0.0
        %867 = vmatpush1.msra.mxu0 0.0
        %868 = vmatprep.subr.mxu0 0.0
        %869 = vmatpush1.msra.mxu0 0.0
        %870 = vmatprep.subr.mxu0 0.0
        %871 = vmatpush1.msra.mxu0 0.0
        %872 = vmatprep.subr.mxu0 0.0
        %873 = vmatpush1.msra.mxu0 0.0
        %874 = vmatprep.subr.mxu0 0.0
        %875 = vmatpush1.msra.mxu0 0.0
        %876 = vmatprep.subr.mxu0 0.0
        %877 = vmatpush1.msra.mxu0 0.0
        %878 = vmatprep.subr.mxu0 0.0
        %879 = vmatpush1.msra.mxu0 0.0
        %880 = vmatprep.mubr.f32.mxu0 0.0
        %881 = vmatmul.mubr.f32.gmra.mrb[0].mxu0 %v728
        %v882 = vpop.f32.mrb[0].mxu0
        %v883 = vadd.f32 %v803, %v882
        %v884 = vpop.f32.mrb[0].mxu0
        %885 = vmatprep.mubr.f32.mxu0 0.0
        %886 = vmatmul.mubr.f32.gmra.mrb[0].mxu0 %v731
        %v887 = vpop.f32.mrb[0].mxu0
        %v888 = vadd.f32 %v808, %v887
        %v889 = vpop.f32.mrb[0].mxu0
        %890 = vmatprep.mubr.f32.mxu0 0.0
        %891 = vmatmul.mubr.f32.gmra.mrb[0].mxu0 %v734
        %v892 = vpop.f32.mrb[0].mxu0
        %v893 = vadd.f32 %v813, %v892
        %v894 = vpop.f32.mrb[0].mxu0
        %895 = vdwg.mxu0
        %v896 = vadd.f32 %v883, %v464
        %v897 = vadd.f32 %v888, %v469
        %v898 = vadd.f32 %v893, %v474
        %v899 = vld [vmem:[%s4] sm:$0xff]
        %v900 = vld [vmem:[%s4 + $0x8] sm:$0xff]
        %v901 = vld [vmem:[%s4 + $0x10] sm:$0xf]
        %v902 = vmul.f32 %v896, %v899
        %v903 = vmul.f32 %v897, %v900
        %v904 = vmul.f32 %v898, %v901
        %v905 = vld [vmem:[%s5] sm:$0xff]
        %v906 = vld [vmem:[%s5 + $0x8] sm:$0xff]
        %v907 = vld [vmem:[%s5 + $0x10] sm:$0xf]
        %v908 = vadd.f32 %v902, %v905
        %v909 = vadd.f32 %v903, %v906
        %v910 = vadd.f32 %v904, %v907
        %v911 = vmax.f32 %v908, 0.0
        %v912 = vmax.f32 %v909, 0.0
        %v913 = vmax.f32 %v910, 0.0
        %914 = vst.msk [vmem:[%s309] sm:$0xff] %vm324, %v911
        %915 = vst.msk [vmem:[%s309 + $0x8] sm:$0xff] %vm324, %v912
        %vm916 = vcmask 3072
        %917 = vst.msk [vmem:[%s309 + $0x10] sm:$0xf] %vm916, %v913
        %918 = vst.msk [vmem:[%s294] sm:$0xff] %vm324, %v883
        %919 = vst.msk [vmem:[%s294 + $0x8] sm:$0xff] %vm324, %v888
        %920 = vst.msk [vmem:[%s294 + $0x10] sm:$0xf] %vm916, %v893
        %p921 = scmp.lt.s32.totalorder %s22, 1
        %s922 = scalar_select %p921, %s22, 1
        %s923 = smul.addr %s922, 3
        %s924 = smul.addr %s923, 8
        %s925 = scalar_lea.vmem %s6, %s924
        %s926 = sand.u32 %s192, 1
        %s927 = scalar_lea.sflag [#allocation5], %s926
        %s928 = sand.u32 %s192, 1
        %s929 = smul.addr %s928, 24
        %s930 = scalar_lea.vmem [#allocation4], %s929
        // Predicated region
        $region45: #{resnet_forward.18} parent=43 // pred_check
          %p931 = pneg %p176
        $region46: #{resnet_forward.18} parent=43 // pred_check_branch
          %933 = sbr.rel (%p931) target = $region48
        $region47: #{resnet_forward.18} parent=43 // pred_region
          _
        $region48: #{resnet_forward.18} parent=43 // pred_fallthru
          _
        // Predicated region
        $region49: #{resnet_forward.18} parent=43 // pred_check
          %p934 = pneg %p202
        $region50: #{resnet_forward.18} parent=43 // pred_check_branch
          %936 = sbr.rel (%p934) target = $region52
        $region51: #{resnet_forward.18} parent=43 // pred_region
          %s938 = ssub.s32 384, 384
          %939 = vsyncadd %s927, %s938
          %s940 = smul.addr %s22, 3
          %s941 = smul.addr %s940, 128
          %s942 = scalar_lea.hbm %s7, %s941
          %s943 = sshll.u32 %s930, 4
          %s944 = int_to_ptr.vmem [resolvable:$true] %s943
          %949 = dma.vmem_to_hbm [thread:$0]  %s944, 384, %s942, %s927, 128, 128, 8
        $region52: #{resnet_forward.18} parent=43 // pred_fallthru
          _
      $region44: #{resnet_forward.18} parent=5 // pred_fallthru
        _
      %p950 = scmp.le.s32.totalorder 2, %s17
      // Predicated region
      $region53: #{resnet_forward.18} parent=5 // pred_check
        %p951 = pneg %p950
      $region54: #{resnet_forward.18} parent=5 // pred_check_branch
        %953 = sbr.rel (%p951) target = $region56
      $region55: #{resnet_forward.18} parent=5 // pred_region
        %s954 = ssub.s32 %s17, 2
        // Predicated region
        $region57: #{resnet_forward.18} parent=55 // pred_check
          %p955 = pneg %p182
        $region58: #{resnet_forward.18} parent=55 // pred_check_branch
          %957 = sbr.rel (%p955) target = $region60
        $region59: #{resnet_forward.18} parent=55 // pred_region
          %p958 = scmp.lt.s32.totalorder %s23, 1
          %s959 = scalar_select %p958, %s23, 1
          %s960 = smul.addr %s959, 3
          %s961 = smul.addr %s960, 8
          %s962 = scalar_lea.vmem %s6, %s961
        $region60: #{resnet_forward.18} parent=55 // pred_fallthru
          _
        // Predicated region
        $region61: #{resnet_forward.18} parent=55 // pred_check
          %p963 = pneg %p208
        $region62: #{resnet_forward.18} parent=55 // pred_check_branch
          %965 = sbr.rel (%p963) target = $region64
        $region63: #{resnet_forward.18} parent=55 // pred_region
          %s966 = sand.u32 %s193, 1
          %s967 = scalar_lea.sflag [#allocation5], %s966
          %s968 = sand.u32 %s193, 1
          %s969 = smul.addr %s968, 24
          %s970 = scalar_lea.vmem [#allocation4], %s969
          %971 = dma.done %s967, 384
        $region64: #{resnet_forward.18} parent=55 // pred_fallthru
          _
      $region56: #{resnet_forward.18} parent=5 // pred_fallthru
        _
    $region6: #{resnet_forward.18} parent=1 // loop_footer
      %s21 = sadd.s32 1, %s17
    $region7: #{resnet_forward.18} parent=1 // loop_footer_branch
      %16 = sbr.rel target = $region3
    $region8: #{resnet_forward.18} parent=1 // loop_exit
      _
    %972 = vsyncpa [#allocation5], 1
    %s973 = scalar_lea.sflag [#allocation5], 1
    %974 = vsyncpa %s973, 1

// kernel: resnet_forward.19
$region0: #{resnet_forward.19}
  #allocation0 [shape = 'u32[]', space=smem, size = 0x4, offset = 0x4, fixed_abs, tag = 'smem constant byte address 0x4 - core index']
  #allocation1 [shape = 'u32[144,128]{1,0:T(1,128)}', space=vmem, size = 0x12000, scoped, tag = 'internal scratch']
  %s0 = inlined_call_operand.vmem [shape: f32[2,20], index: 0, kind: input, shape index: {}]
  %s1 = inlined_call_operand.vmem [shape: f32[20,10], index: 1, kind: input, shape index: {}]
  %s2 = inlined_call_operand.vmem [shape: f32[1,10], index: 2, kind: input, shape index: {}]
  %s3 = inlined_call_operand.hbm [shape: f32[2,10], index: 3, kind: output, shape index: {}]
  %s4 = sld [smem:[#allocation0]]
  $region22: #{resnet_forward.19} parent=0
    _
  %s6 = ssub.s32 1, %s4
  %s7 = scalar_select 0, %s6, %s4
  $region1: #{resnet_forward.19} parent=0
    #allocation2 [shape = 'u8[1024]{0}', space=vmem, size = 0x400, scoped, tag = 'output window, operand 0, single buffered']
    #allocation3 [shape = 's32[1]{0}', space=sflag, size = 0x4, scoped, tag = 'scoped memory for resnet_forward.19']
    %8 = vsyncpa [#allocation3], 0
    // Predicated region
    $region2: #{resnet_forward.19} parent=1 // pred_check
      _
    $region3: #{resnet_forward.19} parent=1 // pred_check_branch
      %10 = sbr.rel (0) target = $region5
    $region4: #{resnet_forward.19} parent=1 // pred_region
      _
    $region5: #{resnet_forward.19} parent=1 // pred_fallthru
      _
    // Predicated region
    $region6: #{resnet_forward.19} parent=1 // pred_check
      _
    $region7: #{resnet_forward.19} parent=1 // pred_check_branch
      %12 = sbr.rel (0) target = $region9
    $region8: #{resnet_forward.19} parent=1 // pred_region
      _
    $region9: #{resnet_forward.19} parent=1 // pred_fallthru
      _
    // Predicated region
    $region10: #{resnet_forward.19} parent=1 // pred_check
      _
    $region11: #{resnet_forward.19} parent=1 // pred_check_branch
      %14 = sbr.rel (0) target = $region13
    $region12: #{resnet_forward.19} parent=1 // pred_region
      _
    $region13: #{resnet_forward.19} parent=1 // pred_fallthru
      _
    %v15 = vld [vmem:[%s0] sm:$0x3]
    %v16 = vld [vmem:[%s1] sm:$0xff]
    %v17 = vld [vmem:[%s1 + $0x8] sm:$0xff]
    %v18 = vld [vmem:[%s1 + $0x10] sm:$0xf]
    %v19 = vld [vmem:[%s2] sm:$0x1]
    %v21 = vlaneseq
    %v22 = vshrl.u32 %v21, 7
    %v23 = vsub.s32 0, %v22
    %v24 = vrot.slane %v19, %v23
    %vm26 = vcmask 162816
    %v28 = vsel %vm26, %v15, 0
    %vm30 = vcmask 1043456
    %v32 = vsel %vm30, %v18, 0
    %34 = vmatprep.subr.mxu0 0.0
    %35 = vmatpush1.msra.mxu0 %v16
    %36 = vmatprep.subr.mxu0 0.0
    %37 = vmatpush1.msra.mxu0 %v17
    %38 = vmatprep.subr.mxu0 0.0
    %39 = vmatpush1.msra.mxu0 %v32
    %40 = vmatprep.subr.mxu0 0.0
    %41 = vmatpush1.msra.mxu0 0.0
    %42 = vmatprep.subr.mxu0 0.0
    %43 = vmatpush1.msra.mxu0 0.0
    %44 = vmatprep.subr.mxu0 0.0
    %45 = vmatpush1.msra.mxu0 0.0
    %46 = vmatprep.subr.mxu0 0.0
    %47 = vmatpush1.msra.mxu0 0.0
    %48 = vmatprep.subr.mxu0 0.0
    %49 = vmatpush1.msra.mxu0 0.0
    %50 = vmatprep.subr.mxu0 0.0
    %51 = vmatpush1.msra.mxu0 0.0
    %52 = vmatprep.subr.mxu0 0.0
    %53 = vmatpush1.msra.mxu0 0.0
    %54 = vmatprep.subr.mxu0 0.0
    %55 = vmatpush1.msra.mxu0 0.0
    %56 = vmatprep.subr.mxu0 0.0
    %57 = vmatpush1.msra.mxu0 0.0
    %58 = vmatprep.subr.mxu0 0.0
    %59 = vmatpush1.msra.mxu0 0.0
    %60 = vmatprep.subr.mxu0 0.0
    %61 = vmatpush1.msra.mxu0 0.0
    %62 = vmatprep.subr.mxu0 0.0
    %63 = vmatpush1.msra.mxu0 0.0
    %64 = vmatprep.subr.mxu0 0.0
    %65 = vmatpush1.msra.mxu0 0.0
    %66 = vmatprep.subr.mxu0 0.0
    %67 = vmatpush1.msra.mxu0 0.0
    %68 = vmatprep.subr.mxu0 0.0
    %69 = vmatpush1.msra.mxu0 0.0
    %70 = vmatprep.subr.mxu0 0.0
    %71 = vmatpush1.msra.mxu0 0.0
    %72 = vmatprep.subr.mxu0 0.0
    %73 = vmatpush1.msra.mxu0 0.0
    %74 = vmatprep.subr.mxu0 0.0
    %75 = vmatpush1.msra.mxu0 0.0
    %76 = vmatprep.subr.mxu0 0.0
    %77 = vmatpush1.msra.mxu0 0.0
    %78 = vmatprep.subr.mxu0 0.0
    %79 = vmatpush1.msra.mxu0 0.0
    %80 = vmatprep.subr.mxu0 0.0
    %81 = vmatpush1.msra.mxu0 0.0
    %82 = vmatprep.subr.mxu0 0.0
    %83 = vmatpush1.msra.mxu0 0.0
    %84 = vmatprep.subr.mxu0 0.0
    %85 = vmatpush1.msra.mxu0 0.0
    %86 = vmatprep.subr.mxu0 0.0
    %87 = vmatpush1.msra.mxu0 0.0
    %88 = vmatprep.subr.mxu0 0.0
    %89 = vmatpush1.msra.mxu0 0.0
    %90 = vmatprep.subr.mxu0 0.0
    %91 = vmatpush1.msra.mxu0 0.0
    %92 = vmatprep.subr.mxu0 0.0
    %93 = vmatpush1.msra.mxu0 0.0
    %94 = vmatprep.subr.mxu0 0.0
    %95 = vmatpush1.msra.mxu0 0.0
    %96 = vmatprep.subr.mxu0 0.0
    %97 = vmatpush1.msra.mxu0 0.0
    %98 = vmatprep.mubr.f32.mxu0 0.0
    %99 = vmatmul.mubr.f32.gmra.mrb[0].mxu0 %v28
    %v100 = vpop.f32.mrb[0].mxu0
    %v101 = vadd.f32 %v24, %v100
    %v102 = vpop.f32.mrb[0].mxu0
    %103 = vdwg.mxu0
    %vm104 = vcmask 74752
    %105 = vst.msk [vmem:[#allocation2] sm:$0x3] %vm104, %v101
    // Predicated region
    $region14: #{resnet_forward.19} parent=1 // pred_check
      _
    $region15: #{resnet_forward.19} parent=1 // pred_check_branch
      %107 = sbr.rel (0) target = $region17
    $region16: #{resnet_forward.19} parent=1 // pred_region
      %s109 = ssub.s32 32, 32
      %110 = vsyncadd [#allocation3], %s109
      %s112 = sshll.u32 [#allocation2], 4
      %s113 = int_to_ptr.vmem [resolvable:$true] %s112
      %115 = dma.vmem_to_hbm [thread:$0]  %s113, 32, %s3, [#allocation3]
    $region17: #{resnet_forward.19} parent=1 // pred_fallthru
      _
    // Predicated region
    $region18: #{resnet_forward.19} parent=1 // pred_check
      _
    $region19: #{resnet_forward.19} parent=1 // pred_check_branch
      %117 = sbr.rel (0) target = $region21
    $region20: #{resnet_forward.19} parent=1 // pred_region
      %118 = dma.done [#allocation3], 32
    $region21: #{resnet_forward.19} parent=1 // pred_fallthru
      _
    %119 = vsyncpa [#allocation3], 1

</llo_original>
